<compile_context>
chip_gen: v6e
topology: v6e:2x2x1
jax: 0.10.0
libtpu: 0.0.40
codegen_flags: <defaults>
</compile_context>

<pallas_src>
import functools

import jax
import jax.numpy as jnp
from jax.experimental import pallas as pl
from jax.experimental.pallas import tpu as pltpu


LANE = 128  # narrow channel counts are zero-padded up to one full lane tile


# ----------------------------------------------------------------------------
# Pallas kernel 1: fused conv stack (per batch element).
#   conv1 (8x8 / stride 4): one matmul on pre-extracted im2col patches,
#   + bias + ReLU, result kept as a (rows_pad, 128) bf16 slab in VMEM scratch
#   (flat rows r*in_w + s, zero padded tail rows).
#   conv2 (3x3 / stride 1): 9 shifted accumulating matmuls on that slab:
#     acc[p, :] += h1[p + di*in_w + dj, :] @ W2[3*di + dj]
#   Output rows whose column index s >= in_w - 2 contain wrap-around garbage
#   and are sliced away by the caller; no im2col HBM round trip for conv2.
# ----------------------------------------------------------------------------
def _conv_stack_kernel(p1_ref, w1_ref, b1_ref, w2_ref, b2_ref, o_ref, h1_ref,
                       *, in_w, rows, rows_pad, out_rows):
    # conv1 + bias + ReLU -> bf16 slab in VMEM scratch.
    h1 = jnp.dot(p1_ref[...], w1_ref[...], preferred_element_type=jnp.float32)
    h1 = jnp.maximum(h1 + b1_ref[...], 0.0)
    h1_ref[0:rows, :] = h1.astype(h1_ref.dtype)
    h1_ref[rows:rows_pad, :] = jnp.zeros(
        (rows_pad - rows, h1_ref.shape[-1]), h1_ref.dtype)

    # conv2: 9 shifted accumulating matmuls, f32 accumulation.
    acc = jnp.zeros((out_rows, o_ref.shape[-1]), jnp.float32)
    for di in range(3):
        for dj in range(3):
            off = di * in_w + dj
            acc = acc + jnp.dot(h1_ref[off:off + out_rows, :],
                                w2_ref[di * 3 + dj],
                                preferred_element_type=jnp.float32)
    o_ref[...] = jnp.maximum(acc + b2_ref[...], 0.0).astype(o_ref.dtype)


def conv_stack(p1, w1, b1, w2, b2, *, in_h, in_w):
    """p1: [B, in_h*in_w, 8*8*C] bf16 conv1 im2col patches.
    Returns [B, (in_h-2)*in_w, 128] bf16 (conv2 activations, padded lanes)."""
    B, rows, k1 = p1.shape
    assert rows == in_h * in_w and rows % 8 == 0
    out_rows = (in_h - 2) * in_w
    rows_pad = rows + 8                       # room for the 3x3 shifts (<= +42? no: +2*in_w+2 <= rows_pad-out_rows+... )
    assert out_rows + 2 * in_w + 2 <= rows_pad
    n = w2.shape[-1]
    kernel = functools.partial(_conv_stack_kernel, in_w=in_w, rows=rows,
                               rows_pad=rows_pad, out_rows=out_rows)
    return pl.pallas_call(
        kernel,
        out_shape=jax.ShapeDtypeStruct((B, out_rows, n), jnp.bfloat16),
        grid_spec=pltpu.PrefetchScalarGridSpec(
            num_scalar_prefetch=0,
            grid=(B,),
            in_specs=[
                pl.BlockSpec((None, rows, k1), lambda b: (b, 0, 0)),
                pl.BlockSpec((k1, LANE), lambda b: (0, 0)),
                pl.BlockSpec((1, LANE), lambda b: (0, 0)),
                pl.BlockSpec((9, LANE, LANE), lambda b: (0, 0, 0)),
                pl.BlockSpec((1, LANE), lambda b: (0, 0)),
            ],
            out_specs=pl.BlockSpec((None, out_rows, n), lambda b: (b, 0, 0)),
            scratch_shapes=[pltpu.VMEM((rows_pad, LANE), jnp.bfloat16)],
        ),
        compiler_params=pltpu.CompilerParams(dimension_semantics=("parallel",)),
    )(p1, w1, b1, w2, b2)


# ----------------------------------------------------------------------------
# Pallas kernel 2: K-tiled Linear(20736, 512) + bias + ReLU fused with both
# heads.  The f32 hidden accumulator lives in a small VMEM scratch; on the
# last K step it is ReLU'd and immediately multiplied by the fused
# (policy | value | pad) head weight -> one lane-dense (M, 128) output.
# ----------------------------------------------------------------------------
def _linear_heads_kernel(a_ref, w_ref, b_ref, wh_ref, bh_ref, heads_ref,
                         acc_ref):
    k = pl.program_id(1)
    prod = jnp.dot(a_ref[...], w_ref[...], preferred_element_type=jnp.float32)

    @pl.when(k == 0)
    def _():
        acc_ref[...] = prod + b_ref[...]

    @pl.when(k > 0)
    def _():
        acc_ref[...] = acc_ref[...] + prod

    @pl.when(k == pl.num_programs(1) - 1)
    def _():
        h = jnp.maximum(acc_ref[...], 0.0).astype(jnp.bfloat16)
        heads_ref[...] = (
            jnp.dot(h, wh_ref[...], preferred_element_type=jnp.float32)
            + bh_ref[...]
        ).astype(heads_ref.dtype)


def linear_heads(a, w, b, wh, bh, *, k_blocks):
    """a: [M, K] bf16, w: [K, H] bf16, b: [1, H] f32,
    wh: [H, Nh] bf16, bh: [1, Nh] f32.  Returns [M, Nh] f32."""
    M, K = a.shape
    K2, H = w.shape
    assert K == K2 and K % k_blocks == 0
    tk = K // k_blocks
    assert tk == K or tk % 128 == 0
    Nh = wh.shape[-1]
    return pl.pallas_call(
        _linear_heads_kernel,
        out_shape=jax.ShapeDtypeStruct((M, Nh), jnp.float32),
        grid_spec=pltpu.PrefetchScalarGridSpec(
            num_scalar_prefetch=0,
            grid=(1, k_blocks),
            in_specs=[
                pl.BlockSpec((M, tk), lambda m, k: (m, k)),
                pl.BlockSpec((tk, H), lambda m, k: (k, 0)),
                pl.BlockSpec((1, H), lambda m, k: (0, 0)),
                pl.BlockSpec((H, Nh), lambda m, k: (0, 0)),
                pl.BlockSpec((1, Nh), lambda m, k: (0, 0)),
            ],
            out_specs=pl.BlockSpec((M, Nh), lambda m, k: (m, 0)),
            scratch_shapes=[pltpu.VMEM((M, H), jnp.float32)],
        ),
        compiler_params=pltpu.CompilerParams(
            dimension_semantics=("parallel", "arbitrary")),
    )(a, w, b, wh, bh)


# ----------------------------------------------------------------------------
# Plain-JAX glue: im2col patch extraction (conv1 only -- cheap data movement;
# everything downstream of it stays inside Pallas kernels).
# ----------------------------------------------------------------------------
def im2col(x, kh, kw, stride):
    """x: [B, H, W, C] -> patches [B, OH, OW, kh*kw*C] ((i, j, c) ordering)."""
    B, H, W, C = x.shape
    oh = (H - kh) // stride + 1
    ow = (W - kw) // stride + 1
    cols = []
    for i in range(kh):
        for j in range(kw):
            cols.append(
                x[:, i: i + oh * stride: stride, j: j + ow * stride: stride, :]
            )
    pat = jnp.stack(cols, axis=3)  # [B, OH, OW, kh*kw, C]
    return pat.reshape(B, oh, ow, kh * kw * C), oh, ow


# ----------------------------------------------------------------------------
# ActorCritic parameters + forward.
# ----------------------------------------------------------------------------
def init_params(key, n_frame, act_dim):
    ks = jax.random.split(key, 8)
    scale = 0.05
    # PyTorch-layout tensors, then converted / padded to the kernel layouts.
    w1_t = jax.random.normal(ks[0], (32, n_frame, 8, 8), jnp.float32) * scale
    b1_t = jax.random.normal(ks[1], (32,), jnp.float32) * scale
    w2_t = jax.random.normal(ks[2], (64, 32, 3, 3), jnp.float32) * scale
    b2_t = jax.random.normal(ks[3], (64,), jnp.float32) * scale
    wl_t = jax.random.normal(ks[4], (512, 20736), jnp.float32) * scale  # NCHW cols
    bl_t = jax.random.normal(ks[5], (512,), jnp.float32) * scale
    wp_t = jax.random.normal(ks[6], (act_dim, 512), jnp.float32) * scale
    wv_t = jax.random.normal(ks[7], (1, 512), jnp.float32) * scale
    bp_t = jnp.zeros((act_dim,), jnp.float32)
    bv_t = jnp.zeros((1,), jnp.float32)

    def pad_lanes(m, n=LANE):
        return jnp.pad(m, ((0, 0),) * (m.ndim - 1) + ((0, n - m.shape[-1]),))

    # conv1: [O,I,8,8] -> [(ki,kj,c), O] im2col layout, O padded 32 -> 128.
    w1 = jnp.transpose(w1_t, (2, 3, 1, 0)).reshape(8 * 8 * n_frame, 32)
    w1 = pad_lanes(w1).astype(jnp.bfloat16)
    b1 = pad_lanes(b1_t[None, :])                                    # (1,128) f32

    # conv2: [O,I,3,3] -> [tap=3*di+dj, c_in(pad 128), c_out(pad 128)].
    w2 = jnp.transpose(w2_t, (2, 3, 1, 0))                           # (3,3,32,64)
    w2 = jnp.pad(w2, ((0, 0), (0, 0), (0, LANE - 32), (0, LANE - 64)))
    w2 = w2.reshape(9, LANE, LANE).astype(jnp.bfloat16)
    b2 = pad_lanes(b2_t[None, :])                                    # (1,128) f32

    # linear: torch columns index the NCHW flatten (c, i, j); permute the
    # rows once so they match our NHWC flatten (i, j, c) -> no runtime
    # transpose of the feature map.
    wl = jnp.transpose(wl_t.reshape(512, 64, 18, 18), (2, 3, 1, 0))
    w_lin = wl.reshape(18 * 18 * 64, 512).astype(jnp.bfloat16)
    b_lin = bl_t[None, :]                                            # (1,512) f32

    # fused heads: [512, act_dim (policy) | 1 (value) | zero pad ... 128].
    w_heads = pad_lanes(jnp.concatenate([wp_t.T, wv_t.T], axis=1)).astype(jnp.bfloat16)
    b_heads = pad_lanes(jnp.concatenate([bp_t, bv_t])[None, :])      # (1,128) f32

    return dict(w1=w1, b1=b1, w2=w2, b2=b2, w_lin=w_lin, b_lin=b_lin,
                w_heads=w_heads, b_heads=b_heads)


def actor_critic_forward(params, x, act_dim):
    """x: [B, 84, 84, n_frame] NHWC (or a single [84, 84, n_frame] frame).
    Returns (logits [B, act_dim], value [B])."""
    if x.ndim == 3:
        x = x[None]
    B = x.shape[0]
    xb = x.astype(jnp.bfloat16)

    # --- Conv1 patch extraction (small vs. the 21 MB linear weight stream) --
    # TODO(synk): fuse the 8x8/stride-4 patch extraction into the conv kernel
    # to drop this remaining im2col HBM round trip as well.
    p1, oh1, ow1 = im2col(xb, 8, 8, 4)                      # (B, 20, 20, 256)
    p1 = p1.reshape(B, oh1 * ow1, 8 * 8 * xb.shape[-1])     # (B, 400, 256)

    # --- Fused conv1 (8x8/4) + ReLU + conv2 (3x3/1) + ReLU (one kernel) -----
    h2 = conv_stack(p1, params["w1"], params["b1"], params["w2"], params["b2"],
                    in_h=oh1, in_w=ow1)                     # (B, 360, 128) bf16
    oh2, ow2 = oh1 - 2, ow1 - 2                             # 18, 18
    # (B, 18*20, 128) -> (B, 18, 20, 128) -> drop wrap-around cols + pad chans
    h2 = h2.reshape(B, oh2, ow1, LANE)[:, :, :ow2, :64]
    feat = h2.reshape(B, oh2 * ow2 * 64)                    # NHWC flatten (20736)

    # --- Linear(20736, 512) + ReLU + fused policy/value heads (one kernel) --
    heads = linear_heads(feat, params["w_lin"], params["b_lin"],
                         params["w_heads"], params["b_heads"],
                         k_blocks=6)                        # (B, 128) f32
    logits = heads[:, :act_dim]
    value = heads[:, act_dim]
    return logits, value


# ----------------------------------------------------------------------------
# Pure-JAX f32 reference (same converted params) for a numerical sanity check.
# ----------------------------------------------------------------------------
def reference_forward(params, x, act_dim):
    if x.ndim == 3:
        x = x[None]
    B = x.shape[0]
    xf = x.astype(jnp.float32)
    p1, oh1, ow1 = im2col(xf, 8, 8, 4)
    h1 = jnp.maximum(p1.reshape(B * oh1 * ow1, -1)
                     @ params["w1"].astype(jnp.float32) + params["b1"], 0.0)
    h1 = h1.reshape(B, oh1, ow1, LANE)
    p2, oh2, ow2 = im2col(h1, 3, 3, 1)
    w2 = params["w2"].astype(jnp.float32).reshape(9 * LANE, LANE)
    h2 = jnp.maximum(p2.reshape(B * oh2 * ow2, -1) @ w2 + params["b2"], 0.0)
    h2 = h2.reshape(B, oh2, ow2, LANE)[..., :64]
    feat = h2.reshape(B, -1)
    hidden = jnp.maximum(feat @ params["w_lin"].astype(jnp.float32)
                         + params["b_lin"], 0.0)
    heads = hidden @ params["w_heads"].astype(jnp.float32) + params["b_heads"]
    return heads[:, :act_dim], heads[:, act_dim]


if __name__ == "__main__":
    n_frame, act_dim = 4, 6
    B = 2
    key = jax.random.PRNGKey(0)
    k_param, k_x = jax.random.split(key)

    params = init_params(k_param, n_frame, act_dim)
    # Spatial size 84x84 is forced by Linear(20736, 512) (= 64 * 18 * 18).
    x = jax.random.uniform(k_x, (B, 84, 84, n_frame), jnp.float32)

    fwd = jax.jit(actor_critic_forward, static_argnames="act_dim")
    logits, value = fwd(params, x, act_dim=act_dim)
    jax.block_until_ready((logits, value))

    assert logits.shape == (B, act_dim), logits.shape
    assert value.shape == (B,), value.shape
    assert bool(jnp.all(jnp.isfinite(logits))) and bool(jnp.all(jnp.isfinite(value)))

    # bf16 operands in the Pallas path vs f32 reference -> loose tolerance.
    ref_logits, ref_value = reference_forward(params, x, act_dim)
    assert float(jnp.max(jnp.abs(logits - ref_logits))) < 0.1, "logits mismatch"
    assert float(jnp.max(jnp.abs(value - ref_value))) < 0.1, "value mismatch"

    print("KERNEL_OK")
</pallas_src>

<mosaic_0001>
module attributes {stable_mosaic.version = 11 : i64} {
  func.func @_conv_stack_kernel(%arg0: i32, %arg1: memref<1x400x256xbf16, #tpu.memory_space<vmem>>, %arg2: memref<256x128xbf16, #tpu.memory_space<vmem>>, %arg3: memref<1x128xf32, #tpu.memory_space<vmem>>, %arg4: memref<9x128x128xbf16, #tpu.memory_space<vmem>>, %arg5: memref<1x128xf32, #tpu.memory_space<vmem>>, %arg6: memref<1x360x128xbf16, #tpu.memory_space<vmem>>, %arg7: memref<408x128xbf16, #tpu.memory_space<vmem>>) attributes {dimension_semantics = [#tpu.dimension_semantics<parallel>], iteration_bounds = array<i64: 2>, scalar_prefetch = 0 : i64, scratch_operands = 1 : i64, tpu.core_type = #tpu.core_type<tc>, window_params = [{transform_indices = @transform_0, window_bounds = array<i64: 1, 400, 256>}, {pipeline_mode = #tpu.pipeline_mode<synchronous>, transform_indices = @transform_1, window_bounds = array<i64: 256, 128>}, {pipeline_mode = #tpu.pipeline_mode<synchronous>, transform_indices = @transform_2, window_bounds = array<i64: 1, 128>}, {pipeline_mode = #tpu.pipeline_mode<synchronous>, transform_indices = @transform_3, window_bounds = array<i64: 9, 128, 128>}, {pipeline_mode = #tpu.pipeline_mode<synchronous>, transform_indices = @transform_4, window_bounds = array<i64: 1, 128>}, {transform_indices = @transform_5, window_bounds = array<i64: 1, 360, 128>}]} {
    %c0 = arith.constant 0 : index
    %c0_0 = arith.constant 0 : index
    %c0_1 = arith.constant 0 : index
    %0 = vector.load %arg1[%c0, %c0_0, %c0_1] : memref<1x400x256xbf16, #tpu.memory_space<vmem>>, vector<1x400x256xbf16>
    %1 = vector.shape_cast %0 : vector<1x400x256xbf16> to vector<400x256xbf16>
    %c0_2 = arith.constant 0 : index
    %c0_3 = arith.constant 0 : index
    %2 = vector.load %arg2[%c0_2, %c0_3] : memref<256x128xbf16, #tpu.memory_space<vmem>>, vector<256x128xbf16>
    %cst = arith.constant dense<0.000000e+00> : vector<400x128xf32>
    %3 = tpu.matmul %1, %2, %cst {dimension_numbers = #tpu.dot_dimension_numbers<[1], [0], [0], [1], [0, 0, 1, 1], [], []>} : vector<400x256xbf16>, vector<256x128xbf16>, vector<400x128xf32> -> vector<400x128xf32>
    %c0_4 = arith.constant 0 : index
    %c0_5 = arith.constant 0 : index
    %4 = vector.load %arg3[%c0_4, %c0_5] : memref<1x128xf32, #tpu.memory_space<vmem>>, vector<1x128xf32>
    %5 = vector.broadcast %4 : vector<1x128xf32> to vector<400x128xf32>
    %6 = arith.addf %3, %5 : vector<400x128xf32>
    %cst_6 = arith.constant 0.000000e+00 : f32
    %7 = vector.broadcast %cst_6 : f32 to vector<400x128xf32>
    %8 = arith.maximumf %6, %7 : vector<400x128xf32>
    %9 = arith.truncf %8 : vector<400x128xf32> to vector<400x128xbf16>
    %c0_7 = arith.constant 0 : index
    %c0_8 = arith.constant 0 : index
    %10 = vector.load %arg7[%c0_7, %c0_8] : memref<408x128xbf16, #tpu.memory_space<vmem>>, vector<400x128xbf16>
    tpu.vector_store %arg7[%c0_7, %c0_8], %9 {strides = array<i32>} : memref<408x128xbf16, #tpu.memory_space<vmem>>, vector<400x128xbf16>,
    %cst_9 = arith.constant 0.000000e+00 : bf16
    %11 = vector.broadcast %cst_9 : bf16 to vector<8x128xbf16>
    %c400 = arith.constant 400 : index
    %c0_10 = arith.constant 0 : index
    %12 = vector.load %arg7[%c400, %c0_10] : memref<408x128xbf16, #tpu.memory_space<vmem>>, vector<8x128xbf16>
    tpu.vector_store %arg7[%c400, %c0_10], %11 {strides = array<i32>} : memref<408x128xbf16, #tpu.memory_space<vmem>>, vector<8x128xbf16>,
    %cst_11 = arith.constant 0.000000e+00 : f32
    %13 = vector.broadcast %cst_11 : f32 to vector<360x128xf32>
    %c0_12 = arith.constant 0 : index
    %c0_13 = arith.constant 0 : index
    %14 = vector.load %arg7[%c0_12, %c0_13] : memref<408x128xbf16, #tpu.memory_space<vmem>>, vector<360x128xbf16>
    %c0_14 = arith.constant 0 : index
    %c0_15 = arith.constant 0 : index
    %c0_16 = arith.constant 0 : index
    %15 = vector.load %arg4[%c0_14, %c0_15, %c0_16] : memref<9x128x128xbf16, #tpu.memory_space<vmem>>, vector<1x128x128xbf16>
    %16 = vector.shape_cast %15 : vector<1x128x128xbf16> to vector<128x128xbf16>
    %cst_17 = arith.constant dense<0.000000e+00> : vector<360x128xf32>
    %17 = tpu.matmul %14, %16, %cst_17 {dimension_numbers = #tpu.dot_dimension_numbers<[1], [0], [0], [1], [0, 0, 1, 1], [], []>} : vector<360x128xbf16>, vector<128x128xbf16>, vector<360x128xf32> -> vector<360x128xf32>
    %18 = arith.addf %13, %17 : vector<360x128xf32>
    %c1 = arith.constant 1 : index
    %c0_18 = arith.constant 0 : index
    %19 = vector.load %arg7[%c1, %c0_18] : memref<408x128xbf16, #tpu.memory_space<vmem>>, vector<360x128xbf16>
    %c1_19 = arith.constant 1 : index
    %c0_20 = arith.constant 0 : index
    %c0_21 = arith.constant 0 : index
    %20 = vector.load %arg4[%c1_19, %c0_20, %c0_21] : memref<9x128x128xbf16, #tpu.memory_space<vmem>>, vector<1x128x128xbf16>
    %21 = vector.shape_cast %20 : vector<1x128x128xbf16> to vector<128x128xbf16>
    %cst_22 = arith.constant dense<0.000000e+00> : vector<360x128xf32>
    %22 = tpu.matmul %19, %21, %cst_22 {dimension_numbers = #tpu.dot_dimension_numbers<[1], [0], [0], [1], [0, 0, 1, 1], [], []>} : vector<360x128xbf16>, vector<128x128xbf16>, vector<360x128xf32> -> vector<360x128xf32>
    %23 = arith.addf %18, %22 : vector<360x128xf32>
    %c2 = arith.constant 2 : index
    %c0_23 = arith.constant 0 : index
    %24 = vector.load %arg7[%c2, %c0_23] : memref<408x128xbf16, #tpu.memory_space<vmem>>, vector<360x128xbf16>
    %c2_24 = arith.constant 2 : index
    %c0_25 = arith.constant 0 : index
    %c0_26 = arith.constant 0 : index
    %25 = vector.load %arg4[%c2_24, %c0_25, %c0_26] : memref<9x128x128xbf16, #tpu.memory_space<vmem>>, vector<1x128x128xbf16>
    %26 = vector.shape_cast %25 : vector<1x128x128xbf16> to vector<128x128xbf16>
    %cst_27 = arith.constant dense<0.000000e+00> : vector<360x128xf32>
    %27 = tpu.matmul %24, %26, %cst_27 {dimension_numbers = #tpu.dot_dimension_numbers<[1], [0], [0], [1], [0, 0, 1, 1], [], []>} : vector<360x128xbf16>, vector<128x128xbf16>, vector<360x128xf32> -> vector<360x128xf32>
    %28 = arith.addf %23, %27 : vector<360x128xf32>
    %c20 = arith.constant 20 : index
    %c0_28 = arith.constant 0 : index
    %29 = vector.load %arg7[%c20, %c0_28] : memref<408x128xbf16, #tpu.memory_space<vmem>>, vector<360x128xbf16>
    %c3 = arith.constant 3 : index
    %c0_29 = arith.constant 0 : index
    %c0_30 = arith.constant 0 : index
    %30 = vector.load %arg4[%c3, %c0_29, %c0_30] : memref<9x128x128xbf16, #tpu.memory_space<vmem>>, vector<1x128x128xbf16>
    %31 = vector.shape_cast %30 : vector<1x128x128xbf16> to vector<128x128xbf16>
    %cst_31 = arith.constant dense<0.000000e+00> : vector<360x128xf32>
    %32 = tpu.matmul %29, %31, %cst_31 {dimension_numbers = #tpu.dot_dimension_numbers<[1], [0], [0], [1], [0, 0, 1, 1], [], []>} : vector<360x128xbf16>, vector<128x128xbf16>, vector<360x128xf32> -> vector<360x128xf32>
    %33 = arith.addf %28, %32 : vector<360x128xf32>
    %c21 = arith.constant 21 : index
    %c0_32 = arith.constant 0 : index
    %34 = vector.load %arg7[%c21, %c0_32] : memref<408x128xbf16, #tpu.memory_space<vmem>>, vector<360x128xbf16>
    %c4 = arith.constant 4 : index
    %c0_33 = arith.constant 0 : index
    %c0_34 = arith.constant 0 : index
    %35 = vector.load %arg4[%c4, %c0_33, %c0_34] : memref<9x128x128xbf16, #tpu.memory_space<vmem>>, vector<1x128x128xbf16>
    %36 = vector.shape_cast %35 : vector<1x128x128xbf16> to vector<128x128xbf16>
    %cst_35 = arith.constant dense<0.000000e+00> : vector<360x128xf32>
    %37 = tpu.matmul %34, %36, %cst_35 {dimension_numbers = #tpu.dot_dimension_numbers<[1], [0], [0], [1], [0, 0, 1, 1], [], []>} : vector<360x128xbf16>, vector<128x128xbf16>, vector<360x128xf32> -> vector<360x128xf32>
    %38 = arith.addf %33, %37 : vector<360x128xf32>
    %c22 = arith.constant 22 : index
    %c0_36 = arith.constant 0 : index
    %39 = vector.load %arg7[%c22, %c0_36] : memref<408x128xbf16, #tpu.memory_space<vmem>>, vector<360x128xbf16>
    %c5 = arith.constant 5 : index
    %c0_37 = arith.constant 0 : index
    %c0_38 = arith.constant 0 : index
    %40 = vector.load %arg4[%c5, %c0_37, %c0_38] : memref<9x128x128xbf16, #tpu.memory_space<vmem>>, vector<1x128x128xbf16>
    %41 = vector.shape_cast %40 : vector<1x128x128xbf16> to vector<128x128xbf16>
    %cst_39 = arith.constant dense<0.000000e+00> : vector<360x128xf32>
    %42 = tpu.matmul %39, %41, %cst_39 {dimension_numbers = #tpu.dot_dimension_numbers<[1], [0], [0], [1], [0, 0, 1, 1], [], []>} : vector<360x128xbf16>, vector<128x128xbf16>, vector<360x128xf32> -> vector<360x128xf32>
    %43 = arith.addf %38, %42 : vector<360x128xf32>
    %c40 = arith.constant 40 : index
    %c0_40 = arith.constant 0 : index
    %44 = vector.load %arg7[%c40, %c0_40] : memref<408x128xbf16, #tpu.memory_space<vmem>>, vector<360x128xbf16>
    %c6 = arith.constant 6 : index
    %c0_41 = arith.constant 0 : index
    %c0_42 = arith.constant 0 : index
    %45 = vector.load %arg4[%c6, %c0_41, %c0_42] : memref<9x128x128xbf16, #tpu.memory_space<vmem>>, vector<1x128x128xbf16>
    %46 = vector.shape_cast %45 : vector<1x128x128xbf16> to vector<128x128xbf16>
    %cst_43 = arith.constant dense<0.000000e+00> : vector<360x128xf32>
    %47 = tpu.matmul %44, %46, %cst_43 {dimension_numbers = #tpu.dot_dimension_numbers<[1], [0], [0], [1], [0, 0, 1, 1], [], []>} : vector<360x128xbf16>, vector<128x128xbf16>, vector<360x128xf32> -> vector<360x128xf32>
    %48 = arith.addf %43, %47 : vector<360x128xf32>
    %c41 = arith.constant 41 : index
    %c0_44 = arith.constant 0 : index
    %49 = vector.load %arg7[%c41, %c0_44] : memref<408x128xbf16, #tpu.memory_space<vmem>>, vector<360x128xbf16>
    %c7 = arith.constant 7 : index
    %c0_45 = arith.constant 0 : index
    %c0_46 = arith.constant 0 : index
    %50 = vector.load %arg4[%c7, %c0_45, %c0_46] : memref<9x128x128xbf16, #tpu.memory_space<vmem>>, vector<1x128x128xbf16>
    %51 = vector.shape_cast %50 : vector<1x128x128xbf16> to vector<128x128xbf16>
    %cst_47 = arith.constant dense<0.000000e+00> : vector<360x128xf32>
    %52 = tpu.matmul %49, %51, %cst_47 {dimension_numbers = #tpu.dot_dimension_numbers<[1], [0], [0], [1], [0, 0, 1, 1], [], []>} : vector<360x128xbf16>, vector<128x128xbf16>, vector<360x128xf32> -> vector<360x128xf32>
    %53 = arith.addf %48, %52 : vector<360x128xf32>
    %c42 = arith.constant 42 : index
    %c0_48 = arith.constant 0 : index
    %54 = vector.load %arg7[%c42, %c0_48] : memref<408x128xbf16, #tpu.memory_space<vmem>>, vector<360x128xbf16>
    %c8 = arith.constant 8 : index
    %c0_49 = arith.constant 0 : index
    %c0_50 = arith.constant 0 : index
    %55 = vector.load %arg4[%c8, %c0_49, %c0_50] : memref<9x128x128xbf16, #tpu.memory_space<vmem>>, vector<1x128x128xbf16>
    %56 = vector.shape_cast %55 : vector<1x128x128xbf16> to vector<128x128xbf16>
    %cst_51 = arith.constant dense<0.000000e+00> : vector<360x128xf32>
    %57 = tpu.matmul %54, %56, %cst_51 {dimension_numbers = #tpu.dot_dimension_numbers<[1], [0], [0], [1], [0, 0, 1, 1], [], []>} : vector<360x128xbf16>, vector<128x128xbf16>, vector<360x128xf32> -> vector<360x128xf32>
    %58 = arith.addf %53, %57 : vector<360x128xf32>
    %c0_52 = arith.constant 0 : index
    %c0_53 = arith.constant 0 : index
    %59 = vector.load %arg5[%c0_52, %c0_53] : memref<1x128xf32, #tpu.memory_space<vmem>>, vector<1x128xf32>
    %60 = vector.broadcast %59 : vector<1x128xf32> to vector<360x128xf32>
    %61 = arith.addf %58, %60 : vector<360x128xf32>
    %cst_54 = arith.constant 0.000000e+00 : f32
    %62 = vector.broadcast %cst_54 : f32 to vector<360x128xf32>
    %63 = arith.maximumf %61, %62 : vector<360x128xf32>
    %64 = arith.truncf %63 : vector<360x128xf32> to vector<360x128xbf16>
    %c0_55 = arith.constant 0 : index
    %c0_56 = arith.constant 0 : index
    %c0_57 = arith.constant 0 : index
    %65 = vector.load %arg6[%c0_55, %c0_56, %c0_57] : memref<1x360x128xbf16, #tpu.memory_space<vmem>>, vector<1x360x128xbf16>
    %66 = vector.shape_cast %65 : vector<1x360x128xbf16> to vector<360x128xbf16>
    %67 = vector.shape_cast %64 : vector<360x128xbf16> to vector<1x360x128xbf16>
    tpu.vector_store %arg6[%c0_55, %c0_56, %c0_57], %67 {strides = array<i32>} : memref<1x360x128xbf16, #tpu.memory_space<vmem>>, vector<1x360x128xbf16>,
    return
  }
  func.func @transform_0(%arg0: i32) -> (i32, i32, i32) {
    %c0_i32 = arith.constant 0 : i32
    %c0_i32_0 = arith.constant 0 : i32
    %c0_i32_1 = arith.constant 0 : i32
    return %arg0, %c0_i32, %c0_i32_0 : i32, i32, i32
  }
  func.func @transform_1(%arg0: i32) -> (i32, i32) {
    %c0_i32 = arith.constant 0 : i32
    %c0_i32_0 = arith.constant 0 : i32
    %c0_i32_1 = arith.constant 0 : i32
    return %c0_i32, %c0_i32_0 : i32, i32
  }
  func.func @transform_2(%arg0: i32) -> (i32, i32) {
    %c0_i32 = arith.constant 0 : i32
    %c0_i32_0 = arith.constant 0 : i32
    %c0_i32_1 = arith.constant 0 : i32
    return %c0_i32, %c0_i32_0 : i32, i32
  }
  func.func @transform_3(%arg0: i32) -> (i32, i32, i32) {
    %c0_i32 = arith.constant 0 : i32
    %c0_i32_0 = arith.constant 0 : i32
    %c0_i32_1 = arith.constant 0 : i32
    %c0_i32_2 = arith.constant 0 : i32
    return %c0_i32, %c0_i32_0, %c0_i32_1 : i32, i32, i32
  }
  func.func @transform_4(%arg0: i32) -> (i32, i32) {
    %c0_i32 = arith.constant 0 : i32
    %c0_i32_0 = arith.constant 0 : i32
    %c0_i32_1 = arith.constant 0 : i32
    return %c0_i32, %c0_i32_0 : i32, i32
  }
  func.func @transform_5(%arg0: i32) -> (i32, i32, i32) {
    %c0_i32 = arith.constant 0 : i32
    %c0_i32_0 = arith.constant 0 : i32
    %c0_i32_1 = arith.constant 0 : i32
    return %arg0, %c0_i32, %c0_i32_0 : i32, i32, i32
  }
}

module attributes {stable_mosaic.version = 11 : i64} {
  func.func @_linear_heads_kernel(%arg0: i32, %arg1: i32, %arg2: memref<2x3456xbf16, #tpu.memory_space<vmem>>, %arg3: memref<3456x512xbf16, #tpu.memory_space<vmem>>, %arg4: memref<1x512xf32, #tpu.memory_space<vmem>>, %arg5: memref<512x128xbf16, #tpu.memory_space<vmem>>, %arg6: memref<1x128xf32, #tpu.memory_space<vmem>>, %arg7: memref<2x128xf32, #tpu.memory_space<vmem>>, %arg8: memref<2x512xf32, #tpu.memory_space<vmem>>) attributes {dimension_semantics = [#tpu.dimension_semantics<parallel>, #tpu.dimension_semantics<arbitrary>], iteration_bounds = array<i64: 1, 6>, scalar_prefetch = 0 : i64, scratch_operands = 1 : i64, tpu.core_type = #tpu.core_type<tc>, window_params = [{transform_indices = @transform_0, window_bounds = array<i64: 2, 3456>}, {transform_indices = @transform_1, window_bounds = array<i64: 3456, 512>}, {pipeline_mode = #tpu.pipeline_mode<synchronous>, transform_indices = @transform_2, window_bounds = array<i64: 1, 512>}, {pipeline_mode = #tpu.pipeline_mode<synchronous>, transform_indices = @transform_3, window_bounds = array<i64: 512, 128>}, {pipeline_mode = #tpu.pipeline_mode<synchronous>, transform_indices = @transform_4, window_bounds = array<i64: 1, 128>}, {transform_indices = @transform_5, window_bounds = array<i64: 2, 128>}]} {
    %c0 = arith.constant 0 : index
    %c0_0 = arith.constant 0 : index
    %0 = vector.load %arg2[%c0, %c0_0] : memref<2x3456xbf16, #tpu.memory_space<vmem>>, vector<2x3456xbf16>
    %c0_1 = arith.constant 0 : index
    %c0_2 = arith.constant 0 : index
    %1 = vector.load %arg3[%c0_1, %c0_2] : memref<3456x512xbf16, #tpu.memory_space<vmem>>, vector<3456x512xbf16>
    %cst = arith.constant dense<0.000000e+00> : vector<2x512xf32>
    %2 = tpu.matmul %0, %1, %cst {dimension_numbers = #tpu.dot_dimension_numbers<[1], [0], [0], [1], [0, 0, 1, 1], [], []>} : vector<2x3456xbf16>, vector<3456x512xbf16>, vector<2x512xf32> -> vector<2x512xf32>
    %c0_i32 = arith.constant 0 : i32
    %3 = arith.cmpi eq, %arg1, %c0_i32 : i32
    %4 = arith.extui %3 : i1 to i32
    %c0_i32_3 = arith.constant 0 : i32
    %5 = arith.cmpi ne, %4, %c0_i32_3 : i32
    scf.if %5 {
      %c0_7 = arith.constant 0 : index
      %c0_8 = arith.constant 0 : index
      %12 = vector.load %arg4[%c0_7, %c0_8] : memref<1x512xf32, #tpu.memory_space<vmem>>, vector<1x512xf32>
      %13 = vector.broadcast %12 : vector<1x512xf32> to vector<2x512xf32>
      %14 = arith.addf %2, %13 : vector<2x512xf32>
      %c0_9 = arith.constant 0 : index
      %c0_10 = arith.constant 0 : index
      %15 = vector.load %arg8[%c0_9, %c0_10] : memref<2x512xf32, #tpu.memory_space<vmem>>, vector<2x512xf32>
      tpu.vector_store %arg8[%c0_9, %c0_10], %14 {strides = array<i32>} : memref<2x512xf32, #tpu.memory_space<vmem>>, vector<2x512xf32>,
    } else {
    }
    %c0_i32_4 = arith.constant 0 : i32
    %6 = arith.cmpi sgt, %arg1, %c0_i32_4 : i32
    %7 = arith.extui %6 : i1 to i32
    %c0_i32_5 = arith.constant 0 : i32
    %8 = arith.cmpi ne, %7, %c0_i32_5 : i32
    scf.if %8 {
      %c0_7 = arith.constant 0 : index
      %c0_8 = arith.constant 0 : index
      %12 = vector.load %arg8[%c0_7, %c0_8] : memref<2x512xf32, #tpu.memory_space<vmem>>, vector<2x512xf32>
      %13 = arith.addf %12, %2 : vector<2x512xf32>
      %c0_9 = arith.constant 0 : index
      %c0_10 = arith.constant 0 : index
      %14 = vector.load %arg8[%c0_9, %c0_10] : memref<2x512xf32, #tpu.memory_space<vmem>>, vector<2x512xf32>
      tpu.vector_store %arg8[%c0_9, %c0_10], %13 {strides = array<i32>} : memref<2x512xf32, #tpu.memory_space<vmem>>, vector<2x512xf32>,
    } else {
    }
    %c5_i32 = arith.constant 5 : i32
    %9 = arith.cmpi eq, %arg1, %c5_i32 : i32
    %10 = arith.extui %9 : i1 to i32
    %c0_i32_6 = arith.constant 0 : i32
    %11 = arith.cmpi ne, %10, %c0_i32_6 : i32
    scf.if %11 {
      %c0_7 = arith.constant 0 : index
      %c0_8 = arith.constant 0 : index
      %12 = vector.load %arg8[%c0_7, %c0_8] : memref<2x512xf32, #tpu.memory_space<vmem>>, vector<2x512xf32>
      %cst_9 = arith.constant 0.000000e+00 : f32
      %13 = vector.broadcast %cst_9 : f32 to vector<2x512xf32>
      %14 = arith.maximumf %12, %13 : vector<2x512xf32>
      %15 = arith.truncf %14 : vector<2x512xf32> to vector<2x512xbf16>
      %c0_10 = arith.constant 0 : index
      %c0_11 = arith.constant 0 : index
      %16 = vector.load %arg5[%c0_10, %c0_11] : memref<512x128xbf16, #tpu.memory_space<vmem>>, vector<512x128xbf16>
      %cst_12 = arith.constant dense<0.000000e+00> : vector<2x128xf32>
      %17 = tpu.matmul %15, %16, %cst_12 {dimension_numbers = #tpu.dot_dimension_numbers<[1], [0], [0], [1], [0, 0, 1, 1], [], []>} : vector<2x512xbf16>, vector<512x128xbf16>, vector<2x128xf32> -> vector<2x128xf32>
      %c0_13 = arith.constant 0 : index
      %c0_14 = arith.constant 0 : index
      %18 = vector.load %arg6[%c0_13, %c0_14] : memref<1x128xf32, #tpu.memory_space<vmem>>, vector<1x128xf32>
      %19 = vector.broadcast %18 : vector<1x128xf32> to vector<2x128xf32>
      %20 = arith.addf %17, %19 : vector<2x128xf32>
      %c0_15 = arith.constant 0 : index
      %c0_16 = arith.constant 0 : index
      %21 = vector.load %arg7[%c0_15, %c0_16] : memref<2x128xf32, #tpu.memory_space<vmem>>, vector<2x128xf32>
      tpu.vector_store %arg7[%c0_15, %c0_16], %20 {strides = array<i32>} : memref<2x128xf32, #tpu.memory_space<vmem>>, vector<2x128xf32>,
    } else {
    }
    return
  }
  func.func @transform_0(%arg0: i32, %arg1: i32) -> (i32, i32) {
    %c0_i32 = arith.constant 0 : i32
    return %arg0, %arg1 : i32, i32
  }
  func.func @transform_1(%arg0: i32, %arg1: i32) -> (i32, i32) {
    %c0_i32 = arith.constant 0 : i32
    %c0_i32_0 = arith.constant 0 : i32
    return %arg1, %c0_i32 : i32, i32
  }
  func.func @transform_2(%arg0: i32, %arg1: i32) -> (i32, i32) {
    %c0_i32 = arith.constant 0 : i32
    %c0_i32_0 = arith.constant 0 : i32
    %c0_i32_1 = arith.constant 0 : i32
    return %c0_i32, %c0_i32_0 : i32, i32
  }
  func.func @transform_3(%arg0: i32, %arg1: i32) -> (i32, i32) {
    %c0_i32 = arith.constant 0 : i32
    %c0_i32_0 = arith.constant 0 : i32
    %c0_i32_1 = arith.constant 0 : i32
    return %c0_i32, %c0_i32_0 : i32, i32
  }
  func.func @transform_4(%arg0: i32, %arg1: i32) -> (i32, i32) {
    %c0_i32 = arith.constant 0 : i32
    %c0_i32_0 = arith.constant 0 : i32
    %c0_i32_1 = arith.constant 0 : i32
    return %c0_i32, %c0_i32_0 : i32, i32
  }
  func.func @transform_5(%arg0: i32, %arg1: i32) -> (i32, i32) {
    %c0_i32 = arith.constant 0 : i32
    %c0_i32_0 = arith.constant 0 : i32
    return %arg0, %c0_i32 : i32, i32
  }
}

</mosaic_0001>

<llo_original>
// kernel: actor_critic_forward.2
$region0: #{actor_critic_forward.2}
  #allocation0 [shape = 'u32[]', space=smem, size = 0x4, offset = 0x4, fixed_abs, tag = 'smem constant byte address 0x4 - core index']
  #allocation1 [shape = 'u32[144,128]{1,0:T(1,128)}', space=vmem, size = 0x12000, scoped, tag = 'internal scratch']
  #allocation2 [shape = 'bf16[408,128]{1,0:T(8,128)(2,1)}', space=vmem, size = 0x19800, scoped, tag = 'scratch operand']
  %s0 = inlined_call_operand.vmem [shape: bf16[2,400,256], index: 0, kind: input, shape index: {}]
  %s1 = inlined_call_operand.vmem [shape: bf16[256,128], index: 1, kind: input, shape index: {}]
  %s2 = inlined_call_operand.vmem [shape: f32[1,128], index: 2, kind: input, shape index: {}]
  %s3 = inlined_call_operand.vmem [shape: bf16[9,128,128], index: 3, kind: input, shape index: {}]
  %s4 = inlined_call_operand.vmem [shape: f32[1,128], index: 4, kind: input, shape index: {}]
  %s5 = inlined_call_operand.vmem [shape: bf16[2,360,128], index: 5, kind: output, shape index: {}]
  %s6 = sld [smem:[#allocation0]]
  $region53: #{actor_critic_forward.2} parent=0
    _
  %s8 = ssub.s32 1, %s6
  %s9 = scalar_select 0, %s8, %s6
  loop: start=0, step=1, limit=4
  $region2: #{actor_critic_forward.2} parent=0 // loop_pre_header
    _
  $region3: #{actor_critic_forward.2} parent=0 // loop_header
    %s11 = sphi 0, %s15
    %p12 = scmp.ge.s32.totalorder %s11, 4
    %s21 = sphi 0, %s23
    %s24 = sphi 0, %s21
    %s25 = sphi 0, %s24
    %s41 = sphi 0, %s25
    %s45 = sphi 0, %s45
    %s47 = sphi 0, %s45
    %s48 = sphi 0, %s47
    %s62 = sphi 0, %s48
    %s66 = sphi 0, %s66
    %s68 = sphi 0, %s66
    %s69 = sphi 0, %s68
    %s83 = sphi 0, %s69
    %s87 = sphi 0, %s87
    %s89 = sphi 0, %s87
    %s90 = sphi 0, %s89
    %s104 = sphi 0, %s90
    %s108 = sphi 0, %s108
    %s110 = sphi 0, %s108
    %s111 = sphi 0, %s110
    %s125 = sphi 0, %s111
    %s131 = sphi 0, %s133
    %s134 = sphi 0, %s131
    %s135 = sphi 0, %s134
    %s151 = sphi 0, %s135
  $region4: #{actor_critic_forward.2} parent=0 // loop_header_branch
    %14 = sbr.rel (%p12) target = $region8
  $region5: #{actor_critic_forward.2} parent=0 // loop_body
    %s16 = ssub.s32 %s11, 1
    %s17 = ssub.s32 %s11, 2
    %s18 = sadd.s32 %s11, 1
    %s19 = ssub.s32 %s11, %s18
    %p20 = scmp.eq.s32.totalorder %s19, 0
    %s22 = sadd.s32 %s21, 1
    %s23 = scalar_select %p20, %s21, %s22
    %p26 = pneg %p20
    %p27 = scmp.eq.s32.totalorder %s11, 1
    %p28 = por %p26, %p27
    %p29 = scmp.ne.s32.totalorder %s21, %s24
    %p30 = scmp.eq.s32.totalorder %s11, 0
    %p31 = por %p29, %p30
    %p32 = scmp.ne.s32.totalorder %s21, %s24
    %p33 = scmp.eq.s32.totalorder %s16, 1
    %p34 = por %p32, %p33
    %p35 = scmp.ne.s32.totalorder %s24, %s25
    %p36 = scmp.eq.s32.totalorder %s16, 0
    %p37 = por %p35, %p36
    %p38 = scmp.ne.s32.totalorder %s24, %s25
    %p39 = scmp.eq.s32.totalorder %s17, 1
    %p40 = por %p38, %p39
    %p42 = scmp.ne.s32.totalorder %s25, %s41
    %p43 = scmp.eq.s32.totalorder %s17, 0
    %p44 = por %p42, %p43
    %s46 = sadd.s32 %s45, 1
    %p49 = scmp.eq.s32.totalorder %s11, 1
    %p50 = scmp.ne.s32.totalorder %s45, %s47
    %p51 = scmp.eq.s32.totalorder %s11, 0
    %p52 = por %p50, %p51
    %p53 = scmp.ne.s32.totalorder %s45, %s47
    %p54 = scmp.eq.s32.totalorder %s16, 1
    %p55 = por %p53, %p54
    %p56 = scmp.ne.s32.totalorder %s47, %s48
    %p57 = scmp.eq.s32.totalorder %s16, 0
    %p58 = por %p56, %p57
    %p59 = scmp.ne.s32.totalorder %s47, %s48
    %p60 = scmp.eq.s32.totalorder %s17, 1
    %p61 = por %p59, %p60
    %p63 = scmp.ne.s32.totalorder %s48, %s62
    %p64 = scmp.eq.s32.totalorder %s17, 0
    %p65 = por %p63, %p64
    %s67 = sadd.s32 %s66, 1
    %p70 = scmp.eq.s32.totalorder %s11, 1
    %p71 = scmp.ne.s32.totalorder %s66, %s68
    %p72 = scmp.eq.s32.totalorder %s11, 0
    %p73 = por %p71, %p72
    %p74 = scmp.ne.s32.totalorder %s66, %s68
    %p75 = scmp.eq.s32.totalorder %s16, 1
    %p76 = por %p74, %p75
    %p77 = scmp.ne.s32.totalorder %s68, %s69
    %p78 = scmp.eq.s32.totalorder %s16, 0
    %p79 = por %p77, %p78
    %p80 = scmp.ne.s32.totalorder %s68, %s69
    %p81 = scmp.eq.s32.totalorder %s17, 1
    %p82 = por %p80, %p81
    %p84 = scmp.ne.s32.totalorder %s69, %s83
    %p85 = scmp.eq.s32.totalorder %s17, 0
    %p86 = por %p84, %p85
    %s88 = sadd.s32 %s87, 1
    %p91 = scmp.eq.s32.totalorder %s11, 1
    %p92 = scmp.ne.s32.totalorder %s87, %s89
    %p93 = scmp.eq.s32.totalorder %s11, 0
    %p94 = por %p92, %p93
    %p95 = scmp.ne.s32.totalorder %s87, %s89
    %p96 = scmp.eq.s32.totalorder %s16, 1
    %p97 = por %p95, %p96
    %p98 = scmp.ne.s32.totalorder %s89, %s90
    %p99 = scmp.eq.s32.totalorder %s16, 0
    %p100 = por %p98, %p99
    %p101 = scmp.ne.s32.totalorder %s89, %s90
    %p102 = scmp.eq.s32.totalorder %s17, 1
    %p103 = por %p101, %p102
    %p105 = scmp.ne.s32.totalorder %s90, %s104
    %p106 = scmp.eq.s32.totalorder %s17, 0
    %p107 = por %p105, %p106
    %s109 = sadd.s32 %s108, 1
    %p112 = scmp.eq.s32.totalorder %s11, 1
    %p113 = scmp.ne.s32.totalorder %s108, %s110
    %p114 = scmp.eq.s32.totalorder %s11, 0
    %p115 = por %p113, %p114
    %p116 = scmp.ne.s32.totalorder %s108, %s110
    %p117 = scmp.eq.s32.totalorder %s16, 1
    %p118 = por %p116, %p117
    %p119 = scmp.ne.s32.totalorder %s110, %s111
    %p120 = scmp.eq.s32.totalorder %s16, 0
    %p121 = por %p119, %p120
    %p122 = scmp.ne.s32.totalorder %s110, %s111
    %p123 = scmp.eq.s32.totalorder %s17, 1
    %p124 = por %p122, %p123
    %p126 = scmp.ne.s32.totalorder %s111, %s125
    %p127 = scmp.eq.s32.totalorder %s17, 0
    %p128 = por %p126, %p127
    %s129 = ssub.s32 %s11, %s18
    %p130 = scmp.eq.s32.totalorder %s129, 0
    %s132 = sadd.s32 %s131, 1
    %s133 = scalar_select %p130, %s131, %s132
    %p136 = pneg %p130
    %p137 = scmp.eq.s32.totalorder %s11, 1
    %p138 = por %p136, %p137
    %p139 = scmp.ne.s32.totalorder %s131, %s134
    %p140 = scmp.eq.s32.totalorder %s11, 0
    %p141 = por %p139, %p140
    %p142 = scmp.ne.s32.totalorder %s131, %s134
    %p143 = scmp.eq.s32.totalorder %s16, 1
    %p144 = por %p142, %p143
    %p145 = scmp.ne.s32.totalorder %s134, %s135
    %p146 = scmp.eq.s32.totalorder %s16, 0
    %p147 = por %p145, %p146
    %p148 = scmp.ne.s32.totalorder %s134, %s135
    %p149 = scmp.eq.s32.totalorder %s17, 1
    %p150 = por %p148, %p149
    %p152 = scmp.ne.s32.totalorder %s135, %s151
    %p153 = scmp.eq.s32.totalorder %s17, 0
    %p154 = por %p152, %p153
    %p155 = scmp.le.s32.totalorder 1, %s11
    %p156 = scmp.lt.s32.totalorder %s11, 3
    %p157 = pnand %p155, %p156
    %p158 = pneg %p157
    // Predicated region
    $region9: #{actor_critic_forward.2} parent=5 // pred_check
      _
    $region10: #{actor_critic_forward.2} parent=5 // pred_check_branch
      %160 = sbr.rel (%p157) target = $region12
    $region11: #{actor_critic_forward.2} parent=5 // pred_region
      %s161 = ssub.s32 %s11, 1
      // Predicated region
      $region13: #{actor_critic_forward.2} parent=11 // pred_check
        %p162 = pneg %p58
      $region14: #{actor_critic_forward.2} parent=11 // pred_check_branch
        %164 = sbr.rel (%p162) target = $region16
      $region15: #{actor_critic_forward.2} parent=11 // pred_region
        _
      $region16: #{actor_critic_forward.2} parent=11 // pred_fallthru
        _
      // Predicated region
      $region17: #{actor_critic_forward.2} parent=11 // pred_check
        %p165 = pneg %p79
      $region18: #{actor_critic_forward.2} parent=11 // pred_check_branch
        %167 = sbr.rel (%p165) target = $region20
      $region19: #{actor_critic_forward.2} parent=11 // pred_region
        _
      $region20: #{actor_critic_forward.2} parent=11 // pred_fallthru
        _
      // Predicated region
      $region21: #{actor_critic_forward.2} parent=11 // pred_check
        %p168 = pneg %p100
      $region22: #{actor_critic_forward.2} parent=11 // pred_check_branch
        %170 = sbr.rel (%p168) target = $region24
      $region23: #{actor_critic_forward.2} parent=11 // pred_region
        _
      $region24: #{actor_critic_forward.2} parent=11 // pred_fallthru
        _
      // Predicated region
      $region25: #{actor_critic_forward.2} parent=11 // pred_check
        %p171 = pneg %p121
      $region26: #{actor_critic_forward.2} parent=11 // pred_check_branch
        %173 = sbr.rel (%p171) target = $region28
      $region27: #{actor_critic_forward.2} parent=11 // pred_region
        _
      $region28: #{actor_critic_forward.2} parent=11 // pred_fallthru
        _
    $region12: #{actor_critic_forward.2} parent=5 // pred_fallthru
      _
    %p174 = scmp.lt.s32.totalorder %s11, 2
    // Predicated region
    $region29: #{actor_critic_forward.2} parent=5 // pred_check
      %p175 = pneg %p174
    $region30: #{actor_critic_forward.2} parent=5 // pred_check_branch
      %177 = sbr.rel (%p175) target = $region32
    $region31: #{actor_critic_forward.2} parent=5 // pred_region
      // Predicated region
      $region33: #{actor_critic_forward.2} parent=31 // pred_check
        %p178 = pneg %p31
      $region34: #{actor_critic_forward.2} parent=31 // pred_check_branch
        %180 = sbr.rel (%p178) target = $region36
      $region35: #{actor_critic_forward.2} parent=31 // pred_region
        %p181 = scmp.lt.s32.totalorder %s11, 1
        %s182 = scalar_select %p181, %s11, 1
        %s183 = smul.addr %s182, 100
        %s184 = smul.addr %s183, 4
        %s185 = scalar_lea.vmem %s0, %s184
      $region36: #{actor_critic_forward.2} parent=31 // pred_fallthru
        _
    $region32: #{actor_critic_forward.2} parent=5 // pred_fallthru
      _
    %p186 = scmp.le.s32.totalorder 1, %s11
    %p187 = scmp.lt.s32.totalorder %s11, 3
    %p188 = pnand %p186, %p187
    %p189 = pneg %p188
    // Predicated region
    $region37: #{actor_critic_forward.2} parent=5 // pred_check
      _
    $region38: #{actor_critic_forward.2} parent=5 // pred_check_branch
      %191 = sbr.rel (%p188) target = $region40
    $region39: #{actor_critic_forward.2} parent=5 // pred_region
      %s192 = ssub.s32 %s11, 1
      %p193 = scmp.lt.s32.totalorder %s16, 1
      %s194 = scalar_select %p193, %s16, 1
      %s195 = smul.addr %s194, 100
      %s196 = smul.addr %s195, 4
      %s197 = scalar_lea.vmem %s0, %s196
      %p198 = pneg %p37
      %p199 = pneg %p34
      %p200 = pneg %p58
      %p201 = pneg %p55
      %p202 = pneg %p79
      %p203 = pneg %p76
      %p204 = pneg %p100
      %p205 = pneg %p97
      %p206 = pneg %p121
      %p207 = pneg %p118
      %p208 = pneg %p147
      %p209 = pneg %p144
      %p210 = scmp.lt.s32.totalorder %s16, 1
      %s211 = scalar_select %p210, %s16, 1
      %s212 = smul.addr %s211, 45
      %s213 = smul.addr %s212, 4
      %s214 = scalar_lea.vmem %s5, %s213
      %p215 = scmp.lt.s32.totalorder %s16, 1
      %s216 = scalar_select %p215, %s16, 1
      %s217 = smul.addr %s216, 100
      %s218 = smul.addr %s217, 4
      %s219 = scalar_lea.vmem %s0, %s218
      %p220 = scmp.lt.s32.totalorder %s16, 1
      %s221 = scalar_select %p220, %s16, 1
      %s222 = smul.addr %s221, 45
      %s223 = smul.addr %s222, 4
      %s224 = scalar_lea.vmem %s5, %s223
      %v226 = vld [vmem:[%s219] sm:$0xff]
      %v227 = vld [vmem:[%s219 + $0x8] sm:$0xff]
      %v228 = vld [vmem:[%s219 + $0x10] sm:$0xff]
      %v229 = vld [vmem:[%s219 + $0x18] sm:$0xff]
      %v230 = vld [vmem:[%s219 + $0x20] sm:$0xff]
      %v231 = vld [vmem:[%s219 + $0x28] sm:$0xff]
      %v232 = vld [vmem:[%s219 + $0x30] sm:$0xff]
      %v233 = vld [vmem:[%s219 + $0x38] sm:$0xff]
      %v234 = vld [vmem:[%s219 + $0x40] sm:$0xff]
      %v235 = vld [vmem:[%s219 + $0x48] sm:$0xff]
      %v236 = vld [vmem:[%s219 + $0x50] sm:$0xff]
      %v237 = vld [vmem:[%s219 + $0x58] sm:$0xff]
      %v238 = vld [vmem:[%s219 + $0x60] sm:$0xff]
      %v239 = vld [vmem:[%s219 + $0x68] sm:$0xff]
      %v240 = vld [vmem:[%s219 + $0x70] sm:$0xff]
      %v241 = vld [vmem:[%s219 + $0x78] sm:$0xff]
      %v242 = vld [vmem:[%s219 + $0x80] sm:$0xff]
      %v243 = vld [vmem:[%s219 + $0x88] sm:$0xff]
      %v244 = vld [vmem:[%s219 + $0x90] sm:$0xff]
      %v245 = vld [vmem:[%s219 + $0x98] sm:$0xff]
      %v246 = vld [vmem:[%s219 + $0xa0] sm:$0xff]
      %v247 = vld [vmem:[%s219 + $0xa8] sm:$0xff]
      %v248 = vld [vmem:[%s219 + $0xb0] sm:$0xff]
      %v249 = vld [vmem:[%s219 + $0xb8] sm:$0xff]
      %v250 = vld [vmem:[%s219 + $0xc0] sm:$0xff]
      %v251 = vld [vmem:[%s219 + $0xc8] sm:$0xff]
      %v252 = vld [vmem:[%s219 + $0xd0] sm:$0xff]
      %v253 = vld [vmem:[%s219 + $0xd8] sm:$0xff]
      %v254 = vld [vmem:[%s219 + $0xe0] sm:$0xff]
      %v255 = vld [vmem:[%s219 + $0xe8] sm:$0xff]
      %v256 = vld [vmem:[%s219 + $0xf0] sm:$0xff]
      %v257 = vld [vmem:[%s219 + $0xf8] sm:$0xff]
      %v258 = vld [vmem:[%s219 + $0x100] sm:$0xff]
      %v259 = vld [vmem:[%s219 + $0x108] sm:$0xff]
      %v260 = vld [vmem:[%s219 + $0x110] sm:$0xff]
      %v261 = vld [vmem:[%s219 + $0x118] sm:$0xff]
      %v262 = vld [vmem:[%s219 + $0x120] sm:$0xff]
      %v263 = vld [vmem:[%s219 + $0x128] sm:$0xff]
      %v264 = vld [vmem:[%s219 + $0x130] sm:$0xff]
      %v265 = vld [vmem:[%s219 + $0x138] sm:$0xff]
      %v266 = vld [vmem:[%s219 + $0x140] sm:$0xff]
      %v267 = vld [vmem:[%s219 + $0x148] sm:$0xff]
      %v268 = vld [vmem:[%s219 + $0x150] sm:$0xff]
      %v269 = vld [vmem:[%s219 + $0x158] sm:$0xff]
      %v270 = vld [vmem:[%s219 + $0x160] sm:$0xff]
      %v271 = vld [vmem:[%s219 + $0x168] sm:$0xff]
      %v272 = vld [vmem:[%s219 + $0x170] sm:$0xff]
      %v273 = vld [vmem:[%s219 + $0x178] sm:$0xff]
      %v274 = vld [vmem:[%s219 + $0x180] sm:$0xff]
      %v275 = vld [vmem:[%s219 + $0x188] sm:$0xff]
      %v276 = vld [vmem:[%s1] sm:$0xf]
      %v277 = vld [vmem:[%s1 + $0x4] sm:$0xf]
      %v278 = vld [vmem:[%s1 + $0x8] sm:$0xf]
      %v279 = vld [vmem:[%s1 + $0xc] sm:$0xf]
      %v280 = vld [vmem:[%s1 + $0x10] sm:$0xf]
      %v281 = vld [vmem:[%s1 + $0x14] sm:$0xf]
      %v282 = vld [vmem:[%s1 + $0x18] sm:$0xf]
      %v283 = vld [vmem:[%s1 + $0x1c] sm:$0xf]
      %v284 = vld [vmem:[%s1 + $0x20] sm:$0xf]
      %v285 = vld [vmem:[%s1 + $0x24] sm:$0xf]
      %v286 = vld [vmem:[%s1 + $0x28] sm:$0xf]
      %v287 = vld [vmem:[%s1 + $0x2c] sm:$0xf]
      %v288 = vld [vmem:[%s1 + $0x30] sm:$0xf]
      %v289 = vld [vmem:[%s1 + $0x34] sm:$0xf]
      %v290 = vld [vmem:[%s1 + $0x38] sm:$0xf]
      %v291 = vld [vmem:[%s1 + $0x3c] sm:$0xf]
      %v292 = vld [vmem:[%s1 + $0x40] sm:$0xf]
      %v293 = vld [vmem:[%s1 + $0x44] sm:$0xf]
      %v294 = vld [vmem:[%s1 + $0x48] sm:$0xf]
      %v295 = vld [vmem:[%s1 + $0x4c] sm:$0xf]
      %v296 = vld [vmem:[%s1 + $0x50] sm:$0xf]
      %v297 = vld [vmem:[%s1 + $0x54] sm:$0xf]
      %v298 = vld [vmem:[%s1 + $0x58] sm:$0xf]
      %v299 = vld [vmem:[%s1 + $0x5c] sm:$0xf]
      %v300 = vld [vmem:[%s1 + $0x60] sm:$0xf]
      %v301 = vld [vmem:[%s1 + $0x64] sm:$0xf]
      %v302 = vld [vmem:[%s1 + $0x68] sm:$0xf]
      %v303 = vld [vmem:[%s1 + $0x6c] sm:$0xf]
      %v304 = vld [vmem:[%s1 + $0x70] sm:$0xf]
      %v305 = vld [vmem:[%s1 + $0x74] sm:$0xf]
      %v306 = vld [vmem:[%s1 + $0x78] sm:$0xf]
      %v307 = vld [vmem:[%s1 + $0x7c] sm:$0xf]
      %v308 = vld [vmem:[%s2] sm:$0x1]
      %v310 = vlaneseq
      %v311 = vshrl.u32 %v310, 7
      %v312 = vsub.s32 0, %v311
      %v313 = vrot.slane %v308, %v312
      %v365 = vunpack.c.l.b16 %v226
      %v366 = vunpack.c.h.b16 %v226
      %v367 = vunpack.c.l.b16 %v227
      %v368 = vunpack.c.h.b16 %v227
      %v369 = vunpack.c.l.b16 %v228
      %v370 = vunpack.c.h.b16 %v228
      %v371 = vunpack.c.l.b16 %v229
      %v372 = vunpack.c.h.b16 %v229
      %v373 = vunpack.c.l.b16 %v230
      %v374 = vunpack.c.h.b16 %v230
      %v375 = vunpack.c.l.b16 %v231
      %v376 = vunpack.c.h.b16 %v231
      %v377 = vunpack.c.l.b16 %v232
      %v378 = vunpack.c.h.b16 %v232
      %v379 = vunpack.c.l.b16 %v233
      %v380 = vunpack.c.h.b16 %v233
      %v381 = vunpack.c.l.b16 %v234
      %v382 = vunpack.c.h.b16 %v234
      %v383 = vunpack.c.l.b16 %v235
      %v384 = vunpack.c.h.b16 %v235
      %v385 = vunpack.c.l.b16 %v236
      %v386 = vunpack.c.h.b16 %v236
      %v387 = vunpack.c.l.b16 %v237
      %v388 = vunpack.c.h.b16 %v237
      %v389 = vunpack.c.l.b16 %v238
      %v390 = vunpack.c.h.b16 %v238
      %v391 = vunpack.c.l.b16 %v239
      %v392 = vunpack.c.h.b16 %v239
      %v393 = vunpack.c.l.b16 %v240
      %v394 = vunpack.c.h.b16 %v240
      %v395 = vunpack.c.l.b16 %v241
      %v396 = vunpack.c.h.b16 %v241
      %v397 = vunpack.c.l.b16 %v242
      %v398 = vunpack.c.h.b16 %v242
      %v399 = vunpack.c.l.b16 %v243
      %v400 = vunpack.c.h.b16 %v243
      %v401 = vunpack.c.l.b16 %v244
      %v402 = vunpack.c.h.b16 %v244
      %v403 = vunpack.c.l.b16 %v245
      %v404 = vunpack.c.h.b16 %v245
      %v405 = vunpack.c.l.b16 %v246
      %v406 = vunpack.c.h.b16 %v246
      %v407 = vunpack.c.l.b16 %v247
      %v408 = vunpack.c.h.b16 %v247
      %v409 = vunpack.c.l.b16 %v248
      %v410 = vunpack.c.h.b16 %v248
      %v411 = vunpack.c.l.b16 %v249
      %v412 = vunpack.c.h.b16 %v249
      %v413 = vunpack.c.l.b16 %v250
      %v414 = vunpack.c.h.b16 %v250
      %v415 = vunpack.c.l.b16 %v251
      %v416 = vunpack.c.h.b16 %v251
      %v417 = vunpack.c.l.b16 %v252
      %v418 = vunpack.c.h.b16 %v252
      %v419 = vunpack.c.l.b16 %v253
      %v420 = vunpack.c.h.b16 %v253
      %v421 = vunpack.c.l.b16 %v254
      %v422 = vunpack.c.h.b16 %v254
      %v423 = vunpack.c.l.b16 %v255
      %v424 = vunpack.c.h.b16 %v255
      %v425 = vunpack.c.l.b16 %v256
      %v426 = vunpack.c.h.b16 %v256
      %v427 = vunpack.c.l.b16 %v257
      %v428 = vunpack.c.h.b16 %v257
      %v429 = vunpack.c.l.b16 %v258
      %v430 = vunpack.c.h.b16 %v258
      %v431 = vunpack.c.l.b16 %v259
      %v432 = vunpack.c.h.b16 %v259
      %v433 = vunpack.c.l.b16 %v260
      %v434 = vunpack.c.h.b16 %v260
      %v435 = vunpack.c.l.b16 %v261
      %v436 = vunpack.c.h.b16 %v261
      %v437 = vunpack.c.l.b16 %v262
      %v438 = vunpack.c.h.b16 %v262
      %v439 = vunpack.c.l.b16 %v263
      %v440 = vunpack.c.h.b16 %v263
      %v441 = vunpack.c.l.b16 %v264
      %v442 = vunpack.c.h.b16 %v264
      %v443 = vunpack.c.l.b16 %v265
      %v444 = vunpack.c.h.b16 %v265
      %v445 = vunpack.c.l.b16 %v266
      %v446 = vunpack.c.h.b16 %v266
      %v447 = vunpack.c.l.b16 %v267
      %v448 = vunpack.c.h.b16 %v267
      %v449 = vunpack.c.l.b16 %v268
      %v450 = vunpack.c.h.b16 %v268
      %v451 = vunpack.c.l.b16 %v269
      %v452 = vunpack.c.h.b16 %v269
      %v453 = vunpack.c.l.b16 %v270
      %v454 = vunpack.c.h.b16 %v270
      %v455 = vunpack.c.l.b16 %v271
      %v456 = vunpack.c.h.b16 %v271
      %v457 = vunpack.c.l.b16 %v272
      %v458 = vunpack.c.h.b16 %v272
      %v459 = vunpack.c.l.b16 %v273
      %v460 = vunpack.c.h.b16 %v273
      %v461 = vunpack.c.l.b16 %v274
      %v462 = vunpack.c.h.b16 %v274
      %v463 = vunpack.c.l.b16 %v275
      %v464 = vunpack.c.h.b16 %v275
      %v465 = vpack.c.b16 %v367, %v365
      %v466 = vpack.c.b16 %v368, %v366
      %v467 = vpack.c.b16 %v371, %v369
      %v468 = vpack.c.b16 %v372, %v370
      %v469 = vpack.c.b16 %v375, %v373
      %v470 = vpack.c.b16 %v376, %v374
      %v471 = vpack.c.b16 %v379, %v377
      %v472 = vpack.c.b16 %v380, %v378
      %v473 = vpack.c.b16 %v383, %v381
      %v474 = vpack.c.b16 %v384, %v382
      %v475 = vpack.c.b16 %v387, %v385
      %v476 = vpack.c.b16 %v388, %v386
      %v477 = vpack.c.b16 %v391, %v389
      %v478 = vpack.c.b16 %v392, %v390
      %v479 = vpack.c.b16 %v395, %v393
      %v480 = vpack.c.b16 %v396, %v394
      %v481 = vpack.c.b16 %v399, %v397
      %v482 = vpack.c.b16 %v400, %v398
      %v483 = vpack.c.b16 %v403, %v401
      %v484 = vpack.c.b16 %v404, %v402
      %v485 = vpack.c.b16 %v407, %v405
      %v486 = vpack.c.b16 %v408, %v406
      %v487 = vpack.c.b16 %v411, %v409
      %v488 = vpack.c.b16 %v412, %v410
      %v489 = vpack.c.b16 %v415, %v413
      %v490 = vpack.c.b16 %v416, %v414
      %v491 = vpack.c.b16 %v419, %v417
      %v492 = vpack.c.b16 %v420, %v418
      %v493 = vpack.c.b16 %v423, %v421
      %v494 = vpack.c.b16 %v424, %v422
      %v495 = vpack.c.b16 %v427, %v425
      %v496 = vpack.c.b16 %v428, %v426
      %v497 = vpack.c.b16 %v431, %v429
      %v498 = vpack.c.b16 %v432, %v430
      %v499 = vpack.c.b16 %v435, %v433
      %v500 = vpack.c.b16 %v436, %v434
      %v501 = vpack.c.b16 %v439, %v437
      %v502 = vpack.c.b16 %v440, %v438
      %v503 = vpack.c.b16 %v443, %v441
      %v504 = vpack.c.b16 %v444, %v442
      %v505 = vpack.c.b16 %v447, %v445
      %v506 = vpack.c.b16 %v448, %v446
      %v507 = vpack.c.b16 %v451, %v449
      %v508 = vpack.c.b16 %v452, %v450
      %v509 = vpack.c.b16 %v455, %v453
      %v510 = vpack.c.b16 %v456, %v454
      %v511 = vpack.c.b16 %v459, %v457
      %v512 = vpack.c.b16 %v460, %v458
      %v513 = vpack.c.b16 %v463, %v461
      %v514 = vpack.c.b16 %v464, %v462
      %v597 = vunpack.c.l.b16 %v276
      %v598 = vunpack.c.l.b16 %v277
      %v599 = vunpack.c.l.b16 %v278
      %v600 = vunpack.c.l.b16 %v279
      %v601 = vunpack.c.l.b16 %v280
      %v602 = vunpack.c.l.b16 %v281
      %v603 = vunpack.c.l.b16 %v282
      %v604 = vunpack.c.l.b16 %v283
      %v605 = vunpack.c.l.b16 %v284
      %v606 = vunpack.c.l.b16 %v285
      %v607 = vunpack.c.l.b16 %v286
      %v608 = vunpack.c.l.b16 %v287
      %v609 = vunpack.c.l.b16 %v288
      %v610 = vunpack.c.l.b16 %v289
      %v611 = vunpack.c.l.b16 %v290
      %v612 = vunpack.c.l.b16 %v291
      %v613 = vunpack.c.l.b16 %v292
      %v614 = vunpack.c.l.b16 %v293
      %v615 = vunpack.c.l.b16 %v294
      %v616 = vunpack.c.l.b16 %v295
      %v617 = vunpack.c.l.b16 %v296
      %v618 = vunpack.c.l.b16 %v297
      %v619 = vunpack.c.l.b16 %v298
      %v620 = vunpack.c.l.b16 %v299
      %v621 = vunpack.c.l.b16 %v300
      %v622 = vunpack.c.l.b16 %v301
      %v623 = vunpack.c.l.b16 %v302
      %v624 = vunpack.c.l.b16 %v303
      %v625 = vunpack.c.l.b16 %v304
      %v626 = vunpack.c.l.b16 %v305
      %v627 = vunpack.c.l.b16 %v306
      %v628 = vunpack.c.l.b16 %v307
      %v629 = vpack.c.b16 %v598, %v597
      %v630 = vpack.c.b16 %v600, %v599
      %v631 = vpack.c.b16 %v602, %v601
      %v632 = vpack.c.b16 %v604, %v603
      %v633 = vpack.c.b16 %v606, %v605
      %v634 = vpack.c.b16 %v608, %v607
      %v635 = vpack.c.b16 %v610, %v609
      %v636 = vpack.c.b16 %v612, %v611
      %v637 = vpack.c.b16 %v614, %v613
      %v638 = vpack.c.b16 %v616, %v615
      %v639 = vpack.c.b16 %v618, %v617
      %v640 = vpack.c.b16 %v620, %v619
      %v641 = vpack.c.b16 %v622, %v621
      %v642 = vpack.c.b16 %v624, %v623
      %v643 = vpack.c.b16 %v626, %v625
      %v644 = vpack.c.b16 %v628, %v627
      %661 = vmatprep.subr.bf16.mxu0 0
      %662 = vmatpush1.bf16.msra.mxu0 %v636
      %663 = vmatprep.subr.bf16.mxu0 0
      %664 = vmatpush1.bf16.msra.mxu0 %v635
      %665 = vmatprep.subr.bf16.mxu0 0
      %666 = vmatpush1.bf16.msra.mxu0 %v634
      %667 = vmatprep.subr.bf16.mxu0 0
      %668 = vmatpush1.bf16.msra.mxu0 %v633
      %669 = vmatprep.subr.bf16.mxu0 0
      %670 = vmatpush1.bf16.msra.mxu0 %v632
      %671 = vmatprep.subr.bf16.mxu0 0
      %672 = vmatpush1.bf16.msra.mxu0 %v631
      %673 = vmatprep.subr.bf16.mxu0 0
      %674 = vmatpush1.bf16.msra.mxu0 %v630
      %675 = vmatprep.subr.bf16.mxu0 0
      %676 = vmatpush1.bf16.msra.mxu0 %v629
      %677 = vmatprep.subr.bf16.mxu0 0
      %678 = vmatpush2.bf16.msra.mxu0 %v644
      %679 = vmatprep.subr.bf16.mxu0 0
      %680 = vmatpush2.bf16.msra.mxu0 %v643
      %681 = vmatprep.subr.bf16.mxu0 0
      %682 = vmatpush2.bf16.msra.mxu0 %v642
      %683 = vmatprep.subr.bf16.mxu0 0
      %684 = vmatpush2.bf16.msra.mxu0 %v641
      %685 = vmatprep.subr.bf16.mxu0 0
      %686 = vmatpush2.bf16.msra.mxu0 %v640
      %687 = vmatprep.subr.bf16.mxu0 0
      %688 = vmatpush2.bf16.msra.mxu0 %v639
      %689 = vmatprep.subr.bf16.mxu0 0
      %690 = vmatpush2.bf16.msra.mxu0 %v638
      %691 = vmatprep.subr.bf16.mxu0 0
      %692 = vmatpush2.bf16.msra.mxu0 %v637
      %693 = vmatprep.mubr.bf16.mxu0 %v466
      %694 = vmatmul.mubr.bf16.gmra.mxu0 %v465
      %v695 = vpop.f32.mrf.mxu0
      %v696 = vadd.f32 %v313, %v695
      %v697 = vpop.f32.mrf.mxu0
      %v698 = vpop.f32.mrf.mxu0
      %v699 = vadd.f32 %v313, %v698
      %v700 = vpop.f32.mrf.mxu0
      %701 = vmatprep.mubr.bf16.mxu0 %v468
      %702 = vmatmul.mubr.bf16.gmra.mxu0 %v467
      %v703 = vpop.f32.mrf.mxu0
      %v704 = vadd.f32 %v313, %v703
      %v705 = vpop.f32.mrf.mxu0
      %v706 = vpop.f32.mrf.mxu0
      %v707 = vadd.f32 %v313, %v706
      %v708 = vpop.f32.mrf.mxu0
      %709 = vmatprep.mubr.bf16.mxu0 %v470
      %710 = vmatmul.mubr.bf16.gmra.mxu0 %v469
      %v711 = vpop.f32.mrf.mxu0
      %v712 = vadd.f32 %v313, %v711
      %v713 = vpop.f32.mrf.mxu0
      %v714 = vpop.f32.mrf.mxu0
      %v715 = vadd.f32 %v313, %v714
      %v716 = vpop.f32.mrf.mxu0
      %717 = vmatprep.mubr.bf16.mxu0 %v472
      %718 = vmatmul.mubr.bf16.gmra.mxu0 %v471
      %v719 = vpop.f32.mrf.mxu0
      %v720 = vadd.f32 %v313, %v719
      %v721 = vpop.f32.mrf.mxu0
      %v722 = vpop.f32.mrf.mxu0
      %v723 = vadd.f32 %v313, %v722
      %v724 = vpop.f32.mrf.mxu0
      %725 = vmatprep.mubr.bf16.mxu0 %v474
      %726 = vmatmul.mubr.bf16.gmra.mxu0 %v473
      %v727 = vpop.f32.mrf.mxu0
      %v728 = vadd.f32 %v313, %v727
      %v729 = vpop.f32.mrf.mxu0
      %v730 = vpop.f32.mrf.mxu0
      %v731 = vadd.f32 %v313, %v730
      %v732 = vpop.f32.mrf.mxu0
      %733 = vmatprep.mubr.bf16.mxu0 %v476
      %734 = vmatmul.mubr.bf16.gmra.mxu0 %v475
      %v735 = vpop.f32.mrf.mxu0
      %v736 = vadd.f32 %v313, %v735
      %v737 = vpop.f32.mrf.mxu0
      %v738 = vpop.f32.mrf.mxu0
      %v739 = vadd.f32 %v313, %v738
      %v740 = vpop.f32.mrf.mxu0
      %741 = vmatprep.mubr.bf16.mxu0 %v478
      %742 = vmatmul.mubr.bf16.gmra.mxu0 %v477
      %v743 = vpop.f32.mrf.mxu0
      %v744 = vadd.f32 %v313, %v743
      %v745 = vpop.f32.mrf.mxu0
      %v746 = vpop.f32.mrf.mxu0
      %v747 = vadd.f32 %v313, %v746
      %v748 = vpop.f32.mrf.mxu0
      %749 = vmatprep.mubr.bf16.mxu0 %v480
      %750 = vmatmul.mubr.bf16.gmra.mxu0 %v479
      %v751 = vpop.f32.mrf.mxu0
      %v752 = vadd.f32 %v313, %v751
      %v753 = vpop.f32.mrf.mxu0
      %v754 = vpop.f32.mrf.mxu0
      %v755 = vadd.f32 %v313, %v754
      %v756 = vpop.f32.mrf.mxu0
      %757 = vmatprep.mubr.bf16.mxu0 %v482
      %758 = vmatmul.mubr.bf16.gmra.mxu0 %v481
      %v759 = vpop.f32.mrf.mxu0
      %v760 = vadd.f32 %v313, %v759
      %v761 = vpop.f32.mrf.mxu0
      %v762 = vpop.f32.mrf.mxu0
      %v763 = vadd.f32 %v313, %v762
      %v764 = vpop.f32.mrf.mxu0
      %765 = vmatprep.mubr.bf16.mxu0 %v484
      %766 = vmatmul.mubr.bf16.gmra.mxu0 %v483
      %v767 = vpop.f32.mrf.mxu0
      %v768 = vadd.f32 %v313, %v767
      %v769 = vpop.f32.mrf.mxu0
      %v770 = vpop.f32.mrf.mxu0
      %v771 = vadd.f32 %v313, %v770
      %v772 = vpop.f32.mrf.mxu0
      %773 = vmatprep.mubr.bf16.mxu0 %v486
      %774 = vmatmul.mubr.bf16.gmra.mxu0 %v485
      %v775 = vpop.f32.mrf.mxu0
      %v776 = vadd.f32 %v313, %v775
      %v777 = vpop.f32.mrf.mxu0
      %v778 = vpop.f32.mrf.mxu0
      %v779 = vadd.f32 %v313, %v778
      %v780 = vpop.f32.mrf.mxu0
      %781 = vmatprep.mubr.bf16.mxu0 %v488
      %782 = vmatmul.mubr.bf16.gmra.mxu0 %v487
      %v783 = vpop.f32.mrf.mxu0
      %v784 = vadd.f32 %v313, %v783
      %v785 = vpop.f32.mrf.mxu0
      %v786 = vpop.f32.mrf.mxu0
      %v787 = vadd.f32 %v313, %v786
      %v788 = vpop.f32.mrf.mxu0
      %789 = vmatprep.mubr.bf16.mxu0 %v490
      %790 = vmatmul.mubr.bf16.gmra.mxu0 %v489
      %v791 = vpop.f32.mrf.mxu0
      %v792 = vadd.f32 %v313, %v791
      %v793 = vpop.f32.mrf.mxu0
      %v794 = vpop.f32.mrf.mxu0
      %v795 = vadd.f32 %v313, %v794
      %v796 = vpop.f32.mrf.mxu0
      %797 = vmatprep.mubr.bf16.mxu0 %v492
      %798 = vmatmul.mubr.bf16.gmra.mxu0 %v491
      %v799 = vpop.f32.mrf.mxu0
      %v800 = vadd.f32 %v313, %v799
      %v801 = vpop.f32.mrf.mxu0
      %v802 = vpop.f32.mrf.mxu0
      %v803 = vadd.f32 %v313, %v802
      %v804 = vpop.f32.mrf.mxu0
      %805 = vmatprep.mubr.bf16.mxu0 %v494
      %806 = vmatmul.mubr.bf16.gmra.mxu0 %v493
      %v807 = vpop.f32.mrf.mxu0
      %v808 = vadd.f32 %v313, %v807
      %v809 = vpop.f32.mrf.mxu0
      %v810 = vpop.f32.mrf.mxu0
      %v811 = vadd.f32 %v313, %v810
      %v812 = vpop.f32.mrf.mxu0
      %813 = vmatprep.mubr.bf16.mxu0 %v496
      %814 = vmatmul.mubr.bf16.gmra.mxu0 %v495
      %v815 = vpop.f32.mrf.mxu0
      %v816 = vadd.f32 %v313, %v815
      %v817 = vpop.f32.mrf.mxu0
      %v818 = vpop.f32.mrf.mxu0
      %v819 = vadd.f32 %v313, %v818
      %v820 = vpop.f32.mrf.mxu0
      %821 = vmatprep.mubr.bf16.mxu0 %v498
      %822 = vmatmul.mubr.bf16.gmra.mxu0 %v497
      %v823 = vpop.f32.mrf.mxu0
      %v824 = vadd.f32 %v313, %v823
      %v825 = vpop.f32.mrf.mxu0
      %v826 = vpop.f32.mrf.mxu0
      %v827 = vadd.f32 %v313, %v826
      %v828 = vpop.f32.mrf.mxu0
      %829 = vmatprep.mubr.bf16.mxu0 %v500
      %830 = vmatmul.mubr.bf16.gmra.mxu0 %v499
      %v831 = vpop.f32.mrf.mxu0
      %v832 = vadd.f32 %v313, %v831
      %v833 = vpop.f32.mrf.mxu0
      %v834 = vpop.f32.mrf.mxu0
      %v835 = vadd.f32 %v313, %v834
      %v836 = vpop.f32.mrf.mxu0
      %837 = vmatprep.mubr.bf16.mxu0 %v502
      %838 = vmatmul.mubr.bf16.gmra.mxu0 %v501
      %v839 = vpop.f32.mrf.mxu0
      %v840 = vadd.f32 %v313, %v839
      %v841 = vpop.f32.mrf.mxu0
      %v842 = vpop.f32.mrf.mxu0
      %v843 = vadd.f32 %v313, %v842
      %v844 = vpop.f32.mrf.mxu0
      %845 = vmatprep.mubr.bf16.mxu0 %v504
      %846 = vmatmul.mubr.bf16.gmra.mxu0 %v503
      %v847 = vpop.f32.mrf.mxu0
      %v848 = vadd.f32 %v313, %v847
      %v849 = vpop.f32.mrf.mxu0
      %v850 = vpop.f32.mrf.mxu0
      %v851 = vadd.f32 %v313, %v850
      %v852 = vpop.f32.mrf.mxu0
      %853 = vmatprep.mubr.bf16.mxu0 %v506
      %854 = vmatmul.mubr.bf16.gmra.mxu0 %v505
      %v855 = vpop.f32.mrf.mxu0
      %v856 = vadd.f32 %v313, %v855
      %v857 = vpop.f32.mrf.mxu0
      %v858 = vpop.f32.mrf.mxu0
      %v859 = vadd.f32 %v313, %v858
      %v860 = vpop.f32.mrf.mxu0
      %861 = vmatprep.mubr.bf16.mxu0 %v508
      %862 = vmatmul.mubr.bf16.gmra.mxu0 %v507
      %v863 = vpop.f32.mrf.mxu0
      %v864 = vadd.f32 %v313, %v863
      %v865 = vpop.f32.mrf.mxu0
      %v866 = vpop.f32.mrf.mxu0
      %v867 = vadd.f32 %v313, %v866
      %v868 = vpop.f32.mrf.mxu0
      %869 = vmatprep.mubr.bf16.mxu0 %v510
      %870 = vmatmul.mubr.bf16.gmra.mxu0 %v509
      %v871 = vpop.f32.mrf.mxu0
      %v872 = vadd.f32 %v313, %v871
      %v873 = vpop.f32.mrf.mxu0
      %v874 = vpop.f32.mrf.mxu0
      %v875 = vadd.f32 %v313, %v874
      %v876 = vpop.f32.mrf.mxu0
      %877 = vmatprep.mubr.bf16.mxu0 %v512
      %878 = vmatmul.mubr.bf16.gmra.mxu0 %v511
      %v879 = vpop.f32.mrf.mxu0
      %v880 = vadd.f32 %v313, %v879
      %v881 = vpop.f32.mrf.mxu0
      %v882 = vpop.f32.mrf.mxu0
      %v883 = vadd.f32 %v313, %v882
      %v884 = vpop.f32.mrf.mxu0
      %885 = vmatprep.mubr.bf16.mxu0 %v514
      %886 = vmatmul.mubr.bf16.gmra.mxu0 %v513
      %v887 = vpop.f32.mrf.mxu0
      %v888 = vadd.f32 %v313, %v887
      %v889 = vpop.f32.mrf.mxu0
      %v890 = vpop.f32.mrf.mxu0
      %v891 = vadd.f32 %v313, %v890
      %v892 = vpop.f32.mrf.mxu0
      %893 = vdwg.mxu0
      %v894 = vmax.f32 %v696, 0.0
      %v895 = vmax.f32 %v699, 0.0
      %v896 = vmax.f32 %v704, 0.0
      %v897 = vmax.f32 %v707, 0.0
      %v898 = vmax.f32 %v712, 0.0
      %v899 = vmax.f32 %v715, 0.0
      %v900 = vmax.f32 %v720, 0.0
      %v901 = vmax.f32 %v723, 0.0
      %v902 = vmax.f32 %v728, 0.0
      %v903 = vmax.f32 %v731, 0.0
      %v904 = vmax.f32 %v736, 0.0
      %v905 = vmax.f32 %v739, 0.0
      %v906 = vmax.f32 %v744, 0.0
      %v907 = vmax.f32 %v747, 0.0
      %v908 = vmax.f32 %v752, 0.0
      %v909 = vmax.f32 %v755, 0.0
      %v910 = vmax.f32 %v760, 0.0
      %v911 = vmax.f32 %v763, 0.0
      %v912 = vmax.f32 %v768, 0.0
      %v913 = vmax.f32 %v771, 0.0
      %v914 = vmax.f32 %v776, 0.0
      %v915 = vmax.f32 %v779, 0.0
      %v916 = vmax.f32 %v784, 0.0
      %v917 = vmax.f32 %v787, 0.0
      %v918 = vmax.f32 %v792, 0.0
      %v919 = vmax.f32 %v795, 0.0
      %v920 = vmax.f32 %v800, 0.0
      %v921 = vmax.f32 %v803, 0.0
      %v922 = vmax.f32 %v808, 0.0
      %v923 = vmax.f32 %v811, 0.0
      %v924 = vmax.f32 %v816, 0.0
      %v925 = vmax.f32 %v819, 0.0
      %v926 = vmax.f32 %v824, 0.0
      %v927 = vmax.f32 %v827, 0.0
      %v928 = vmax.f32 %v832, 0.0
      %v929 = vmax.f32 %v835, 0.0
      %v930 = vmax.f32 %v840, 0.0
      %v931 = vmax.f32 %v843, 0.0
      %v932 = vmax.f32 %v848, 0.0
      %v933 = vmax.f32 %v851, 0.0
      %v934 = vmax.f32 %v856, 0.0
      %v935 = vmax.f32 %v859, 0.0
      %v936 = vmax.f32 %v864, 0.0
      %v937 = vmax.f32 %v867, 0.0
      %v938 = vmax.f32 %v872, 0.0
      %v939 = vmax.f32 %v875, 0.0
      %v940 = vmax.f32 %v880, 0.0
      %v941 = vmax.f32 %v883, 0.0
      %v942 = vmax.f32 %v888, 0.0
      %v943 = vmax.f32 %v891, 0.0
      %v944 = vpack.c.bf16 %v895, %v894
      %v945 = vpack.c.bf16 %v897, %v896
      %v946 = vpack.c.bf16 %v899, %v898
      %v947 = vpack.c.bf16 %v901, %v900
      %v948 = vpack.c.bf16 %v903, %v902
      %v949 = vpack.c.bf16 %v905, %v904
      %v950 = vpack.c.bf16 %v907, %v906
      %v951 = vpack.c.bf16 %v909, %v908
      %v952 = vpack.c.bf16 %v911, %v910
      %v953 = vpack.c.bf16 %v913, %v912
      %v954 = vpack.c.bf16 %v915, %v914
      %v955 = vpack.c.bf16 %v917, %v916
      %v956 = vpack.c.bf16 %v919, %v918
      %v957 = vpack.c.bf16 %v921, %v920
      %v958 = vpack.c.bf16 %v923, %v922
      %v959 = vpack.c.bf16 %v925, %v924
      %v960 = vpack.c.bf16 %v927, %v926
      %v961 = vpack.c.bf16 %v929, %v928
      %v962 = vpack.c.bf16 %v931, %v930
      %v963 = vpack.c.bf16 %v933, %v932
      %v964 = vpack.c.bf16 %v935, %v934
      %v965 = vpack.c.bf16 %v937, %v936
      %v966 = vpack.c.bf16 %v939, %v938
      %v967 = vpack.c.bf16 %v941, %v940
      %v968 = vpack.c.bf16 %v943, %v942
      %v994 = vunpack.c.l.b16 %v944
      %v995 = vunpack.c.h.b16 %v944
      %v996 = vunpack.c.l.b16 %v945
      %v997 = vunpack.c.h.b16 %v945
      %v998 = vunpack.c.l.b16 %v946
      %v999 = vunpack.c.h.b16 %v946
      %v1000 = vunpack.c.l.b16 %v947
      %v1001 = vunpack.c.h.b16 %v947
      %v1002 = vunpack.c.l.b16 %v948
      %v1003 = vunpack.c.h.b16 %v948
      %v1004 = vunpack.c.l.b16 %v949
      %v1005 = vunpack.c.h.b16 %v949
      %v1006 = vunpack.c.l.b16 %v950
      %v1007 = vunpack.c.h.b16 %v950
      %v1008 = vunpack.c.l.b16 %v951
      %v1009 = vunpack.c.h.b16 %v951
      %v1010 = vunpack.c.l.b16 %v952
      %v1011 = vunpack.c.h.b16 %v952
      %v1012 = vunpack.c.l.b16 %v953
      %v1013 = vunpack.c.h.b16 %v953
      %v1014 = vunpack.c.l.b16 %v954
      %v1015 = vunpack.c.h.b16 %v954
      %v1016 = vunpack.c.l.b16 %v955
      %v1017 = vunpack.c.h.b16 %v955
      %v1018 = vunpack.c.l.b16 %v956
      %v1019 = vunpack.c.h.b16 %v956
      %v1020 = vunpack.c.l.b16 %v957
      %v1021 = vunpack.c.h.b16 %v957
      %v1022 = vunpack.c.l.b16 %v958
      %v1023 = vunpack.c.h.b16 %v958
      %v1024 = vunpack.c.l.b16 %v959
      %v1025 = vunpack.c.h.b16 %v959
      %v1026 = vunpack.c.l.b16 %v960
      %v1027 = vunpack.c.h.b16 %v960
      %v1028 = vunpack.c.l.b16 %v961
      %v1029 = vunpack.c.h.b16 %v961
      %v1030 = vunpack.c.l.b16 %v962
      %v1031 = vunpack.c.h.b16 %v962
      %v1032 = vunpack.c.l.b16 %v963
      %v1033 = vunpack.c.h.b16 %v963
      %v1034 = vunpack.c.l.b16 %v964
      %v1035 = vunpack.c.h.b16 %v964
      %v1036 = vunpack.c.l.b16 %v965
      %v1037 = vunpack.c.h.b16 %v965
      %v1038 = vunpack.c.l.b16 %v966
      %v1039 = vunpack.c.h.b16 %v966
      %v1040 = vunpack.c.l.b16 %v967
      %v1041 = vunpack.c.h.b16 %v967
      %v1042 = vunpack.c.l.b16 %v968
      %v1043 = vunpack.c.h.b16 %v968
      %v1044 = vpack.c.b16 %v994, %v994
      %v1045 = vpack.c.b16 %v995, %v995
      %v1046 = vpack.c.b16 %v996, %v996
      %v1047 = vpack.c.b16 %v997, %v997
      %v1048 = vpack.c.b16 %v998, %v998
      %v1049 = vpack.c.b16 %v999, %v999
      %v1050 = vpack.c.b16 %v1000, %v1000
      %v1051 = vpack.c.b16 %v1001, %v1001
      %v1052 = vpack.c.b16 %v1002, %v1002
      %v1053 = vpack.c.b16 %v1003, %v1003
      %v1054 = vpack.c.b16 %v1004, %v1004
      %v1055 = vpack.c.b16 %v1005, %v1005
      %v1056 = vpack.c.b16 %v1006, %v1006
      %v1057 = vpack.c.b16 %v1007, %v1007
      %v1058 = vpack.c.b16 %v1008, %v1008
      %v1059 = vpack.c.b16 %v1009, %v1009
      %v1060 = vpack.c.b16 %v1010, %v1010
      %v1061 = vpack.c.b16 %v1011, %v1011
      %v1062 = vpack.c.b16 %v1012, %v1012
      %v1063 = vpack.c.b16 %v1013, %v1013
      %v1064 = vpack.c.b16 %v1014, %v1014
      %v1065 = vpack.c.b16 %v1015, %v1015
      %v1066 = vpack.c.b16 %v1016, %v1016
      %v1067 = vpack.c.b16 %v1017, %v1017
      %v1068 = vpack.c.b16 %v1018, %v1018
      %v1069 = vpack.c.b16 %v1019, %v1019
      %v1070 = vpack.c.b16 %v1020, %v1020
      %v1071 = vpack.c.b16 %v1021, %v1021
      %v1072 = vpack.c.b16 %v1022, %v1022
      %v1073 = vpack.c.b16 %v1023, %v1023
      %v1074 = vpack.c.b16 %v1024, %v1024
      %v1075 = vpack.c.b16 %v1025, %v1025
      %v1076 = vpack.c.b16 %v1026, %v1026
      %v1077 = vpack.c.b16 %v1027, %v1027
      %v1078 = vpack.c.b16 %v1028, %v1028
      %v1079 = vpack.c.b16 %v1029, %v1029
      %v1080 = vpack.c.b16 %v1030, %v1030
      %v1081 = vpack.c.b16 %v1031, %v1031
      %v1082 = vpack.c.b16 %v1032, %v1032
      %v1083 = vpack.c.b16 %v1033, %v1033
      %v1084 = vpack.c.b16 %v1034, %v1034
      %v1085 = vpack.c.b16 %v1035, %v1035
      %v1086 = vpack.c.b16 %v1036, %v1036
      %v1087 = vpack.c.b16 %v1037, %v1037
      %v1088 = vpack.c.b16 %v1038, %v1038
      %v1089 = vpack.c.b16 %v1039, %v1039
      %v1090 = vpack.c.b16 %v1040, %v1040
      %v1091 = vpack.c.b16 %v1041, %v1041
      %v1092 = vpack.c.b16 %v1042, %v1042
      %v1093 = vpack.c.b16 %v1043, %v1043
      %1144 = vst [vmem:[#allocation2] sm:$0xf] %v1044
      %1145 = vst [vmem:[#allocation2 + $0x4] sm:$0xf] %v1045
      %1146 = vst [vmem:[#allocation2 + $0x8] sm:$0xf] %v1046
      %1147 = vst [vmem:[#allocation2 + $0xc] sm:$0xf] %v1047
      %1148 = vst [vmem:[#allocation2 + $0x10] sm:$0xf] %v1048
      %1149 = vst [vmem:[#allocation2 + $0x14] sm:$0xf] %v1049
      %1150 = vst [vmem:[#allocation2 + $0x18] sm:$0xf] %v1050
      %1151 = vst [vmem:[#allocation2 + $0x1c] sm:$0xf] %v1051
      %1152 = vst [vmem:[#allocation2 + $0x20] sm:$0xf] %v1052
      %1153 = vst [vmem:[#allocation2 + $0x24] sm:$0xf] %v1053
      %1154 = vst [vmem:[#allocation2 + $0x28] sm:$0xf] %v1054
      %1155 = vst [vmem:[#allocation2 + $0x2c] sm:$0xf] %v1055
      %1156 = vst [vmem:[#allocation2 + $0x30] sm:$0xf] %v1056
      %1157 = vst [vmem:[#allocation2 + $0x34] sm:$0xf] %v1057
      %1158 = vst [vmem:[#allocation2 + $0x38] sm:$0xf] %v1058
      %1159 = vst [vmem:[#allocation2 + $0x3c] sm:$0xf] %v1059
      %1160 = vst [vmem:[#allocation2 + $0x40] sm:$0xf] %v1060
      %1161 = vst [vmem:[#allocation2 + $0x44] sm:$0xf] %v1061
      %1162 = vst [vmem:[#allocation2 + $0x48] sm:$0xf] %v1062
      %1163 = vst [vmem:[#allocation2 + $0x4c] sm:$0xf] %v1063
      %1164 = vst [vmem:[#allocation2 + $0x50] sm:$0xf] %v1064
      %1165 = vst [vmem:[#allocation2 + $0x54] sm:$0xf] %v1065
      %1166 = vst [vmem:[#allocation2 + $0x58] sm:$0xf] %v1066
      %1167 = vst [vmem:[#allocation2 + $0x5c] sm:$0xf] %v1067
      %1168 = vst [vmem:[#allocation2 + $0x60] sm:$0xf] %v1068
      %1169 = vst [vmem:[#allocation2 + $0x64] sm:$0xf] %v1069
      %1170 = vst [vmem:[#allocation2 + $0x68] sm:$0xf] %v1070
      %1171 = vst [vmem:[#allocation2 + $0x6c] sm:$0xf] %v1071
      %1172 = vst [vmem:[#allocation2 + $0x70] sm:$0xf] %v1072
      %1173 = vst [vmem:[#allocation2 + $0x74] sm:$0xf] %v1073
      %1174 = vst [vmem:[#allocation2 + $0x78] sm:$0xf] %v1074
      %1175 = vst [vmem:[#allocation2 + $0x7c] sm:$0xf] %v1075
      %1176 = vst [vmem:[#allocation2 + $0x80] sm:$0xf] %v1076
      %1177 = vst [vmem:[#allocation2 + $0x84] sm:$0xf] %v1077
      %1178 = vst [vmem:[#allocation2 + $0x88] sm:$0xf] %v1078
      %1179 = vst [vmem:[#allocation2 + $0x8c] sm:$0xf] %v1079
      %1180 = vst [vmem:[#allocation2 + $0x90] sm:$0xf] %v1080
      %1181 = vst [vmem:[#allocation2 + $0x94] sm:$0xf] %v1081
      %1182 = vst [vmem:[#allocation2 + $0x98] sm:$0xf] %v1082
      %1183 = vst [vmem:[#allocation2 + $0x9c] sm:$0xf] %v1083
      %1184 = vst [vmem:[#allocation2 + $0xa0] sm:$0xf] %v1084
      %1185 = vst [vmem:[#allocation2 + $0xa4] sm:$0xf] %v1085
      %1186 = vst [vmem:[#allocation2 + $0xa8] sm:$0xf] %v1086
      %1187 = vst [vmem:[#allocation2 + $0xac] sm:$0xf] %v1087
      %1188 = vst [vmem:[#allocation2 + $0xb0] sm:$0xf] %v1088
      %1189 = vst [vmem:[#allocation2 + $0xb4] sm:$0xf] %v1089
      %1190 = vst [vmem:[#allocation2 + $0xb8] sm:$0xf] %v1090
      %1191 = vst [vmem:[#allocation2 + $0xbc] sm:$0xf] %v1091
      %1192 = vst [vmem:[#allocation2 + $0xc0] sm:$0xf] %v1092
      %1193 = vst [vmem:[#allocation2 + $0xc4] sm:$0xf] %v1093
      %1194 = vst [vmem:[#allocation2 + $0xc8] sm:$0xf] 0
      %v1195 = vld [vmem:[#allocation2] sm:$0xf]
      %v1196 = vld [vmem:[#allocation2 + $0x4] sm:$0xf]
      %v1197 = vld [vmem:[#allocation2 + $0x8] sm:$0xf]
      %v1198 = vld [vmem:[#allocation2 + $0xc] sm:$0xf]
      %v1199 = vld [vmem:[#allocation2 + $0x10] sm:$0xf]
      %v1200 = vld [vmem:[#allocation2 + $0x14] sm:$0xf]
      %v1201 = vld [vmem:[#allocation2 + $0x18] sm:$0xf]
      %v1202 = vld [vmem:[#allocation2 + $0x1c] sm:$0xf]
      %v1203 = vld [vmem:[#allocation2 + $0x20] sm:$0xf]
      %v1204 = vld [vmem:[#allocation2 + $0x24] sm:$0xf]
      %v1205 = vld [vmem:[#allocation2 + $0x28] sm:$0xf]
      %v1206 = vld [vmem:[#allocation2 + $0x2c] sm:$0xf]
      %v1207 = vld [vmem:[#allocation2 + $0x30] sm:$0xf]
      %v1208 = vld [vmem:[#allocation2 + $0x34] sm:$0xf]
      %v1209 = vld [vmem:[#allocation2 + $0x38] sm:$0xf]
      %v1210 = vld [vmem:[#allocation2 + $0x3c] sm:$0xf]
      %v1211 = vld [vmem:[#allocation2 + $0x40] sm:$0xf]
      %v1212 = vld [vmem:[#allocation2 + $0x44] sm:$0xf]
      %v1213 = vld [vmem:[#allocation2 + $0x48] sm:$0xf]
      %v1214 = vld [vmem:[#allocation2 + $0x4c] sm:$0xf]
      %v1215 = vld [vmem:[#allocation2 + $0x50] sm:$0xf]
      %v1216 = vld [vmem:[#allocation2 + $0x54] sm:$0xf]
      %v1217 = vld [vmem:[#allocation2 + $0x58] sm:$0xf]
      %v1218 = vld [vmem:[#allocation2 + $0x5c] sm:$0xf]
      %v1219 = vld [vmem:[#allocation2 + $0x60] sm:$0xf]
      %v1220 = vld [vmem:[#allocation2 + $0x64] sm:$0xf]
      %v1221 = vld [vmem:[#allocation2 + $0x68] sm:$0xf]
      %v1222 = vld [vmem:[#allocation2 + $0x6c] sm:$0xf]
      %v1223 = vld [vmem:[#allocation2 + $0x70] sm:$0xf]
      %v1224 = vld [vmem:[#allocation2 + $0x74] sm:$0xf]
      %v1225 = vld [vmem:[#allocation2 + $0x78] sm:$0xf]
      %v1226 = vld [vmem:[#allocation2 + $0x7c] sm:$0xf]
      %v1227 = vld [vmem:[#allocation2 + $0x80] sm:$0xf]
      %v1228 = vld [vmem:[#allocation2 + $0x84] sm:$0xf]
      %v1229 = vld [vmem:[#allocation2 + $0x88] sm:$0xf]
      %v1230 = vld [vmem:[#allocation2 + $0x8c] sm:$0xf]
      %v1231 = vld [vmem:[#allocation2 + $0x90] sm:$0xf]
      %v1232 = vld [vmem:[#allocation2 + $0x94] sm:$0xf]
      %v1233 = vld [vmem:[#allocation2 + $0x98] sm:$0xf]
      %v1234 = vld [vmem:[#allocation2 + $0x9c] sm:$0xf]
      %v1235 = vld [vmem:[#allocation2 + $0xa0] sm:$0xf]
      %v1236 = vld [vmem:[#allocation2 + $0xa4] sm:$0xf]
      %v1237 = vld [vmem:[#allocation2 + $0xa8] sm:$0xf]
      %v1238 = vld [vmem:[#allocation2 + $0xac] sm:$0xf]
      %v1239 = vld [vmem:[#allocation2 + $0xb0] sm:$0xf]
      %v1240 = vld [vmem:[%s3] sm:$0xf]
      %v1241 = vld [vmem:[%s3 + $0x4] sm:$0xf]
      %v1242 = vld [vmem:[%s3 + $0x8] sm:$0xf]
      %v1243 = vld [vmem:[%s3 + $0xc] sm:$0xf]
      %v1244 = vld [vmem:[%s3 + $0x10] sm:$0xf]
      %v1245 = vld [vmem:[%s3 + $0x14] sm:$0xf]
      %v1246 = vld [vmem:[%s3 + $0x18] sm:$0xf]
      %v1247 = vld [vmem:[%s3 + $0x1c] sm:$0xf]
      %v1248 = vld [vmem:[%s3 + $0x20] sm:$0xf]
      %v1249 = vld [vmem:[%s3 + $0x24] sm:$0xf]
      %v1250 = vld [vmem:[%s3 + $0x28] sm:$0xf]
      %v1251 = vld [vmem:[%s3 + $0x2c] sm:$0xf]
      %v1252 = vld [vmem:[%s3 + $0x30] sm:$0xf]
      %v1253 = vld [vmem:[%s3 + $0x34] sm:$0xf]
      %v1254 = vld [vmem:[%s3 + $0x38] sm:$0xf]
      %v1255 = vld [vmem:[%s3 + $0x3c] sm:$0xf]
      %v1256 = vld [vmem:[#allocation2 + $0xb4] sm:$0x1]
      %s1257 = scalar_lea.vmem %s3, 64
      %v1258 = vld [vmem:[%s1257] sm:$0xf]
      %v1259 = vld [vmem:[%s1257 + $0x4] sm:$0xf]
      %v1260 = vld [vmem:[%s1257 + $0x8] sm:$0xf]
      %v1261 = vld [vmem:[%s1257 + $0xc] sm:$0xf]
      %v1262 = vld [vmem:[%s1257 + $0x10] sm:$0xf]
      %v1263 = vld [vmem:[%s1257 + $0x14] sm:$0xf]
      %v1264 = vld [vmem:[%s1257 + $0x18] sm:$0xf]
      %v1265 = vld [vmem:[%s1257 + $0x1c] sm:$0xf]
      %v1266 = vld [vmem:[%s1257 + $0x20] sm:$0xf]
      %v1267 = vld [vmem:[%s1257 + $0x24] sm:$0xf]
      %v1268 = vld [vmem:[%s1257 + $0x28] sm:$0xf]
      %v1269 = vld [vmem:[%s1257 + $0x2c] sm:$0xf]
      %v1270 = vld [vmem:[%s1257 + $0x30] sm:$0xf]
      %v1271 = vld [vmem:[%s1257 + $0x34] sm:$0xf]
      %v1272 = vld [vmem:[%s1257 + $0x38] sm:$0xf]
      %v1273 = vld [vmem:[%s1257 + $0x3c] sm:$0xf]
      %v1320 = vunpack.c.l.b16 %v1195
      %v1321 = vunpack.c.l.b16 %v1196
      %v1322 = vunpack.c.l.b16 %v1197
      %v1323 = vunpack.c.l.b16 %v1198
      %v1324 = vunpack.c.l.b16 %v1199
      %v1325 = vunpack.c.l.b16 %v1200
      %v1326 = vunpack.c.l.b16 %v1201
      %v1327 = vunpack.c.l.b16 %v1202
      %v1328 = vunpack.c.l.b16 %v1203
      %v1329 = vunpack.c.l.b16 %v1204
      %v1330 = vunpack.c.l.b16 %v1205
      %v1331 = vunpack.c.l.b16 %v1206
      %v1332 = vunpack.c.l.b16 %v1207
      %v1333 = vunpack.c.l.b16 %v1208
      %v1334 = vunpack.c.l.b16 %v1209
      %v1335 = vunpack.c.l.b16 %v1210
      %v1336 = vunpack.c.l.b16 %v1211
      %v1337 = vunpack.c.l.b16 %v1212
      %v1338 = vunpack.c.l.b16 %v1213
      %v1339 = vunpack.c.l.b16 %v1214
      %v1340 = vunpack.c.l.b16 %v1215
      %v1341 = vunpack.c.l.b16 %v1216
      %v1342 = vunpack.c.l.b16 %v1217
      %v1343 = vunpack.c.l.b16 %v1218
      %v1344 = vunpack.c.l.b16 %v1219
      %v1345 = vunpack.c.l.b16 %v1220
      %v1346 = vunpack.c.l.b16 %v1221
      %v1347 = vunpack.c.l.b16 %v1222
      %v1348 = vunpack.c.l.b16 %v1223
      %v1349 = vunpack.c.l.b16 %v1224
      %v1350 = vunpack.c.l.b16 %v1225
      %v1351 = vunpack.c.l.b16 %v1226
      %v1352 = vunpack.c.l.b16 %v1227
      %v1353 = vunpack.c.l.b16 %v1228
      %v1354 = vunpack.c.l.b16 %v1229
      %v1355 = vunpack.c.l.b16 %v1230
      %v1356 = vunpack.c.l.b16 %v1231
      %v1357 = vunpack.c.l.b16 %v1232
      %v1358 = vunpack.c.l.b16 %v1233
      %v1359 = vunpack.c.l.b16 %v1234
      %v1360 = vunpack.c.l.b16 %v1235
      %v1361 = vunpack.c.l.b16 %v1236
      %v1362 = vunpack.c.l.b16 %v1237
      %v1363 = vunpack.c.l.b16 %v1238
      %v1364 = vunpack.c.l.b16 %v1239
      %v1365 = vunpack.c.l.b16 %v1256
      %v1366 = vpack.c.b16 %v1321, %v1320
      %v1367 = vpack.c.b16 %v1323, %v1322
      %v1368 = vpack.c.b16 %v1325, %v1324
      %v1369 = vpack.c.b16 %v1327, %v1326
      %v1370 = vpack.c.b16 %v1329, %v1328
      %v1371 = vpack.c.b16 %v1331, %v1330
      %v1372 = vpack.c.b16 %v1333, %v1332
      %v1373 = vpack.c.b16 %v1335, %v1334
      %v1374 = vpack.c.b16 %v1337, %v1336
      %v1375 = vpack.c.b16 %v1339, %v1338
      %v1376 = vpack.c.b16 %v1341, %v1340
      %v1377 = vpack.c.b16 %v1343, %v1342
      %v1378 = vpack.c.b16 %v1345, %v1344
      %v1379 = vpack.c.b16 %v1347, %v1346
      %v1380 = vpack.c.b16 %v1349, %v1348
      %v1381 = vpack.c.b16 %v1351, %v1350
      %v1382 = vpack.c.b16 %v1353, %v1352
      %v1383 = vpack.c.b16 %v1355, %v1354
      %v1384 = vpack.c.b16 %v1357, %v1356
      %v1385 = vpack.c.b16 %v1359, %v1358
      %v1386 = vpack.c.b16 %v1361, %v1360
      %v1387 = vpack.c.b16 %v1363, %v1362
      %v1388 = vpack.c.b16 %v1365, %v1364
      %vm1389 = vsmask.f32 7424
      %v1391 = vshrl.u32 %v1366, 16
      %v1393 = vshll.u32 %v1366, 16
      %v1395 = vrot.slane %v1393, 1
      %v1396 = vor.u32 %v1391, %v1395
      %v1398 = vshll.u32 %v1367, 16
      %v1400 = vrot.slane %v1398, 1
      %v1401 = vsel %vm1389, %v1396, %v1400
      %v1402 = vshrl.u32 %v1367, 16
      %v1404 = vor.u32 %v1402, %v1400
      %v1406 = vshll.u32 %v1368, 16
      %v1408 = vrot.slane %v1406, 1
      %v1409 = vsel %vm1389, %v1404, %v1408
      %v1410 = vshrl.u32 %v1368, 16
      %v1412 = vor.u32 %v1410, %v1408
      %v1414 = vshll.u32 %v1369, 16
      %v1416 = vrot.slane %v1414, 1
      %v1417 = vsel %vm1389, %v1412, %v1416
      %v1418 = vshrl.u32 %v1369, 16
      %v1420 = vor.u32 %v1418, %v1416
      %v1422 = vshll.u32 %v1370, 16
      %v1424 = vrot.slane %v1422, 1
      %v1425 = vsel %vm1389, %v1420, %v1424
      %v1426 = vshrl.u32 %v1370, 16
      %v1428 = vor.u32 %v1426, %v1424
      %v1430 = vshll.u32 %v1371, 16
      %v1432 = vrot.slane %v1430, 1
      %v1433 = vsel %vm1389, %v1428, %v1432
      %v1434 = vshrl.u32 %v1371, 16
      %v1436 = vor.u32 %v1434, %v1432
      %v1438 = vshll.u32 %v1372, 16
      %v1440 = vrot.slane %v1438, 1
      %v1441 = vsel %vm1389, %v1436, %v1440
      %v1442 = vshrl.u32 %v1372, 16
      %v1444 = vor.u32 %v1442, %v1440
      %v1446 = vshll.u32 %v1373, 16
      %v1448 = vrot.slane %v1446, 1
      %v1449 = vsel %vm1389, %v1444, %v1448
      %v1450 = vshrl.u32 %v1373, 16
      %v1452 = vor.u32 %v1450, %v1448
      %v1454 = vshll.u32 %v1374, 16
      %v1456 = vrot.slane %v1454, 1
      %v1457 = vsel %vm1389, %v1452, %v1456
      %v1458 = vshrl.u32 %v1374, 16
      %v1460 = vor.u32 %v1458, %v1456
      %v1462 = vshll.u32 %v1375, 16
      %v1464 = vrot.slane %v1462, 1
      %v1465 = vsel %vm1389, %v1460, %v1464
      %v1466 = vshrl.u32 %v1375, 16
      %v1468 = vor.u32 %v1466, %v1464
      %v1470 = vshll.u32 %v1376, 16
      %v1472 = vrot.slane %v1470, 1
      %v1473 = vsel %vm1389, %v1468, %v1472
      %v1474 = vshrl.u32 %v1376, 16
      %v1476 = vor.u32 %v1474, %v1472
      %v1478 = vshll.u32 %v1377, 16
      %v1480 = vrot.slane %v1478, 1
      %v1481 = vsel %vm1389, %v1476, %v1480
      %v1482 = vshrl.u32 %v1377, 16
      %v1484 = vor.u32 %v1482, %v1480
      %v1486 = vshll.u32 %v1378, 16
      %v1488 = vrot.slane %v1486, 1
      %v1489 = vsel %vm1389, %v1484, %v1488
      %v1490 = vshrl.u32 %v1378, 16
      %v1492 = vor.u32 %v1490, %v1488
      %v1494 = vshll.u32 %v1379, 16
      %v1496 = vrot.slane %v1494, 1
      %v1497 = vsel %vm1389, %v1492, %v1496
      %v1498 = vshrl.u32 %v1379, 16
      %v1500 = vor.u32 %v1498, %v1496
      %v1502 = vshll.u32 %v1380, 16
      %v1504 = vrot.slane %v1502, 1
      %v1505 = vsel %vm1389, %v1500, %v1504
      %v1506 = vshrl.u32 %v1380, 16
      %v1508 = vor.u32 %v1506, %v1504
      %v1510 = vshll.u32 %v1381, 16
      %v1512 = vrot.slane %v1510, 1
      %v1513 = vsel %vm1389, %v1508, %v1512
      %v1514 = vshrl.u32 %v1381, 16
      %v1516 = vor.u32 %v1514, %v1512
      %v1518 = vshll.u32 %v1382, 16
      %v1520 = vrot.slane %v1518, 1
      %v1521 = vsel %vm1389, %v1516, %v1520
      %v1522 = vshrl.u32 %v1382, 16
      %v1524 = vor.u32 %v1522, %v1520
      %v1526 = vshll.u32 %v1383, 16
      %v1528 = vrot.slane %v1526, 1
      %v1529 = vsel %vm1389, %v1524, %v1528
      %v1530 = vshrl.u32 %v1383, 16
      %v1532 = vor.u32 %v1530, %v1528
      %v1534 = vshll.u32 %v1384, 16
      %v1536 = vrot.slane %v1534, 1
      %v1537 = vsel %vm1389, %v1532, %v1536
      %v1538 = vshrl.u32 %v1384, 16
      %v1540 = vor.u32 %v1538, %v1536
      %v1542 = vshll.u32 %v1385, 16
      %v1544 = vrot.slane %v1542, 1
      %v1545 = vsel %vm1389, %v1540, %v1544
      %v1546 = vshrl.u32 %v1385, 16
      %v1548 = vor.u32 %v1546, %v1544
      %v1550 = vshll.u32 %v1386, 16
      %v1552 = vrot.slane %v1550, 1
      %v1553 = vsel %vm1389, %v1548, %v1552
      %v1554 = vshrl.u32 %v1386, 16
      %v1556 = vor.u32 %v1554, %v1552
      %v1558 = vshll.u32 %v1387, 16
      %v1560 = vrot.slane %v1558, 1
      %v1561 = vsel %vm1389, %v1556, %v1560
      %v1562 = vshrl.u32 %v1387, 16
      %v1564 = vor.u32 %v1562, %v1560
      %v1566 = vshll.u32 %v1388, 16
      %v1568 = vrot.slane %v1566, 1
      %v1569 = vsel %vm1389, %v1564, %v1568
      %v1570 = vshrl.u32 %v1388, 16
      %v1572 = vor.u32 %v1570, %v1568
      %v1612 = vunpack.c.l.b16 %v1258
      %v1613 = vunpack.c.l.b16 %v1259
      %v1614 = vunpack.c.l.b16 %v1260
      %v1615 = vunpack.c.l.b16 %v1261
      %v1616 = vunpack.c.l.b16 %v1262
      %v1617 = vunpack.c.l.b16 %v1263
      %v1618 = vunpack.c.l.b16 %v1264
      %v1619 = vunpack.c.l.b16 %v1265
      %v1620 = vunpack.c.l.b16 %v1266
      %v1621 = vunpack.c.l.b16 %v1267
      %v1622 = vunpack.c.l.b16 %v1268
      %v1623 = vunpack.c.l.b16 %v1269
      %v1624 = vunpack.c.l.b16 %v1270
      %v1625 = vunpack.c.l.b16 %v1271
      %v1626 = vunpack.c.l.b16 %v1272
      %v1627 = vunpack.c.l.b16 %v1273
      %v1628 = vpack.c.b16 %v1613, %v1612
      %v1629 = vpack.c.b16 %v1615, %v1614
      %v1630 = vpack.c.b16 %v1617, %v1616
      %v1631 = vpack.c.b16 %v1619, %v1618
      %v1632 = vpack.c.b16 %v1621, %v1620
      %v1633 = vpack.c.b16 %v1623, %v1622
      %v1634 = vpack.c.b16 %v1625, %v1624
      %v1635 = vpack.c.b16 %v1627, %v1626
      %1644 = vmatprep.subr.bf16.mxu0 0
      %1645 = vmatpush1.bf16.msra.mxu0 %v1635
      %1646 = vmatprep.subr.bf16.mxu0 0
      %1647 = vmatpush1.bf16.msra.mxu0 %v1634
      %1648 = vmatprep.subr.bf16.mxu0 0
      %1649 = vmatpush1.bf16.msra.mxu0 %v1633
      %1650 = vmatprep.subr.bf16.mxu0 0
      %1651 = vmatpush1.bf16.msra.mxu0 %v1632
      %1652 = vmatprep.subr.bf16.mxu0 0
      %1653 = vmatpush1.bf16.msra.mxu0 %v1631
      %1654 = vmatprep.subr.bf16.mxu0 0
      %1655 = vmatpush1.bf16.msra.mxu0 %v1630
      %1656 = vmatprep.subr.bf16.mxu0 0
      %1657 = vmatpush1.bf16.msra.mxu0 %v1629
      %1658 = vmatprep.subr.bf16.mxu0 0
      %1659 = vmatpush1.bf16.msra.mxu0 %v1628
      %1660 = vmatprep.subr.bf16.mxu0 0
      %1661 = vmatpush2.bf16.msra.mxu0 0
      %1662 = vmatprep.subr.bf16.mxu0 0
      %1663 = vmatpush2.bf16.msra.mxu0 0
      %1664 = vmatprep.subr.bf16.mxu0 0
      %1665 = vmatpush2.bf16.msra.mxu0 0
      %1666 = vmatprep.subr.bf16.mxu0 0
      %1667 = vmatpush2.bf16.msra.mxu0 0
      %1668 = vmatprep.subr.bf16.mxu0 0
      %1669 = vmatpush2.bf16.msra.mxu0 0
      %1670 = vmatprep.subr.bf16.mxu0 0
      %1671 = vmatpush2.bf16.msra.mxu0 0
      %1672 = vmatprep.subr.bf16.mxu0 0
      %1673 = vmatpush2.bf16.msra.mxu0 0
      %1674 = vmatprep.subr.bf16.mxu0 0
      %1675 = vmatpush2.bf16.msra.mxu0 0
      %1676 = vmatprep.mubr.bf16.mxu0 0
      %1677 = vmatmul.mubr.bf16.gmra.mxu0 %v1401
      %v1678 = vpop.f32.mrf.mxu0
      %v1679 = vadd.f32 0.0, %v1678
      %v1680 = vpop.f32.mrf.mxu0
      %v1681 = vpop.f32.mrf.mxu0
      %v1682 = vadd.f32 0.0, %v1681
      %v1683 = vpop.f32.mrf.mxu0
      %1684 = vmatprep.mubr.bf16.mxu0 0
      %1685 = vmatmul.mubr.bf16.gmra.mxu0 %v1409
      %v1686 = vpop.f32.mrf.mxu0
      %v1687 = vadd.f32 0.0, %v1686
      %v1688 = vpop.f32.mrf.mxu0
      %v1689 = vpop.f32.mrf.mxu0
      %v1690 = vadd.f32 0.0, %v1689
      %v1691 = vpop.f32.mrf.mxu0
      %1692 = vmatprep.mubr.bf16.mxu0 0
      %1693 = vmatmul.mubr.bf16.gmra.mxu0 %v1417
      %v1694 = vpop.f32.mrf.mxu0
      %v1695 = vadd.f32 0.0, %v1694
      %v1696 = vpop.f32.mrf.mxu0
      %v1697 = vpop.f32.mrf.mxu0
      %v1698 = vadd.f32 0.0, %v1697
      %v1699 = vpop.f32.mrf.mxu0
      %1700 = vmatprep.mubr.bf16.mxu0 0
      %1701 = vmatmul.mubr.bf16.gmra.mxu0 %v1425
      %v1702 = vpop.f32.mrf.mxu0
      %v1703 = vadd.f32 0.0, %v1702
      %v1704 = vpop.f32.mrf.mxu0
      %v1705 = vpop.f32.mrf.mxu0
      %v1706 = vadd.f32 0.0, %v1705
      %v1707 = vpop.f32.mrf.mxu0
      %1708 = vmatprep.mubr.bf16.mxu0 0
      %1709 = vmatmul.mubr.bf16.gmra.mxu0 %v1433
      %v1710 = vpop.f32.mrf.mxu0
      %v1711 = vadd.f32 0.0, %v1710
      %v1712 = vpop.f32.mrf.mxu0
      %v1713 = vpop.f32.mrf.mxu0
      %v1714 = vadd.f32 0.0, %v1713
      %v1715 = vpop.f32.mrf.mxu0
      %1716 = vmatprep.mubr.bf16.mxu0 0
      %1717 = vmatmul.mubr.bf16.gmra.mxu0 %v1441
      %v1718 = vpop.f32.mrf.mxu0
      %v1719 = vadd.f32 0.0, %v1718
      %v1720 = vpop.f32.mrf.mxu0
      %v1721 = vpop.f32.mrf.mxu0
      %v1722 = vadd.f32 0.0, %v1721
      %v1723 = vpop.f32.mrf.mxu0
      %1724 = vmatprep.mubr.bf16.mxu0 0
      %1725 = vmatmul.mubr.bf16.gmra.mxu0 %v1449
      %v1726 = vpop.f32.mrf.mxu0
      %v1727 = vadd.f32 0.0, %v1726
      %v1728 = vpop.f32.mrf.mxu0
      %v1729 = vpop.f32.mrf.mxu0
      %v1730 = vadd.f32 0.0, %v1729
      %v1731 = vpop.f32.mrf.mxu0
      %1732 = vmatprep.mubr.bf16.mxu0 0
      %1733 = vmatmul.mubr.bf16.gmra.mxu0 %v1457
      %v1734 = vpop.f32.mrf.mxu0
      %v1735 = vadd.f32 0.0, %v1734
      %v1736 = vpop.f32.mrf.mxu0
      %v1737 = vpop.f32.mrf.mxu0
      %v1738 = vadd.f32 0.0, %v1737
      %v1739 = vpop.f32.mrf.mxu0
      %1740 = vmatprep.mubr.bf16.mxu0 0
      %1741 = vmatmul.mubr.bf16.gmra.mxu0 %v1465
      %v1742 = vpop.f32.mrf.mxu0
      %v1743 = vadd.f32 0.0, %v1742
      %v1744 = vpop.f32.mrf.mxu0
      %v1745 = vpop.f32.mrf.mxu0
      %v1746 = vadd.f32 0.0, %v1745
      %v1747 = vpop.f32.mrf.mxu0
      %1748 = vmatprep.mubr.bf16.mxu0 0
      %1749 = vmatmul.mubr.bf16.gmra.mxu0 %v1473
      %v1750 = vpop.f32.mrf.mxu0
      %v1751 = vadd.f32 0.0, %v1750
      %v1752 = vpop.f32.mrf.mxu0
      %v1753 = vpop.f32.mrf.mxu0
      %v1754 = vadd.f32 0.0, %v1753
      %v1755 = vpop.f32.mrf.mxu0
      %1756 = vmatprep.mubr.bf16.mxu0 0
      %1757 = vmatmul.mubr.bf16.gmra.mxu0 %v1481
      %v1758 = vpop.f32.mrf.mxu0
      %v1759 = vadd.f32 0.0, %v1758
      %v1760 = vpop.f32.mrf.mxu0
      %v1761 = vpop.f32.mrf.mxu0
      %v1762 = vadd.f32 0.0, %v1761
      %v1763 = vpop.f32.mrf.mxu0
      %1764 = vmatprep.mubr.bf16.mxu0 0
      %1765 = vmatmul.mubr.bf16.gmra.mxu0 %v1489
      %v1766 = vpop.f32.mrf.mxu0
      %v1767 = vadd.f32 0.0, %v1766
      %v1768 = vpop.f32.mrf.mxu0
      %v1769 = vpop.f32.mrf.mxu0
      %v1770 = vadd.f32 0.0, %v1769
      %v1771 = vpop.f32.mrf.mxu0
      %1772 = vmatprep.mubr.bf16.mxu0 0
      %1773 = vmatmul.mubr.bf16.gmra.mxu0 %v1497
      %v1774 = vpop.f32.mrf.mxu0
      %v1775 = vadd.f32 0.0, %v1774
      %v1776 = vpop.f32.mrf.mxu0
      %v1777 = vpop.f32.mrf.mxu0
      %v1778 = vadd.f32 0.0, %v1777
      %v1779 = vpop.f32.mrf.mxu0
      %1780 = vmatprep.mubr.bf16.mxu0 0
      %1781 = vmatmul.mubr.bf16.gmra.mxu0 %v1505
      %v1782 = vpop.f32.mrf.mxu0
      %v1783 = vadd.f32 0.0, %v1782
      %v1784 = vpop.f32.mrf.mxu0
      %v1785 = vpop.f32.mrf.mxu0
      %v1786 = vadd.f32 0.0, %v1785
      %v1787 = vpop.f32.mrf.mxu0
      %1788 = vmatprep.mubr.bf16.mxu0 0
      %1789 = vmatmul.mubr.bf16.gmra.mxu0 %v1513
      %v1790 = vpop.f32.mrf.mxu0
      %v1791 = vadd.f32 0.0, %v1790
      %v1792 = vpop.f32.mrf.mxu0
      %v1793 = vpop.f32.mrf.mxu0
      %v1794 = vadd.f32 0.0, %v1793
      %v1795 = vpop.f32.mrf.mxu0
      %1796 = vmatprep.mubr.bf16.mxu0 0
      %1797 = vmatmul.mubr.bf16.gmra.mxu0 %v1521
      %v1798 = vpop.f32.mrf.mxu0
      %v1799 = vadd.f32 0.0, %v1798
      %v1800 = vpop.f32.mrf.mxu0
      %v1801 = vpop.f32.mrf.mxu0
      %v1802 = vadd.f32 0.0, %v1801
      %v1803 = vpop.f32.mrf.mxu0
      %1804 = vmatprep.mubr.bf16.mxu0 0
      %1805 = vmatmul.mubr.bf16.gmra.mxu0 %v1529
      %v1806 = vpop.f32.mrf.mxu0
      %v1807 = vadd.f32 0.0, %v1806
      %v1808 = vpop.f32.mrf.mxu0
      %v1809 = vpop.f32.mrf.mxu0
      %v1810 = vadd.f32 0.0, %v1809
      %v1811 = vpop.f32.mrf.mxu0
      %1812 = vmatprep.mubr.bf16.mxu0 0
      %1813 = vmatmul.mubr.bf16.gmra.mxu0 %v1537
      %v1814 = vpop.f32.mrf.mxu0
      %v1815 = vadd.f32 0.0, %v1814
      %v1816 = vpop.f32.mrf.mxu0
      %v1817 = vpop.f32.mrf.mxu0
      %v1818 = vadd.f32 0.0, %v1817
      %v1819 = vpop.f32.mrf.mxu0
      %1820 = vmatprep.mubr.bf16.mxu0 0
      %1821 = vmatmul.mubr.bf16.gmra.mxu0 %v1545
      %v1822 = vpop.f32.mrf.mxu0
      %v1823 = vadd.f32 0.0, %v1822
      %v1824 = vpop.f32.mrf.mxu0
      %v1825 = vpop.f32.mrf.mxu0
      %v1826 = vadd.f32 0.0, %v1825
      %v1827 = vpop.f32.mrf.mxu0
      %1828 = vmatprep.mubr.bf16.mxu0 0
      %1829 = vmatmul.mubr.bf16.gmra.mxu0 %v1553
      %v1830 = vpop.f32.mrf.mxu0
      %v1831 = vadd.f32 0.0, %v1830
      %v1832 = vpop.f32.mrf.mxu0
      %v1833 = vpop.f32.mrf.mxu0
      %v1834 = vadd.f32 0.0, %v1833
      %v1835 = vpop.f32.mrf.mxu0
      %1836 = vmatprep.mubr.bf16.mxu0 0
      %1837 = vmatmul.mubr.bf16.gmra.mxu0 %v1561
      %v1838 = vpop.f32.mrf.mxu0
      %v1839 = vadd.f32 0.0, %v1838
      %v1840 = vpop.f32.mrf.mxu0
      %v1841 = vpop.f32.mrf.mxu0
      %v1842 = vadd.f32 0.0, %v1841
      %v1843 = vpop.f32.mrf.mxu0
      %1844 = vmatprep.mubr.bf16.mxu0 0
      %1845 = vmatmul.mubr.bf16.gmra.mxu0 %v1569
      %v1846 = vpop.f32.mrf.mxu0
      %v1847 = vadd.f32 0.0, %v1846
      %v1848 = vpop.f32.mrf.mxu0
      %v1849 = vpop.f32.mrf.mxu0
      %v1850 = vadd.f32 0.0, %v1849
      %v1851 = vpop.f32.mrf.mxu0
      %1852 = vmatprep.mubr.bf16.mxu0 0
      %1853 = vmatmul.mubr.bf16.gmra.mxu0 %v1572
      %v1854 = vpop.f32.mrf.mxu0
      %v1855 = vadd.f32 0.0, %v1854
      %v1856 = vpop.f32.mrf.mxu0
      %v1857 = vpop.f32.mrf.mxu0
      %v1858 = vpop.f32.mrf.mxu0
      %1859 = vdwg.mxu0
      %v1860 = vpack.c.b16 %v1364, %v1364
      %v1900 = vunpack.c.l.b16 %v1240
      %v1901 = vunpack.c.l.b16 %v1241
      %v1902 = vunpack.c.l.b16 %v1242
      %v1903 = vunpack.c.l.b16 %v1243
      %v1904 = vunpack.c.l.b16 %v1244
      %v1905 = vunpack.c.l.b16 %v1245
      %v1906 = vunpack.c.l.b16 %v1246
      %v1907 = vunpack.c.l.b16 %v1247
      %v1908 = vunpack.c.l.b16 %v1248
      %v1909 = vunpack.c.l.b16 %v1249
      %v1910 = vunpack.c.l.b16 %v1250
      %v1911 = vunpack.c.l.b16 %v1251
      %v1912 = vunpack.c.l.b16 %v1252
      %v1913 = vunpack.c.l.b16 %v1253
      %v1914 = vunpack.c.l.b16 %v1254
      %v1915 = vunpack.c.l.b16 %v1255
      %v1916 = vpack.c.b16 %v1901, %v1900
      %v1917 = vpack.c.b16 %v1903, %v1902
      %v1918 = vpack.c.b16 %v1905, %v1904
      %v1919 = vpack.c.b16 %v1907, %v1906
      %v1920 = vpack.c.b16 %v1909, %v1908
      %v1921 = vpack.c.b16 %v1911, %v1910
      %v1922 = vpack.c.b16 %v1913, %v1912
      %v1923 = vpack.c.b16 %v1915, %v1914
      %1932 = vmatprep.subr.bf16.mxu0 0
      %1933 = vmatpush1.bf16.msra.mxu0 %v1923
      %1934 = vmatprep.subr.bf16.mxu0 0
      %1935 = vmatpush1.bf16.msra.mxu0 %v1922
      %1936 = vmatprep.subr.bf16.mxu0 0
      %1937 = vmatpush1.bf16.msra.mxu0 %v1921
      %1938 = vmatprep.subr.bf16.mxu0 0
      %1939 = vmatpush1.bf16.msra.mxu0 %v1920
      %1940 = vmatprep.subr.bf16.mxu0 0
      %1941 = vmatpush1.bf16.msra.mxu0 %v1919
      %1942 = vmatprep.subr.bf16.mxu0 0
      %1943 = vmatpush1.bf16.msra.mxu0 %v1918
      %1944 = vmatprep.subr.bf16.mxu0 0
      %1945 = vmatpush1.bf16.msra.mxu0 %v1917
      %1946 = vmatprep.subr.bf16.mxu0 0
      %1947 = vmatpush1.bf16.msra.mxu0 %v1916
      %1948 = vmatprep.subr.bf16.mxu0 0
      %1949 = vmatpush2.bf16.msra.mxu0 0
      %1950 = vmatprep.subr.bf16.mxu0 0
      %1951 = vmatpush2.bf16.msra.mxu0 0
      %1952 = vmatprep.subr.bf16.mxu0 0
      %1953 = vmatpush2.bf16.msra.mxu0 0
      %1954 = vmatprep.subr.bf16.mxu0 0
      %1955 = vmatpush2.bf16.msra.mxu0 0
      %1956 = vmatprep.subr.bf16.mxu0 0
      %1957 = vmatpush2.bf16.msra.mxu0 0
      %1958 = vmatprep.subr.bf16.mxu0 0
      %1959 = vmatpush2.bf16.msra.mxu0 0
      %1960 = vmatprep.subr.bf16.mxu0 0
      %1961 = vmatpush2.bf16.msra.mxu0 0
      %1962 = vmatprep.subr.bf16.mxu0 0
      %1963 = vmatpush2.bf16.msra.mxu0 0
      %1964 = vmatprep.mubr.bf16.mxu0 0
      %1965 = vmatmul.mubr.bf16.gmra.mxu0 %v1366
      %v1966 = vpop.f32.mrf.mxu0
      %v1967 = vadd.f32 %v1679, %v1966
      %v1968 = vpop.f32.mrf.mxu0
      %v1969 = vpop.f32.mrf.mxu0
      %v1970 = vadd.f32 %v1682, %v1969
      %v1971 = vpop.f32.mrf.mxu0
      %1972 = vmatprep.mubr.bf16.mxu0 0
      %1973 = vmatmul.mubr.bf16.gmra.mxu0 %v1367
      %v1974 = vpop.f32.mrf.mxu0
      %v1975 = vadd.f32 %v1687, %v1974
      %v1976 = vpop.f32.mrf.mxu0
      %v1977 = vpop.f32.mrf.mxu0
      %v1978 = vadd.f32 %v1690, %v1977
      %v1979 = vpop.f32.mrf.mxu0
      %1980 = vmatprep.mubr.bf16.mxu0 0
      %1981 = vmatmul.mubr.bf16.gmra.mxu0 %v1368
      %v1982 = vpop.f32.mrf.mxu0
      %v1983 = vadd.f32 %v1695, %v1982
      %v1984 = vpop.f32.mrf.mxu0
      %v1985 = vpop.f32.mrf.mxu0
      %v1986 = vadd.f32 %v1698, %v1985
      %v1987 = vpop.f32.mrf.mxu0
      %1988 = vmatprep.mubr.bf16.mxu0 0
      %1989 = vmatmul.mubr.bf16.gmra.mxu0 %v1369
      %v1990 = vpop.f32.mrf.mxu0
      %v1991 = vadd.f32 %v1703, %v1990
      %v1992 = vpop.f32.mrf.mxu0
      %v1993 = vpop.f32.mrf.mxu0
      %v1994 = vadd.f32 %v1706, %v1993
      %v1995 = vpop.f32.mrf.mxu0
      %1996 = vmatprep.mubr.bf16.mxu0 0
      %1997 = vmatmul.mubr.bf16.gmra.mxu0 %v1370
      %v1998 = vpop.f32.mrf.mxu0
      %v1999 = vadd.f32 %v1711, %v1998
      %v2000 = vpop.f32.mrf.mxu0
      %v2001 = vpop.f32.mrf.mxu0
      %v2002 = vadd.f32 %v1714, %v2001
      %v2003 = vpop.f32.mrf.mxu0
      %2004 = vmatprep.mubr.bf16.mxu0 0
      %2005 = vmatmul.mubr.bf16.gmra.mxu0 %v1371
      %v2006 = vpop.f32.mrf.mxu0
      %v2007 = vadd.f32 %v1719, %v2006
      %v2008 = vpop.f32.mrf.mxu0
      %v2009 = vpop.f32.mrf.mxu0
      %v2010 = vadd.f32 %v1722, %v2009
      %v2011 = vpop.f32.mrf.mxu0
      %2012 = vmatprep.mubr.bf16.mxu0 0
      %2013 = vmatmul.mubr.bf16.gmra.mxu0 %v1372
      %v2014 = vpop.f32.mrf.mxu0
      %v2015 = vadd.f32 %v1727, %v2014
      %v2016 = vpop.f32.mrf.mxu0
      %v2017 = vpop.f32.mrf.mxu0
      %v2018 = vadd.f32 %v1730, %v2017
      %v2019 = vpop.f32.mrf.mxu0
      %2020 = vmatprep.mubr.bf16.mxu0 0
      %2021 = vmatmul.mubr.bf16.gmra.mxu0 %v1373
      %v2022 = vpop.f32.mrf.mxu0
      %v2023 = vadd.f32 %v1735, %v2022
      %v2024 = vpop.f32.mrf.mxu0
      %v2025 = vpop.f32.mrf.mxu0
      %v2026 = vadd.f32 %v1738, %v2025
      %v2027 = vpop.f32.mrf.mxu0
      %2028 = vmatprep.mubr.bf16.mxu0 0
      %2029 = vmatmul.mubr.bf16.gmra.mxu0 %v1374
      %v2030 = vpop.f32.mrf.mxu0
      %v2031 = vadd.f32 %v1743, %v2030
      %v2032 = vpop.f32.mrf.mxu0
      %v2033 = vpop.f32.mrf.mxu0
      %v2034 = vadd.f32 %v1746, %v2033
      %v2035 = vpop.f32.mrf.mxu0
      %2036 = vmatprep.mubr.bf16.mxu0 0
      %2037 = vmatmul.mubr.bf16.gmra.mxu0 %v1375
      %v2038 = vpop.f32.mrf.mxu0
      %v2039 = vadd.f32 %v1751, %v2038
      %v2040 = vpop.f32.mrf.mxu0
      %v2041 = vpop.f32.mrf.mxu0
      %v2042 = vadd.f32 %v1754, %v2041
      %v2043 = vpop.f32.mrf.mxu0
      %2044 = vmatprep.mubr.bf16.mxu0 0
      %2045 = vmatmul.mubr.bf16.gmra.mxu0 %v1376
      %v2046 = vpop.f32.mrf.mxu0
      %v2047 = vadd.f32 %v1759, %v2046
      %v2048 = vpop.f32.mrf.mxu0
      %v2049 = vpop.f32.mrf.mxu0
      %v2050 = vadd.f32 %v1762, %v2049
      %v2051 = vpop.f32.mrf.mxu0
      %2052 = vmatprep.mubr.bf16.mxu0 0
      %2053 = vmatmul.mubr.bf16.gmra.mxu0 %v1377
      %v2054 = vpop.f32.mrf.mxu0
      %v2055 = vadd.f32 %v1767, %v2054
      %v2056 = vpop.f32.mrf.mxu0
      %v2057 = vpop.f32.mrf.mxu0
      %v2058 = vadd.f32 %v1770, %v2057
      %v2059 = vpop.f32.mrf.mxu0
      %2060 = vmatprep.mubr.bf16.mxu0 0
      %2061 = vmatmul.mubr.bf16.gmra.mxu0 %v1378
      %v2062 = vpop.f32.mrf.mxu0
      %v2063 = vadd.f32 %v1775, %v2062
      %v2064 = vpop.f32.mrf.mxu0
      %v2065 = vpop.f32.mrf.mxu0
      %v2066 = vadd.f32 %v1778, %v2065
      %v2067 = vpop.f32.mrf.mxu0
      %2068 = vmatprep.mubr.bf16.mxu0 0
      %2069 = vmatmul.mubr.bf16.gmra.mxu0 %v1379
      %v2070 = vpop.f32.mrf.mxu0
      %v2071 = vadd.f32 %v1783, %v2070
      %v2072 = vpop.f32.mrf.mxu0
      %v2073 = vpop.f32.mrf.mxu0
      %v2074 = vadd.f32 %v1786, %v2073
      %v2075 = vpop.f32.mrf.mxu0
      %2076 = vmatprep.mubr.bf16.mxu0 0
      %2077 = vmatmul.mubr.bf16.gmra.mxu0 %v1380
      %v2078 = vpop.f32.mrf.mxu0
      %v2079 = vadd.f32 %v1791, %v2078
      %v2080 = vpop.f32.mrf.mxu0
      %v2081 = vpop.f32.mrf.mxu0
      %v2082 = vadd.f32 %v1794, %v2081
      %v2083 = vpop.f32.mrf.mxu0
      %2084 = vmatprep.mubr.bf16.mxu0 0
      %2085 = vmatmul.mubr.bf16.gmra.mxu0 %v1381
      %v2086 = vpop.f32.mrf.mxu0
      %v2087 = vadd.f32 %v1799, %v2086
      %v2088 = vpop.f32.mrf.mxu0
      %v2089 = vpop.f32.mrf.mxu0
      %v2090 = vadd.f32 %v1802, %v2089
      %v2091 = vpop.f32.mrf.mxu0
      %2092 = vmatprep.mubr.bf16.mxu0 0
      %2093 = vmatmul.mubr.bf16.gmra.mxu0 %v1382
      %v2094 = vpop.f32.mrf.mxu0
      %v2095 = vadd.f32 %v1807, %v2094
      %v2096 = vpop.f32.mrf.mxu0
      %v2097 = vpop.f32.mrf.mxu0
      %v2098 = vadd.f32 %v1810, %v2097
      %v2099 = vpop.f32.mrf.mxu0
      %2100 = vmatprep.mubr.bf16.mxu0 0
      %2101 = vmatmul.mubr.bf16.gmra.mxu0 %v1383
      %v2102 = vpop.f32.mrf.mxu0
      %v2103 = vadd.f32 %v1815, %v2102
      %v2104 = vpop.f32.mrf.mxu0
      %v2105 = vpop.f32.mrf.mxu0
      %v2106 = vadd.f32 %v1818, %v2105
      %v2107 = vpop.f32.mrf.mxu0
      %2108 = vmatprep.mubr.bf16.mxu0 0
      %2109 = vmatmul.mubr.bf16.gmra.mxu0 %v1384
      %v2110 = vpop.f32.mrf.mxu0
      %v2111 = vadd.f32 %v1823, %v2110
      %v2112 = vpop.f32.mrf.mxu0
      %v2113 = vpop.f32.mrf.mxu0
      %v2114 = vadd.f32 %v1826, %v2113
      %v2115 = vpop.f32.mrf.mxu0
      %2116 = vmatprep.mubr.bf16.mxu0 0
      %2117 = vmatmul.mubr.bf16.gmra.mxu0 %v1385
      %v2118 = vpop.f32.mrf.mxu0
      %v2119 = vadd.f32 %v1831, %v2118
      %v2120 = vpop.f32.mrf.mxu0
      %v2121 = vpop.f32.mrf.mxu0
      %v2122 = vadd.f32 %v1834, %v2121
      %v2123 = vpop.f32.mrf.mxu0
      %2124 = vmatprep.mubr.bf16.mxu0 0
      %2125 = vmatmul.mubr.bf16.gmra.mxu0 %v1386
      %v2126 = vpop.f32.mrf.mxu0
      %v2127 = vadd.f32 %v1839, %v2126
      %v2128 = vpop.f32.mrf.mxu0
      %v2129 = vpop.f32.mrf.mxu0
      %v2130 = vadd.f32 %v1842, %v2129
      %v2131 = vpop.f32.mrf.mxu0
      %2132 = vmatprep.mubr.bf16.mxu0 0
      %2133 = vmatmul.mubr.bf16.gmra.mxu0 %v1387
      %v2134 = vpop.f32.mrf.mxu0
      %v2135 = vadd.f32 %v1847, %v2134
      %v2136 = vpop.f32.mrf.mxu0
      %v2137 = vpop.f32.mrf.mxu0
      %v2138 = vadd.f32 %v1850, %v2137
      %v2139 = vpop.f32.mrf.mxu0
      %2140 = vmatprep.mubr.bf16.mxu0 0
      %2141 = vmatmul.mubr.bf16.gmra.mxu0 %v1860
      %v2142 = vpop.f32.mrf.mxu0
      %v2143 = vadd.f32 %v1855, %v2142
      %v2144 = vpop.f32.mrf.mxu0
      %v2145 = vpop.f32.mrf.mxu0
      %v2146 = vpop.f32.mrf.mxu0
      %2147 = vdwg.mxu0
      %v2148 = vld [vmem:[#allocation2] sm:$0xe]
      %s2149 = scalar_lea.vmem %s3, 128
      %v2150 = vld [vmem:[%s2149] sm:$0xf]
      %v2151 = vld [vmem:[%s2149 + $0x4] sm:$0xf]
      %v2152 = vld [vmem:[%s2149 + $0x8] sm:$0xf]
      %v2153 = vld [vmem:[%s2149 + $0xc] sm:$0xf]
      %v2154 = vld [vmem:[%s2149 + $0x10] sm:$0xf]
      %v2155 = vld [vmem:[%s2149 + $0x14] sm:$0xf]
      %v2156 = vld [vmem:[%s2149 + $0x18] sm:$0xf]
      %v2157 = vld [vmem:[%s2149 + $0x1c] sm:$0xf]
      %v2158 = vld [vmem:[%s2149 + $0x20] sm:$0xf]
      %v2159 = vld [vmem:[%s2149 + $0x24] sm:$0xf]
      %v2160 = vld [vmem:[%s2149 + $0x28] sm:$0xf]
      %v2161 = vld [vmem:[%s2149 + $0x2c] sm:$0xf]
      %v2162 = vld [vmem:[%s2149 + $0x30] sm:$0xf]
      %v2163 = vld [vmem:[%s2149 + $0x34] sm:$0xf]
      %v2164 = vld [vmem:[%s2149 + $0x38] sm:$0xf]
      %v2165 = vld [vmem:[%s2149 + $0x3c] sm:$0xf]
      %v2167 = vunpack.c.l.b16 %v2148
      %v2168 = vpack.c.b16 %v1321, %v2167
      %vm2169 = vcmask 1046528
      %v2170 = vrot.slane %v2168, 1
      %v2171 = vrot.slane %v1367, 1
      %v2172 = vsel %vm2169, %v2170, %v2171
      %v2173 = vrot.slane %v1368, 1
      %v2174 = vsel %vm2169, %v2171, %v2173
      %v2175 = vrot.slane %v1369, 1
      %v2176 = vsel %vm2169, %v2173, %v2175
      %v2177 = vrot.slane %v1370, 1
      %v2178 = vsel %vm2169, %v2175, %v2177
      %v2179 = vrot.slane %v1371, 1
      %v2180 = vsel %vm2169, %v2177, %v2179
      %v2181 = vrot.slane %v1372, 1
      %v2182 = vsel %vm2169, %v2179, %v2181
      %v2183 = vrot.slane %v1373, 1
      %v2184 = vsel %vm2169, %v2181, %v2183
      %v2185 = vrot.slane %v1374, 1
      %v2186 = vsel %vm2169, %v2183, %v2185
      %v2187 = vrot.slane %v1375, 1
      %v2188 = vsel %vm2169, %v2185, %v2187
      %v2189 = vrot.slane %v1376, 1
      %v2190 = vsel %vm2169, %v2187, %v2189
      %v2191 = vrot.slane %v1377, 1
      %v2192 = vsel %vm2169, %v2189, %v2191
      %v2193 = vrot.slane %v1378, 1
      %v2194 = vsel %vm2169, %v2191, %v2193
      %v2195 = vrot.slane %v1379, 1
      %v2196 = vsel %vm2169, %v2193, %v2195
      %v2197 = vrot.slane %v1380, 1
      %v2198 = vsel %vm2169, %v2195, %v2197
      %v2199 = vrot.slane %v1381, 1
      %v2200 = vsel %vm2169, %v2197, %v2199
      %v2201 = vrot.slane %v1382, 1
      %v2202 = vsel %vm2169, %v2199, %v2201
      %v2203 = vrot.slane %v1383, 1
      %v2204 = vsel %vm2169, %v2201, %v2203
      %v2205 = vrot.slane %v1384, 1
      %v2206 = vsel %vm2169, %v2203, %v2205
      %v2207 = vrot.slane %v1385, 1
      %v2208 = vsel %vm2169, %v2205, %v2207
      %v2209 = vrot.slane %v1386, 1
      %v2210 = vsel %vm2169, %v2207, %v2209
      %v2211 = vrot.slane %v1387, 1
      %v2212 = vsel %vm2169, %v2209, %v2211
      %v2213 = vrot.slane %v1388, 1
      %v2214 = vsel %vm2169, %v2211, %v2213
      %v2254 = vunpack.c.l.b16 %v2150
      %v2255 = vunpack.c.l.b16 %v2151
      %v2256 = vunpack.c.l.b16 %v2152
      %v2257 = vunpack.c.l.b16 %v2153
      %v2258 = vunpack.c.l.b16 %v2154
      %v2259 = vunpack.c.l.b16 %v2155
      %v2260 = vunpack.c.l.b16 %v2156
      %v2261 = vunpack.c.l.b16 %v2157
      %v2262 = vunpack.c.l.b16 %v2158
      %v2263 = vunpack.c.l.b16 %v2159
      %v2264 = vunpack.c.l.b16 %v2160
      %v2265 = vunpack.c.l.b16 %v2161
      %v2266 = vunpack.c.l.b16 %v2162
      %v2267 = vunpack.c.l.b16 %v2163
      %v2268 = vunpack.c.l.b16 %v2164
      %v2269 = vunpack.c.l.b16 %v2165
      %v2270 = vpack.c.b16 %v2255, %v2254
      %v2271 = vpack.c.b16 %v2257, %v2256
      %v2272 = vpack.c.b16 %v2259, %v2258
      %v2273 = vpack.c.b16 %v2261, %v2260
      %v2274 = vpack.c.b16 %v2263, %v2262
      %v2275 = vpack.c.b16 %v2265, %v2264
      %v2276 = vpack.c.b16 %v2267, %v2266
      %v2277 = vpack.c.b16 %v2269, %v2268
      %2286 = vmatprep.subr.bf16.mxu0 0
      %2287 = vmatpush1.bf16.msra.mxu0 %v2277
      %2288 = vmatprep.subr.bf16.mxu0 0
      %2289 = vmatpush1.bf16.msra.mxu0 %v2276
      %2290 = vmatprep.subr.bf16.mxu0 0
      %2291 = vmatpush1.bf16.msra.mxu0 %v2275
      %2292 = vmatprep.subr.bf16.mxu0 0
      %2293 = vmatpush1.bf16.msra.mxu0 %v2274
      %2294 = vmatprep.subr.bf16.mxu0 0
      %2295 = vmatpush1.bf16.msra.mxu0 %v2273
      %2296 = vmatprep.subr.bf16.mxu0 0
      %2297 = vmatpush1.bf16.msra.mxu0 %v2272
      %2298 = vmatprep.subr.bf16.mxu0 0
      %2299 = vmatpush1.bf16.msra.mxu0 %v2271
      %2300 = vmatprep.subr.bf16.mxu0 0
      %2301 = vmatpush1.bf16.msra.mxu0 %v2270
      %2302 = vmatprep.subr.bf16.mxu0 0
      %2303 = vmatpush2.bf16.msra.mxu0 0
      %2304 = vmatprep.subr.bf16.mxu0 0
      %2305 = vmatpush2.bf16.msra.mxu0 0
      %2306 = vmatprep.subr.bf16.mxu0 0
      %2307 = vmatpush2.bf16.msra.mxu0 0
      %2308 = vmatprep.subr.bf16.mxu0 0
      %2309 = vmatpush2.bf16.msra.mxu0 0
      %2310 = vmatprep.subr.bf16.mxu0 0
      %2311 = vmatpush2.bf16.msra.mxu0 0
      %2312 = vmatprep.subr.bf16.mxu0 0
      %2313 = vmatpush2.bf16.msra.mxu0 0
      %2314 = vmatprep.subr.bf16.mxu0 0
      %2315 = vmatpush2.bf16.msra.mxu0 0
      %2316 = vmatprep.subr.bf16.mxu0 0
      %2317 = vmatpush2.bf16.msra.mxu0 0
      %2318 = vmatprep.mubr.bf16.mxu0 0
      %2319 = vmatmul.mubr.bf16.gmra.mxu0 %v2172
      %v2320 = vpop.f32.mrf.mxu0
      %v2321 = vadd.f32 0.0, %v2320
      %v2322 = vpop.f32.mrf.mxu0
      %v2323 = vpop.f32.mrf.mxu0
      %v2324 = vadd.f32 0.0, %v2323
      %v2325 = vpop.f32.mrf.mxu0
      %2326 = vmatprep.mubr.bf16.mxu0 0
      %2327 = vmatmul.mubr.bf16.gmra.mxu0 %v2174
      %v2328 = vpop.f32.mrf.mxu0
      %v2329 = vadd.f32 0.0, %v2328
      %v2330 = vpop.f32.mrf.mxu0
      %v2331 = vpop.f32.mrf.mxu0
      %v2332 = vadd.f32 0.0, %v2331
      %v2333 = vpop.f32.mrf.mxu0
      %2334 = vmatprep.mubr.bf16.mxu0 0
      %2335 = vmatmul.mubr.bf16.gmra.mxu0 %v2176
      %v2336 = vpop.f32.mrf.mxu0
      %v2337 = vadd.f32 0.0, %v2336
      %v2338 = vpop.f32.mrf.mxu0
      %v2339 = vpop.f32.mrf.mxu0
      %v2340 = vadd.f32 0.0, %v2339
      %v2341 = vpop.f32.mrf.mxu0
      %2342 = vmatprep.mubr.bf16.mxu0 0
      %2343 = vmatmul.mubr.bf16.gmra.mxu0 %v2178
      %v2344 = vpop.f32.mrf.mxu0
      %v2345 = vadd.f32 0.0, %v2344
      %v2346 = vpop.f32.mrf.mxu0
      %v2347 = vpop.f32.mrf.mxu0
      %v2348 = vadd.f32 0.0, %v2347
      %v2349 = vpop.f32.mrf.mxu0
      %2350 = vmatprep.mubr.bf16.mxu0 0
      %2351 = vmatmul.mubr.bf16.gmra.mxu0 %v2180
      %v2352 = vpop.f32.mrf.mxu0
      %v2353 = vadd.f32 0.0, %v2352
      %v2354 = vpop.f32.mrf.mxu0
      %v2355 = vpop.f32.mrf.mxu0
      %v2356 = vadd.f32 0.0, %v2355
      %v2357 = vpop.f32.mrf.mxu0
      %2358 = vmatprep.mubr.bf16.mxu0 0
      %2359 = vmatmul.mubr.bf16.gmra.mxu0 %v2182
      %v2360 = vpop.f32.mrf.mxu0
      %v2361 = vadd.f32 0.0, %v2360
      %v2362 = vpop.f32.mrf.mxu0
      %v2363 = vpop.f32.mrf.mxu0
      %v2364 = vadd.f32 0.0, %v2363
      %v2365 = vpop.f32.mrf.mxu0
      %2366 = vmatprep.mubr.bf16.mxu0 0
      %2367 = vmatmul.mubr.bf16.gmra.mxu0 %v2184
      %v2368 = vpop.f32.mrf.mxu0
      %v2369 = vadd.f32 0.0, %v2368
      %v2370 = vpop.f32.mrf.mxu0
      %v2371 = vpop.f32.mrf.mxu0
      %v2372 = vadd.f32 0.0, %v2371
      %v2373 = vpop.f32.mrf.mxu0
      %2374 = vmatprep.mubr.bf16.mxu0 0
      %2375 = vmatmul.mubr.bf16.gmra.mxu0 %v2186
      %v2376 = vpop.f32.mrf.mxu0
      %v2377 = vadd.f32 0.0, %v2376
      %v2378 = vpop.f32.mrf.mxu0
      %v2379 = vpop.f32.mrf.mxu0
      %v2380 = vadd.f32 0.0, %v2379
      %v2381 = vpop.f32.mrf.mxu0
      %2382 = vmatprep.mubr.bf16.mxu0 0
      %2383 = vmatmul.mubr.bf16.gmra.mxu0 %v2188
      %v2384 = vpop.f32.mrf.mxu0
      %v2385 = vadd.f32 0.0, %v2384
      %v2386 = vpop.f32.mrf.mxu0
      %v2387 = vpop.f32.mrf.mxu0
      %v2388 = vadd.f32 0.0, %v2387
      %v2389 = vpop.f32.mrf.mxu0
      %2390 = vmatprep.mubr.bf16.mxu0 0
      %2391 = vmatmul.mubr.bf16.gmra.mxu0 %v2190
      %v2392 = vpop.f32.mrf.mxu0
      %v2393 = vadd.f32 0.0, %v2392
      %v2394 = vpop.f32.mrf.mxu0
      %v2395 = vpop.f32.mrf.mxu0
      %v2396 = vadd.f32 0.0, %v2395
      %v2397 = vpop.f32.mrf.mxu0
      %2398 = vmatprep.mubr.bf16.mxu0 0
      %2399 = vmatmul.mubr.bf16.gmra.mxu0 %v2192
      %v2400 = vpop.f32.mrf.mxu0
      %v2401 = vadd.f32 0.0, %v2400
      %v2402 = vpop.f32.mrf.mxu0
      %v2403 = vpop.f32.mrf.mxu0
      %v2404 = vadd.f32 0.0, %v2403
      %v2405 = vpop.f32.mrf.mxu0
      %2406 = vmatprep.mubr.bf16.mxu0 0
      %2407 = vmatmul.mubr.bf16.gmra.mxu0 %v2194
      %v2408 = vpop.f32.mrf.mxu0
      %v2409 = vadd.f32 0.0, %v2408
      %v2410 = vpop.f32.mrf.mxu0
      %v2411 = vpop.f32.mrf.mxu0
      %v2412 = vadd.f32 0.0, %v2411
      %v2413 = vpop.f32.mrf.mxu0
      %2414 = vmatprep.mubr.bf16.mxu0 0
      %2415 = vmatmul.mubr.bf16.gmra.mxu0 %v2196
      %v2416 = vpop.f32.mrf.mxu0
      %v2417 = vadd.f32 0.0, %v2416
      %v2418 = vpop.f32.mrf.mxu0
      %v2419 = vpop.f32.mrf.mxu0
      %v2420 = vadd.f32 0.0, %v2419
      %v2421 = vpop.f32.mrf.mxu0
      %2422 = vmatprep.mubr.bf16.mxu0 0
      %2423 = vmatmul.mubr.bf16.gmra.mxu0 %v2198
      %v2424 = vpop.f32.mrf.mxu0
      %v2425 = vadd.f32 0.0, %v2424
      %v2426 = vpop.f32.mrf.mxu0
      %v2427 = vpop.f32.mrf.mxu0
      %v2428 = vadd.f32 0.0, %v2427
      %v2429 = vpop.f32.mrf.mxu0
      %2430 = vmatprep.mubr.bf16.mxu0 0
      %2431 = vmatmul.mubr.bf16.gmra.mxu0 %v2200
      %v2432 = vpop.f32.mrf.mxu0
      %v2433 = vadd.f32 0.0, %v2432
      %v2434 = vpop.f32.mrf.mxu0
      %v2435 = vpop.f32.mrf.mxu0
      %v2436 = vadd.f32 0.0, %v2435
      %v2437 = vpop.f32.mrf.mxu0
      %2438 = vmatprep.mubr.bf16.mxu0 0
      %2439 = vmatmul.mubr.bf16.gmra.mxu0 %v2202
      %v2440 = vpop.f32.mrf.mxu0
      %v2441 = vadd.f32 0.0, %v2440
      %v2442 = vpop.f32.mrf.mxu0
      %v2443 = vpop.f32.mrf.mxu0
      %v2444 = vadd.f32 0.0, %v2443
      %v2445 = vpop.f32.mrf.mxu0
      %2446 = vmatprep.mubr.bf16.mxu0 0
      %2447 = vmatmul.mubr.bf16.gmra.mxu0 %v2204
      %v2448 = vpop.f32.mrf.mxu0
      %v2449 = vadd.f32 0.0, %v2448
      %v2450 = vpop.f32.mrf.mxu0
      %v2451 = vpop.f32.mrf.mxu0
      %v2452 = vadd.f32 0.0, %v2451
      %v2453 = vpop.f32.mrf.mxu0
      %2454 = vmatprep.mubr.bf16.mxu0 0
      %2455 = vmatmul.mubr.bf16.gmra.mxu0 %v2206
      %v2456 = vpop.f32.mrf.mxu0
      %v2457 = vadd.f32 0.0, %v2456
      %v2458 = vpop.f32.mrf.mxu0
      %v2459 = vpop.f32.mrf.mxu0
      %v2460 = vadd.f32 0.0, %v2459
      %v2461 = vpop.f32.mrf.mxu0
      %2462 = vmatprep.mubr.bf16.mxu0 0
      %2463 = vmatmul.mubr.bf16.gmra.mxu0 %v2208
      %v2464 = vpop.f32.mrf.mxu0
      %v2465 = vadd.f32 0.0, %v2464
      %v2466 = vpop.f32.mrf.mxu0
      %v2467 = vpop.f32.mrf.mxu0
      %v2468 = vadd.f32 0.0, %v2467
      %v2469 = vpop.f32.mrf.mxu0
      %2470 = vmatprep.mubr.bf16.mxu0 0
      %2471 = vmatmul.mubr.bf16.gmra.mxu0 %v2210
      %v2472 = vpop.f32.mrf.mxu0
      %v2473 = vadd.f32 0.0, %v2472
      %v2474 = vpop.f32.mrf.mxu0
      %v2475 = vpop.f32.mrf.mxu0
      %v2476 = vadd.f32 0.0, %v2475
      %v2477 = vpop.f32.mrf.mxu0
      %2478 = vmatprep.mubr.bf16.mxu0 0
      %2479 = vmatmul.mubr.bf16.gmra.mxu0 %v2212
      %v2480 = vpop.f32.mrf.mxu0
      %v2481 = vadd.f32 0.0, %v2480
      %v2482 = vpop.f32.mrf.mxu0
      %v2483 = vpop.f32.mrf.mxu0
      %v2484 = vadd.f32 0.0, %v2483
      %v2485 = vpop.f32.mrf.mxu0
      %2486 = vmatprep.mubr.bf16.mxu0 0
      %2487 = vmatmul.mubr.bf16.gmra.mxu0 %v2214
      %v2488 = vpop.f32.mrf.mxu0
      %v2489 = vadd.f32 0.0, %v2488
      %v2490 = vpop.f32.mrf.mxu0
      %v2491 = vpop.f32.mrf.mxu0
      %v2492 = vadd.f32 0.0, %v2491
      %v2493 = vpop.f32.mrf.mxu0
      %2494 = vmatprep.mubr.bf16.mxu0 0
      %2495 = vmatmul.mubr.bf16.gmra.mxu0 %v2213
      %v2496 = vpop.f32.mrf.mxu0
      %v2497 = vadd.f32 0.0, %v2496
      %v2498 = vpop.f32.mrf.mxu0
      %v2499 = vpop.f32.mrf.mxu0
      %v2500 = vpop.f32.mrf.mxu0
      %2501 = vdwg.mxu0
      %v2502 = vadd.f32 %v1967, %v2321
      %v2503 = vadd.f32 %v1970, %v2324
      %v2504 = vadd.f32 %v1975, %v2329
      %v2505 = vadd.f32 %v1978, %v2332
      %v2506 = vadd.f32 %v1983, %v2337
      %v2507 = vadd.f32 %v1986, %v2340
      %v2508 = vadd.f32 %v1991, %v2345
      %v2509 = vadd.f32 %v1994, %v2348
      %v2510 = vadd.f32 %v1999, %v2353
      %v2511 = vadd.f32 %v2002, %v2356
      %v2512 = vadd.f32 %v2007, %v2361
      %v2513 = vadd.f32 %v2010, %v2364
      %v2514 = vadd.f32 %v2015, %v2369
      %v2515 = vadd.f32 %v2018, %v2372
      %v2516 = vadd.f32 %v2023, %v2377
      %v2517 = vadd.f32 %v2026, %v2380
      %v2518 = vadd.f32 %v2031, %v2385
      %v2519 = vadd.f32 %v2034, %v2388
      %v2520 = vadd.f32 %v2039, %v2393
      %v2521 = vadd.f32 %v2042, %v2396
      %v2522 = vadd.f32 %v2047, %v2401
      %v2523 = vadd.f32 %v2050, %v2404
      %v2524 = vadd.f32 %v2055, %v2409
      %v2525 = vadd.f32 %v2058, %v2412
      %v2526 = vadd.f32 %v2063, %v2417
      %v2527 = vadd.f32 %v2066, %v2420
      %v2528 = vadd.f32 %v2071, %v2425
      %v2529 = vadd.f32 %v2074, %v2428
      %v2530 = vadd.f32 %v2079, %v2433
      %v2531 = vadd.f32 %v2082, %v2436
      %v2532 = vadd.f32 %v2087, %v2441
      %v2533 = vadd.f32 %v2090, %v2444
      %v2534 = vadd.f32 %v2095, %v2449
      %v2535 = vadd.f32 %v2098, %v2452
      %v2536 = vadd.f32 %v2103, %v2457
      %v2537 = vadd.f32 %v2106, %v2460
      %v2538 = vadd.f32 %v2111, %v2465
      %v2539 = vadd.f32 %v2114, %v2468
      %v2540 = vadd.f32 %v2119, %v2473
      %v2541 = vadd.f32 %v2122, %v2476
      %v2542 = vadd.f32 %v2127, %v2481
      %v2543 = vadd.f32 %v2130, %v2484
      %v2544 = vadd.f32 %v2135, %v2489
      %v2545 = vadd.f32 %v2138, %v2492
      %v2546 = vadd.f32 %v2143, %v2497
      %v2547 = vld [vmem:[#allocation2 + $0x8] sm:$0xc]
      %v2548 = vld [vmem:[#allocation2 + $0xc] sm:$0xf]
      %v2549 = vld [vmem:[#allocation2 + $0x10] sm:$0xf]
      %v2550 = vld [vmem:[#allocation2 + $0x14] sm:$0xf]
      %v2551 = vld [vmem:[#allocation2 + $0x18] sm:$0xf]
      %v2552 = vld [vmem:[#allocation2 + $0x1c] sm:$0xf]
      %v2553 = vld [vmem:[#allocation2 + $0x20] sm:$0xf]
      %v2554 = vld [vmem:[#allocation2 + $0x24] sm:$0xf]
      %v2555 = vld [vmem:[#allocation2 + $0x28] sm:$0xf]
      %v2556 = vld [vmem:[#allocation2 + $0x2c] sm:$0xf]
      %v2557 = vld [vmem:[#allocation2 + $0x30] sm:$0xf]
      %v2558 = vld [vmem:[#allocation2 + $0x34] sm:$0xf]
      %v2559 = vld [vmem:[#allocation2 + $0x38] sm:$0xf]
      %v2560 = vld [vmem:[#allocation2 + $0x3c] sm:$0xf]
      %v2561 = vld [vmem:[#allocation2 + $0x40] sm:$0xf]
      %v2562 = vld [vmem:[#allocation2 + $0x44] sm:$0xf]
      %v2563 = vld [vmem:[#allocation2 + $0x48] sm:$0xf]
      %v2564 = vld [vmem:[#allocation2 + $0x4c] sm:$0xf]
      %v2565 = vld [vmem:[#allocation2 + $0x50] sm:$0xf]
      %v2566 = vld [vmem:[#allocation2 + $0x54] sm:$0xf]
      %v2567 = vld [vmem:[#allocation2 + $0x58] sm:$0xf]
      %v2568 = vld [vmem:[#allocation2 + $0x5c] sm:$0xf]
      %v2569 = vld [vmem:[#allocation2 + $0x60] sm:$0xf]
      %v2570 = vld [vmem:[#allocation2 + $0x64] sm:$0xf]
      %v2571 = vld [vmem:[#allocation2 + $0x68] sm:$0xf]
      %v2572 = vld [vmem:[#allocation2 + $0x6c] sm:$0xf]
      %v2573 = vld [vmem:[#allocation2 + $0x70] sm:$0xf]
      %v2574 = vld [vmem:[#allocation2 + $0x74] sm:$0xf]
      %v2575 = vld [vmem:[#allocation2 + $0x78] sm:$0xf]
      %v2576 = vld [vmem:[#allocation2 + $0x7c] sm:$0xf]
      %v2577 = vld [vmem:[#allocation2 + $0x80] sm:$0xf]
      %v2578 = vld [vmem:[#allocation2 + $0x84] sm:$0xf]
      %v2579 = vld [vmem:[#allocation2 + $0x88] sm:$0xf]
      %v2580 = vld [vmem:[#allocation2 + $0x8c] sm:$0xf]
      %v2581 = vld [vmem:[#allocation2 + $0x90] sm:$0xf]
      %v2582 = vld [vmem:[#allocation2 + $0x94] sm:$0xf]
      %v2583 = vld [vmem:[#allocation2 + $0x98] sm:$0xf]
      %v2584 = vld [vmem:[#allocation2 + $0x9c] sm:$0xf]
      %v2585 = vld [vmem:[#allocation2 + $0xa0] sm:$0xf]
      %v2586 = vld [vmem:[#allocation2 + $0xa4] sm:$0xf]
      %v2587 = vld [vmem:[#allocation2 + $0xa8] sm:$0xf]
      %v2588 = vld [vmem:[#allocation2 + $0xac] sm:$0xf]
      %v2589 = vld [vmem:[#allocation2 + $0xb0] sm:$0xf]
      %v2590 = vld [vmem:[#allocation2 + $0xb4] sm:$0xf]
      %v2591 = vld [vmem:[#allocation2 + $0xb8] sm:$0xf]
      %v2592 = vld [vmem:[#allocation2 + $0xbc] sm:$0x3]
      %s2593 = scalar_lea.vmem %s3, 192
      %v2594 = vld [vmem:[%s2593] sm:$0xf]
      %v2595 = vld [vmem:[%s2593 + $0x4] sm:$0xf]
      %v2596 = vld [vmem:[%s2593 + $0x8] sm:$0xf]
      %v2597 = vld [vmem:[%s2593 + $0xc] sm:$0xf]
      %v2598 = vld [vmem:[%s2593 + $0x10] sm:$0xf]
      %v2599 = vld [vmem:[%s2593 + $0x14] sm:$0xf]
      %v2600 = vld [vmem:[%s2593 + $0x18] sm:$0xf]
      %v2601 = vld [vmem:[%s2593 + $0x1c] sm:$0xf]
      %v2602 = vld [vmem:[%s2593 + $0x20] sm:$0xf]
      %v2603 = vld [vmem:[%s2593 + $0x24] sm:$0xf]
      %v2604 = vld [vmem:[%s2593 + $0x28] sm:$0xf]
      %v2605 = vld [vmem:[%s2593 + $0x2c] sm:$0xf]
      %v2606 = vld [vmem:[%s2593 + $0x30] sm:$0xf]
      %v2607 = vld [vmem:[%s2593 + $0x34] sm:$0xf]
      %v2608 = vld [vmem:[%s2593 + $0x38] sm:$0xf]
      %v2609 = vld [vmem:[%s2593 + $0x3c] sm:$0xf]
      %v2656 = vunpack.c.l.b16 %v2547
      %v2657 = vunpack.c.l.b16 %v2548
      %v2658 = vunpack.c.l.b16 %v2549
      %v2659 = vunpack.c.l.b16 %v2550
      %v2660 = vunpack.c.l.b16 %v2551
      %v2661 = vunpack.c.l.b16 %v2552
      %v2662 = vunpack.c.l.b16 %v2553
      %v2663 = vunpack.c.l.b16 %v2554
      %v2664 = vunpack.c.l.b16 %v2555
      %v2665 = vunpack.c.l.b16 %v2556
      %v2666 = vunpack.c.l.b16 %v2557
      %v2667 = vunpack.c.l.b16 %v2558
      %v2668 = vunpack.c.l.b16 %v2559
      %v2669 = vunpack.c.l.b16 %v2560
      %v2670 = vunpack.c.l.b16 %v2561
      %v2671 = vunpack.c.l.b16 %v2562
      %v2672 = vunpack.c.l.b16 %v2563
      %v2673 = vunpack.c.l.b16 %v2564
      %v2674 = vunpack.c.l.b16 %v2565
      %v2675 = vunpack.c.l.b16 %v2566
      %v2676 = vunpack.c.l.b16 %v2567
      %v2677 = vunpack.c.l.b16 %v2568
      %v2678 = vunpack.c.l.b16 %v2569
      %v2679 = vunpack.c.l.b16 %v2570
      %v2680 = vunpack.c.l.b16 %v2571
      %v2681 = vunpack.c.l.b16 %v2572
      %v2682 = vunpack.c.l.b16 %v2573
      %v2683 = vunpack.c.l.b16 %v2574
      %v2684 = vunpack.c.l.b16 %v2575
      %v2685 = vunpack.c.l.b16 %v2576
      %v2686 = vunpack.c.l.b16 %v2577
      %v2687 = vunpack.c.l.b16 %v2578
      %v2688 = vunpack.c.l.b16 %v2579
      %v2689 = vunpack.c.l.b16 %v2580
      %v2690 = vunpack.c.l.b16 %v2581
      %v2691 = vunpack.c.l.b16 %v2582
      %v2692 = vunpack.c.l.b16 %v2583
      %v2693 = vunpack.c.l.b16 %v2584
      %v2694 = vunpack.c.l.b16 %v2585
      %v2695 = vunpack.c.l.b16 %v2586
      %v2696 = vunpack.c.l.b16 %v2587
      %v2697 = vunpack.c.l.b16 %v2588
      %v2698 = vunpack.c.l.b16 %v2589
      %v2699 = vunpack.c.l.b16 %v2590
      %v2700 = vunpack.c.l.b16 %v2591
      %v2701 = vunpack.c.l.b16 %v2592
      %v2702 = vpack.c.b16 %v2657, %v2656
      %v2703 = vpack.c.b16 %v2659, %v2658
      %v2704 = vpack.c.b16 %v2661, %v2660
      %v2705 = vpack.c.b16 %v2663, %v2662
      %v2706 = vpack.c.b16 %v2665, %v2664
      %v2707 = vpack.c.b16 %v2667, %v2666
      %v2708 = vpack.c.b16 %v2669, %v2668
      %v2709 = vpack.c.b16 %v2671, %v2670
      %v2710 = vpack.c.b16 %v2673, %v2672
      %v2711 = vpack.c.b16 %v2675, %v2674
      %v2712 = vpack.c.b16 %v2677, %v2676
      %v2713 = vpack.c.b16 %v2679, %v2678
      %v2714 = vpack.c.b16 %v2681, %v2680
      %v2715 = vpack.c.b16 %v2683, %v2682
      %v2716 = vpack.c.b16 %v2685, %v2684
      %v2717 = vpack.c.b16 %v2687, %v2686
      %v2718 = vpack.c.b16 %v2689, %v2688
      %v2719 = vpack.c.b16 %v2691, %v2690
      %v2720 = vpack.c.b16 %v2693, %v2692
      %v2721 = vpack.c.b16 %v2695, %v2694
      %v2722 = vpack.c.b16 %v2697, %v2696
      %v2723 = vpack.c.b16 %v2699, %v2698
      %v2724 = vpack.c.b16 %v2701, %v2700
      %vm2725 = vcmask 1045504
      %v2726 = vrot.slane %v2702, 2
      %v2727 = vrot.slane %v2703, 2
      %v2728 = vsel %vm2725, %v2726, %v2727
      %v2729 = vrot.slane %v2704, 2
      %v2730 = vsel %vm2725, %v2727, %v2729
      %v2731 = vrot.slane %v2705, 2
      %v2732 = vsel %vm2725, %v2729, %v2731
      %v2733 = vrot.slane %v2706, 2
      %v2734 = vsel %vm2725, %v2731, %v2733
      %v2735 = vrot.slane %v2707, 2
      %v2736 = vsel %vm2725, %v2733, %v2735
      %v2737 = vrot.slane %v2708, 2
      %v2738 = vsel %vm2725, %v2735, %v2737
      %v2739 = vrot.slane %v2709, 2
      %v2740 = vsel %vm2725, %v2737, %v2739
      %v2741 = vrot.slane %v2710, 2
      %v2742 = vsel %vm2725, %v2739, %v2741
      %v2743 = vrot.slane %v2711, 2
      %v2744 = vsel %vm2725, %v2741, %v2743
      %v2745 = vrot.slane %v2712, 2
      %v2746 = vsel %vm2725, %v2743, %v2745
      %v2747 = vrot.slane %v2713, 2
      %v2748 = vsel %vm2725, %v2745, %v2747
      %v2749 = vrot.slane %v2714, 2
      %v2750 = vsel %vm2725, %v2747, %v2749
      %v2751 = vrot.slane %v2715, 2
      %v2752 = vsel %vm2725, %v2749, %v2751
      %v2753 = vrot.slane %v2716, 2
      %v2754 = vsel %vm2725, %v2751, %v2753
      %v2755 = vrot.slane %v2717, 2
      %v2756 = vsel %vm2725, %v2753, %v2755
      %v2757 = vrot.slane %v2718, 2
      %v2758 = vsel %vm2725, %v2755, %v2757
      %v2759 = vrot.slane %v2719, 2
      %v2760 = vsel %vm2725, %v2757, %v2759
      %v2761 = vrot.slane %v2720, 2
      %v2762 = vsel %vm2725, %v2759, %v2761
      %v2763 = vrot.slane %v2721, 2
      %v2764 = vsel %vm2725, %v2761, %v2763
      %v2765 = vrot.slane %v2722, 2
      %v2766 = vsel %vm2725, %v2763, %v2765
      %v2767 = vrot.slane %v2723, 2
      %v2768 = vsel %vm2725, %v2765, %v2767
      %v2769 = vrot.slane %v2724, 2
      %v2770 = vsel %vm2725, %v2767, %v2769
      %v2810 = vunpack.c.l.b16 %v2594
      %v2811 = vunpack.c.l.b16 %v2595
      %v2812 = vunpack.c.l.b16 %v2596
      %v2813 = vunpack.c.l.b16 %v2597
      %v2814 = vunpack.c.l.b16 %v2598
      %v2815 = vunpack.c.l.b16 %v2599
      %v2816 = vunpack.c.l.b16 %v2600
      %v2817 = vunpack.c.l.b16 %v2601
      %v2818 = vunpack.c.l.b16 %v2602
      %v2819 = vunpack.c.l.b16 %v2603
      %v2820 = vunpack.c.l.b16 %v2604
      %v2821 = vunpack.c.l.b16 %v2605
      %v2822 = vunpack.c.l.b16 %v2606
      %v2823 = vunpack.c.l.b16 %v2607
      %v2824 = vunpack.c.l.b16 %v2608
      %v2825 = vunpack.c.l.b16 %v2609
      %v2826 = vpack.c.b16 %v2811, %v2810
      %v2827 = vpack.c.b16 %v2813, %v2812
      %v2828 = vpack.c.b16 %v2815, %v2814
      %v2829 = vpack.c.b16 %v2817, %v2816
      %v2830 = vpack.c.b16 %v2819, %v2818
      %v2831 = vpack.c.b16 %v2821, %v2820
      %v2832 = vpack.c.b16 %v2823, %v2822
      %v2833 = vpack.c.b16 %v2825, %v2824
      %2842 = vmatprep.subr.bf16.mxu0 0
      %2843 = vmatpush1.bf16.msra.mxu0 %v2833
      %2844 = vmatprep.subr.bf16.mxu0 0
      %2845 = vmatpush1.bf16.msra.mxu0 %v2832
      %2846 = vmatprep.subr.bf16.mxu0 0
      %2847 = vmatpush1.bf16.msra.mxu0 %v2831
      %2848 = vmatprep.subr.bf16.mxu0 0
      %2849 = vmatpush1.bf16.msra.mxu0 %v2830
      %2850 = vmatprep.subr.bf16.mxu0 0
      %2851 = vmatpush1.bf16.msra.mxu0 %v2829
      %2852 = vmatprep.subr.bf16.mxu0 0
      %2853 = vmatpush1.bf16.msra.mxu0 %v2828
      %2854 = vmatprep.subr.bf16.mxu0 0
      %2855 = vmatpush1.bf16.msra.mxu0 %v2827
      %2856 = vmatprep.subr.bf16.mxu0 0
      %2857 = vmatpush1.bf16.msra.mxu0 %v2826
      %2858 = vmatprep.subr.bf16.mxu0 0
      %2859 = vmatpush2.bf16.msra.mxu0 0
      %2860 = vmatprep.subr.bf16.mxu0 0
      %2861 = vmatpush2.bf16.msra.mxu0 0
      %2862 = vmatprep.subr.bf16.mxu0 0
      %2863 = vmatpush2.bf16.msra.mxu0 0
      %2864 = vmatprep.subr.bf16.mxu0 0
      %2865 = vmatpush2.bf16.msra.mxu0 0
      %2866 = vmatprep.subr.bf16.mxu0 0
      %2867 = vmatpush2.bf16.msra.mxu0 0
      %2868 = vmatprep.subr.bf16.mxu0 0
      %2869 = vmatpush2.bf16.msra.mxu0 0
      %2870 = vmatprep.subr.bf16.mxu0 0
      %2871 = vmatpush2.bf16.msra.mxu0 0
      %2872 = vmatprep.subr.bf16.mxu0 0
      %2873 = vmatpush2.bf16.msra.mxu0 0
      %2874 = vmatprep.mubr.bf16.mxu0 0
      %2875 = vmatmul.mubr.bf16.gmra.mxu0 %v2728
      %v2876 = vpop.f32.mrf.mxu0
      %v2877 = vadd.f32 0.0, %v2876
      %v2878 = vpop.f32.mrf.mxu0
      %v2879 = vpop.f32.mrf.mxu0
      %v2880 = vadd.f32 0.0, %v2879
      %v2881 = vpop.f32.mrf.mxu0
      %2882 = vmatprep.mubr.bf16.mxu0 0
      %2883 = vmatmul.mubr.bf16.gmra.mxu0 %v2730
      %v2884 = vpop.f32.mrf.mxu0
      %v2885 = vadd.f32 0.0, %v2884
      %v2886 = vpop.f32.mrf.mxu0
      %v2887 = vpop.f32.mrf.mxu0
      %v2888 = vadd.f32 0.0, %v2887
      %v2889 = vpop.f32.mrf.mxu0
      %2890 = vmatprep.mubr.bf16.mxu0 0
      %2891 = vmatmul.mubr.bf16.gmra.mxu0 %v2732
      %v2892 = vpop.f32.mrf.mxu0
      %v2893 = vadd.f32 0.0, %v2892
      %v2894 = vpop.f32.mrf.mxu0
      %v2895 = vpop.f32.mrf.mxu0
      %v2896 = vadd.f32 0.0, %v2895
      %v2897 = vpop.f32.mrf.mxu0
      %2898 = vmatprep.mubr.bf16.mxu0 0
      %2899 = vmatmul.mubr.bf16.gmra.mxu0 %v2734
      %v2900 = vpop.f32.mrf.mxu0
      %v2901 = vadd.f32 0.0, %v2900
      %v2902 = vpop.f32.mrf.mxu0
      %v2903 = vpop.f32.mrf.mxu0
      %v2904 = vadd.f32 0.0, %v2903
      %v2905 = vpop.f32.mrf.mxu0
      %2906 = vmatprep.mubr.bf16.mxu0 0
      %2907 = vmatmul.mubr.bf16.gmra.mxu0 %v2736
      %v2908 = vpop.f32.mrf.mxu0
      %v2909 = vadd.f32 0.0, %v2908
      %v2910 = vpop.f32.mrf.mxu0
      %v2911 = vpop.f32.mrf.mxu0
      %v2912 = vadd.f32 0.0, %v2911
      %v2913 = vpop.f32.mrf.mxu0
      %2914 = vmatprep.mubr.bf16.mxu0 0
      %2915 = vmatmul.mubr.bf16.gmra.mxu0 %v2738
      %v2916 = vpop.f32.mrf.mxu0
      %v2917 = vadd.f32 0.0, %v2916
      %v2918 = vpop.f32.mrf.mxu0
      %v2919 = vpop.f32.mrf.mxu0
      %v2920 = vadd.f32 0.0, %v2919
      %v2921 = vpop.f32.mrf.mxu0
      %2922 = vmatprep.mubr.bf16.mxu0 0
      %2923 = vmatmul.mubr.bf16.gmra.mxu0 %v2740
      %v2924 = vpop.f32.mrf.mxu0
      %v2925 = vadd.f32 0.0, %v2924
      %v2926 = vpop.f32.mrf.mxu0
      %v2927 = vpop.f32.mrf.mxu0
      %v2928 = vadd.f32 0.0, %v2927
      %v2929 = vpop.f32.mrf.mxu0
      %2930 = vmatprep.mubr.bf16.mxu0 0
      %2931 = vmatmul.mubr.bf16.gmra.mxu0 %v2742
      %v2932 = vpop.f32.mrf.mxu0
      %v2933 = vadd.f32 0.0, %v2932
      %v2934 = vpop.f32.mrf.mxu0
      %v2935 = vpop.f32.mrf.mxu0
      %v2936 = vadd.f32 0.0, %v2935
      %v2937 = vpop.f32.mrf.mxu0
      %2938 = vmatprep.mubr.bf16.mxu0 0
      %2939 = vmatmul.mubr.bf16.gmra.mxu0 %v2744
      %v2940 = vpop.f32.mrf.mxu0
      %v2941 = vadd.f32 0.0, %v2940
      %v2942 = vpop.f32.mrf.mxu0
      %v2943 = vpop.f32.mrf.mxu0
      %v2944 = vadd.f32 0.0, %v2943
      %v2945 = vpop.f32.mrf.mxu0
      %2946 = vmatprep.mubr.bf16.mxu0 0
      %2947 = vmatmul.mubr.bf16.gmra.mxu0 %v2746
      %v2948 = vpop.f32.mrf.mxu0
      %v2949 = vadd.f32 0.0, %v2948
      %v2950 = vpop.f32.mrf.mxu0
      %v2951 = vpop.f32.mrf.mxu0
      %v2952 = vadd.f32 0.0, %v2951
      %v2953 = vpop.f32.mrf.mxu0
      %2954 = vmatprep.mubr.bf16.mxu0 0
      %2955 = vmatmul.mubr.bf16.gmra.mxu0 %v2748
      %v2956 = vpop.f32.mrf.mxu0
      %v2957 = vadd.f32 0.0, %v2956
      %v2958 = vpop.f32.mrf.mxu0
      %v2959 = vpop.f32.mrf.mxu0
      %v2960 = vadd.f32 0.0, %v2959
      %v2961 = vpop.f32.mrf.mxu0
      %2962 = vmatprep.mubr.bf16.mxu0 0
      %2963 = vmatmul.mubr.bf16.gmra.mxu0 %v2750
      %v2964 = vpop.f32.mrf.mxu0
      %v2965 = vadd.f32 0.0, %v2964
      %v2966 = vpop.f32.mrf.mxu0
      %v2967 = vpop.f32.mrf.mxu0
      %v2968 = vadd.f32 0.0, %v2967
      %v2969 = vpop.f32.mrf.mxu0
      %2970 = vmatprep.mubr.bf16.mxu0 0
      %2971 = vmatmul.mubr.bf16.gmra.mxu0 %v2752
      %v2972 = vpop.f32.mrf.mxu0
      %v2973 = vadd.f32 0.0, %v2972
      %v2974 = vpop.f32.mrf.mxu0
      %v2975 = vpop.f32.mrf.mxu0
      %v2976 = vadd.f32 0.0, %v2975
      %v2977 = vpop.f32.mrf.mxu0
      %2978 = vmatprep.mubr.bf16.mxu0 0
      %2979 = vmatmul.mubr.bf16.gmra.mxu0 %v2754
      %v2980 = vpop.f32.mrf.mxu0
      %v2981 = vadd.f32 0.0, %v2980
      %v2982 = vpop.f32.mrf.mxu0
      %v2983 = vpop.f32.mrf.mxu0
      %v2984 = vadd.f32 0.0, %v2983
      %v2985 = vpop.f32.mrf.mxu0
      %2986 = vmatprep.mubr.bf16.mxu0 0
      %2987 = vmatmul.mubr.bf16.gmra.mxu0 %v2756
      %v2988 = vpop.f32.mrf.mxu0
      %v2989 = vadd.f32 0.0, %v2988
      %v2990 = vpop.f32.mrf.mxu0
      %v2991 = vpop.f32.mrf.mxu0
      %v2992 = vadd.f32 0.0, %v2991
      %v2993 = vpop.f32.mrf.mxu0
      %2994 = vmatprep.mubr.bf16.mxu0 0
      %2995 = vmatmul.mubr.bf16.gmra.mxu0 %v2758
      %v2996 = vpop.f32.mrf.mxu0
      %v2997 = vadd.f32 0.0, %v2996
      %v2998 = vpop.f32.mrf.mxu0
      %v2999 = vpop.f32.mrf.mxu0
      %v3000 = vadd.f32 0.0, %v2999
      %v3001 = vpop.f32.mrf.mxu0
      %3002 = vmatprep.mubr.bf16.mxu0 0
      %3003 = vmatmul.mubr.bf16.gmra.mxu0 %v2760
      %v3004 = vpop.f32.mrf.mxu0
      %v3005 = vadd.f32 0.0, %v3004
      %v3006 = vpop.f32.mrf.mxu0
      %v3007 = vpop.f32.mrf.mxu0
      %v3008 = vadd.f32 0.0, %v3007
      %v3009 = vpop.f32.mrf.mxu0
      %3010 = vmatprep.mubr.bf16.mxu0 0
      %3011 = vmatmul.mubr.bf16.gmra.mxu0 %v2762
      %v3012 = vpop.f32.mrf.mxu0
      %v3013 = vadd.f32 0.0, %v3012
      %v3014 = vpop.f32.mrf.mxu0
      %v3015 = vpop.f32.mrf.mxu0
      %v3016 = vadd.f32 0.0, %v3015
      %v3017 = vpop.f32.mrf.mxu0
      %3018 = vmatprep.mubr.bf16.mxu0 0
      %3019 = vmatmul.mubr.bf16.gmra.mxu0 %v2764
      %v3020 = vpop.f32.mrf.mxu0
      %v3021 = vadd.f32 0.0, %v3020
      %v3022 = vpop.f32.mrf.mxu0
      %v3023 = vpop.f32.mrf.mxu0
      %v3024 = vadd.f32 0.0, %v3023
      %v3025 = vpop.f32.mrf.mxu0
      %3026 = vmatprep.mubr.bf16.mxu0 0
      %3027 = vmatmul.mubr.bf16.gmra.mxu0 %v2766
      %v3028 = vpop.f32.mrf.mxu0
      %v3029 = vadd.f32 0.0, %v3028
      %v3030 = vpop.f32.mrf.mxu0
      %v3031 = vpop.f32.mrf.mxu0
      %v3032 = vadd.f32 0.0, %v3031
      %v3033 = vpop.f32.mrf.mxu0
      %3034 = vmatprep.mubr.bf16.mxu0 0
      %3035 = vmatmul.mubr.bf16.gmra.mxu0 %v2768
      %v3036 = vpop.f32.mrf.mxu0
      %v3037 = vadd.f32 0.0, %v3036
      %v3038 = vpop.f32.mrf.mxu0
      %v3039 = vpop.f32.mrf.mxu0
      %v3040 = vadd.f32 0.0, %v3039
      %v3041 = vpop.f32.mrf.mxu0
      %3042 = vmatprep.mubr.bf16.mxu0 0
      %3043 = vmatmul.mubr.bf16.gmra.mxu0 %v2770
      %v3044 = vpop.f32.mrf.mxu0
      %v3045 = vadd.f32 0.0, %v3044
      %v3046 = vpop.f32.mrf.mxu0
      %v3047 = vpop.f32.mrf.mxu0
      %v3048 = vadd.f32 0.0, %v3047
      %v3049 = vpop.f32.mrf.mxu0
      %3050 = vmatprep.mubr.bf16.mxu0 0
      %3051 = vmatmul.mubr.bf16.gmra.mxu0 %v2769
      %v3052 = vpop.f32.mrf.mxu0
      %v3053 = vadd.f32 0.0, %v3052
      %v3054 = vpop.f32.mrf.mxu0
      %v3055 = vpop.f32.mrf.mxu0
      %v3056 = vpop.f32.mrf.mxu0
      %3057 = vdwg.mxu0
      %v3058 = vadd.f32 %v2502, %v2877
      %v3059 = vadd.f32 %v2503, %v2880
      %v3060 = vadd.f32 %v2504, %v2885
      %v3061 = vadd.f32 %v2505, %v2888
      %v3062 = vadd.f32 %v2506, %v2893
      %v3063 = vadd.f32 %v2507, %v2896
      %v3064 = vadd.f32 %v2508, %v2901
      %v3065 = vadd.f32 %v2509, %v2904
      %v3066 = vadd.f32 %v2510, %v2909
      %v3067 = vadd.f32 %v2511, %v2912
      %v3068 = vadd.f32 %v2512, %v2917
      %v3069 = vadd.f32 %v2513, %v2920
      %v3070 = vadd.f32 %v2514, %v2925
      %v3071 = vadd.f32 %v2515, %v2928
      %v3072 = vadd.f32 %v2516, %v2933
      %v3073 = vadd.f32 %v2517, %v2936
      %v3074 = vadd.f32 %v2518, %v2941
      %v3075 = vadd.f32 %v2519, %v2944
      %v3076 = vadd.f32 %v2520, %v2949
      %v3077 = vadd.f32 %v2521, %v2952
      %v3078 = vadd.f32 %v2522, %v2957
      %v3079 = vadd.f32 %v2523, %v2960
      %v3080 = vadd.f32 %v2524, %v2965
      %v3081 = vadd.f32 %v2525, %v2968
      %v3082 = vadd.f32 %v2526, %v2973
      %v3083 = vadd.f32 %v2527, %v2976
      %v3084 = vadd.f32 %v2528, %v2981
      %v3085 = vadd.f32 %v2529, %v2984
      %v3086 = vadd.f32 %v2530, %v2989
      %v3087 = vadd.f32 %v2531, %v2992
      %v3088 = vadd.f32 %v2532, %v2997
      %v3089 = vadd.f32 %v2533, %v3000
      %v3090 = vadd.f32 %v2534, %v3005
      %v3091 = vadd.f32 %v2535, %v3008
      %v3092 = vadd.f32 %v2536, %v3013
      %v3093 = vadd.f32 %v2537, %v3016
      %v3094 = vadd.f32 %v2538, %v3021
      %v3095 = vadd.f32 %v2539, %v3024
      %v3096 = vadd.f32 %v2540, %v3029
      %v3097 = vadd.f32 %v2541, %v3032
      %v3098 = vadd.f32 %v2542, %v3037
      %v3099 = vadd.f32 %v2543, %v3040
      %v3100 = vadd.f32 %v2544, %v3045
      %v3101 = vadd.f32 %v2545, %v3048
      %v3102 = vadd.f32 %v2546, %v3053
      %v3103 = vld [vmem:[#allocation2 + $0xbc] sm:$0x7]
      %s3104 = scalar_lea.vmem %s3, 256
      %v3105 = vld [vmem:[%s3104] sm:$0xf]
      %v3106 = vld [vmem:[%s3104 + $0x4] sm:$0xf]
      %v3107 = vld [vmem:[%s3104 + $0x8] sm:$0xf]
      %v3108 = vld [vmem:[%s3104 + $0xc] sm:$0xf]
      %v3109 = vld [vmem:[%s3104 + $0x10] sm:$0xf]
      %v3110 = vld [vmem:[%s3104 + $0x14] sm:$0xf]
      %v3111 = vld [vmem:[%s3104 + $0x18] sm:$0xf]
      %v3112 = vld [vmem:[%s3104 + $0x1c] sm:$0xf]
      %v3113 = vld [vmem:[%s3104 + $0x20] sm:$0xf]
      %v3114 = vld [vmem:[%s3104 + $0x24] sm:$0xf]
      %v3115 = vld [vmem:[%s3104 + $0x28] sm:$0xf]
      %v3116 = vld [vmem:[%s3104 + $0x2c] sm:$0xf]
      %v3117 = vld [vmem:[%s3104 + $0x30] sm:$0xf]
      %v3118 = vld [vmem:[%s3104 + $0x34] sm:$0xf]
      %v3119 = vld [vmem:[%s3104 + $0x38] sm:$0xf]
      %v3120 = vld [vmem:[%s3104 + $0x3c] sm:$0xf]
      %v3122 = vunpack.c.l.b16 %v3103
      %v3123 = vpack.c.b16 %v3122, %v2700
      %vm3124 = vsmask.f32 5376
      %v3126 = vshrl.u32 %v2702, 16
      %v3128 = vrot.slane %v3126, 2
      %v3129 = vshll.u32 %v2702, 16
      %v3131 = vrot.slane %v3129, 3
      %v3132 = vor.u32 %v3128, %v3131
      %v3134 = vshrl.u32 %v2703, 16
      %v3136 = vrot.slane %v3134, 2
      %v3137 = vshll.u32 %v2703, 16
      %v3139 = vrot.slane %v3137, 3
      %v3140 = vor.u32 %v3136, %v3139
      %v3141 = vsel %vm3124, %v3132, %v3140
      %v3143 = vshrl.u32 %v2704, 16
      %v3145 = vrot.slane %v3143, 2
      %v3146 = vshll.u32 %v2704, 16
      %v3148 = vrot.slane %v3146, 3
      %v3149 = vor.u32 %v3145, %v3148
      %v3150 = vsel %vm3124, %v3140, %v3149
      %v3152 = vshrl.u32 %v2705, 16
      %v3154 = vrot.slane %v3152, 2
      %v3155 = vshll.u32 %v2705, 16
      %v3157 = vrot.slane %v3155, 3
      %v3158 = vor.u32 %v3154, %v3157
      %v3159 = vsel %vm3124, %v3149, %v3158
      %v3161 = vshrl.u32 %v2706, 16
      %v3163 = vrot.slane %v3161, 2
      %v3164 = vshll.u32 %v2706, 16
      %v3166 = vrot.slane %v3164, 3
      %v3167 = vor.u32 %v3163, %v3166
      %v3168 = vsel %vm3124, %v3158, %v3167
      %v3170 = vshrl.u32 %v2707, 16
      %v3172 = vrot.slane %v3170, 2
      %v3173 = vshll.u32 %v2707, 16
      %v3175 = vrot.slane %v3173, 3
      %v3176 = vor.u32 %v3172, %v3175
      %v3177 = vsel %vm3124, %v3167, %v3176
      %v3179 = vshrl.u32 %v2708, 16
      %v3181 = vrot.slane %v3179, 2
      %v3182 = vshll.u32 %v2708, 16
      %v3184 = vrot.slane %v3182, 3
      %v3185 = vor.u32 %v3181, %v3184
      %v3186 = vsel %vm3124, %v3176, %v3185
      %v3188 = vshrl.u32 %v2709, 16
      %v3190 = vrot.slane %v3188, 2
      %v3191 = vshll.u32 %v2709, 16
      %v3193 = vrot.slane %v3191, 3
      %v3194 = vor.u32 %v3190, %v3193
      %v3195 = vsel %vm3124, %v3185, %v3194
      %v3197 = vshrl.u32 %v2710, 16
      %v3199 = vrot.slane %v3197, 2
      %v3200 = vshll.u32 %v2710, 16
      %v3202 = vrot.slane %v3200, 3
      %v3203 = vor.u32 %v3199, %v3202
      %v3204 = vsel %vm3124, %v3194, %v3203
      %v3206 = vshrl.u32 %v2711, 16
      %v3208 = vrot.slane %v3206, 2
      %v3209 = vshll.u32 %v2711, 16
      %v3211 = vrot.slane %v3209, 3
      %v3212 = vor.u32 %v3208, %v3211
      %v3213 = vsel %vm3124, %v3203, %v3212
      %v3215 = vshrl.u32 %v2712, 16
      %v3217 = vrot.slane %v3215, 2
      %v3218 = vshll.u32 %v2712, 16
      %v3220 = vrot.slane %v3218, 3
      %v3221 = vor.u32 %v3217, %v3220
      %v3222 = vsel %vm3124, %v3212, %v3221
      %v3224 = vshrl.u32 %v2713, 16
      %v3226 = vrot.slane %v3224, 2
      %v3227 = vshll.u32 %v2713, 16
      %v3229 = vrot.slane %v3227, 3
      %v3230 = vor.u32 %v3226, %v3229
      %v3231 = vsel %vm3124, %v3221, %v3230
      %v3233 = vshrl.u32 %v2714, 16
      %v3235 = vrot.slane %v3233, 2
      %v3236 = vshll.u32 %v2714, 16
      %v3238 = vrot.slane %v3236, 3
      %v3239 = vor.u32 %v3235, %v3238
      %v3240 = vsel %vm3124, %v3230, %v3239
      %v3242 = vshrl.u32 %v2715, 16
      %v3244 = vrot.slane %v3242, 2
      %v3245 = vshll.u32 %v2715, 16
      %v3247 = vrot.slane %v3245, 3
      %v3248 = vor.u32 %v3244, %v3247
      %v3249 = vsel %vm3124, %v3239, %v3248
      %v3251 = vshrl.u32 %v2716, 16
      %v3253 = vrot.slane %v3251, 2
      %v3254 = vshll.u32 %v2716, 16
      %v3256 = vrot.slane %v3254, 3
      %v3257 = vor.u32 %v3253, %v3256
      %v3258 = vsel %vm3124, %v3248, %v3257
      %v3260 = vshrl.u32 %v2717, 16
      %v3262 = vrot.slane %v3260, 2
      %v3263 = vshll.u32 %v2717, 16
      %v3265 = vrot.slane %v3263, 3
      %v3266 = vor.u32 %v3262, %v3265
      %v3267 = vsel %vm3124, %v3257, %v3266
      %v3269 = vshrl.u32 %v2718, 16
      %v3271 = vrot.slane %v3269, 2
      %v3272 = vshll.u32 %v2718, 16
      %v3274 = vrot.slane %v3272, 3
      %v3275 = vor.u32 %v3271, %v3274
      %v3276 = vsel %vm3124, %v3266, %v3275
      %v3278 = vshrl.u32 %v2719, 16
      %v3280 = vrot.slane %v3278, 2
      %v3281 = vshll.u32 %v2719, 16
      %v3283 = vrot.slane %v3281, 3
      %v3284 = vor.u32 %v3280, %v3283
      %v3285 = vsel %vm3124, %v3275, %v3284
      %v3287 = vshrl.u32 %v2720, 16
      %v3289 = vrot.slane %v3287, 2
      %v3290 = vshll.u32 %v2720, 16
      %v3292 = vrot.slane %v3290, 3
      %v3293 = vor.u32 %v3289, %v3292
      %v3294 = vsel %vm3124, %v3284, %v3293
      %v3296 = vshrl.u32 %v2721, 16
      %v3298 = vrot.slane %v3296, 2
      %v3299 = vshll.u32 %v2721, 16
      %v3301 = vrot.slane %v3299, 3
      %v3302 = vor.u32 %v3298, %v3301
      %v3303 = vsel %vm3124, %v3293, %v3302
      %v3305 = vshrl.u32 %v2722, 16
      %v3307 = vrot.slane %v3305, 2
      %v3308 = vshll.u32 %v2722, 16
      %v3310 = vrot.slane %v3308, 3
      %v3311 = vor.u32 %v3307, %v3310
      %v3312 = vsel %vm3124, %v3302, %v3311
      %v3314 = vshrl.u32 %v2723, 16
      %v3316 = vrot.slane %v3314, 2
      %v3317 = vshll.u32 %v2723, 16
      %v3319 = vrot.slane %v3317, 3
      %v3320 = vor.u32 %v3316, %v3319
      %v3321 = vsel %vm3124, %v3311, %v3320
      %v3323 = vshrl.u32 %v3123, 16
      %v3325 = vrot.slane %v3323, 2
      %v3326 = vshll.u32 %v3123, 16
      %v3328 = vrot.slane %v3326, 3
      %v3329 = vor.u32 %v3325, %v3328
      %v3330 = vsel %vm3124, %v3320, %v3329
      %v3370 = vunpack.c.l.b16 %v3105
      %v3371 = vunpack.c.l.b16 %v3106
      %v3372 = vunpack.c.l.b16 %v3107
      %v3373 = vunpack.c.l.b16 %v3108
      %v3374 = vunpack.c.l.b16 %v3109
      %v3375 = vunpack.c.l.b16 %v3110
      %v3376 = vunpack.c.l.b16 %v3111
      %v3377 = vunpack.c.l.b16 %v3112
      %v3378 = vunpack.c.l.b16 %v3113
      %v3379 = vunpack.c.l.b16 %v3114
      %v3380 = vunpack.c.l.b16 %v3115
      %v3381 = vunpack.c.l.b16 %v3116
      %v3382 = vunpack.c.l.b16 %v3117
      %v3383 = vunpack.c.l.b16 %v3118
      %v3384 = vunpack.c.l.b16 %v3119
      %v3385 = vunpack.c.l.b16 %v3120
      %v3386 = vpack.c.b16 %v3371, %v3370
      %v3387 = vpack.c.b16 %v3373, %v3372
      %v3388 = vpack.c.b16 %v3375, %v3374
      %v3389 = vpack.c.b16 %v3377, %v3376
      %v3390 = vpack.c.b16 %v3379, %v3378
      %v3391 = vpack.c.b16 %v3381, %v3380
      %v3392 = vpack.c.b16 %v3383, %v3382
      %v3393 = vpack.c.b16 %v3385, %v3384
      %3402 = vmatprep.subr.bf16.mxu0 0
      %3403 = vmatpush1.bf16.msra.mxu0 %v3393
      %3404 = vmatprep.subr.bf16.mxu0 0
      %3405 = vmatpush1.bf16.msra.mxu0 %v3392
      %3406 = vmatprep.subr.bf16.mxu0 0
      %3407 = vmatpush1.bf16.msra.mxu0 %v3391
      %3408 = vmatprep.subr.bf16.mxu0 0
      %3409 = vmatpush1.bf16.msra.mxu0 %v3390
      %3410 = vmatprep.subr.bf16.mxu0 0
      %3411 = vmatpush1.bf16.msra.mxu0 %v3389
      %3412 = vmatprep.subr.bf16.mxu0 0
      %3413 = vmatpush1.bf16.msra.mxu0 %v3388
      %3414 = vmatprep.subr.bf16.mxu0 0
      %3415 = vmatpush1.bf16.msra.mxu0 %v3387
      %3416 = vmatprep.subr.bf16.mxu0 0
      %3417 = vmatpush1.bf16.msra.mxu0 %v3386
      %3418 = vmatprep.subr.bf16.mxu0 0
      %3419 = vmatpush2.bf16.msra.mxu0 0
      %3420 = vmatprep.subr.bf16.mxu0 0
      %3421 = vmatpush2.bf16.msra.mxu0 0
      %3422 = vmatprep.subr.bf16.mxu0 0
      %3423 = vmatpush2.bf16.msra.mxu0 0
      %3424 = vmatprep.subr.bf16.mxu0 0
      %3425 = vmatpush2.bf16.msra.mxu0 0
      %3426 = vmatprep.subr.bf16.mxu0 0
      %3427 = vmatpush2.bf16.msra.mxu0 0
      %3428 = vmatprep.subr.bf16.mxu0 0
      %3429 = vmatpush2.bf16.msra.mxu0 0
      %3430 = vmatprep.subr.bf16.mxu0 0
      %3431 = vmatpush2.bf16.msra.mxu0 0
      %3432 = vmatprep.subr.bf16.mxu0 0
      %3433 = vmatpush2.bf16.msra.mxu0 0
      %3434 = vmatprep.mubr.bf16.mxu0 0
      %3435 = vmatmul.mubr.bf16.gmra.mxu0 %v3141
      %v3436 = vpop.f32.mrf.mxu0
      %v3437 = vadd.f32 0.0, %v3436
      %v3438 = vpop.f32.mrf.mxu0
      %v3439 = vpop.f32.mrf.mxu0
      %v3440 = vadd.f32 0.0, %v3439
      %v3441 = vpop.f32.mrf.mxu0
      %3442 = vmatprep.mubr.bf16.mxu0 0
      %3443 = vmatmul.mubr.bf16.gmra.mxu0 %v3150
      %v3444 = vpop.f32.mrf.mxu0
      %v3445 = vadd.f32 0.0, %v3444
      %v3446 = vpop.f32.mrf.mxu0
      %v3447 = vpop.f32.mrf.mxu0
      %v3448 = vadd.f32 0.0, %v3447
      %v3449 = vpop.f32.mrf.mxu0
      %3450 = vmatprep.mubr.bf16.mxu0 0
      %3451 = vmatmul.mubr.bf16.gmra.mxu0 %v3159
      %v3452 = vpop.f32.mrf.mxu0
      %v3453 = vadd.f32 0.0, %v3452
      %v3454 = vpop.f32.mrf.mxu0
      %v3455 = vpop.f32.mrf.mxu0
      %v3456 = vadd.f32 0.0, %v3455
      %v3457 = vpop.f32.mrf.mxu0
      %3458 = vmatprep.mubr.bf16.mxu0 0
      %3459 = vmatmul.mubr.bf16.gmra.mxu0 %v3168
      %v3460 = vpop.f32.mrf.mxu0
      %v3461 = vadd.f32 0.0, %v3460
      %v3462 = vpop.f32.mrf.mxu0
      %v3463 = vpop.f32.mrf.mxu0
      %v3464 = vadd.f32 0.0, %v3463
      %v3465 = vpop.f32.mrf.mxu0
      %3466 = vmatprep.mubr.bf16.mxu0 0
      %3467 = vmatmul.mubr.bf16.gmra.mxu0 %v3177
      %v3468 = vpop.f32.mrf.mxu0
      %v3469 = vadd.f32 0.0, %v3468
      %v3470 = vpop.f32.mrf.mxu0
      %v3471 = vpop.f32.mrf.mxu0
      %v3472 = vadd.f32 0.0, %v3471
      %v3473 = vpop.f32.mrf.mxu0
      %3474 = vmatprep.mubr.bf16.mxu0 0
      %3475 = vmatmul.mubr.bf16.gmra.mxu0 %v3186
      %v3476 = vpop.f32.mrf.mxu0
      %v3477 = vadd.f32 0.0, %v3476
      %v3478 = vpop.f32.mrf.mxu0
      %v3479 = vpop.f32.mrf.mxu0
      %v3480 = vadd.f32 0.0, %v3479
      %v3481 = vpop.f32.mrf.mxu0
      %3482 = vmatprep.mubr.bf16.mxu0 0
      %3483 = vmatmul.mubr.bf16.gmra.mxu0 %v3195
      %v3484 = vpop.f32.mrf.mxu0
      %v3485 = vadd.f32 0.0, %v3484
      %v3486 = vpop.f32.mrf.mxu0
      %v3487 = vpop.f32.mrf.mxu0
      %v3488 = vadd.f32 0.0, %v3487
      %v3489 = vpop.f32.mrf.mxu0
      %3490 = vmatprep.mubr.bf16.mxu0 0
      %3491 = vmatmul.mubr.bf16.gmra.mxu0 %v3204
      %v3492 = vpop.f32.mrf.mxu0
      %v3493 = vadd.f32 0.0, %v3492
      %v3494 = vpop.f32.mrf.mxu0
      %v3495 = vpop.f32.mrf.mxu0
      %v3496 = vadd.f32 0.0, %v3495
      %v3497 = vpop.f32.mrf.mxu0
      %3498 = vmatprep.mubr.bf16.mxu0 0
      %3499 = vmatmul.mubr.bf16.gmra.mxu0 %v3213
      %v3500 = vpop.f32.mrf.mxu0
      %v3501 = vadd.f32 0.0, %v3500
      %v3502 = vpop.f32.mrf.mxu0
      %v3503 = vpop.f32.mrf.mxu0
      %v3504 = vadd.f32 0.0, %v3503
      %v3505 = vpop.f32.mrf.mxu0
      %3506 = vmatprep.mubr.bf16.mxu0 0
      %3507 = vmatmul.mubr.bf16.gmra.mxu0 %v3222
      %v3508 = vpop.f32.mrf.mxu0
      %v3509 = vadd.f32 0.0, %v3508
      %v3510 = vpop.f32.mrf.mxu0
      %v3511 = vpop.f32.mrf.mxu0
      %v3512 = vadd.f32 0.0, %v3511
      %v3513 = vpop.f32.mrf.mxu0
      %3514 = vmatprep.mubr.bf16.mxu0 0
      %3515 = vmatmul.mubr.bf16.gmra.mxu0 %v3231
      %v3516 = vpop.f32.mrf.mxu0
      %v3517 = vadd.f32 0.0, %v3516
      %v3518 = vpop.f32.mrf.mxu0
      %v3519 = vpop.f32.mrf.mxu0
      %v3520 = vadd.f32 0.0, %v3519
      %v3521 = vpop.f32.mrf.mxu0
      %3522 = vmatprep.mubr.bf16.mxu0 0
      %3523 = vmatmul.mubr.bf16.gmra.mxu0 %v3240
      %v3524 = vpop.f32.mrf.mxu0
      %v3525 = vadd.f32 0.0, %v3524
      %v3526 = vpop.f32.mrf.mxu0
      %v3527 = vpop.f32.mrf.mxu0
      %v3528 = vadd.f32 0.0, %v3527
      %v3529 = vpop.f32.mrf.mxu0
      %3530 = vmatprep.mubr.bf16.mxu0 0
      %3531 = vmatmul.mubr.bf16.gmra.mxu0 %v3249
      %v3532 = vpop.f32.mrf.mxu0
      %v3533 = vadd.f32 0.0, %v3532
      %v3534 = vpop.f32.mrf.mxu0
      %v3535 = vpop.f32.mrf.mxu0
      %v3536 = vadd.f32 0.0, %v3535
      %v3537 = vpop.f32.mrf.mxu0
      %3538 = vmatprep.mubr.bf16.mxu0 0
      %3539 = vmatmul.mubr.bf16.gmra.mxu0 %v3258
      %v3540 = vpop.f32.mrf.mxu0
      %v3541 = vadd.f32 0.0, %v3540
      %v3542 = vpop.f32.mrf.mxu0
      %v3543 = vpop.f32.mrf.mxu0
      %v3544 = vadd.f32 0.0, %v3543
      %v3545 = vpop.f32.mrf.mxu0
      %3546 = vmatprep.mubr.bf16.mxu0 0
      %3547 = vmatmul.mubr.bf16.gmra.mxu0 %v3267
      %v3548 = vpop.f32.mrf.mxu0
      %v3549 = vadd.f32 0.0, %v3548
      %v3550 = vpop.f32.mrf.mxu0
      %v3551 = vpop.f32.mrf.mxu0
      %v3552 = vadd.f32 0.0, %v3551
      %v3553 = vpop.f32.mrf.mxu0
      %3554 = vmatprep.mubr.bf16.mxu0 0
      %3555 = vmatmul.mubr.bf16.gmra.mxu0 %v3276
      %v3556 = vpop.f32.mrf.mxu0
      %v3557 = vadd.f32 0.0, %v3556
      %v3558 = vpop.f32.mrf.mxu0
      %v3559 = vpop.f32.mrf.mxu0
      %v3560 = vadd.f32 0.0, %v3559
      %v3561 = vpop.f32.mrf.mxu0
      %3562 = vmatprep.mubr.bf16.mxu0 0
      %3563 = vmatmul.mubr.bf16.gmra.mxu0 %v3285
      %v3564 = vpop.f32.mrf.mxu0
      %v3565 = vadd.f32 0.0, %v3564
      %v3566 = vpop.f32.mrf.mxu0
      %v3567 = vpop.f32.mrf.mxu0
      %v3568 = vadd.f32 0.0, %v3567
      %v3569 = vpop.f32.mrf.mxu0
      %3570 = vmatprep.mubr.bf16.mxu0 0
      %3571 = vmatmul.mubr.bf16.gmra.mxu0 %v3294
      %v3572 = vpop.f32.mrf.mxu0
      %v3573 = vadd.f32 0.0, %v3572
      %v3574 = vpop.f32.mrf.mxu0
      %v3575 = vpop.f32.mrf.mxu0
      %v3576 = vadd.f32 0.0, %v3575
      %v3577 = vpop.f32.mrf.mxu0
      %3578 = vmatprep.mubr.bf16.mxu0 0
      %3579 = vmatmul.mubr.bf16.gmra.mxu0 %v3303
      %v3580 = vpop.f32.mrf.mxu0
      %v3581 = vadd.f32 0.0, %v3580
      %v3582 = vpop.f32.mrf.mxu0
      %v3583 = vpop.f32.mrf.mxu0
      %v3584 = vadd.f32 0.0, %v3583
      %v3585 = vpop.f32.mrf.mxu0
      %3586 = vmatprep.mubr.bf16.mxu0 0
      %3587 = vmatmul.mubr.bf16.gmra.mxu0 %v3312
      %v3588 = vpop.f32.mrf.mxu0
      %v3589 = vadd.f32 0.0, %v3588
      %v3590 = vpop.f32.mrf.mxu0
      %v3591 = vpop.f32.mrf.mxu0
      %v3592 = vadd.f32 0.0, %v3591
      %v3593 = vpop.f32.mrf.mxu0
      %3594 = vmatprep.mubr.bf16.mxu0 0
      %3595 = vmatmul.mubr.bf16.gmra.mxu0 %v3321
      %v3596 = vpop.f32.mrf.mxu0
      %v3597 = vadd.f32 0.0, %v3596
      %v3598 = vpop.f32.mrf.mxu0
      %v3599 = vpop.f32.mrf.mxu0
      %v3600 = vadd.f32 0.0, %v3599
      %v3601 = vpop.f32.mrf.mxu0
      %3602 = vmatprep.mubr.bf16.mxu0 0
      %3603 = vmatmul.mubr.bf16.gmra.mxu0 %v3330
      %v3604 = vpop.f32.mrf.mxu0
      %v3605 = vadd.f32 0.0, %v3604
      %v3606 = vpop.f32.mrf.mxu0
      %v3607 = vpop.f32.mrf.mxu0
      %v3608 = vadd.f32 0.0, %v3607
      %v3609 = vpop.f32.mrf.mxu0
      %3610 = vmatprep.mubr.bf16.mxu0 0
      %3611 = vmatmul.mubr.bf16.gmra.mxu0 %v3329
      %v3612 = vpop.f32.mrf.mxu0
      %v3613 = vadd.f32 0.0, %v3612
      %v3614 = vpop.f32.mrf.mxu0
      %v3615 = vpop.f32.mrf.mxu0
      %v3616 = vpop.f32.mrf.mxu0
      %3617 = vdwg.mxu0
      %v3618 = vadd.f32 %v3058, %v3437
      %v3619 = vadd.f32 %v3059, %v3440
      %v3620 = vadd.f32 %v3060, %v3445
      %v3621 = vadd.f32 %v3061, %v3448
      %v3622 = vadd.f32 %v3062, %v3453
      %v3623 = vadd.f32 %v3063, %v3456
      %v3624 = vadd.f32 %v3064, %v3461
      %v3625 = vadd.f32 %v3065, %v3464
      %v3626 = vadd.f32 %v3066, %v3469
      %v3627 = vadd.f32 %v3067, %v3472
      %v3628 = vadd.f32 %v3068, %v3477
      %v3629 = vadd.f32 %v3069, %v3480
      %v3630 = vadd.f32 %v3070, %v3485
      %v3631 = vadd.f32 %v3071, %v3488
      %v3632 = vadd.f32 %v3072, %v3493
      %v3633 = vadd.f32 %v3073, %v3496
      %v3634 = vadd.f32 %v3074, %v3501
      %v3635 = vadd.f32 %v3075, %v3504
      %v3636 = vadd.f32 %v3076, %v3509
      %v3637 = vadd.f32 %v3077, %v3512
      %v3638 = vadd.f32 %v3078, %v3517
      %v3639 = vadd.f32 %v3079, %v3520
      %v3640 = vadd.f32 %v3080, %v3525
      %v3641 = vadd.f32 %v3081, %v3528
      %v3642 = vadd.f32 %v3082, %v3533
      %v3643 = vadd.f32 %v3083, %v3536
      %v3644 = vadd.f32 %v3084, %v3541
      %v3645 = vadd.f32 %v3085, %v3544
      %v3646 = vadd.f32 %v3086, %v3549
      %v3647 = vadd.f32 %v3087, %v3552
      %v3648 = vadd.f32 %v3088, %v3557
      %v3649 = vadd.f32 %v3089, %v3560
      %v3650 = vadd.f32 %v3090, %v3565
      %v3651 = vadd.f32 %v3091, %v3568
      %v3652 = vadd.f32 %v3092, %v3573
      %v3653 = vadd.f32 %v3093, %v3576
      %v3654 = vadd.f32 %v3094, %v3581
      %v3655 = vadd.f32 %v3095, %v3584
      %v3656 = vadd.f32 %v3096, %v3589
      %v3657 = vadd.f32 %v3097, %v3592
      %v3658 = vadd.f32 %v3098, %v3597
      %v3659 = vadd.f32 %v3099, %v3600
      %v3660 = vadd.f32 %v3100, %v3605
      %v3661 = vadd.f32 %v3101, %v3608
      %v3662 = vadd.f32 %v3102, %v3613
      %v3663 = vld [vmem:[#allocation2 + $0x8] sm:$0x8]
      %s3664 = scalar_lea.vmem %s3, 320
      %v3665 = vld [vmem:[%s3664] sm:$0xf]
      %v3666 = vld [vmem:[%s3664 + $0x4] sm:$0xf]
      %v3667 = vld [vmem:[%s3664 + $0x8] sm:$0xf]
      %v3668 = vld [vmem:[%s3664 + $0xc] sm:$0xf]
      %v3669 = vld [vmem:[%s3664 + $0x10] sm:$0xf]
      %v3670 = vld [vmem:[%s3664 + $0x14] sm:$0xf]
      %v3671 = vld [vmem:[%s3664 + $0x18] sm:$0xf]
      %v3672 = vld [vmem:[%s3664 + $0x1c] sm:$0xf]
      %v3673 = vld [vmem:[%s3664 + $0x20] sm:$0xf]
      %v3674 = vld [vmem:[%s3664 + $0x24] sm:$0xf]
      %v3675 = vld [vmem:[%s3664 + $0x28] sm:$0xf]
      %v3676 = vld [vmem:[%s3664 + $0x2c] sm:$0xf]
      %v3677 = vld [vmem:[%s3664 + $0x30] sm:$0xf]
      %v3678 = vld [vmem:[%s3664 + $0x34] sm:$0xf]
      %v3679 = vld [vmem:[%s3664 + $0x38] sm:$0xf]
      %v3680 = vld [vmem:[%s3664 + $0x3c] sm:$0xf]
      %v3682 = vunpack.c.l.b16 %v3663
      %v3683 = vpack.c.b16 %v2657, %v3682
      %vm3684 = vcmask 1044480
      %v3685 = vrot.slane %v3683, 3
      %v3686 = vrot.slane %v2703, 3
      %v3687 = vsel %vm3684, %v3685, %v3686
      %v3688 = vrot.slane %v2704, 3
      %v3689 = vsel %vm3684, %v3686, %v3688
      %v3690 = vrot.slane %v2705, 3
      %v3691 = vsel %vm3684, %v3688, %v3690
      %v3692 = vrot.slane %v2706, 3
      %v3693 = vsel %vm3684, %v3690, %v3692
      %v3694 = vrot.slane %v2707, 3
      %v3695 = vsel %vm3684, %v3692, %v3694
      %v3696 = vrot.slane %v2708, 3
      %v3697 = vsel %vm3684, %v3694, %v3696
      %v3698 = vrot.slane %v2709, 3
      %v3699 = vsel %vm3684, %v3696, %v3698
      %v3700 = vrot.slane %v2710, 3
      %v3701 = vsel %vm3684, %v3698, %v3700
      %v3702 = vrot.slane %v2711, 3
      %v3703 = vsel %vm3684, %v3700, %v3702
      %v3704 = vrot.slane %v2712, 3
      %v3705 = vsel %vm3684, %v3702, %v3704
      %v3706 = vrot.slane %v2713, 3
      %v3707 = vsel %vm3684, %v3704, %v3706
      %v3708 = vrot.slane %v2714, 3
      %v3709 = vsel %vm3684, %v3706, %v3708
      %v3710 = vrot.slane %v2715, 3
      %v3711 = vsel %vm3684, %v3708, %v3710
      %v3712 = vrot.slane %v2716, 3
      %v3713 = vsel %vm3684, %v3710, %v3712
      %v3714 = vrot.slane %v2717, 3
      %v3715 = vsel %vm3684, %v3712, %v3714
      %v3716 = vrot.slane %v2718, 3
      %v3717 = vsel %vm3684, %v3714, %v3716
      %v3718 = vrot.slane %v2719, 3
      %v3719 = vsel %vm3684, %v3716, %v3718
      %v3720 = vrot.slane %v2720, 3
      %v3721 = vsel %vm3684, %v3718, %v3720
      %v3722 = vrot.slane %v2721, 3
      %v3723 = vsel %vm3684, %v3720, %v3722
      %v3724 = vrot.slane %v2722, 3
      %v3725 = vsel %vm3684, %v3722, %v3724
      %v3726 = vrot.slane %v2723, 3
      %v3727 = vsel %vm3684, %v3724, %v3726
      %v3728 = vrot.slane %v3123, 3
      %v3729 = vsel %vm3684, %v3726, %v3728
      %v3769 = vunpack.c.l.b16 %v3665
      %v3770 = vunpack.c.l.b16 %v3666
      %v3771 = vunpack.c.l.b16 %v3667
      %v3772 = vunpack.c.l.b16 %v3668
      %v3773 = vunpack.c.l.b16 %v3669
      %v3774 = vunpack.c.l.b16 %v3670
      %v3775 = vunpack.c.l.b16 %v3671
      %v3776 = vunpack.c.l.b16 %v3672
      %v3777 = vunpack.c.l.b16 %v3673
      %v3778 = vunpack.c.l.b16 %v3674
      %v3779 = vunpack.c.l.b16 %v3675
      %v3780 = vunpack.c.l.b16 %v3676
      %v3781 = vunpack.c.l.b16 %v3677
      %v3782 = vunpack.c.l.b16 %v3678
      %v3783 = vunpack.c.l.b16 %v3679
      %v3784 = vunpack.c.l.b16 %v3680
      %v3785 = vpack.c.b16 %v3770, %v3769
      %v3786 = vpack.c.b16 %v3772, %v3771
      %v3787 = vpack.c.b16 %v3774, %v3773
      %v3788 = vpack.c.b16 %v3776, %v3775
      %v3789 = vpack.c.b16 %v3778, %v3777
      %v3790 = vpack.c.b16 %v3780, %v3779
      %v3791 = vpack.c.b16 %v3782, %v3781
      %v3792 = vpack.c.b16 %v3784, %v3783
      %3801 = vmatprep.subr.bf16.mxu0 0
      %3802 = vmatpush1.bf16.msra.mxu0 %v3792
      %3803 = vmatprep.subr.bf16.mxu0 0
      %3804 = vmatpush1.bf16.msra.mxu0 %v3791
      %3805 = vmatprep.subr.bf16.mxu0 0
      %3806 = vmatpush1.bf16.msra.mxu0 %v3790
      %3807 = vmatprep.subr.bf16.mxu0 0
      %3808 = vmatpush1.bf16.msra.mxu0 %v3789
      %3809 = vmatprep.subr.bf16.mxu0 0
      %3810 = vmatpush1.bf16.msra.mxu0 %v3788
      %3811 = vmatprep.subr.bf16.mxu0 0
      %3812 = vmatpush1.bf16.msra.mxu0 %v3787
      %3813 = vmatprep.subr.bf16.mxu0 0
      %3814 = vmatpush1.bf16.msra.mxu0 %v3786
      %3815 = vmatprep.subr.bf16.mxu0 0
      %3816 = vmatpush1.bf16.msra.mxu0 %v3785
      %3817 = vmatprep.subr.bf16.mxu0 0
      %3818 = vmatpush2.bf16.msra.mxu0 0
      %3819 = vmatprep.subr.bf16.mxu0 0
      %3820 = vmatpush2.bf16.msra.mxu0 0
      %3821 = vmatprep.subr.bf16.mxu0 0
      %3822 = vmatpush2.bf16.msra.mxu0 0
      %3823 = vmatprep.subr.bf16.mxu0 0
      %3824 = vmatpush2.bf16.msra.mxu0 0
      %3825 = vmatprep.subr.bf16.mxu0 0
      %3826 = vmatpush2.bf16.msra.mxu0 0
      %3827 = vmatprep.subr.bf16.mxu0 0
      %3828 = vmatpush2.bf16.msra.mxu0 0
      %3829 = vmatprep.subr.bf16.mxu0 0
      %3830 = vmatpush2.bf16.msra.mxu0 0
      %3831 = vmatprep.subr.bf16.mxu0 0
      %3832 = vmatpush2.bf16.msra.mxu0 0
      %3833 = vmatprep.mubr.bf16.mxu0 0
      %3834 = vmatmul.mubr.bf16.gmra.mxu0 %v3687
      %v3835 = vpop.f32.mrf.mxu0
      %v3836 = vadd.f32 0.0, %v3835
      %v3837 = vpop.f32.mrf.mxu0
      %v3838 = vpop.f32.mrf.mxu0
      %v3839 = vadd.f32 0.0, %v3838
      %v3840 = vpop.f32.mrf.mxu0
      %3841 = vmatprep.mubr.bf16.mxu0 0
      %3842 = vmatmul.mubr.bf16.gmra.mxu0 %v3689
      %v3843 = vpop.f32.mrf.mxu0
      %v3844 = vadd.f32 0.0, %v3843
      %v3845 = vpop.f32.mrf.mxu0
      %v3846 = vpop.f32.mrf.mxu0
      %v3847 = vadd.f32 0.0, %v3846
      %v3848 = vpop.f32.mrf.mxu0
      %3849 = vmatprep.mubr.bf16.mxu0 0
      %3850 = vmatmul.mubr.bf16.gmra.mxu0 %v3691
      %v3851 = vpop.f32.mrf.mxu0
      %v3852 = vadd.f32 0.0, %v3851
      %v3853 = vpop.f32.mrf.mxu0
      %v3854 = vpop.f32.mrf.mxu0
      %v3855 = vadd.f32 0.0, %v3854
      %v3856 = vpop.f32.mrf.mxu0
      %3857 = vmatprep.mubr.bf16.mxu0 0
      %3858 = vmatmul.mubr.bf16.gmra.mxu0 %v3693
      %v3859 = vpop.f32.mrf.mxu0
      %v3860 = vadd.f32 0.0, %v3859
      %v3861 = vpop.f32.mrf.mxu0
      %v3862 = vpop.f32.mrf.mxu0
      %v3863 = vadd.f32 0.0, %v3862
      %v3864 = vpop.f32.mrf.mxu0
      %3865 = vmatprep.mubr.bf16.mxu0 0
      %3866 = vmatmul.mubr.bf16.gmra.mxu0 %v3695
      %v3867 = vpop.f32.mrf.mxu0
      %v3868 = vadd.f32 0.0, %v3867
      %v3869 = vpop.f32.mrf.mxu0
      %v3870 = vpop.f32.mrf.mxu0
      %v3871 = vadd.f32 0.0, %v3870
      %v3872 = vpop.f32.mrf.mxu0
      %3873 = vmatprep.mubr.bf16.mxu0 0
      %3874 = vmatmul.mubr.bf16.gmra.mxu0 %v3697
      %v3875 = vpop.f32.mrf.mxu0
      %v3876 = vadd.f32 0.0, %v3875
      %v3877 = vpop.f32.mrf.mxu0
      %v3878 = vpop.f32.mrf.mxu0
      %v3879 = vadd.f32 0.0, %v3878
      %v3880 = vpop.f32.mrf.mxu0
      %3881 = vmatprep.mubr.bf16.mxu0 0
      %3882 = vmatmul.mubr.bf16.gmra.mxu0 %v3699
      %v3883 = vpop.f32.mrf.mxu0
      %v3884 = vadd.f32 0.0, %v3883
      %v3885 = vpop.f32.mrf.mxu0
      %v3886 = vpop.f32.mrf.mxu0
      %v3887 = vadd.f32 0.0, %v3886
      %v3888 = vpop.f32.mrf.mxu0
      %3889 = vmatprep.mubr.bf16.mxu0 0
      %3890 = vmatmul.mubr.bf16.gmra.mxu0 %v3701
      %v3891 = vpop.f32.mrf.mxu0
      %v3892 = vadd.f32 0.0, %v3891
      %v3893 = vpop.f32.mrf.mxu0
      %v3894 = vpop.f32.mrf.mxu0
      %v3895 = vadd.f32 0.0, %v3894
      %v3896 = vpop.f32.mrf.mxu0
      %3897 = vmatprep.mubr.bf16.mxu0 0
      %3898 = vmatmul.mubr.bf16.gmra.mxu0 %v3703
      %v3899 = vpop.f32.mrf.mxu0
      %v3900 = vadd.f32 0.0, %v3899
      %v3901 = vpop.f32.mrf.mxu0
      %v3902 = vpop.f32.mrf.mxu0
      %v3903 = vadd.f32 0.0, %v3902
      %v3904 = vpop.f32.mrf.mxu0
      %3905 = vmatprep.mubr.bf16.mxu0 0
      %3906 = vmatmul.mubr.bf16.gmra.mxu0 %v3705
      %v3907 = vpop.f32.mrf.mxu0
      %v3908 = vadd.f32 0.0, %v3907
      %v3909 = vpop.f32.mrf.mxu0
      %v3910 = vpop.f32.mrf.mxu0
      %v3911 = vadd.f32 0.0, %v3910
      %v3912 = vpop.f32.mrf.mxu0
      %3913 = vmatprep.mubr.bf16.mxu0 0
      %3914 = vmatmul.mubr.bf16.gmra.mxu0 %v3707
      %v3915 = vpop.f32.mrf.mxu0
      %v3916 = vadd.f32 0.0, %v3915
      %v3917 = vpop.f32.mrf.mxu0
      %v3918 = vpop.f32.mrf.mxu0
      %v3919 = vadd.f32 0.0, %v3918
      %v3920 = vpop.f32.mrf.mxu0
      %3921 = vmatprep.mubr.bf16.mxu0 0
      %3922 = vmatmul.mubr.bf16.gmra.mxu0 %v3709
      %v3923 = vpop.f32.mrf.mxu0
      %v3924 = vadd.f32 0.0, %v3923
      %v3925 = vpop.f32.mrf.mxu0
      %v3926 = vpop.f32.mrf.mxu0
      %v3927 = vadd.f32 0.0, %v3926
      %v3928 = vpop.f32.mrf.mxu0
      %3929 = vmatprep.mubr.bf16.mxu0 0
      %3930 = vmatmul.mubr.bf16.gmra.mxu0 %v3711
      %v3931 = vpop.f32.mrf.mxu0
      %v3932 = vadd.f32 0.0, %v3931
      %v3933 = vpop.f32.mrf.mxu0
      %v3934 = vpop.f32.mrf.mxu0
      %v3935 = vadd.f32 0.0, %v3934
      %v3936 = vpop.f32.mrf.mxu0
      %3937 = vmatprep.mubr.bf16.mxu0 0
      %3938 = vmatmul.mubr.bf16.gmra.mxu0 %v3713
      %v3939 = vpop.f32.mrf.mxu0
      %v3940 = vadd.f32 0.0, %v3939
      %v3941 = vpop.f32.mrf.mxu0
      %v3942 = vpop.f32.mrf.mxu0
      %v3943 = vadd.f32 0.0, %v3942
      %v3944 = vpop.f32.mrf.mxu0
      %3945 = vmatprep.mubr.bf16.mxu0 0
      %3946 = vmatmul.mubr.bf16.gmra.mxu0 %v3715
      %v3947 = vpop.f32.mrf.mxu0
      %v3948 = vadd.f32 0.0, %v3947
      %v3949 = vpop.f32.mrf.mxu0
      %v3950 = vpop.f32.mrf.mxu0
      %v3951 = vadd.f32 0.0, %v3950
      %v3952 = vpop.f32.mrf.mxu0
      %3953 = vmatprep.mubr.bf16.mxu0 0
      %3954 = vmatmul.mubr.bf16.gmra.mxu0 %v3717
      %v3955 = vpop.f32.mrf.mxu0
      %v3956 = vadd.f32 0.0, %v3955
      %v3957 = vpop.f32.mrf.mxu0
      %v3958 = vpop.f32.mrf.mxu0
      %v3959 = vadd.f32 0.0, %v3958
      %v3960 = vpop.f32.mrf.mxu0
      %3961 = vmatprep.mubr.bf16.mxu0 0
      %3962 = vmatmul.mubr.bf16.gmra.mxu0 %v3719
      %v3963 = vpop.f32.mrf.mxu0
      %v3964 = vadd.f32 0.0, %v3963
      %v3965 = vpop.f32.mrf.mxu0
      %v3966 = vpop.f32.mrf.mxu0
      %v3967 = vadd.f32 0.0, %v3966
      %v3968 = vpop.f32.mrf.mxu0
      %3969 = vmatprep.mubr.bf16.mxu0 0
      %3970 = vmatmul.mubr.bf16.gmra.mxu0 %v3721
      %v3971 = vpop.f32.mrf.mxu0
      %v3972 = vadd.f32 0.0, %v3971
      %v3973 = vpop.f32.mrf.mxu0
      %v3974 = vpop.f32.mrf.mxu0
      %v3975 = vadd.f32 0.0, %v3974
      %v3976 = vpop.f32.mrf.mxu0
      %3977 = vmatprep.mubr.bf16.mxu0 0
      %3978 = vmatmul.mubr.bf16.gmra.mxu0 %v3723
      %v3979 = vpop.f32.mrf.mxu0
      %v3980 = vadd.f32 0.0, %v3979
      %v3981 = vpop.f32.mrf.mxu0
      %v3982 = vpop.f32.mrf.mxu0
      %v3983 = vadd.f32 0.0, %v3982
      %v3984 = vpop.f32.mrf.mxu0
      %3985 = vmatprep.mubr.bf16.mxu0 0
      %3986 = vmatmul.mubr.bf16.gmra.mxu0 %v3725
      %v3987 = vpop.f32.mrf.mxu0
      %v3988 = vadd.f32 0.0, %v3987
      %v3989 = vpop.f32.mrf.mxu0
      %v3990 = vpop.f32.mrf.mxu0
      %v3991 = vadd.f32 0.0, %v3990
      %v3992 = vpop.f32.mrf.mxu0
      %3993 = vmatprep.mubr.bf16.mxu0 0
      %3994 = vmatmul.mubr.bf16.gmra.mxu0 %v3727
      %v3995 = vpop.f32.mrf.mxu0
      %v3996 = vadd.f32 0.0, %v3995
      %v3997 = vpop.f32.mrf.mxu0
      %v3998 = vpop.f32.mrf.mxu0
      %v3999 = vadd.f32 0.0, %v3998
      %v4000 = vpop.f32.mrf.mxu0
      %4001 = vmatprep.mubr.bf16.mxu0 0
      %4002 = vmatmul.mubr.bf16.gmra.mxu0 %v3729
      %v4003 = vpop.f32.mrf.mxu0
      %v4004 = vadd.f32 0.0, %v4003
      %v4005 = vpop.f32.mrf.mxu0
      %v4006 = vpop.f32.mrf.mxu0
      %v4007 = vadd.f32 0.0, %v4006
      %v4008 = vpop.f32.mrf.mxu0
      %4009 = vmatprep.mubr.bf16.mxu0 0
      %4010 = vmatmul.mubr.bf16.gmra.mxu0 %v3728
      %v4011 = vpop.f32.mrf.mxu0
      %v4012 = vadd.f32 0.0, %v4011
      %v4013 = vpop.f32.mrf.mxu0
      %v4014 = vpop.f32.mrf.mxu0
      %v4015 = vpop.f32.mrf.mxu0
      %4016 = vdwg.mxu0
      %v4017 = vadd.f32 %v3618, %v3836
      %v4018 = vadd.f32 %v3619, %v3839
      %v4019 = vadd.f32 %v3620, %v3844
      %v4020 = vadd.f32 %v3621, %v3847
      %v4021 = vadd.f32 %v3622, %v3852
      %v4022 = vadd.f32 %v3623, %v3855
      %v4023 = vadd.f32 %v3624, %v3860
      %v4024 = vadd.f32 %v3625, %v3863
      %v4025 = vadd.f32 %v3626, %v3868
      %v4026 = vadd.f32 %v3627, %v3871
      %v4027 = vadd.f32 %v3628, %v3876
      %v4028 = vadd.f32 %v3629, %v3879
      %v4029 = vadd.f32 %v3630, %v3884
      %v4030 = vadd.f32 %v3631, %v3887
      %v4031 = vadd.f32 %v3632, %v3892
      %v4032 = vadd.f32 %v3633, %v3895
      %v4033 = vadd.f32 %v3634, %v3900
      %v4034 = vadd.f32 %v3635, %v3903
      %v4035 = vadd.f32 %v3636, %v3908
      %v4036 = vadd.f32 %v3637, %v3911
      %v4037 = vadd.f32 %v3638, %v3916
      %v4038 = vadd.f32 %v3639, %v3919
      %v4039 = vadd.f32 %v3640, %v3924
      %v4040 = vadd.f32 %v3641, %v3927
      %v4041 = vadd.f32 %v3642, %v3932
      %v4042 = vadd.f32 %v3643, %v3935
      %v4043 = vadd.f32 %v3644, %v3940
      %v4044 = vadd.f32 %v3645, %v3943
      %v4045 = vadd.f32 %v3646, %v3948
      %v4046 = vadd.f32 %v3647, %v3951
      %v4047 = vadd.f32 %v3648, %v3956
      %v4048 = vadd.f32 %v3649, %v3959
      %v4049 = vadd.f32 %v3650, %v3964
      %v4050 = vadd.f32 %v3651, %v3967
      %v4051 = vadd.f32 %v3652, %v3972
      %v4052 = vadd.f32 %v3653, %v3975
      %v4053 = vadd.f32 %v3654, %v3980
      %v4054 = vadd.f32 %v3655, %v3983
      %v4055 = vadd.f32 %v3656, %v3988
      %v4056 = vadd.f32 %v3657, %v3991
      %v4057 = vadd.f32 %v3658, %v3996
      %v4058 = vadd.f32 %v3659, %v3999
      %v4059 = vadd.f32 %v3660, %v4004
      %v4060 = vadd.f32 %v3661, %v4007
      %v4061 = vadd.f32 %v3662, %v4012
      %v4062 = vld [vmem:[#allocation2 + $0x14] sm:$0xf]
      %v4063 = vld [vmem:[#allocation2 + $0x18] sm:$0xf]
      %v4064 = vld [vmem:[#allocation2 + $0x1c] sm:$0xf]
      %v4065 = vld [vmem:[#allocation2 + $0x20] sm:$0xf]
      %v4066 = vld [vmem:[#allocation2 + $0x24] sm:$0xf]
      %v4067 = vld [vmem:[#allocation2 + $0x28] sm:$0xf]
      %v4068 = vld [vmem:[#allocation2 + $0x2c] sm:$0xf]
      %v4069 = vld [vmem:[#allocation2 + $0x30] sm:$0xf]
      %v4070 = vld [vmem:[#allocation2 + $0x34] sm:$0xf]
      %v4071 = vld [vmem:[#allocation2 + $0x38] sm:$0xf]
      %v4072 = vld [vmem:[#allocation2 + $0x3c] sm:$0xf]
      %v4073 = vld [vmem:[#allocation2 + $0x40] sm:$0xf]
      %v4074 = vld [vmem:[#allocation2 + $0x44] sm:$0xf]
      %v4075 = vld [vmem:[#allocation2 + $0x48] sm:$0xf]
      %v4076 = vld [vmem:[#allocation2 + $0x4c] sm:$0xf]
      %v4077 = vld [vmem:[#allocation2 + $0x50] sm:$0xf]
      %v4078 = vld [vmem:[#allocation2 + $0x54] sm:$0xf]
      %v4079 = vld [vmem:[#allocation2 + $0x58] sm:$0xf]
      %v4080 = vld [vmem:[#allocation2 + $0x5c] sm:$0xf]
      %v4081 = vld [vmem:[#allocation2 + $0x60] sm:$0xf]
      %v4082 = vld [vmem:[#allocation2 + $0x64] sm:$0xf]
      %v4083 = vld [vmem:[#allocation2 + $0x68] sm:$0xf]
      %v4084 = vld [vmem:[#allocation2 + $0x6c] sm:$0xf]
      %v4085 = vld [vmem:[#allocation2 + $0x70] sm:$0xf]
      %v4086 = vld [vmem:[#allocation2 + $0x74] sm:$0xf]
      %v4087 = vld [vmem:[#allocation2 + $0x78] sm:$0xf]
      %v4088 = vld [vmem:[#allocation2 + $0x7c] sm:$0xf]
      %v4089 = vld [vmem:[#allocation2 + $0x80] sm:$0xf]
      %v4090 = vld [vmem:[#allocation2 + $0x84] sm:$0xf]
      %v4091 = vld [vmem:[#allocation2 + $0x88] sm:$0xf]
      %v4092 = vld [vmem:[#allocation2 + $0x8c] sm:$0xf]
      %v4093 = vld [vmem:[#allocation2 + $0x90] sm:$0xf]
      %v4094 = vld [vmem:[#allocation2 + $0x94] sm:$0xf]
      %v4095 = vld [vmem:[#allocation2 + $0x98] sm:$0xf]
      %v4096 = vld [vmem:[#allocation2 + $0x9c] sm:$0xf]
      %v4097 = vld [vmem:[#allocation2 + $0xa0] sm:$0xf]
      %v4098 = vld [vmem:[#allocation2 + $0xa4] sm:$0xf]
      %v4099 = vld [vmem:[#allocation2 + $0xa8] sm:$0xf]
      %v4100 = vld [vmem:[#allocation2 + $0xac] sm:$0xf]
      %v4101 = vld [vmem:[#allocation2 + $0xb0] sm:$0xf]
      %v4102 = vld [vmem:[#allocation2 + $0xb4] sm:$0xf]
      %v4103 = vld [vmem:[#allocation2 + $0xb8] sm:$0xf]
      %v4104 = vld [vmem:[#allocation2 + $0xbc] sm:$0xf]
      %v4105 = vld [vmem:[#allocation2 + $0xc0] sm:$0xf]
      %v4106 = vld [vmem:[#allocation2 + $0xc4] sm:$0xf]
      %s4107 = scalar_lea.vmem %s3, 384
      %v4108 = vld [vmem:[%s4107] sm:$0xf]
      %v4109 = vld [vmem:[%s4107 + $0x4] sm:$0xf]
      %v4110 = vld [vmem:[%s4107 + $0x8] sm:$0xf]
      %v4111 = vld [vmem:[%s4107 + $0xc] sm:$0xf]
      %v4112 = vld [vmem:[%s4107 + $0x10] sm:$0xf]
      %v4113 = vld [vmem:[%s4107 + $0x14] sm:$0xf]
      %v4114 = vld [vmem:[%s4107 + $0x18] sm:$0xf]
      %v4115 = vld [vmem:[%s4107 + $0x1c] sm:$0xf]
      %v4116 = vld [vmem:[%s4107 + $0x20] sm:$0xf]
      %v4117 = vld [vmem:[%s4107 + $0x24] sm:$0xf]
      %v4118 = vld [vmem:[%s4107 + $0x28] sm:$0xf]
      %v4119 = vld [vmem:[%s4107 + $0x2c] sm:$0xf]
      %v4120 = vld [vmem:[%s4107 + $0x30] sm:$0xf]
      %v4121 = vld [vmem:[%s4107 + $0x34] sm:$0xf]
      %v4122 = vld [vmem:[%s4107 + $0x38] sm:$0xf]
      %v4123 = vld [vmem:[%s4107 + $0x3c] sm:$0xf]
      %v4169 = vunpack.c.l.b16 %v4062
      %v4170 = vunpack.c.l.b16 %v4063
      %v4171 = vunpack.c.l.b16 %v4064
      %v4172 = vunpack.c.l.b16 %v4065
      %v4173 = vunpack.c.l.b16 %v4066
      %v4174 = vunpack.c.l.b16 %v4067
      %v4175 = vunpack.c.l.b16 %v4068
      %v4176 = vunpack.c.l.b16 %v4069
      %v4177 = vunpack.c.l.b16 %v4070
      %v4178 = vunpack.c.l.b16 %v4071
      %v4179 = vunpack.c.l.b16 %v4072
      %v4180 = vunpack.c.l.b16 %v4073
      %v4181 = vunpack.c.l.b16 %v4074
      %v4182 = vunpack.c.l.b16 %v4075
      %v4183 = vunpack.c.l.b16 %v4076
      %v4184 = vunpack.c.l.b16 %v4077
      %v4185 = vunpack.c.l.b16 %v4078
      %v4186 = vunpack.c.l.b16 %v4079
      %v4187 = vunpack.c.l.b16 %v4080
      %v4188 = vunpack.c.l.b16 %v4081
      %v4189 = vunpack.c.l.b16 %v4082
      %v4190 = vunpack.c.l.b16 %v4083
      %v4191 = vunpack.c.l.b16 %v4084
      %v4192 = vunpack.c.l.b16 %v4085
      %v4193 = vunpack.c.l.b16 %v4086
      %v4194 = vunpack.c.l.b16 %v4087
      %v4195 = vunpack.c.l.b16 %v4088
      %v4196 = vunpack.c.l.b16 %v4089
      %v4197 = vunpack.c.l.b16 %v4090
      %v4198 = vunpack.c.l.b16 %v4091
      %v4199 = vunpack.c.l.b16 %v4092
      %v4200 = vunpack.c.l.b16 %v4093
      %v4201 = vunpack.c.l.b16 %v4094
      %v4202 = vunpack.c.l.b16 %v4095
      %v4203 = vunpack.c.l.b16 %v4096
      %v4204 = vunpack.c.l.b16 %v4097
      %v4205 = vunpack.c.l.b16 %v4098
      %v4206 = vunpack.c.l.b16 %v4099
      %v4207 = vunpack.c.l.b16 %v4100
      %v4208 = vunpack.c.l.b16 %v4101
      %v4209 = vunpack.c.l.b16 %v4102
      %v4210 = vunpack.c.l.b16 %v4103
      %v4211 = vunpack.c.l.b16 %v4104
      %v4212 = vunpack.c.l.b16 %v4105
      %v4213 = vunpack.c.l.b16 %v4106
      %v4214 = vpack.c.b16 %v4170, %v4169
      %v4215 = vpack.c.b16 %v4172, %v4171
      %v4216 = vpack.c.b16 %v4174, %v4173
      %v4217 = vpack.c.b16 %v4176, %v4175
      %v4218 = vpack.c.b16 %v4178, %v4177
      %v4219 = vpack.c.b16 %v4180, %v4179
      %v4220 = vpack.c.b16 %v4182, %v4181
      %v4221 = vpack.c.b16 %v4184, %v4183
      %v4222 = vpack.c.b16 %v4186, %v4185
      %v4223 = vpack.c.b16 %v4188, %v4187
      %v4224 = vpack.c.b16 %v4190, %v4189
      %v4225 = vpack.c.b16 %v4192, %v4191
      %v4226 = vpack.c.b16 %v4194, %v4193
      %v4227 = vpack.c.b16 %v4196, %v4195
      %v4228 = vpack.c.b16 %v4198, %v4197
      %v4229 = vpack.c.b16 %v4200, %v4199
      %v4230 = vpack.c.b16 %v4202, %v4201
      %v4231 = vpack.c.b16 %v4204, %v4203
      %v4232 = vpack.c.b16 %v4206, %v4205
      %v4233 = vpack.c.b16 %v4208, %v4207
      %v4234 = vpack.c.b16 %v4210, %v4209
      %v4235 = vpack.c.b16 %v4212, %v4211
      %v4236 = vpack.c.b16 %v4213, %v4213
      %v4276 = vunpack.c.l.b16 %v4108
      %v4277 = vunpack.c.l.b16 %v4109
      %v4278 = vunpack.c.l.b16 %v4110
      %v4279 = vunpack.c.l.b16 %v4111
      %v4280 = vunpack.c.l.b16 %v4112
      %v4281 = vunpack.c.l.b16 %v4113
      %v4282 = vunpack.c.l.b16 %v4114
      %v4283 = vunpack.c.l.b16 %v4115
      %v4284 = vunpack.c.l.b16 %v4116
      %v4285 = vunpack.c.l.b16 %v4117
      %v4286 = vunpack.c.l.b16 %v4118
      %v4287 = vunpack.c.l.b16 %v4119
      %v4288 = vunpack.c.l.b16 %v4120
      %v4289 = vunpack.c.l.b16 %v4121
      %v4290 = vunpack.c.l.b16 %v4122
      %v4291 = vunpack.c.l.b16 %v4123
      %v4292 = vpack.c.b16 %v4277, %v4276
      %v4293 = vpack.c.b16 %v4279, %v4278
      %v4294 = vpack.c.b16 %v4281, %v4280
      %v4295 = vpack.c.b16 %v4283, %v4282
      %v4296 = vpack.c.b16 %v4285, %v4284
      %v4297 = vpack.c.b16 %v4287, %v4286
      %v4298 = vpack.c.b16 %v4289, %v4288
      %v4299 = vpack.c.b16 %v4291, %v4290
      %4308 = vmatprep.subr.bf16.mxu0 0
      %4309 = vmatpush1.bf16.msra.mxu0 %v4299
      %4310 = vmatprep.subr.bf16.mxu0 0
      %4311 = vmatpush1.bf16.msra.mxu0 %v4298
      %4312 = vmatprep.subr.bf16.mxu0 0
      %4313 = vmatpush1.bf16.msra.mxu0 %v4297
      %4314 = vmatprep.subr.bf16.mxu0 0
      %4315 = vmatpush1.bf16.msra.mxu0 %v4296
      %4316 = vmatprep.subr.bf16.mxu0 0
      %4317 = vmatpush1.bf16.msra.mxu0 %v4295
      %4318 = vmatprep.subr.bf16.mxu0 0
      %4319 = vmatpush1.bf16.msra.mxu0 %v4294
      %4320 = vmatprep.subr.bf16.mxu0 0
      %4321 = vmatpush1.bf16.msra.mxu0 %v4293
      %4322 = vmatprep.subr.bf16.mxu0 0
      %4323 = vmatpush1.bf16.msra.mxu0 %v4292
      %4324 = vmatprep.subr.bf16.mxu0 0
      %4325 = vmatpush2.bf16.msra.mxu0 0
      %4326 = vmatprep.subr.bf16.mxu0 0
      %4327 = vmatpush2.bf16.msra.mxu0 0
      %4328 = vmatprep.subr.bf16.mxu0 0
      %4329 = vmatpush2.bf16.msra.mxu0 0
      %4330 = vmatprep.subr.bf16.mxu0 0
      %4331 = vmatpush2.bf16.msra.mxu0 0
      %4332 = vmatprep.subr.bf16.mxu0 0
      %4333 = vmatpush2.bf16.msra.mxu0 0
      %4334 = vmatprep.subr.bf16.mxu0 0
      %4335 = vmatpush2.bf16.msra.mxu0 0
      %4336 = vmatprep.subr.bf16.mxu0 0
      %4337 = vmatpush2.bf16.msra.mxu0 0
      %4338 = vmatprep.subr.bf16.mxu0 0
      %4339 = vmatpush2.bf16.msra.mxu0 0
      %4340 = vmatprep.mubr.bf16.mxu0 0
      %4341 = vmatmul.mubr.bf16.gmra.mxu0 %v4214
      %v4342 = vpop.f32.mrf.mxu0
      %v4343 = vadd.f32 0.0, %v4342
      %v4344 = vpop.f32.mrf.mxu0
      %v4345 = vpop.f32.mrf.mxu0
      %v4346 = vadd.f32 0.0, %v4345
      %v4347 = vpop.f32.mrf.mxu0
      %4348 = vmatprep.mubr.bf16.mxu0 0
      %4349 = vmatmul.mubr.bf16.gmra.mxu0 %v4215
      %v4350 = vpop.f32.mrf.mxu0
      %v4351 = vadd.f32 0.0, %v4350
      %v4352 = vpop.f32.mrf.mxu0
      %v4353 = vpop.f32.mrf.mxu0
      %v4354 = vadd.f32 0.0, %v4353
      %v4355 = vpop.f32.mrf.mxu0
      %4356 = vmatprep.mubr.bf16.mxu0 0
      %4357 = vmatmul.mubr.bf16.gmra.mxu0 %v4216
      %v4358 = vpop.f32.mrf.mxu0
      %v4359 = vadd.f32 0.0, %v4358
      %v4360 = vpop.f32.mrf.mxu0
      %v4361 = vpop.f32.mrf.mxu0
      %v4362 = vadd.f32 0.0, %v4361
      %v4363 = vpop.f32.mrf.mxu0
      %4364 = vmatprep.mubr.bf16.mxu0 0
      %4365 = vmatmul.mubr.bf16.gmra.mxu0 %v4217
      %v4366 = vpop.f32.mrf.mxu0
      %v4367 = vadd.f32 0.0, %v4366
      %v4368 = vpop.f32.mrf.mxu0
      %v4369 = vpop.f32.mrf.mxu0
      %v4370 = vadd.f32 0.0, %v4369
      %v4371 = vpop.f32.mrf.mxu0
      %4372 = vmatprep.mubr.bf16.mxu0 0
      %4373 = vmatmul.mubr.bf16.gmra.mxu0 %v4218
      %v4374 = vpop.f32.mrf.mxu0
      %v4375 = vadd.f32 0.0, %v4374
      %v4376 = vpop.f32.mrf.mxu0
      %v4377 = vpop.f32.mrf.mxu0
      %v4378 = vadd.f32 0.0, %v4377
      %v4379 = vpop.f32.mrf.mxu0
      %4380 = vmatprep.mubr.bf16.mxu0 0
      %4381 = vmatmul.mubr.bf16.gmra.mxu0 %v4219
      %v4382 = vpop.f32.mrf.mxu0
      %v4383 = vadd.f32 0.0, %v4382
      %v4384 = vpop.f32.mrf.mxu0
      %v4385 = vpop.f32.mrf.mxu0
      %v4386 = vadd.f32 0.0, %v4385
      %v4387 = vpop.f32.mrf.mxu0
      %4388 = vmatprep.mubr.bf16.mxu0 0
      %4389 = vmatmul.mubr.bf16.gmra.mxu0 %v4220
      %v4390 = vpop.f32.mrf.mxu0
      %v4391 = vadd.f32 0.0, %v4390
      %v4392 = vpop.f32.mrf.mxu0
      %v4393 = vpop.f32.mrf.mxu0
      %v4394 = vadd.f32 0.0, %v4393
      %v4395 = vpop.f32.mrf.mxu0
      %4396 = vmatprep.mubr.bf16.mxu0 0
      %4397 = vmatmul.mubr.bf16.gmra.mxu0 %v4221
      %v4398 = vpop.f32.mrf.mxu0
      %v4399 = vadd.f32 0.0, %v4398
      %v4400 = vpop.f32.mrf.mxu0
      %v4401 = vpop.f32.mrf.mxu0
      %v4402 = vadd.f32 0.0, %v4401
      %v4403 = vpop.f32.mrf.mxu0
      %4404 = vmatprep.mubr.bf16.mxu0 0
      %4405 = vmatmul.mubr.bf16.gmra.mxu0 %v4222
      %v4406 = vpop.f32.mrf.mxu0
      %v4407 = vadd.f32 0.0, %v4406
      %v4408 = vpop.f32.mrf.mxu0
      %v4409 = vpop.f32.mrf.mxu0
      %v4410 = vadd.f32 0.0, %v4409
      %v4411 = vpop.f32.mrf.mxu0
      %4412 = vmatprep.mubr.bf16.mxu0 0
      %4413 = vmatmul.mubr.bf16.gmra.mxu0 %v4223
      %v4414 = vpop.f32.mrf.mxu0
      %v4415 = vadd.f32 0.0, %v4414
      %v4416 = vpop.f32.mrf.mxu0
      %v4417 = vpop.f32.mrf.mxu0
      %v4418 = vadd.f32 0.0, %v4417
      %v4419 = vpop.f32.mrf.mxu0
      %4420 = vmatprep.mubr.bf16.mxu0 0
      %4421 = vmatmul.mubr.bf16.gmra.mxu0 %v4224
      %v4422 = vpop.f32.mrf.mxu0
      %v4423 = vadd.f32 0.0, %v4422
      %v4424 = vpop.f32.mrf.mxu0
      %v4425 = vpop.f32.mrf.mxu0
      %v4426 = vadd.f32 0.0, %v4425
      %v4427 = vpop.f32.mrf.mxu0
      %4428 = vmatprep.mubr.bf16.mxu0 0
      %4429 = vmatmul.mubr.bf16.gmra.mxu0 %v4225
      %v4430 = vpop.f32.mrf.mxu0
      %v4431 = vadd.f32 0.0, %v4430
      %v4432 = vpop.f32.mrf.mxu0
      %v4433 = vpop.f32.mrf.mxu0
      %v4434 = vadd.f32 0.0, %v4433
      %v4435 = vpop.f32.mrf.mxu0
      %4436 = vmatprep.mubr.bf16.mxu0 0
      %4437 = vmatmul.mubr.bf16.gmra.mxu0 %v4226
      %v4438 = vpop.f32.mrf.mxu0
      %v4439 = vadd.f32 0.0, %v4438
      %v4440 = vpop.f32.mrf.mxu0
      %v4441 = vpop.f32.mrf.mxu0
      %v4442 = vadd.f32 0.0, %v4441
      %v4443 = vpop.f32.mrf.mxu0
      %4444 = vmatprep.mubr.bf16.mxu0 0
      %4445 = vmatmul.mubr.bf16.gmra.mxu0 %v4227
      %v4446 = vpop.f32.mrf.mxu0
      %v4447 = vadd.f32 0.0, %v4446
      %v4448 = vpop.f32.mrf.mxu0
      %v4449 = vpop.f32.mrf.mxu0
      %v4450 = vadd.f32 0.0, %v4449
      %v4451 = vpop.f32.mrf.mxu0
      %4452 = vmatprep.mubr.bf16.mxu0 0
      %4453 = vmatmul.mubr.bf16.gmra.mxu0 %v4228
      %v4454 = vpop.f32.mrf.mxu0
      %v4455 = vadd.f32 0.0, %v4454
      %v4456 = vpop.f32.mrf.mxu0
      %v4457 = vpop.f32.mrf.mxu0
      %v4458 = vadd.f32 0.0, %v4457
      %v4459 = vpop.f32.mrf.mxu0
      %4460 = vmatprep.mubr.bf16.mxu0 0
      %4461 = vmatmul.mubr.bf16.gmra.mxu0 %v4229
      %v4462 = vpop.f32.mrf.mxu0
      %v4463 = vadd.f32 0.0, %v4462
      %v4464 = vpop.f32.mrf.mxu0
      %v4465 = vpop.f32.mrf.mxu0
      %v4466 = vadd.f32 0.0, %v4465
      %v4467 = vpop.f32.mrf.mxu0
      %4468 = vmatprep.mubr.bf16.mxu0 0
      %4469 = vmatmul.mubr.bf16.gmra.mxu0 %v4230
      %v4470 = vpop.f32.mrf.mxu0
      %v4471 = vadd.f32 0.0, %v4470
      %v4472 = vpop.f32.mrf.mxu0
      %v4473 = vpop.f32.mrf.mxu0
      %v4474 = vadd.f32 0.0, %v4473
      %v4475 = vpop.f32.mrf.mxu0
      %4476 = vmatprep.mubr.bf16.mxu0 0
      %4477 = vmatmul.mubr.bf16.gmra.mxu0 %v4231
      %v4478 = vpop.f32.mrf.mxu0
      %v4479 = vadd.f32 0.0, %v4478
      %v4480 = vpop.f32.mrf.mxu0
      %v4481 = vpop.f32.mrf.mxu0
      %v4482 = vadd.f32 0.0, %v4481
      %v4483 = vpop.f32.mrf.mxu0
      %4484 = vmatprep.mubr.bf16.mxu0 0
      %4485 = vmatmul.mubr.bf16.gmra.mxu0 %v4232
      %v4486 = vpop.f32.mrf.mxu0
      %v4487 = vadd.f32 0.0, %v4486
      %v4488 = vpop.f32.mrf.mxu0
      %v4489 = vpop.f32.mrf.mxu0
      %v4490 = vadd.f32 0.0, %v4489
      %v4491 = vpop.f32.mrf.mxu0
      %4492 = vmatprep.mubr.bf16.mxu0 0
      %4493 = vmatmul.mubr.bf16.gmra.mxu0 %v4233
      %v4494 = vpop.f32.mrf.mxu0
      %v4495 = vadd.f32 0.0, %v4494
      %v4496 = vpop.f32.mrf.mxu0
      %v4497 = vpop.f32.mrf.mxu0
      %v4498 = vadd.f32 0.0, %v4497
      %v4499 = vpop.f32.mrf.mxu0
      %4500 = vmatprep.mubr.bf16.mxu0 0
      %4501 = vmatmul.mubr.bf16.gmra.mxu0 %v4234
      %v4502 = vpop.f32.mrf.mxu0
      %v4503 = vadd.f32 0.0, %v4502
      %v4504 = vpop.f32.mrf.mxu0
      %v4505 = vpop.f32.mrf.mxu0
      %v4506 = vadd.f32 0.0, %v4505
      %v4507 = vpop.f32.mrf.mxu0
      %4508 = vmatprep.mubr.bf16.mxu0 0
      %4509 = vmatmul.mubr.bf16.gmra.mxu0 %v4235
      %v4510 = vpop.f32.mrf.mxu0
      %v4511 = vadd.f32 0.0, %v4510
      %v4512 = vpop.f32.mrf.mxu0
      %v4513 = vpop.f32.mrf.mxu0
      %v4514 = vadd.f32 0.0, %v4513
      %v4515 = vpop.f32.mrf.mxu0
      %4516 = vmatprep.mubr.bf16.mxu0 0
      %4517 = vmatmul.mubr.bf16.gmra.mxu0 %v4236
      %v4518 = vpop.f32.mrf.mxu0
      %v4519 = vadd.f32 0.0, %v4518
      %v4520 = vpop.f32.mrf.mxu0
      %v4521 = vpop.f32.mrf.mxu0
      %v4522 = vpop.f32.mrf.mxu0
      %4523 = vdwg.mxu0
      %v4524 = vadd.f32 %v4017, %v4343
      %v4525 = vadd.f32 %v4018, %v4346
      %v4526 = vadd.f32 %v4019, %v4351
      %v4527 = vadd.f32 %v4020, %v4354
      %v4528 = vadd.f32 %v4021, %v4359
      %v4529 = vadd.f32 %v4022, %v4362
      %v4530 = vadd.f32 %v4023, %v4367
      %v4531 = vadd.f32 %v4024, %v4370
      %v4532 = vadd.f32 %v4025, %v4375
      %v4533 = vadd.f32 %v4026, %v4378
      %v4534 = vadd.f32 %v4027, %v4383
      %v4535 = vadd.f32 %v4028, %v4386
      %v4536 = vadd.f32 %v4029, %v4391
      %v4537 = vadd.f32 %v4030, %v4394
      %v4538 = vadd.f32 %v4031, %v4399
      %v4539 = vadd.f32 %v4032, %v4402
      %v4540 = vadd.f32 %v4033, %v4407
      %v4541 = vadd.f32 %v4034, %v4410
      %v4542 = vadd.f32 %v4035, %v4415
      %v4543 = vadd.f32 %v4036, %v4418
      %v4544 = vadd.f32 %v4037, %v4423
      %v4545 = vadd.f32 %v4038, %v4426
      %v4546 = vadd.f32 %v4039, %v4431
      %v4547 = vadd.f32 %v4040, %v4434
      %v4548 = vadd.f32 %v4041, %v4439
      %v4549 = vadd.f32 %v4042, %v4442
      %v4550 = vadd.f32 %v4043, %v4447
      %v4551 = vadd.f32 %v4044, %v4450
      %v4552 = vadd.f32 %v4045, %v4455
      %v4553 = vadd.f32 %v4046, %v4458
      %v4554 = vadd.f32 %v4047, %v4463
      %v4555 = vadd.f32 %v4048, %v4466
      %v4556 = vadd.f32 %v4049, %v4471
      %v4557 = vadd.f32 %v4050, %v4474
      %v4558 = vadd.f32 %v4051, %v4479
      %v4559 = vadd.f32 %v4052, %v4482
      %v4560 = vadd.f32 %v4053, %v4487
      %v4561 = vadd.f32 %v4054, %v4490
      %v4562 = vadd.f32 %v4055, %v4495
      %v4563 = vadd.f32 %v4056, %v4498
      %v4564 = vadd.f32 %v4057, %v4503
      %v4565 = vadd.f32 %v4058, %v4506
      %v4566 = vadd.f32 %v4059, %v4511
      %v4567 = vadd.f32 %v4060, %v4514
      %v4568 = vadd.f32 %v4061, %v4519
      %v4569 = vld [vmem:[#allocation2 + $0x14] sm:$0xf]
      %v4570 = vld [vmem:[#allocation2 + $0x18] sm:$0xf]
      %v4571 = vld [vmem:[#allocation2 + $0x1c] sm:$0xf]
      %v4572 = vld [vmem:[#allocation2 + $0x20] sm:$0xf]
      %v4573 = vld [vmem:[#allocation2 + $0x24] sm:$0xf]
      %v4574 = vld [vmem:[#allocation2 + $0x28] sm:$0xf]
      %v4575 = vld [vmem:[#allocation2 + $0x2c] sm:$0xf]
      %v4576 = vld [vmem:[#allocation2 + $0x30] sm:$0xf]
      %v4577 = vld [vmem:[#allocation2 + $0x34] sm:$0xf]
      %v4578 = vld [vmem:[#allocation2 + $0x38] sm:$0xf]
      %v4579 = vld [vmem:[#allocation2 + $0x3c] sm:$0xf]
      %v4580 = vld [vmem:[#allocation2 + $0x40] sm:$0xf]
      %v4581 = vld [vmem:[#allocation2 + $0x44] sm:$0xf]
      %v4582 = vld [vmem:[#allocation2 + $0x48] sm:$0xf]
      %v4583 = vld [vmem:[#allocation2 + $0x4c] sm:$0xf]
      %v4584 = vld [vmem:[#allocation2 + $0x50] sm:$0xf]
      %v4585 = vld [vmem:[#allocation2 + $0x54] sm:$0xf]
      %v4586 = vld [vmem:[#allocation2 + $0x58] sm:$0xf]
      %v4587 = vld [vmem:[#allocation2 + $0x5c] sm:$0xf]
      %v4588 = vld [vmem:[#allocation2 + $0x60] sm:$0xf]
      %v4589 = vld [vmem:[#allocation2 + $0x64] sm:$0xf]
      %v4590 = vld [vmem:[#allocation2 + $0x68] sm:$0xf]
      %v4591 = vld [vmem:[#allocation2 + $0x6c] sm:$0xf]
      %v4592 = vld [vmem:[#allocation2 + $0x70] sm:$0xf]
      %v4593 = vld [vmem:[#allocation2 + $0x74] sm:$0xf]
      %v4594 = vld [vmem:[#allocation2 + $0x78] sm:$0xf]
      %v4595 = vld [vmem:[#allocation2 + $0x7c] sm:$0xf]
      %v4596 = vld [vmem:[#allocation2 + $0x80] sm:$0xf]
      %v4597 = vld [vmem:[#allocation2 + $0x84] sm:$0xf]
      %v4598 = vld [vmem:[#allocation2 + $0x88] sm:$0xf]
      %v4599 = vld [vmem:[#allocation2 + $0x8c] sm:$0xf]
      %v4600 = vld [vmem:[#allocation2 + $0x90] sm:$0xf]
      %v4601 = vld [vmem:[#allocation2 + $0x94] sm:$0xf]
      %v4602 = vld [vmem:[#allocation2 + $0x98] sm:$0xf]
      %v4603 = vld [vmem:[#allocation2 + $0x9c] sm:$0xf]
      %v4604 = vld [vmem:[#allocation2 + $0xa0] sm:$0xf]
      %v4605 = vld [vmem:[#allocation2 + $0xa4] sm:$0xf]
      %v4606 = vld [vmem:[#allocation2 + $0xa8] sm:$0xf]
      %v4607 = vld [vmem:[#allocation2 + $0xac] sm:$0xf]
      %v4608 = vld [vmem:[#allocation2 + $0xb0] sm:$0xf]
      %v4609 = vld [vmem:[#allocation2 + $0xb4] sm:$0xf]
      %v4610 = vld [vmem:[#allocation2 + $0xb8] sm:$0xf]
      %v4611 = vld [vmem:[#allocation2 + $0xbc] sm:$0xf]
      %v4612 = vld [vmem:[#allocation2 + $0xc0] sm:$0xf]
      %v4613 = vld [vmem:[#allocation2 + $0xc4] sm:$0xf]
      %v4614 = vld [vmem:[#allocation2 + $0xc8] sm:$0x1]
      %s4615 = scalar_lea.vmem %s3, 448
      %v4616 = vld [vmem:[%s4615] sm:$0xf]
      %v4617 = vld [vmem:[%s4615 + $0x4] sm:$0xf]
      %v4618 = vld [vmem:[%s4615 + $0x8] sm:$0xf]
      %v4619 = vld [vmem:[%s4615 + $0xc] sm:$0xf]
      %v4620 = vld [vmem:[%s4615 + $0x10] sm:$0xf]
      %v4621 = vld [vmem:[%s4615 + $0x14] sm:$0xf]
      %v4622 = vld [vmem:[%s4615 + $0x18] sm:$0xf]
      %v4623 = vld [vmem:[%s4615 + $0x1c] sm:$0xf]
      %v4624 = vld [vmem:[%s4615 + $0x20] sm:$0xf]
      %v4625 = vld [vmem:[%s4615 + $0x24] sm:$0xf]
      %v4626 = vld [vmem:[%s4615 + $0x28] sm:$0xf]
      %v4627 = vld [vmem:[%s4615 + $0x2c] sm:$0xf]
      %v4628 = vld [vmem:[%s4615 + $0x30] sm:$0xf]
      %v4629 = vld [vmem:[%s4615 + $0x34] sm:$0xf]
      %v4630 = vld [vmem:[%s4615 + $0x38] sm:$0xf]
      %v4631 = vld [vmem:[%s4615 + $0x3c] sm:$0xf]
      %v4678 = vunpack.c.l.b16 %v4569
      %v4679 = vunpack.c.l.b16 %v4570
      %v4680 = vunpack.c.l.b16 %v4571
      %v4681 = vunpack.c.l.b16 %v4572
      %v4682 = vunpack.c.l.b16 %v4573
      %v4683 = vunpack.c.l.b16 %v4574
      %v4684 = vunpack.c.l.b16 %v4575
      %v4685 = vunpack.c.l.b16 %v4576
      %v4686 = vunpack.c.l.b16 %v4577
      %v4687 = vunpack.c.l.b16 %v4578
      %v4688 = vunpack.c.l.b16 %v4579
      %v4689 = vunpack.c.l.b16 %v4580
      %v4690 = vunpack.c.l.b16 %v4581
      %v4691 = vunpack.c.l.b16 %v4582
      %v4692 = vunpack.c.l.b16 %v4583
      %v4693 = vunpack.c.l.b16 %v4584
      %v4694 = vunpack.c.l.b16 %v4585
      %v4695 = vunpack.c.l.b16 %v4586
      %v4696 = vunpack.c.l.b16 %v4587
      %v4697 = vunpack.c.l.b16 %v4588
      %v4698 = vunpack.c.l.b16 %v4589
      %v4699 = vunpack.c.l.b16 %v4590
      %v4700 = vunpack.c.l.b16 %v4591
      %v4701 = vunpack.c.l.b16 %v4592
      %v4702 = vunpack.c.l.b16 %v4593
      %v4703 = vunpack.c.l.b16 %v4594
      %v4704 = vunpack.c.l.b16 %v4595
      %v4705 = vunpack.c.l.b16 %v4596
      %v4706 = vunpack.c.l.b16 %v4597
      %v4707 = vunpack.c.l.b16 %v4598
      %v4708 = vunpack.c.l.b16 %v4599
      %v4709 = vunpack.c.l.b16 %v4600
      %v4710 = vunpack.c.l.b16 %v4601
      %v4711 = vunpack.c.l.b16 %v4602
      %v4712 = vunpack.c.l.b16 %v4603
      %v4713 = vunpack.c.l.b16 %v4604
      %v4714 = vunpack.c.l.b16 %v4605
      %v4715 = vunpack.c.l.b16 %v4606
      %v4716 = vunpack.c.l.b16 %v4607
      %v4717 = vunpack.c.l.b16 %v4608
      %v4718 = vunpack.c.l.b16 %v4609
      %v4719 = vunpack.c.l.b16 %v4610
      %v4720 = vunpack.c.l.b16 %v4611
      %v4721 = vunpack.c.l.b16 %v4612
      %v4722 = vunpack.c.l.b16 %v4613
      %v4723 = vunpack.c.l.b16 %v4614
      %v4724 = vpack.c.b16 %v4679, %v4678
      %v4725 = vpack.c.b16 %v4681, %v4680
      %v4726 = vpack.c.b16 %v4683, %v4682
      %v4727 = vpack.c.b16 %v4685, %v4684
      %v4728 = vpack.c.b16 %v4687, %v4686
      %v4729 = vpack.c.b16 %v4689, %v4688
      %v4730 = vpack.c.b16 %v4691, %v4690
      %v4731 = vpack.c.b16 %v4693, %v4692
      %v4732 = vpack.c.b16 %v4695, %v4694
      %v4733 = vpack.c.b16 %v4697, %v4696
      %v4734 = vpack.c.b16 %v4699, %v4698
      %v4735 = vpack.c.b16 %v4701, %v4700
      %v4736 = vpack.c.b16 %v4703, %v4702
      %v4737 = vpack.c.b16 %v4705, %v4704
      %v4738 = vpack.c.b16 %v4707, %v4706
      %v4739 = vpack.c.b16 %v4709, %v4708
      %v4740 = vpack.c.b16 %v4711, %v4710
      %v4741 = vpack.c.b16 %v4713, %v4712
      %v4742 = vpack.c.b16 %v4715, %v4714
      %v4743 = vpack.c.b16 %v4717, %v4716
      %v4744 = vpack.c.b16 %v4719, %v4718
      %v4745 = vpack.c.b16 %v4721, %v4720
      %v4746 = vpack.c.b16 %v4723, %v4722
      %v4748 = vshrl.u32 %v4724, 16
      %v4750 = vshll.u32 %v4724, 16
      %v4752 = vrot.slane %v4750, 1
      %v4753 = vor.u32 %v4748, %v4752
      %v4755 = vshll.u32 %v4725, 16
      %v4757 = vrot.slane %v4755, 1
      %v4758 = vsel %vm1389, %v4753, %v4757
      %v4759 = vshrl.u32 %v4725, 16
      %v4761 = vor.u32 %v4759, %v4757
      %v4763 = vshll.u32 %v4726, 16
      %v4765 = vrot.slane %v4763, 1
      %v4766 = vsel %vm1389, %v4761, %v4765
      %v4767 = vshrl.u32 %v4726, 16
      %v4769 = vor.u32 %v4767, %v4765
      %v4771 = vshll.u32 %v4727, 16
      %v4773 = vrot.slane %v4771, 1
      %v4774 = vsel %vm1389, %v4769, %v4773
      %v4775 = vshrl.u32 %v4727, 16
      %v4777 = vor.u32 %v4775, %v4773
      %v4779 = vshll.u32 %v4728, 16
      %v4781 = vrot.slane %v4779, 1
      %v4782 = vsel %vm1389, %v4777, %v4781
      %v4783 = vshrl.u32 %v4728, 16
      %v4785 = vor.u32 %v4783, %v4781
      %v4787 = vshll.u32 %v4729, 16
      %v4789 = vrot.slane %v4787, 1
      %v4790 = vsel %vm1389, %v4785, %v4789
      %v4791 = vshrl.u32 %v4729, 16
      %v4793 = vor.u32 %v4791, %v4789
      %v4795 = vshll.u32 %v4730, 16
      %v4797 = vrot.slane %v4795, 1
      %v4798 = vsel %vm1389, %v4793, %v4797
      %v4799 = vshrl.u32 %v4730, 16
      %v4801 = vor.u32 %v4799, %v4797
      %v4803 = vshll.u32 %v4731, 16
      %v4805 = vrot.slane %v4803, 1
      %v4806 = vsel %vm1389, %v4801, %v4805
      %v4807 = vshrl.u32 %v4731, 16
      %v4809 = vor.u32 %v4807, %v4805
      %v4811 = vshll.u32 %v4732, 16
      %v4813 = vrot.slane %v4811, 1
      %v4814 = vsel %vm1389, %v4809, %v4813
      %v4815 = vshrl.u32 %v4732, 16
      %v4817 = vor.u32 %v4815, %v4813
      %v4819 = vshll.u32 %v4733, 16
      %v4821 = vrot.slane %v4819, 1
      %v4822 = vsel %vm1389, %v4817, %v4821
      %v4823 = vshrl.u32 %v4733, 16
      %v4825 = vor.u32 %v4823, %v4821
      %v4827 = vshll.u32 %v4734, 16
      %v4829 = vrot.slane %v4827, 1
      %v4830 = vsel %vm1389, %v4825, %v4829
      %v4831 = vshrl.u32 %v4734, 16
      %v4833 = vor.u32 %v4831, %v4829
      %v4835 = vshll.u32 %v4735, 16
      %v4837 = vrot.slane %v4835, 1
      %v4838 = vsel %vm1389, %v4833, %v4837
      %v4839 = vshrl.u32 %v4735, 16
      %v4841 = vor.u32 %v4839, %v4837
      %v4843 = vshll.u32 %v4736, 16
      %v4845 = vrot.slane %v4843, 1
      %v4846 = vsel %vm1389, %v4841, %v4845
      %v4847 = vshrl.u32 %v4736, 16
      %v4849 = vor.u32 %v4847, %v4845
      %v4851 = vshll.u32 %v4737, 16
      %v4853 = vrot.slane %v4851, 1
      %v4854 = vsel %vm1389, %v4849, %v4853
      %v4855 = vshrl.u32 %v4737, 16
      %v4857 = vor.u32 %v4855, %v4853
      %v4859 = vshll.u32 %v4738, 16
      %v4861 = vrot.slane %v4859, 1
      %v4862 = vsel %vm1389, %v4857, %v4861
      %v4863 = vshrl.u32 %v4738, 16
      %v4865 = vor.u32 %v4863, %v4861
      %v4867 = vshll.u32 %v4739, 16
      %v4869 = vrot.slane %v4867, 1
      %v4870 = vsel %vm1389, %v4865, %v4869
      %v4871 = vshrl.u32 %v4739, 16
      %v4873 = vor.u32 %v4871, %v4869
      %v4875 = vshll.u32 %v4740, 16
      %v4877 = vrot.slane %v4875, 1
      %v4878 = vsel %vm1389, %v4873, %v4877
      %v4879 = vshrl.u32 %v4740, 16
      %v4881 = vor.u32 %v4879, %v4877
      %v4883 = vshll.u32 %v4741, 16
      %v4885 = vrot.slane %v4883, 1
      %v4886 = vsel %vm1389, %v4881, %v4885
      %v4887 = vshrl.u32 %v4741, 16
      %v4889 = vor.u32 %v4887, %v4885
      %v4891 = vshll.u32 %v4742, 16
      %v4893 = vrot.slane %v4891, 1
      %v4894 = vsel %vm1389, %v4889, %v4893
      %v4895 = vshrl.u32 %v4742, 16
      %v4897 = vor.u32 %v4895, %v4893
      %v4899 = vshll.u32 %v4743, 16
      %v4901 = vrot.slane %v4899, 1
      %v4902 = vsel %vm1389, %v4897, %v4901
      %v4903 = vshrl.u32 %v4743, 16
      %v4905 = vor.u32 %v4903, %v4901
      %v4907 = vshll.u32 %v4744, 16
      %v4909 = vrot.slane %v4907, 1
      %v4910 = vsel %vm1389, %v4905, %v4909
      %v4911 = vshrl.u32 %v4744, 16
      %v4913 = vor.u32 %v4911, %v4909
      %v4915 = vshll.u32 %v4745, 16
      %v4917 = vrot.slane %v4915, 1
      %v4918 = vsel %vm1389, %v4913, %v4917
      %v4919 = vshrl.u32 %v4745, 16
      %v4921 = vor.u32 %v4919, %v4917
      %v4923 = vshll.u32 %v4746, 16
      %v4925 = vrot.slane %v4923, 1
      %v4926 = vsel %vm1389, %v4921, %v4925
      %v4927 = vshrl.u32 %v4746, 16
      %v4929 = vor.u32 %v4927, %v4925
      %v4969 = vunpack.c.l.b16 %v4616
      %v4970 = vunpack.c.l.b16 %v4617
      %v4971 = vunpack.c.l.b16 %v4618
      %v4972 = vunpack.c.l.b16 %v4619
      %v4973 = vunpack.c.l.b16 %v4620
      %v4974 = vunpack.c.l.b16 %v4621
      %v4975 = vunpack.c.l.b16 %v4622
      %v4976 = vunpack.c.l.b16 %v4623
      %v4977 = vunpack.c.l.b16 %v4624
      %v4978 = vunpack.c.l.b16 %v4625
      %v4979 = vunpack.c.l.b16 %v4626
      %v4980 = vunpack.c.l.b16 %v4627
      %v4981 = vunpack.c.l.b16 %v4628
      %v4982 = vunpack.c.l.b16 %v4629
      %v4983 = vunpack.c.l.b16 %v4630
      %v4984 = vunpack.c.l.b16 %v4631
      %v4985 = vpack.c.b16 %v4970, %v4969
      %v4986 = vpack.c.b16 %v4972, %v4971
      %v4987 = vpack.c.b16 %v4974, %v4973
      %v4988 = vpack.c.b16 %v4976, %v4975
      %v4989 = vpack.c.b16 %v4978, %v4977
      %v4990 = vpack.c.b16 %v4980, %v4979
      %v4991 = vpack.c.b16 %v4982, %v4981
      %v4992 = vpack.c.b16 %v4984, %v4983
      %5001 = vmatprep.subr.bf16.mxu0 0
      %5002 = vmatpush1.bf16.msra.mxu0 %v4992
      %5003 = vmatprep.subr.bf16.mxu0 0
      %5004 = vmatpush1.bf16.msra.mxu0 %v4991
      %5005 = vmatprep.subr.bf16.mxu0 0
      %5006 = vmatpush1.bf16.msra.mxu0 %v4990
      %5007 = vmatprep.subr.bf16.mxu0 0
      %5008 = vmatpush1.bf16.msra.mxu0 %v4989
      %5009 = vmatprep.subr.bf16.mxu0 0
      %5010 = vmatpush1.bf16.msra.mxu0 %v4988
      %5011 = vmatprep.subr.bf16.mxu0 0
      %5012 = vmatpush1.bf16.msra.mxu0 %v4987
      %5013 = vmatprep.subr.bf16.mxu0 0
      %5014 = vmatpush1.bf16.msra.mxu0 %v4986
      %5015 = vmatprep.subr.bf16.mxu0 0
      %5016 = vmatpush1.bf16.msra.mxu0 %v4985
      %5017 = vmatprep.subr.bf16.mxu0 0
      %5018 = vmatpush2.bf16.msra.mxu0 0
      %5019 = vmatprep.subr.bf16.mxu0 0
      %5020 = vmatpush2.bf16.msra.mxu0 0
      %5021 = vmatprep.subr.bf16.mxu0 0
      %5022 = vmatpush2.bf16.msra.mxu0 0
      %5023 = vmatprep.subr.bf16.mxu0 0
      %5024 = vmatpush2.bf16.msra.mxu0 0
      %5025 = vmatprep.subr.bf16.mxu0 0
      %5026 = vmatpush2.bf16.msra.mxu0 0
      %5027 = vmatprep.subr.bf16.mxu0 0
      %5028 = vmatpush2.bf16.msra.mxu0 0
      %5029 = vmatprep.subr.bf16.mxu0 0
      %5030 = vmatpush2.bf16.msra.mxu0 0
      %5031 = vmatprep.subr.bf16.mxu0 0
      %5032 = vmatpush2.bf16.msra.mxu0 0
      %5033 = vmatprep.mubr.bf16.mxu0 0
      %5034 = vmatmul.mubr.bf16.gmra.mxu0 %v4758
      %v5035 = vpop.f32.mrf.mxu0
      %v5036 = vadd.f32 0.0, %v5035
      %v5037 = vpop.f32.mrf.mxu0
      %v5038 = vpop.f32.mrf.mxu0
      %v5039 = vadd.f32 0.0, %v5038
      %v5040 = vpop.f32.mrf.mxu0
      %5041 = vmatprep.mubr.bf16.mxu0 0
      %5042 = vmatmul.mubr.bf16.gmra.mxu0 %v4766
      %v5043 = vpop.f32.mrf.mxu0
      %v5044 = vadd.f32 0.0, %v5043
      %v5045 = vpop.f32.mrf.mxu0
      %v5046 = vpop.f32.mrf.mxu0
      %v5047 = vadd.f32 0.0, %v5046
      %v5048 = vpop.f32.mrf.mxu0
      %5049 = vmatprep.mubr.bf16.mxu0 0
      %5050 = vmatmul.mubr.bf16.gmra.mxu0 %v4774
      %v5051 = vpop.f32.mrf.mxu0
      %v5052 = vadd.f32 0.0, %v5051
      %v5053 = vpop.f32.mrf.mxu0
      %v5054 = vpop.f32.mrf.mxu0
      %v5055 = vadd.f32 0.0, %v5054
      %v5056 = vpop.f32.mrf.mxu0
      %5057 = vmatprep.mubr.bf16.mxu0 0
      %5058 = vmatmul.mubr.bf16.gmra.mxu0 %v4782
      %v5059 = vpop.f32.mrf.mxu0
      %v5060 = vadd.f32 0.0, %v5059
      %v5061 = vpop.f32.mrf.mxu0
      %v5062 = vpop.f32.mrf.mxu0
      %v5063 = vadd.f32 0.0, %v5062
      %v5064 = vpop.f32.mrf.mxu0
      %5065 = vmatprep.mubr.bf16.mxu0 0
      %5066 = vmatmul.mubr.bf16.gmra.mxu0 %v4790
      %v5067 = vpop.f32.mrf.mxu0
      %v5068 = vadd.f32 0.0, %v5067
      %v5069 = vpop.f32.mrf.mxu0
      %v5070 = vpop.f32.mrf.mxu0
      %v5071 = vadd.f32 0.0, %v5070
      %v5072 = vpop.f32.mrf.mxu0
      %5073 = vmatprep.mubr.bf16.mxu0 0
      %5074 = vmatmul.mubr.bf16.gmra.mxu0 %v4798
      %v5075 = vpop.f32.mrf.mxu0
      %v5076 = vadd.f32 0.0, %v5075
      %v5077 = vpop.f32.mrf.mxu0
      %v5078 = vpop.f32.mrf.mxu0
      %v5079 = vadd.f32 0.0, %v5078
      %v5080 = vpop.f32.mrf.mxu0
      %5081 = vmatprep.mubr.bf16.mxu0 0
      %5082 = vmatmul.mubr.bf16.gmra.mxu0 %v4806
      %v5083 = vpop.f32.mrf.mxu0
      %v5084 = vadd.f32 0.0, %v5083
      %v5085 = vpop.f32.mrf.mxu0
      %v5086 = vpop.f32.mrf.mxu0
      %v5087 = vadd.f32 0.0, %v5086
      %v5088 = vpop.f32.mrf.mxu0
      %5089 = vmatprep.mubr.bf16.mxu0 0
      %5090 = vmatmul.mubr.bf16.gmra.mxu0 %v4814
      %v5091 = vpop.f32.mrf.mxu0
      %v5092 = vadd.f32 0.0, %v5091
      %v5093 = vpop.f32.mrf.mxu0
      %v5094 = vpop.f32.mrf.mxu0
      %v5095 = vadd.f32 0.0, %v5094
      %v5096 = vpop.f32.mrf.mxu0
      %5097 = vmatprep.mubr.bf16.mxu0 0
      %5098 = vmatmul.mubr.bf16.gmra.mxu0 %v4822
      %v5099 = vpop.f32.mrf.mxu0
      %v5100 = vadd.f32 0.0, %v5099
      %v5101 = vpop.f32.mrf.mxu0
      %v5102 = vpop.f32.mrf.mxu0
      %v5103 = vadd.f32 0.0, %v5102
      %v5104 = vpop.f32.mrf.mxu0
      %5105 = vmatprep.mubr.bf16.mxu0 0
      %5106 = vmatmul.mubr.bf16.gmra.mxu0 %v4830
      %v5107 = vpop.f32.mrf.mxu0
      %v5108 = vadd.f32 0.0, %v5107
      %v5109 = vpop.f32.mrf.mxu0
      %v5110 = vpop.f32.mrf.mxu0
      %v5111 = vadd.f32 0.0, %v5110
      %v5112 = vpop.f32.mrf.mxu0
      %5113 = vmatprep.mubr.bf16.mxu0 0
      %5114 = vmatmul.mubr.bf16.gmra.mxu0 %v4838
      %v5115 = vpop.f32.mrf.mxu0
      %v5116 = vadd.f32 0.0, %v5115
      %v5117 = vpop.f32.mrf.mxu0
      %v5118 = vpop.f32.mrf.mxu0
      %v5119 = vadd.f32 0.0, %v5118
      %v5120 = vpop.f32.mrf.mxu0
      %5121 = vmatprep.mubr.bf16.mxu0 0
      %5122 = vmatmul.mubr.bf16.gmra.mxu0 %v4846
      %v5123 = vpop.f32.mrf.mxu0
      %v5124 = vadd.f32 0.0, %v5123
      %v5125 = vpop.f32.mrf.mxu0
      %v5126 = vpop.f32.mrf.mxu0
      %v5127 = vadd.f32 0.0, %v5126
      %v5128 = vpop.f32.mrf.mxu0
      %5129 = vmatprep.mubr.bf16.mxu0 0
      %5130 = vmatmul.mubr.bf16.gmra.mxu0 %v4854
      %v5131 = vpop.f32.mrf.mxu0
      %v5132 = vadd.f32 0.0, %v5131
      %v5133 = vpop.f32.mrf.mxu0
      %v5134 = vpop.f32.mrf.mxu0
      %v5135 = vadd.f32 0.0, %v5134
      %v5136 = vpop.f32.mrf.mxu0
      %5137 = vmatprep.mubr.bf16.mxu0 0
      %5138 = vmatmul.mubr.bf16.gmra.mxu0 %v4862
      %v5139 = vpop.f32.mrf.mxu0
      %v5140 = vadd.f32 0.0, %v5139
      %v5141 = vpop.f32.mrf.mxu0
      %v5142 = vpop.f32.mrf.mxu0
      %v5143 = vadd.f32 0.0, %v5142
      %v5144 = vpop.f32.mrf.mxu0
      %5145 = vmatprep.mubr.bf16.mxu0 0
      %5146 = vmatmul.mubr.bf16.gmra.mxu0 %v4870
      %v5147 = vpop.f32.mrf.mxu0
      %v5148 = vadd.f32 0.0, %v5147
      %v5149 = vpop.f32.mrf.mxu0
      %v5150 = vpop.f32.mrf.mxu0
      %v5151 = vadd.f32 0.0, %v5150
      %v5152 = vpop.f32.mrf.mxu0
      %5153 = vmatprep.mubr.bf16.mxu0 0
      %5154 = vmatmul.mubr.bf16.gmra.mxu0 %v4878
      %v5155 = vpop.f32.mrf.mxu0
      %v5156 = vadd.f32 0.0, %v5155
      %v5157 = vpop.f32.mrf.mxu0
      %v5158 = vpop.f32.mrf.mxu0
      %v5159 = vadd.f32 0.0, %v5158
      %v5160 = vpop.f32.mrf.mxu0
      %5161 = vmatprep.mubr.bf16.mxu0 0
      %5162 = vmatmul.mubr.bf16.gmra.mxu0 %v4886
      %v5163 = vpop.f32.mrf.mxu0
      %v5164 = vadd.f32 0.0, %v5163
      %v5165 = vpop.f32.mrf.mxu0
      %v5166 = vpop.f32.mrf.mxu0
      %v5167 = vadd.f32 0.0, %v5166
      %v5168 = vpop.f32.mrf.mxu0
      %5169 = vmatprep.mubr.bf16.mxu0 0
      %5170 = vmatmul.mubr.bf16.gmra.mxu0 %v4894
      %v5171 = vpop.f32.mrf.mxu0
      %v5172 = vadd.f32 0.0, %v5171
      %v5173 = vpop.f32.mrf.mxu0
      %v5174 = vpop.f32.mrf.mxu0
      %v5175 = vadd.f32 0.0, %v5174
      %v5176 = vpop.f32.mrf.mxu0
      %5177 = vmatprep.mubr.bf16.mxu0 0
      %5178 = vmatmul.mubr.bf16.gmra.mxu0 %v4902
      %v5179 = vpop.f32.mrf.mxu0
      %v5180 = vadd.f32 0.0, %v5179
      %v5181 = vpop.f32.mrf.mxu0
      %v5182 = vpop.f32.mrf.mxu0
      %v5183 = vadd.f32 0.0, %v5182
      %v5184 = vpop.f32.mrf.mxu0
      %5185 = vmatprep.mubr.bf16.mxu0 0
      %5186 = vmatmul.mubr.bf16.gmra.mxu0 %v4910
      %v5187 = vpop.f32.mrf.mxu0
      %v5188 = vadd.f32 0.0, %v5187
      %v5189 = vpop.f32.mrf.mxu0
      %v5190 = vpop.f32.mrf.mxu0
      %v5191 = vadd.f32 0.0, %v5190
      %v5192 = vpop.f32.mrf.mxu0
      %5193 = vmatprep.mubr.bf16.mxu0 0
      %5194 = vmatmul.mubr.bf16.gmra.mxu0 %v4918
      %v5195 = vpop.f32.mrf.mxu0
      %v5196 = vadd.f32 0.0, %v5195
      %v5197 = vpop.f32.mrf.mxu0
      %v5198 = vpop.f32.mrf.mxu0
      %v5199 = vadd.f32 0.0, %v5198
      %v5200 = vpop.f32.mrf.mxu0
      %5201 = vmatprep.mubr.bf16.mxu0 0
      %5202 = vmatmul.mubr.bf16.gmra.mxu0 %v4926
      %v5203 = vpop.f32.mrf.mxu0
      %v5204 = vadd.f32 0.0, %v5203
      %v5205 = vpop.f32.mrf.mxu0
      %v5206 = vpop.f32.mrf.mxu0
      %v5207 = vadd.f32 0.0, %v5206
      %v5208 = vpop.f32.mrf.mxu0
      %5209 = vmatprep.mubr.bf16.mxu0 0
      %5210 = vmatmul.mubr.bf16.gmra.mxu0 %v4929
      %v5211 = vpop.f32.mrf.mxu0
      %v5212 = vadd.f32 0.0, %v5211
      %v5213 = vpop.f32.mrf.mxu0
      %v5214 = vpop.f32.mrf.mxu0
      %v5215 = vpop.f32.mrf.mxu0
      %5216 = vdwg.mxu0
      %v5217 = vadd.f32 %v4524, %v5036
      %v5218 = vadd.f32 %v4525, %v5039
      %v5219 = vadd.f32 %v4526, %v5044
      %v5220 = vadd.f32 %v4527, %v5047
      %v5221 = vadd.f32 %v4528, %v5052
      %v5222 = vadd.f32 %v4529, %v5055
      %v5223 = vadd.f32 %v4530, %v5060
      %v5224 = vadd.f32 %v4531, %v5063
      %v5225 = vadd.f32 %v4532, %v5068
      %v5226 = vadd.f32 %v4533, %v5071
      %v5227 = vadd.f32 %v4534, %v5076
      %v5228 = vadd.f32 %v4535, %v5079
      %v5229 = vadd.f32 %v4536, %v5084
      %v5230 = vadd.f32 %v4537, %v5087
      %v5231 = vadd.f32 %v4538, %v5092
      %v5232 = vadd.f32 %v4539, %v5095
      %v5233 = vadd.f32 %v4540, %v5100
      %v5234 = vadd.f32 %v4541, %v5103
      %v5235 = vadd.f32 %v4542, %v5108
      %v5236 = vadd.f32 %v4543, %v5111
      %v5237 = vadd.f32 %v4544, %v5116
      %v5238 = vadd.f32 %v4545, %v5119
      %v5239 = vadd.f32 %v4546, %v5124
      %v5240 = vadd.f32 %v4547, %v5127
      %v5241 = vadd.f32 %v4548, %v5132
      %v5242 = vadd.f32 %v4549, %v5135
      %v5243 = vadd.f32 %v4550, %v5140
      %v5244 = vadd.f32 %v4551, %v5143
      %v5245 = vadd.f32 %v4552, %v5148
      %v5246 = vadd.f32 %v4553, %v5151
      %v5247 = vadd.f32 %v4554, %v5156
      %v5248 = vadd.f32 %v4555, %v5159
      %v5249 = vadd.f32 %v4556, %v5164
      %v5250 = vadd.f32 %v4557, %v5167
      %v5251 = vadd.f32 %v4558, %v5172
      %v5252 = vadd.f32 %v4559, %v5175
      %v5253 = vadd.f32 %v4560, %v5180
      %v5254 = vadd.f32 %v4561, %v5183
      %v5255 = vadd.f32 %v4562, %v5188
      %v5256 = vadd.f32 %v4563, %v5191
      %v5257 = vadd.f32 %v4564, %v5196
      %v5258 = vadd.f32 %v4565, %v5199
      %v5259 = vadd.f32 %v4566, %v5204
      %v5260 = vadd.f32 %v4567, %v5207
      %v5261 = vadd.f32 %v4568, %v5212
      %v5262 = vld [vmem:[#allocation2 + $0x14] sm:$0xe]
      %s5263 = scalar_lea.vmem %s3, 512
      %v5264 = vld [vmem:[%s5263] sm:$0xf]
      %v5265 = vld [vmem:[%s5263 + $0x4] sm:$0xf]
      %v5266 = vld [vmem:[%s5263 + $0x8] sm:$0xf]
      %v5267 = vld [vmem:[%s5263 + $0xc] sm:$0xf]
      %v5268 = vld [vmem:[%s5263 + $0x10] sm:$0xf]
      %v5269 = vld [vmem:[%s5263 + $0x14] sm:$0xf]
      %v5270 = vld [vmem:[%s5263 + $0x18] sm:$0xf]
      %v5271 = vld [vmem:[%s5263 + $0x1c] sm:$0xf]
      %v5272 = vld [vmem:[%s5263 + $0x20] sm:$0xf]
      %v5273 = vld [vmem:[%s5263 + $0x24] sm:$0xf]
      %v5274 = vld [vmem:[%s5263 + $0x28] sm:$0xf]
      %v5275 = vld [vmem:[%s5263 + $0x2c] sm:$0xf]
      %v5276 = vld [vmem:[%s5263 + $0x30] sm:$0xf]
      %v5277 = vld [vmem:[%s5263 + $0x34] sm:$0xf]
      %v5278 = vld [vmem:[%s5263 + $0x38] sm:$0xf]
      %v5279 = vld [vmem:[%s5263 + $0x3c] sm:$0xf]
      %v5281 = vunpack.c.l.b16 %v5262
      %v5282 = vpack.c.b16 %v4679, %v5281
      %v5283 = vrot.slane %v5282, 1
      %v5284 = vrot.slane %v4725, 1
      %v5285 = vsel %vm2169, %v5283, %v5284
      %v5286 = vrot.slane %v4726, 1
      %v5287 = vsel %vm2169, %v5284, %v5286
      %v5288 = vrot.slane %v4727, 1
      %v5289 = vsel %vm2169, %v5286, %v5288
      %v5290 = vrot.slane %v4728, 1
      %v5291 = vsel %vm2169, %v5288, %v5290
      %v5292 = vrot.slane %v4729, 1
      %v5293 = vsel %vm2169, %v5290, %v5292
      %v5294 = vrot.slane %v4730, 1
      %v5295 = vsel %vm2169, %v5292, %v5294
      %v5296 = vrot.slane %v4731, 1
      %v5297 = vsel %vm2169, %v5294, %v5296
      %v5298 = vrot.slane %v4732, 1
      %v5299 = vsel %vm2169, %v5296, %v5298
      %v5300 = vrot.slane %v4733, 1
      %v5301 = vsel %vm2169, %v5298, %v5300
      %v5302 = vrot.slane %v4734, 1
      %v5303 = vsel %vm2169, %v5300, %v5302
      %v5304 = vrot.slane %v4735, 1
      %v5305 = vsel %vm2169, %v5302, %v5304
      %v5306 = vrot.slane %v4736, 1
      %v5307 = vsel %vm2169, %v5304, %v5306
      %v5308 = vrot.slane %v4737, 1
      %v5309 = vsel %vm2169, %v5306, %v5308
      %v5310 = vrot.slane %v4738, 1
      %v5311 = vsel %vm2169, %v5308, %v5310
      %v5312 = vrot.slane %v4739, 1
      %v5313 = vsel %vm2169, %v5310, %v5312
      %v5314 = vrot.slane %v4740, 1
      %v5315 = vsel %vm2169, %v5312, %v5314
      %v5316 = vrot.slane %v4741, 1
      %v5317 = vsel %vm2169, %v5314, %v5316
      %v5318 = vrot.slane %v4742, 1
      %v5319 = vsel %vm2169, %v5316, %v5318
      %v5320 = vrot.slane %v4743, 1
      %v5321 = vsel %vm2169, %v5318, %v5320
      %v5322 = vrot.slane %v4744, 1
      %v5323 = vsel %vm2169, %v5320, %v5322
      %v5324 = vrot.slane %v4745, 1
      %v5325 = vsel %vm2169, %v5322, %v5324
      %v5326 = vrot.slane %v4746, 1
      %v5327 = vsel %vm2169, %v5324, %v5326
      %v5367 = vunpack.c.l.b16 %v5264
      %v5368 = vunpack.c.l.b16 %v5265
      %v5369 = vunpack.c.l.b16 %v5266
      %v5370 = vunpack.c.l.b16 %v5267
      %v5371 = vunpack.c.l.b16 %v5268
      %v5372 = vunpack.c.l.b16 %v5269
      %v5373 = vunpack.c.l.b16 %v5270
      %v5374 = vunpack.c.l.b16 %v5271
      %v5375 = vunpack.c.l.b16 %v5272
      %v5376 = vunpack.c.l.b16 %v5273
      %v5377 = vunpack.c.l.b16 %v5274
      %v5378 = vunpack.c.l.b16 %v5275
      %v5379 = vunpack.c.l.b16 %v5276
      %v5380 = vunpack.c.l.b16 %v5277
      %v5381 = vunpack.c.l.b16 %v5278
      %v5382 = vunpack.c.l.b16 %v5279
      %v5383 = vpack.c.b16 %v5368, %v5367
      %v5384 = vpack.c.b16 %v5370, %v5369
      %v5385 = vpack.c.b16 %v5372, %v5371
      %v5386 = vpack.c.b16 %v5374, %v5373
      %v5387 = vpack.c.b16 %v5376, %v5375
      %v5388 = vpack.c.b16 %v5378, %v5377
      %v5389 = vpack.c.b16 %v5380, %v5379
      %v5390 = vpack.c.b16 %v5382, %v5381
      %5399 = vmatprep.subr.bf16.mxu0 0
      %5400 = vmatpush1.bf16.msra.mxu0 %v5390
      %5401 = vmatprep.subr.bf16.mxu0 0
      %5402 = vmatpush1.bf16.msra.mxu0 %v5389
      %5403 = vmatprep.subr.bf16.mxu0 0
      %5404 = vmatpush1.bf16.msra.mxu0 %v5388
      %5405 = vmatprep.subr.bf16.mxu0 0
      %5406 = vmatpush1.bf16.msra.mxu0 %v5387
      %5407 = vmatprep.subr.bf16.mxu0 0
      %5408 = vmatpush1.bf16.msra.mxu0 %v5386
      %5409 = vmatprep.subr.bf16.mxu0 0
      %5410 = vmatpush1.bf16.msra.mxu0 %v5385
      %5411 = vmatprep.subr.bf16.mxu0 0
      %5412 = vmatpush1.bf16.msra.mxu0 %v5384
      %5413 = vmatprep.subr.bf16.mxu0 0
      %5414 = vmatpush1.bf16.msra.mxu0 %v5383
      %5415 = vmatprep.subr.bf16.mxu0 0
      %5416 = vmatpush2.bf16.msra.mxu0 0
      %5417 = vmatprep.subr.bf16.mxu0 0
      %5418 = vmatpush2.bf16.msra.mxu0 0
      %5419 = vmatprep.subr.bf16.mxu0 0
      %5420 = vmatpush2.bf16.msra.mxu0 0
      %5421 = vmatprep.subr.bf16.mxu0 0
      %5422 = vmatpush2.bf16.msra.mxu0 0
      %5423 = vmatprep.subr.bf16.mxu0 0
      %5424 = vmatpush2.bf16.msra.mxu0 0
      %5425 = vmatprep.subr.bf16.mxu0 0
      %5426 = vmatpush2.bf16.msra.mxu0 0
      %5427 = vmatprep.subr.bf16.mxu0 0
      %5428 = vmatpush2.bf16.msra.mxu0 0
      %5429 = vmatprep.subr.bf16.mxu0 0
      %5430 = vmatpush2.bf16.msra.mxu0 0
      %5431 = vmatprep.mubr.bf16.mxu0 0
      %5432 = vmatmul.mubr.bf16.gmra.mxu0 %v5285
      %v5433 = vpop.f32.mrf.mxu0
      %v5434 = vadd.f32 0.0, %v5433
      %v5435 = vpop.f32.mrf.mxu0
      %v5436 = vpop.f32.mrf.mxu0
      %v5437 = vadd.f32 0.0, %v5436
      %v5438 = vpop.f32.mrf.mxu0
      %5439 = vmatprep.mubr.bf16.mxu0 0
      %5440 = vmatmul.mubr.bf16.gmra.mxu0 %v5287
      %v5441 = vpop.f32.mrf.mxu0
      %v5442 = vadd.f32 0.0, %v5441
      %v5443 = vpop.f32.mrf.mxu0
      %v5444 = vpop.f32.mrf.mxu0
      %v5445 = vadd.f32 0.0, %v5444
      %v5446 = vpop.f32.mrf.mxu0
      %5447 = vmatprep.mubr.bf16.mxu0 0
      %5448 = vmatmul.mubr.bf16.gmra.mxu0 %v5289
      %v5449 = vpop.f32.mrf.mxu0
      %v5450 = vadd.f32 0.0, %v5449
      %v5451 = vpop.f32.mrf.mxu0
      %v5452 = vpop.f32.mrf.mxu0
      %v5453 = vadd.f32 0.0, %v5452
      %v5454 = vpop.f32.mrf.mxu0
      %5455 = vmatprep.mubr.bf16.mxu0 0
      %5456 = vmatmul.mubr.bf16.gmra.mxu0 %v5291
      %v5457 = vpop.f32.mrf.mxu0
      %v5458 = vadd.f32 0.0, %v5457
      %v5459 = vpop.f32.mrf.mxu0
      %v5460 = vpop.f32.mrf.mxu0
      %v5461 = vadd.f32 0.0, %v5460
      %v5462 = vpop.f32.mrf.mxu0
      %5463 = vmatprep.mubr.bf16.mxu0 0
      %5464 = vmatmul.mubr.bf16.gmra.mxu0 %v5293
      %v5465 = vpop.f32.mrf.mxu0
      %v5466 = vadd.f32 0.0, %v5465
      %v5467 = vpop.f32.mrf.mxu0
      %v5468 = vpop.f32.mrf.mxu0
      %v5469 = vadd.f32 0.0, %v5468
      %v5470 = vpop.f32.mrf.mxu0
      %5471 = vmatprep.mubr.bf16.mxu0 0
      %5472 = vmatmul.mubr.bf16.gmra.mxu0 %v5295
      %v5473 = vpop.f32.mrf.mxu0
      %v5474 = vadd.f32 0.0, %v5473
      %v5475 = vpop.f32.mrf.mxu0
      %v5476 = vpop.f32.mrf.mxu0
      %v5477 = vadd.f32 0.0, %v5476
      %v5478 = vpop.f32.mrf.mxu0
      %5479 = vmatprep.mubr.bf16.mxu0 0
      %5480 = vmatmul.mubr.bf16.gmra.mxu0 %v5297
      %v5481 = vpop.f32.mrf.mxu0
      %v5482 = vadd.f32 0.0, %v5481
      %v5483 = vpop.f32.mrf.mxu0
      %v5484 = vpop.f32.mrf.mxu0
      %v5485 = vadd.f32 0.0, %v5484
      %v5486 = vpop.f32.mrf.mxu0
      %5487 = vmatprep.mubr.bf16.mxu0 0
      %5488 = vmatmul.mubr.bf16.gmra.mxu0 %v5299
      %v5489 = vpop.f32.mrf.mxu0
      %v5490 = vadd.f32 0.0, %v5489
      %v5491 = vpop.f32.mrf.mxu0
      %v5492 = vpop.f32.mrf.mxu0
      %v5493 = vadd.f32 0.0, %v5492
      %v5494 = vpop.f32.mrf.mxu0
      %5495 = vmatprep.mubr.bf16.mxu0 0
      %5496 = vmatmul.mubr.bf16.gmra.mxu0 %v5301
      %v5497 = vpop.f32.mrf.mxu0
      %v5498 = vadd.f32 0.0, %v5497
      %v5499 = vpop.f32.mrf.mxu0
      %v5500 = vpop.f32.mrf.mxu0
      %v5501 = vadd.f32 0.0, %v5500
      %v5502 = vpop.f32.mrf.mxu0
      %5503 = vmatprep.mubr.bf16.mxu0 0
      %5504 = vmatmul.mubr.bf16.gmra.mxu0 %v5303
      %v5505 = vpop.f32.mrf.mxu0
      %v5506 = vadd.f32 0.0, %v5505
      %v5507 = vpop.f32.mrf.mxu0
      %v5508 = vpop.f32.mrf.mxu0
      %v5509 = vadd.f32 0.0, %v5508
      %v5510 = vpop.f32.mrf.mxu0
      %5511 = vmatprep.mubr.bf16.mxu0 0
      %5512 = vmatmul.mubr.bf16.gmra.mxu0 %v5305
      %v5513 = vpop.f32.mrf.mxu0
      %v5514 = vadd.f32 0.0, %v5513
      %v5515 = vpop.f32.mrf.mxu0
      %v5516 = vpop.f32.mrf.mxu0
      %v5517 = vadd.f32 0.0, %v5516
      %v5518 = vpop.f32.mrf.mxu0
      %5519 = vmatprep.mubr.bf16.mxu0 0
      %5520 = vmatmul.mubr.bf16.gmra.mxu0 %v5307
      %v5521 = vpop.f32.mrf.mxu0
      %v5522 = vadd.f32 0.0, %v5521
      %v5523 = vpop.f32.mrf.mxu0
      %v5524 = vpop.f32.mrf.mxu0
      %v5525 = vadd.f32 0.0, %v5524
      %v5526 = vpop.f32.mrf.mxu0
      %5527 = vmatprep.mubr.bf16.mxu0 0
      %5528 = vmatmul.mubr.bf16.gmra.mxu0 %v5309
      %v5529 = vpop.f32.mrf.mxu0
      %v5530 = vadd.f32 0.0, %v5529
      %v5531 = vpop.f32.mrf.mxu0
      %v5532 = vpop.f32.mrf.mxu0
      %v5533 = vadd.f32 0.0, %v5532
      %v5534 = vpop.f32.mrf.mxu0
      %5535 = vmatprep.mubr.bf16.mxu0 0
      %5536 = vmatmul.mubr.bf16.gmra.mxu0 %v5311
      %v5537 = vpop.f32.mrf.mxu0
      %v5538 = vadd.f32 0.0, %v5537
      %v5539 = vpop.f32.mrf.mxu0
      %v5540 = vpop.f32.mrf.mxu0
      %v5541 = vadd.f32 0.0, %v5540
      %v5542 = vpop.f32.mrf.mxu0
      %5543 = vmatprep.mubr.bf16.mxu0 0
      %5544 = vmatmul.mubr.bf16.gmra.mxu0 %v5313
      %v5545 = vpop.f32.mrf.mxu0
      %v5546 = vadd.f32 0.0, %v5545
      %v5547 = vpop.f32.mrf.mxu0
      %v5548 = vpop.f32.mrf.mxu0
      %v5549 = vadd.f32 0.0, %v5548
      %v5550 = vpop.f32.mrf.mxu0
      %5551 = vmatprep.mubr.bf16.mxu0 0
      %5552 = vmatmul.mubr.bf16.gmra.mxu0 %v5315
      %v5553 = vpop.f32.mrf.mxu0
      %v5554 = vadd.f32 0.0, %v5553
      %v5555 = vpop.f32.mrf.mxu0
      %v5556 = vpop.f32.mrf.mxu0
      %v5557 = vadd.f32 0.0, %v5556
      %v5558 = vpop.f32.mrf.mxu0
      %5559 = vmatprep.mubr.bf16.mxu0 0
      %5560 = vmatmul.mubr.bf16.gmra.mxu0 %v5317
      %v5561 = vpop.f32.mrf.mxu0
      %v5562 = vadd.f32 0.0, %v5561
      %v5563 = vpop.f32.mrf.mxu0
      %v5564 = vpop.f32.mrf.mxu0
      %v5565 = vadd.f32 0.0, %v5564
      %v5566 = vpop.f32.mrf.mxu0
      %5567 = vmatprep.mubr.bf16.mxu0 0
      %5568 = vmatmul.mubr.bf16.gmra.mxu0 %v5319
      %v5569 = vpop.f32.mrf.mxu0
      %v5570 = vadd.f32 0.0, %v5569
      %v5571 = vpop.f32.mrf.mxu0
      %v5572 = vpop.f32.mrf.mxu0
      %v5573 = vadd.f32 0.0, %v5572
      %v5574 = vpop.f32.mrf.mxu0
      %5575 = vmatprep.mubr.bf16.mxu0 0
      %5576 = vmatmul.mubr.bf16.gmra.mxu0 %v5321
      %v5577 = vpop.f32.mrf.mxu0
      %v5578 = vadd.f32 0.0, %v5577
      %v5579 = vpop.f32.mrf.mxu0
      %v5580 = vpop.f32.mrf.mxu0
      %v5581 = vadd.f32 0.0, %v5580
      %v5582 = vpop.f32.mrf.mxu0
      %5583 = vmatprep.mubr.bf16.mxu0 0
      %5584 = vmatmul.mubr.bf16.gmra.mxu0 %v5323
      %v5585 = vpop.f32.mrf.mxu0
      %v5586 = vadd.f32 0.0, %v5585
      %v5587 = vpop.f32.mrf.mxu0
      %v5588 = vpop.f32.mrf.mxu0
      %v5589 = vadd.f32 0.0, %v5588
      %v5590 = vpop.f32.mrf.mxu0
      %5591 = vmatprep.mubr.bf16.mxu0 0
      %5592 = vmatmul.mubr.bf16.gmra.mxu0 %v5325
      %v5593 = vpop.f32.mrf.mxu0
      %v5594 = vadd.f32 0.0, %v5593
      %v5595 = vpop.f32.mrf.mxu0
      %v5596 = vpop.f32.mrf.mxu0
      %v5597 = vadd.f32 0.0, %v5596
      %v5598 = vpop.f32.mrf.mxu0
      %5599 = vmatprep.mubr.bf16.mxu0 0
      %5600 = vmatmul.mubr.bf16.gmra.mxu0 %v5327
      %v5601 = vpop.f32.mrf.mxu0
      %v5602 = vadd.f32 0.0, %v5601
      %v5603 = vpop.f32.mrf.mxu0
      %v5604 = vpop.f32.mrf.mxu0
      %v5605 = vadd.f32 0.0, %v5604
      %v5606 = vpop.f32.mrf.mxu0
      %5607 = vmatprep.mubr.bf16.mxu0 0
      %5608 = vmatmul.mubr.bf16.gmra.mxu0 %v5326
      %v5609 = vpop.f32.mrf.mxu0
      %v5610 = vadd.f32 0.0, %v5609
      %v5611 = vpop.f32.mrf.mxu0
      %v5612 = vpop.f32.mrf.mxu0
      %v5613 = vpop.f32.mrf.mxu0
      %5614 = vdwg.mxu0
      %v5615 = vadd.f32 %v5217, %v5434
      %v5616 = vadd.f32 %v5218, %v5437
      %v5617 = vadd.f32 %v5219, %v5442
      %v5618 = vadd.f32 %v5220, %v5445
      %v5619 = vadd.f32 %v5221, %v5450
      %v5620 = vadd.f32 %v5222, %v5453
      %v5621 = vadd.f32 %v5223, %v5458
      %v5622 = vadd.f32 %v5224, %v5461
      %v5623 = vadd.f32 %v5225, %v5466
      %v5624 = vadd.f32 %v5226, %v5469
      %v5625 = vadd.f32 %v5227, %v5474
      %v5626 = vadd.f32 %v5228, %v5477
      %v5627 = vadd.f32 %v5229, %v5482
      %v5628 = vadd.f32 %v5230, %v5485
      %v5629 = vadd.f32 %v5231, %v5490
      %v5630 = vadd.f32 %v5232, %v5493
      %v5631 = vadd.f32 %v5233, %v5498
      %v5632 = vadd.f32 %v5234, %v5501
      %v5633 = vadd.f32 %v5235, %v5506
      %v5634 = vadd.f32 %v5236, %v5509
      %v5635 = vadd.f32 %v5237, %v5514
      %v5636 = vadd.f32 %v5238, %v5517
      %v5637 = vadd.f32 %v5239, %v5522
      %v5638 = vadd.f32 %v5240, %v5525
      %v5639 = vadd.f32 %v5241, %v5530
      %v5640 = vadd.f32 %v5242, %v5533
      %v5641 = vadd.f32 %v5243, %v5538
      %v5642 = vadd.f32 %v5244, %v5541
      %v5643 = vadd.f32 %v5245, %v5546
      %v5644 = vadd.f32 %v5246, %v5549
      %v5645 = vadd.f32 %v5247, %v5554
      %v5646 = vadd.f32 %v5248, %v5557
      %v5647 = vadd.f32 %v5249, %v5562
      %v5648 = vadd.f32 %v5250, %v5565
      %v5649 = vadd.f32 %v5251, %v5570
      %v5650 = vadd.f32 %v5252, %v5573
      %v5651 = vadd.f32 %v5253, %v5578
      %v5652 = vadd.f32 %v5254, %v5581
      %v5653 = vadd.f32 %v5255, %v5586
      %v5654 = vadd.f32 %v5256, %v5589
      %v5655 = vadd.f32 %v5257, %v5594
      %v5656 = vadd.f32 %v5258, %v5597
      %v5657 = vadd.f32 %v5259, %v5602
      %v5658 = vadd.f32 %v5260, %v5605
      %v5659 = vadd.f32 %v5261, %v5610
      %v5660 = vld [vmem:[%s4] sm:$0x1]
      %v5662 = vlaneseq
      %v5663 = vshrl.u32 %v5662, 7
      %v5664 = vsub.s32 0, %v5663
      %v5665 = vrot.slane %v5660, %v5664
      %v5667 = vadd.f32 %v5615, %v5665
      %v5668 = vadd.f32 %v5616, %v5665
      %v5669 = vadd.f32 %v5617, %v5665
      %v5670 = vadd.f32 %v5618, %v5665
      %v5671 = vadd.f32 %v5619, %v5665
      %v5672 = vadd.f32 %v5620, %v5665
      %v5673 = vadd.f32 %v5621, %v5665
      %v5674 = vadd.f32 %v5622, %v5665
      %v5675 = vadd.f32 %v5623, %v5665
      %v5676 = vadd.f32 %v5624, %v5665
      %v5677 = vadd.f32 %v5625, %v5665
      %v5678 = vadd.f32 %v5626, %v5665
      %v5679 = vadd.f32 %v5627, %v5665
      %v5680 = vadd.f32 %v5628, %v5665
      %v5681 = vadd.f32 %v5629, %v5665
      %v5682 = vadd.f32 %v5630, %v5665
      %v5683 = vadd.f32 %v5631, %v5665
      %v5684 = vadd.f32 %v5632, %v5665
      %v5685 = vadd.f32 %v5633, %v5665
      %v5686 = vadd.f32 %v5634, %v5665
      %v5687 = vadd.f32 %v5635, %v5665
      %v5688 = vadd.f32 %v5636, %v5665
      %v5689 = vadd.f32 %v5637, %v5665
      %v5690 = vadd.f32 %v5638, %v5665
      %v5691 = vadd.f32 %v5639, %v5665
      %v5692 = vadd.f32 %v5640, %v5665
      %v5693 = vadd.f32 %v5641, %v5665
      %v5694 = vadd.f32 %v5642, %v5665
      %v5695 = vadd.f32 %v5643, %v5665
      %v5696 = vadd.f32 %v5644, %v5665
      %v5697 = vadd.f32 %v5645, %v5665
      %v5698 = vadd.f32 %v5646, %v5665
      %v5699 = vadd.f32 %v5647, %v5665
      %v5700 = vadd.f32 %v5648, %v5665
      %v5701 = vadd.f32 %v5649, %v5665
      %v5702 = vadd.f32 %v5650, %v5665
      %v5703 = vadd.f32 %v5651, %v5665
      %v5704 = vadd.f32 %v5652, %v5665
      %v5705 = vadd.f32 %v5653, %v5665
      %v5706 = vadd.f32 %v5654, %v5665
      %v5707 = vadd.f32 %v5655, %v5665
      %v5708 = vadd.f32 %v5656, %v5665
      %v5709 = vadd.f32 %v5657, %v5665
      %v5710 = vadd.f32 %v5658, %v5665
      %v5711 = vadd.f32 %v5659, %v5665
      %v5712 = vmax.f32 %v5667, 0.0
      %v5713 = vmax.f32 %v5668, 0.0
      %v5714 = vmax.f32 %v5669, 0.0
      %v5715 = vmax.f32 %v5670, 0.0
      %v5716 = vmax.f32 %v5671, 0.0
      %v5717 = vmax.f32 %v5672, 0.0
      %v5718 = vmax.f32 %v5673, 0.0
      %v5719 = vmax.f32 %v5674, 0.0
      %v5720 = vmax.f32 %v5675, 0.0
      %v5721 = vmax.f32 %v5676, 0.0
      %v5722 = vmax.f32 %v5677, 0.0
      %v5723 = vmax.f32 %v5678, 0.0
      %v5724 = vmax.f32 %v5679, 0.0
      %v5725 = vmax.f32 %v5680, 0.0
      %v5726 = vmax.f32 %v5681, 0.0
      %v5727 = vmax.f32 %v5682, 0.0
      %v5728 = vmax.f32 %v5683, 0.0
      %v5729 = vmax.f32 %v5684, 0.0
      %v5730 = vmax.f32 %v5685, 0.0
      %v5731 = vmax.f32 %v5686, 0.0
      %v5732 = vmax.f32 %v5687, 0.0
      %v5733 = vmax.f32 %v5688, 0.0
      %v5734 = vmax.f32 %v5689, 0.0
      %v5735 = vmax.f32 %v5690, 0.0
      %v5736 = vmax.f32 %v5691, 0.0
      %v5737 = vmax.f32 %v5692, 0.0
      %v5738 = vmax.f32 %v5693, 0.0
      %v5739 = vmax.f32 %v5694, 0.0
      %v5740 = vmax.f32 %v5695, 0.0
      %v5741 = vmax.f32 %v5696, 0.0
      %v5742 = vmax.f32 %v5697, 0.0
      %v5743 = vmax.f32 %v5698, 0.0
      %v5744 = vmax.f32 %v5699, 0.0
      %v5745 = vmax.f32 %v5700, 0.0
      %v5746 = vmax.f32 %v5701, 0.0
      %v5747 = vmax.f32 %v5702, 0.0
      %v5748 = vmax.f32 %v5703, 0.0
      %v5749 = vmax.f32 %v5704, 0.0
      %v5750 = vmax.f32 %v5705, 0.0
      %v5751 = vmax.f32 %v5706, 0.0
      %v5752 = vmax.f32 %v5707, 0.0
      %v5753 = vmax.f32 %v5708, 0.0
      %v5754 = vmax.f32 %v5709, 0.0
      %v5755 = vmax.f32 %v5710, 0.0
      %v5756 = vmax.f32 %v5711, 0.0
      %v5757 = vpack.c.bf16 %v5713, %v5712
      %v5758 = vpack.c.bf16 %v5715, %v5714
      %v5759 = vpack.c.bf16 %v5717, %v5716
      %v5760 = vpack.c.bf16 %v5719, %v5718
      %v5761 = vpack.c.bf16 %v5721, %v5720
      %v5762 = vpack.c.bf16 %v5723, %v5722
      %v5763 = vpack.c.bf16 %v5725, %v5724
      %v5764 = vpack.c.bf16 %v5727, %v5726
      %v5765 = vpack.c.bf16 %v5729, %v5728
      %v5766 = vpack.c.bf16 %v5731, %v5730
      %v5767 = vpack.c.bf16 %v5733, %v5732
      %v5768 = vpack.c.bf16 %v5735, %v5734
      %v5769 = vpack.c.bf16 %v5737, %v5736
      %v5770 = vpack.c.bf16 %v5739, %v5738
      %v5771 = vpack.c.bf16 %v5741, %v5740
      %v5772 = vpack.c.bf16 %v5743, %v5742
      %v5773 = vpack.c.bf16 %v5745, %v5744
      %v5774 = vpack.c.bf16 %v5747, %v5746
      %v5775 = vpack.c.bf16 %v5749, %v5748
      %v5776 = vpack.c.bf16 %v5751, %v5750
      %v5777 = vpack.c.bf16 %v5753, %v5752
      %v5778 = vpack.c.bf16 %v5755, %v5754
      %v5779 = vpack.c.bf16 %v5756, %v5756
      %v5803 = vunpack.c.l.b16 %v5757
      %v5804 = vunpack.c.h.b16 %v5757
      %v5805 = vunpack.c.l.b16 %v5758
      %v5806 = vunpack.c.h.b16 %v5758
      %v5807 = vunpack.c.l.b16 %v5759
      %v5808 = vunpack.c.h.b16 %v5759
      %v5809 = vunpack.c.l.b16 %v5760
      %v5810 = vunpack.c.h.b16 %v5760
      %v5811 = vunpack.c.l.b16 %v5761
      %v5812 = vunpack.c.h.b16 %v5761
      %v5813 = vunpack.c.l.b16 %v5762
      %v5814 = vunpack.c.h.b16 %v5762
      %v5815 = vunpack.c.l.b16 %v5763
      %v5816 = vunpack.c.h.b16 %v5763
      %v5817 = vunpack.c.l.b16 %v5764
      %v5818 = vunpack.c.h.b16 %v5764
      %v5819 = vunpack.c.l.b16 %v5765
      %v5820 = vunpack.c.h.b16 %v5765
      %v5821 = vunpack.c.l.b16 %v5766
      %v5822 = vunpack.c.h.b16 %v5766
      %v5823 = vunpack.c.l.b16 %v5767
      %v5824 = vunpack.c.h.b16 %v5767
      %v5825 = vunpack.c.l.b16 %v5768
      %v5826 = vunpack.c.h.b16 %v5768
      %v5827 = vunpack.c.l.b16 %v5769
      %v5828 = vunpack.c.h.b16 %v5769
      %v5829 = vunpack.c.l.b16 %v5770
      %v5830 = vunpack.c.h.b16 %v5770
      %v5831 = vunpack.c.l.b16 %v5771
      %v5832 = vunpack.c.h.b16 %v5771
      %v5833 = vunpack.c.l.b16 %v5772
      %v5834 = vunpack.c.h.b16 %v5772
      %v5835 = vunpack.c.l.b16 %v5773
      %v5836 = vunpack.c.h.b16 %v5773
      %v5837 = vunpack.c.l.b16 %v5774
      %v5838 = vunpack.c.h.b16 %v5774
      %v5839 = vunpack.c.l.b16 %v5775
      %v5840 = vunpack.c.h.b16 %v5775
      %v5841 = vunpack.c.l.b16 %v5776
      %v5842 = vunpack.c.h.b16 %v5776
      %v5843 = vunpack.c.l.b16 %v5777
      %v5844 = vunpack.c.h.b16 %v5777
      %v5845 = vunpack.c.l.b16 %v5778
      %v5846 = vunpack.c.h.b16 %v5778
      %v5847 = vunpack.c.l.b16 %v5779
      %v5848 = vpack.c.b16 %v5803, %v5803
      %v5849 = vpack.c.b16 %v5804, %v5804
      %v5850 = vpack.c.b16 %v5805, %v5805
      %v5851 = vpack.c.b16 %v5806, %v5806
      %v5852 = vpack.c.b16 %v5807, %v5807
      %v5853 = vpack.c.b16 %v5808, %v5808
      %v5854 = vpack.c.b16 %v5809, %v5809
      %v5855 = vpack.c.b16 %v5810, %v5810
      %v5856 = vpack.c.b16 %v5811, %v5811
      %v5857 = vpack.c.b16 %v5812, %v5812
      %v5858 = vpack.c.b16 %v5813, %v5813
      %v5859 = vpack.c.b16 %v5814, %v5814
      %v5860 = vpack.c.b16 %v5815, %v5815
      %v5861 = vpack.c.b16 %v5816, %v5816
      %v5862 = vpack.c.b16 %v5817, %v5817
      %v5863 = vpack.c.b16 %v5818, %v5818
      %v5864 = vpack.c.b16 %v5819, %v5819
      %v5865 = vpack.c.b16 %v5820, %v5820
      %v5866 = vpack.c.b16 %v5821, %v5821
      %v5867 = vpack.c.b16 %v5822, %v5822
      %v5868 = vpack.c.b16 %v5823, %v5823
      %v5869 = vpack.c.b16 %v5824, %v5824
      %v5870 = vpack.c.b16 %v5825, %v5825
      %v5871 = vpack.c.b16 %v5826, %v5826
      %v5872 = vpack.c.b16 %v5827, %v5827
      %v5873 = vpack.c.b16 %v5828, %v5828
      %v5874 = vpack.c.b16 %v5829, %v5829
      %v5875 = vpack.c.b16 %v5830, %v5830
      %v5876 = vpack.c.b16 %v5831, %v5831
      %v5877 = vpack.c.b16 %v5832, %v5832
      %v5878 = vpack.c.b16 %v5833, %v5833
      %v5879 = vpack.c.b16 %v5834, %v5834
      %v5880 = vpack.c.b16 %v5835, %v5835
      %v5881 = vpack.c.b16 %v5836, %v5836
      %v5882 = vpack.c.b16 %v5837, %v5837
      %v5883 = vpack.c.b16 %v5838, %v5838
      %v5884 = vpack.c.b16 %v5839, %v5839
      %v5885 = vpack.c.b16 %v5840, %v5840
      %v5886 = vpack.c.b16 %v5841, %v5841
      %v5887 = vpack.c.b16 %v5842, %v5842
      %v5888 = vpack.c.b16 %v5843, %v5843
      %v5889 = vpack.c.b16 %v5844, %v5844
      %v5890 = vpack.c.b16 %v5845, %v5845
      %v5891 = vpack.c.b16 %v5846, %v5846
      %v5892 = vpack.c.b16 %v5847, %v5847
      %5938 = vst [vmem:[%s224] sm:$0xf] %v5848
      %5939 = vst [vmem:[%s224 + $0x4] sm:$0xf] %v5849
      %5940 = vst [vmem:[%s224 + $0x8] sm:$0xf] %v5850
      %5941 = vst [vmem:[%s224 + $0xc] sm:$0xf] %v5851
      %5942 = vst [vmem:[%s224 + $0x10] sm:$0xf] %v5852
      %5943 = vst [vmem:[%s224 + $0x14] sm:$0xf] %v5853
      %5944 = vst [vmem:[%s224 + $0x18] sm:$0xf] %v5854
      %5945 = vst [vmem:[%s224 + $0x1c] sm:$0xf] %v5855
      %5946 = vst [vmem:[%s224 + $0x20] sm:$0xf] %v5856
      %5947 = vst [vmem:[%s224 + $0x24] sm:$0xf] %v5857
      %5948 = vst [vmem:[%s224 + $0x28] sm:$0xf] %v5858
      %5949 = vst [vmem:[%s224 + $0x2c] sm:$0xf] %v5859
      %5950 = vst [vmem:[%s224 + $0x30] sm:$0xf] %v5860
      %5951 = vst [vmem:[%s224 + $0x34] sm:$0xf] %v5861
      %5952 = vst [vmem:[%s224 + $0x38] sm:$0xf] %v5862
      %5953 = vst [vmem:[%s224 + $0x3c] sm:$0xf] %v5863
      %5954 = vst [vmem:[%s224 + $0x40] sm:$0xf] %v5864
      %5955 = vst [vmem:[%s224 + $0x44] sm:$0xf] %v5865
      %5956 = vst [vmem:[%s224 + $0x48] sm:$0xf] %v5866
      %5957 = vst [vmem:[%s224 + $0x4c] sm:$0xf] %v5867
      %5958 = vst [vmem:[%s224 + $0x50] sm:$0xf] %v5868
      %5959 = vst [vmem:[%s224 + $0x54] sm:$0xf] %v5869
      %5960 = vst [vmem:[%s224 + $0x58] sm:$0xf] %v5870
      %5961 = vst [vmem:[%s224 + $0x5c] sm:$0xf] %v5871
      %5962 = vst [vmem:[%s224 + $0x60] sm:$0xf] %v5872
      %5963 = vst [vmem:[%s224 + $0x64] sm:$0xf] %v5873
      %5964 = vst [vmem:[%s224 + $0x68] sm:$0xf] %v5874
      %5965 = vst [vmem:[%s224 + $0x6c] sm:$0xf] %v5875
      %5966 = vst [vmem:[%s224 + $0x70] sm:$0xf] %v5876
      %5967 = vst [vmem:[%s224 + $0x74] sm:$0xf] %v5877
      %5968 = vst [vmem:[%s224 + $0x78] sm:$0xf] %v5878
      %5969 = vst [vmem:[%s224 + $0x7c] sm:$0xf] %v5879
      %5970 = vst [vmem:[%s224 + $0x80] sm:$0xf] %v5880
      %5971 = vst [vmem:[%s224 + $0x84] sm:$0xf] %v5881
      %5972 = vst [vmem:[%s224 + $0x88] sm:$0xf] %v5882
      %5973 = vst [vmem:[%s224 + $0x8c] sm:$0xf] %v5883
      %5974 = vst [vmem:[%s224 + $0x90] sm:$0xf] %v5884
      %5975 = vst [vmem:[%s224 + $0x94] sm:$0xf] %v5885
      %5976 = vst [vmem:[%s224 + $0x98] sm:$0xf] %v5886
      %5977 = vst [vmem:[%s224 + $0x9c] sm:$0xf] %v5887
      %5978 = vst [vmem:[%s224 + $0xa0] sm:$0xf] %v5888
      %5979 = vst [vmem:[%s224 + $0xa4] sm:$0xf] %v5889
      %5980 = vst [vmem:[%s224 + $0xa8] sm:$0xf] %v5890
      %5981 = vst [vmem:[%s224 + $0xac] sm:$0xf] %v5891
      %5982 = vst [vmem:[%s224 + $0xb0] sm:$0xf] %v5892
      %p5983 = scmp.lt.s32.totalorder %s16, 1
      %s5984 = scalar_select %p5983, %s16, 1
      %s5985 = smul.addr %s5984, 45
      %s5986 = smul.addr %s5985, 4
      %s5987 = scalar_lea.vmem %s5, %s5986
      // Predicated region
      $region41: #{actor_critic_forward.2} parent=39 // pred_check
        %p5988 = pneg %p144
      $region42: #{actor_critic_forward.2} parent=39 // pred_check_branch
        %5990 = sbr.rel (%p5988) target = $region44
      $region43: #{actor_critic_forward.2} parent=39 // pred_region
        _
      $region44: #{actor_critic_forward.2} parent=39 // pred_fallthru
        _
    $region40: #{actor_critic_forward.2} parent=5 // pred_fallthru
      _
    %p5991 = scmp.le.s32.totalorder 2, %s11
    // Predicated region
    $region45: #{actor_critic_forward.2} parent=5 // pred_check
      %p5992 = pneg %p5991
    $region46: #{actor_critic_forward.2} parent=5 // pred_check_branch
      %5994 = sbr.rel (%p5992) target = $region48
    $region47: #{actor_critic_forward.2} parent=5 // pred_region
      %s5995 = ssub.s32 %s11, 2
      // Predicated region
      $region49: #{actor_critic_forward.2} parent=47 // pred_check
        %p5996 = pneg %p150
      $region50: #{actor_critic_forward.2} parent=47 // pred_check_branch
        %5998 = sbr.rel (%p5996) target = $region52
      $region51: #{actor_critic_forward.2} parent=47 // pred_region
        %p5999 = scmp.lt.s32.totalorder %s17, 1
        %s6000 = scalar_select %p5999, %s17, 1
        %s6001 = smul.addr %s6000, 45
        %s6002 = smul.addr %s6001, 4
        %s6003 = scalar_lea.vmem %s5, %s6002
      $region52: #{actor_critic_forward.2} parent=47 // pred_fallthru
        _
    $region48: #{actor_critic_forward.2} parent=5 // pred_fallthru
      _
  $region6: #{actor_critic_forward.2} parent=0 // loop_footer
    %s15 = sadd.s32 1, %s11
  $region7: #{actor_critic_forward.2} parent=0 // loop_footer_branch
    %10 = sbr.rel target = $region3
  $region8: #{actor_critic_forward.2} parent=0 // loop_exit
    _

// kernel: actor_critic_forward.3
$region0: #{actor_critic_forward.3}
  #allocation0 [shape = 'u32[]', space=smem, size = 0x4, offset = 0x4, fixed_abs, tag = 'smem constant byte address 0x4 - core index']
  #allocation1 [shape = 'u32[144,128]{1,0:T(1,128)}', space=vmem, size = 0x12000, scoped, tag = 'internal scratch']
  #allocation2 [shape = 'f32[2,512]{1,0:T(2,128)}', space=vmem, size = 0x1000, scoped, tag = 'scratch operand']
  %s0 = inlined_call_operand.vmem [shape: bf16[2,20736], index: 0, kind: input, shape index: {}]
  %s1 = inlined_call_operand.vmem [shape: bf16[20736,512], index: 1, kind: input, shape index: {}]
  %s2 = inlined_call_operand.vmem [shape: f32[1,512], index: 2, kind: input, shape index: {}]
  %s3 = inlined_call_operand.vmem [shape: bf16[512,128], index: 3, kind: input, shape index: {}]
  %s4 = inlined_call_operand.vmem [shape: f32[1,128], index: 4, kind: input, shape index: {}]
  %s5 = inlined_call_operand.vmem [shape: f32[2,128], index: 5, kind: output, shape index: {}]
  %s6 = sld [smem:[#allocation0]]
  $region65: #{actor_critic_forward.3} parent=0
    _
  %s8 = ssub.s32 1, %s6
  %s9 = scalar_select 0, %s8, %s6
  loop: start=0, step=1, limit=8
  $region2: #{actor_critic_forward.3} parent=0 // loop_pre_header
    _
  $region3: #{actor_critic_forward.3} parent=0 // loop_header
    %s11 = sphi 0, %s15
    %p12 = scmp.ge.s32.totalorder %s11, 8
    %s18 = sphi 0, %s30
    %s19 = sphi 0, %s26
    %s20 = sphi 0, %s18
    %s21 = sphi 0, %s19
    %s22 = sphi 0, %s20
    %s23 = sphi 0, %s21
    %s35 = sphi 0, %s37
    %s38 = sphi 0, %s35
    %s39 = sphi 0, %s38
    %s55 = sphi 0, %s39
    %s61 = sphi 0, %s63
    %s64 = sphi 0, %s61
    %s65 = sphi 0, %s64
    %s81 = sphi 0, %s65
    %s85 = sphi 0, %s85
    %s87 = sphi 0, %s85
    %s88 = sphi 0, %s87
    %s102 = sphi 0, %s88
    %s106 = sphi 0, %s106
    %s108 = sphi 0, %s106
    %s109 = sphi 0, %s108
    %s123 = sphi 0, %s109
    %s127 = sphi 0, %s127
    %s129 = sphi 0, %s127
    %s130 = sphi 0, %s129
    %s144 = sphi 0, %s130
    %s150 = sphi 0, %s152
    %s153 = sphi 0, %s150
    %s154 = sphi 0, %s153
    %s170 = sphi 0, %s154
  $region4: #{actor_critic_forward.3} parent=0 // loop_header_branch
    %14 = sbr.rel (%p12) target = $region8
  $region5: #{actor_critic_forward.3} parent=0 // loop_body
    %s16 = ssub.s32 %s11, 1
    %s17 = ssub.s32 %s11, 2
    %s24 = sadd.s32 1, %s19
    %p25 = scmp.ge.s32.totalorder %s24, 6
    %s26 = scalar_select %p25, 0, %s24
    %s27 = sadd.s32 1, %s18
    %s28 = scalar_select %p25, %s27, %s18
    %p29 = scmp.ge.s32.totalorder %s28, 1
    %s30 = scalar_select %p29, 0, %s28
    %s31 = ssub.s32 %s18, %s30
    %s32 = ssub.s32 %s19, %s26
    %s33 = sor.u32 %s31, %s32
    %p34 = scmp.eq.s32.totalorder %s33, 0
    %s36 = sadd.s32 %s35, 1
    %s37 = scalar_select %p34, %s35, %s36
    %p40 = pneg %p34
    %p41 = scmp.eq.s32.totalorder %s11, 5
    %p42 = por %p40, %p41
    %p43 = scmp.ne.s32.totalorder %s35, %s38
    %p44 = scmp.eq.s32.totalorder %s11, 0
    %p45 = por %p43, %p44
    %p46 = scmp.ne.s32.totalorder %s35, %s38
    %p47 = scmp.eq.s32.totalorder %s16, 5
    %p48 = por %p46, %p47
    %p49 = scmp.ne.s32.totalorder %s38, %s39
    %p50 = scmp.eq.s32.totalorder %s16, 0
    %p51 = por %p49, %p50
    %p52 = scmp.ne.s32.totalorder %s38, %s39
    %p53 = scmp.eq.s32.totalorder %s17, 5
    %p54 = por %p52, %p53
    %p56 = scmp.ne.s32.totalorder %s39, %s55
    %p57 = scmp.eq.s32.totalorder %s17, 0
    %p58 = por %p56, %p57
    %s59 = ssub.s32 %s19, %s26
    %p60 = scmp.eq.s32.totalorder %s59, 0
    %s62 = sadd.s32 %s61, 1
    %s63 = scalar_select %p60, %s61, %s62
    %p66 = pneg %p60
    %p67 = scmp.eq.s32.totalorder %s11, 5
    %p68 = por %p66, %p67
    %p69 = scmp.ne.s32.totalorder %s61, %s64
    %p70 = scmp.eq.s32.totalorder %s11, 0
    %p71 = por %p69, %p70
    %p72 = scmp.ne.s32.totalorder %s61, %s64
    %p73 = scmp.eq.s32.totalorder %s16, 5
    %p74 = por %p72, %p73
    %p75 = scmp.ne.s32.totalorder %s64, %s65
    %p76 = scmp.eq.s32.totalorder %s16, 0
    %p77 = por %p75, %p76
    %p78 = scmp.ne.s32.totalorder %s64, %s65
    %p79 = scmp.eq.s32.totalorder %s17, 5
    %p80 = por %p78, %p79
    %p82 = scmp.ne.s32.totalorder %s65, %s81
    %p83 = scmp.eq.s32.totalorder %s17, 0
    %p84 = por %p82, %p83
    %s86 = sadd.s32 %s85, 1
    %p89 = scmp.eq.s32.totalorder %s11, 5
    %p90 = scmp.ne.s32.totalorder %s85, %s87
    %p91 = scmp.eq.s32.totalorder %s11, 0
    %p92 = por %p90, %p91
    %p93 = scmp.ne.s32.totalorder %s85, %s87
    %p94 = scmp.eq.s32.totalorder %s16, 5
    %p95 = por %p93, %p94
    %p96 = scmp.ne.s32.totalorder %s87, %s88
    %p97 = scmp.eq.s32.totalorder %s16, 0
    %p98 = por %p96, %p97
    %p99 = scmp.ne.s32.totalorder %s87, %s88
    %p100 = scmp.eq.s32.totalorder %s17, 5
    %p101 = por %p99, %p100
    %p103 = scmp.ne.s32.totalorder %s88, %s102
    %p104 = scmp.eq.s32.totalorder %s17, 0
    %p105 = por %p103, %p104
    %s107 = sadd.s32 %s106, 1
    %p110 = scmp.eq.s32.totalorder %s11, 5
    %p111 = scmp.ne.s32.totalorder %s106, %s108
    %p112 = scmp.eq.s32.totalorder %s11, 0
    %p113 = por %p111, %p112
    %p114 = scmp.ne.s32.totalorder %s106, %s108
    %p115 = scmp.eq.s32.totalorder %s16, 5
    %p116 = por %p114, %p115
    %p117 = scmp.ne.s32.totalorder %s108, %s109
    %p118 = scmp.eq.s32.totalorder %s16, 0
    %p119 = por %p117, %p118
    %p120 = scmp.ne.s32.totalorder %s108, %s109
    %p121 = scmp.eq.s32.totalorder %s17, 5
    %p122 = por %p120, %p121
    %p124 = scmp.ne.s32.totalorder %s109, %s123
    %p125 = scmp.eq.s32.totalorder %s17, 0
    %p126 = por %p124, %p125
    %s128 = sadd.s32 %s127, 1
    %p131 = scmp.eq.s32.totalorder %s11, 5
    %p132 = scmp.ne.s32.totalorder %s127, %s129
    %p133 = scmp.eq.s32.totalorder %s11, 0
    %p134 = por %p132, %p133
    %p135 = scmp.ne.s32.totalorder %s127, %s129
    %p136 = scmp.eq.s32.totalorder %s16, 5
    %p137 = por %p135, %p136
    %p138 = scmp.ne.s32.totalorder %s129, %s130
    %p139 = scmp.eq.s32.totalorder %s16, 0
    %p140 = por %p138, %p139
    %p141 = scmp.ne.s32.totalorder %s129, %s130
    %p142 = scmp.eq.s32.totalorder %s17, 5
    %p143 = por %p141, %p142
    %p145 = scmp.ne.s32.totalorder %s130, %s144
    %p146 = scmp.eq.s32.totalorder %s17, 0
    %p147 = por %p145, %p146
    %s148 = ssub.s32 %s18, %s30
    %p149 = scmp.eq.s32.totalorder %s148, 0
    %s151 = sadd.s32 %s150, 1
    %s152 = scalar_select %p149, %s150, %s151
    %p155 = pneg %p149
    %p156 = scmp.eq.s32.totalorder %s11, 5
    %p157 = por %p155, %p156
    %p158 = scmp.ne.s32.totalorder %s150, %s153
    %p159 = scmp.eq.s32.totalorder %s11, 0
    %p160 = por %p158, %p159
    %p161 = scmp.ne.s32.totalorder %s150, %s153
    %p162 = scmp.eq.s32.totalorder %s16, 5
    %p163 = por %p161, %p162
    %p164 = scmp.ne.s32.totalorder %s153, %s154
    %p165 = scmp.eq.s32.totalorder %s16, 0
    %p166 = por %p164, %p165
    %p167 = scmp.ne.s32.totalorder %s153, %s154
    %p168 = scmp.eq.s32.totalorder %s17, 5
    %p169 = por %p167, %p168
    %p171 = scmp.ne.s32.totalorder %s154, %s170
    %p172 = scmp.eq.s32.totalorder %s17, 0
    %p173 = por %p171, %p172
    %p174 = scmp.le.s32.totalorder 1, %s11
    %p175 = scmp.lt.s32.totalorder %s11, 7
    %p176 = pnand %p174, %p175
    %p177 = pneg %p176
    // Predicated region
    $region9: #{actor_critic_forward.3} parent=5 // pred_check
      _
    $region10: #{actor_critic_forward.3} parent=5 // pred_check_branch
      %179 = sbr.rel (%p176) target = $region12
    $region11: #{actor_critic_forward.3} parent=5 // pred_region
      %s180 = ssub.s32 %s11, 1
      // Predicated region
      $region13: #{actor_critic_forward.3} parent=11 // pred_check
        %p181 = pneg %p98
      $region14: #{actor_critic_forward.3} parent=11 // pred_check_branch
        %183 = sbr.rel (%p181) target = $region16
      $region15: #{actor_critic_forward.3} parent=11 // pred_region
        _
      $region16: #{actor_critic_forward.3} parent=11 // pred_fallthru
        _
      // Predicated region
      $region17: #{actor_critic_forward.3} parent=11 // pred_check
        %p184 = pneg %p119
      $region18: #{actor_critic_forward.3} parent=11 // pred_check_branch
        %186 = sbr.rel (%p184) target = $region20
      $region19: #{actor_critic_forward.3} parent=11 // pred_region
        _
      $region20: #{actor_critic_forward.3} parent=11 // pred_fallthru
        _
      // Predicated region
      $region21: #{actor_critic_forward.3} parent=11 // pred_check
        %p187 = pneg %p140
      $region22: #{actor_critic_forward.3} parent=11 // pred_check_branch
        %189 = sbr.rel (%p187) target = $region24
      $region23: #{actor_critic_forward.3} parent=11 // pred_region
        _
      $region24: #{actor_critic_forward.3} parent=11 // pred_fallthru
        _
    $region12: #{actor_critic_forward.3} parent=5 // pred_fallthru
      _
    %p190 = scmp.lt.s32.totalorder %s11, 6
    // Predicated region
    $region25: #{actor_critic_forward.3} parent=5 // pred_check
      %p191 = pneg %p190
    $region26: #{actor_critic_forward.3} parent=5 // pred_check_branch
      %193 = sbr.rel (%p191) target = $region28
    $region27: #{actor_critic_forward.3} parent=5 // pred_region
      // Predicated region
      $region29: #{actor_critic_forward.3} parent=27 // pred_check
        %p194 = pneg %p45
      $region30: #{actor_critic_forward.3} parent=27 // pred_check_branch
        %196 = sbr.rel (%p194) target = $region32
      $region31: #{actor_critic_forward.3} parent=27 // pred_region
        %s197 = smul.u32 27, %s19
        %p198 = scmp.lt.s32.totalorder %s18, 0
        %s199 = scalar_select %p198, %s18, 0
        %p200 = scmp.lt.s32.totalorder %s197, 161
        %s201 = scalar_select %p200, %s197, 161
        %s202 = smul.addr %s199, 162
        %s203 = sadd.s32 %s201, %s202
        %s204 = scalar_lea.vmem %s0, %s203
        %s205 = smul.u32 27, %s19
      $region32: #{actor_critic_forward.3} parent=27 // pred_fallthru
        _
      // Predicated region
      $region33: #{actor_critic_forward.3} parent=27 // pred_check
        %p206 = pneg %p71
      $region34: #{actor_critic_forward.3} parent=27 // pred_check_branch
        %208 = sbr.rel (%p206) target = $region36
      $region35: #{actor_critic_forward.3} parent=27 // pred_region
        %s209 = smul.u32 432, %s19
        %p210 = scmp.lt.s32.totalorder %s209, 2591
        %s211 = scalar_select %p210, %s209, 2591
        %s212 = smul.addr %s211, 4
        %s213 = smul.addr %s212, 4
        %s214 = scalar_lea.vmem %s1, %s213
        %s215 = smul.u32 432, %s19
      $region36: #{actor_critic_forward.3} parent=27 // pred_fallthru
        _
    $region28: #{actor_critic_forward.3} parent=5 // pred_fallthru
      _
    %p216 = scmp.le.s32.totalorder 1, %s11
    %p217 = scmp.lt.s32.totalorder %s11, 7
    %p218 = pnand %p216, %p217
    %p219 = pneg %p218
    // Predicated region
    $region37: #{actor_critic_forward.3} parent=5 // pred_check
      _
    $region38: #{actor_critic_forward.3} parent=5 // pred_check_branch
      %221 = sbr.rel (%p218) target = $region40
    $region39: #{actor_critic_forward.3} parent=5 // pred_region
      %s222 = ssub.s32 %s11, 1
      %s223 = smul.u32 27, %s21
      %p224 = scmp.lt.s32.totalorder %s20, 0
      %s225 = scalar_select %p224, %s20, 0
      %p226 = scmp.lt.s32.totalorder %s223, 161
      %s227 = scalar_select %p226, %s223, 161
      %s228 = smul.addr %s225, 162
      %s229 = sadd.s32 %s227, %s228
      %s230 = scalar_lea.vmem %s0, %s229
      %p231 = pneg %p51
      %p232 = pneg %p48
      %s233 = smul.u32 432, %s21
      %p234 = scmp.lt.s32.totalorder %s233, 2591
      %s235 = scalar_select %p234, %s233, 2591
      %s236 = smul.addr %s235, 4
      %s237 = smul.addr %s236, 4
      %s238 = scalar_lea.vmem %s1, %s237
      %p239 = pneg %p77
      %p240 = pneg %p74
      %p241 = pneg %p98
      %p242 = pneg %p95
      %p243 = pneg %p119
      %p244 = pneg %p116
      %p245 = pneg %p140
      %p246 = pneg %p137
      %p247 = pneg %p166
      %p248 = pneg %p163
      %p249 = scmp.lt.s32.totalorder %s20, 0
      %s250 = scalar_select %p249, %s20, 0
      %s251 = smul.addr %s250, 2
      %s252 = scalar_lea.vmem %s5, %s251
      %s253 = smul.u32 27, %s21
      %p254 = scmp.lt.s32.totalorder %s20, 0
      %s255 = scalar_select %p254, %s20, 0
      %p256 = scmp.lt.s32.totalorder %s253, 161
      %s257 = scalar_select %p256, %s253, 161
      %s258 = smul.addr %s255, 162
      %s259 = sadd.s32 %s257, %s258
      %s260 = scalar_lea.vmem %s0, %s259
      %s261 = smul.u32 27, %s21
      %s262 = smul.u32 432, %s21
      %p263 = scmp.lt.s32.totalorder %s262, 2591
      %s264 = scalar_select %p263, %s262, 2591
      %s265 = smul.addr %s264, 4
      %s266 = smul.addr %s265, 4
      %s267 = scalar_lea.vmem %s1, %s266
      %s268 = smul.u32 432, %s21
      %p269 = scmp.lt.s32.totalorder %s20, 0
      %s270 = scalar_select %p269, %s20, 0
      %s271 = smul.addr %s270, 2
      %s272 = scalar_lea.vmem %s5, %s271
      %v274 = vld [vmem:[%s260] sm:$0xff]
      %v275 = vld [vmem:[%s260 + $0x8] sm:$0xff]
      %v276 = vld [vmem:[%s260 + $0x10] sm:$0xff]
      %v277 = vld [vmem:[%s260 + $0x18] sm:$0x7]
      %v278 = vld [vmem:[%s267] sm:$0xff]
      %v279 = vld [vmem:[%s267 + $0x8] sm:$0xff]
      %v280 = vld [vmem:[%s267 + $0x10] sm:$0xff]
      %v281 = vld [vmem:[%s267 + $0x18] sm:$0xff]
      %v282 = vld [vmem:[%s267 + $0x20] sm:$0xff]
      %v283 = vld [vmem:[%s267 + $0x28] sm:$0xff]
      %v284 = vld [vmem:[%s267 + $0x30] sm:$0xff]
      %v285 = vld [vmem:[%s267 + $0x38] sm:$0xff]
      %v286 = vld [vmem:[%s267 + $0x40] sm:$0xff]
      %v287 = vld [vmem:[%s267 + $0x48] sm:$0xff]
      %v288 = vld [vmem:[%s267 + $0x50] sm:$0xff]
      %v289 = vld [vmem:[%s267 + $0x58] sm:$0xff]
      %v290 = vld [vmem:[%s267 + $0x60] sm:$0xff]
      %v291 = vld [vmem:[%s267 + $0x68] sm:$0xff]
      %v292 = vld [vmem:[%s267 + $0x70] sm:$0xff]
      %v293 = vld [vmem:[%s267 + $0x78] sm:$0xff]
      %v294 = vld [vmem:[%s267 + $0x80] sm:$0xff]
      %v295 = vld [vmem:[%s267 + $0x88] sm:$0xff]
      %v296 = vld [vmem:[%s267 + $0x90] sm:$0xff]
      %v297 = vld [vmem:[%s267 + $0x98] sm:$0xff]
      %v298 = vld [vmem:[%s267 + $0xa0] sm:$0xff]
      %v299 = vld [vmem:[%s267 + $0xa8] sm:$0xff]
      %v300 = vld [vmem:[%s267 + $0xb0] sm:$0xff]
      %v301 = vld [vmem:[%s267 + $0xb8] sm:$0xff]
      %v302 = vld [vmem:[%s267 + $0xc0] sm:$0xff]
      %v303 = vld [vmem:[%s267 + $0xc8] sm:$0xff]
      %v304 = vld [vmem:[%s267 + $0xd0] sm:$0xff]
      %v305 = vld [vmem:[%s267 + $0xd8] sm:$0xff]
      %v306 = vld [vmem:[%s267 + $0xe0] sm:$0xff]
      %v307 = vld [vmem:[%s267 + $0xe8] sm:$0xff]
      %v308 = vld [vmem:[%s267 + $0xf0] sm:$0xff]
      %v309 = vld [vmem:[%s267 + $0xf8] sm:$0xff]
      %v310 = vld [vmem:[%s267 + $0x100] sm:$0xff]
      %v311 = vld [vmem:[%s267 + $0x108] sm:$0xff]
      %v312 = vld [vmem:[%s267 + $0x110] sm:$0xff]
      %v313 = vld [vmem:[%s267 + $0x118] sm:$0xff]
      %v314 = vld [vmem:[%s267 + $0x120] sm:$0xff]
      %v315 = vld [vmem:[%s267 + $0x128] sm:$0xff]
      %v316 = vld [vmem:[%s267 + $0x130] sm:$0xff]
      %v317 = vld [vmem:[%s267 + $0x138] sm:$0xff]
      %v318 = vld [vmem:[%s267 + $0x140] sm:$0xff]
      %v319 = vld [vmem:[%s267 + $0x148] sm:$0xff]
      %v320 = vld [vmem:[%s267 + $0x150] sm:$0xff]
      %v321 = vld [vmem:[%s267 + $0x158] sm:$0xff]
      %v322 = vld [vmem:[%s267 + $0x160] sm:$0xff]
      %v323 = vld [vmem:[%s267 + $0x168] sm:$0xff]
      %v324 = vld [vmem:[%s267 + $0x170] sm:$0xff]
      %v325 = vld [vmem:[%s267 + $0x178] sm:$0xff]
      %v326 = vld [vmem:[%s267 + $0x180] sm:$0xff]
      %v327 = vld [vmem:[%s267 + $0x188] sm:$0xff]
      %v328 = vld [vmem:[%s267 + $0x190] sm:$0xff]
      %v329 = vld [vmem:[%s267 + $0x198] sm:$0xff]
      %v330 = vld [vmem:[%s267 + $0x1a0] sm:$0xff]
      %v331 = vld [vmem:[%s267 + $0x1a8] sm:$0xff]
      %v332 = vld [vmem:[%s267 + $0x1b0] sm:$0xff]
      %v333 = vld [vmem:[%s267 + $0x1b8] sm:$0xff]
      %v334 = vld [vmem:[%s267 + $0x1c0] sm:$0xff]
      %v335 = vld [vmem:[%s267 + $0x1c8] sm:$0xff]
      %v336 = vld [vmem:[%s267 + $0x1d0] sm:$0xff]
      %v337 = vld [vmem:[%s267 + $0x1d8] sm:$0xff]
      %v338 = vld [vmem:[%s267 + $0x1e0] sm:$0xff]
      %v339 = vld [vmem:[%s267 + $0x1e8] sm:$0xff]
      %v340 = vld [vmem:[%s267 + $0x1f0] sm:$0xff]
      %v341 = vld [vmem:[%s267 + $0x1f8] sm:$0xff]
      %v342 = vld [vmem:[%s267 + $0x200] sm:$0xff]
      %v343 = vld [vmem:[%s267 + $0x208] sm:$0xff]
      %v344 = vld [vmem:[%s267 + $0x210] sm:$0xff]
      %v345 = vld [vmem:[%s267 + $0x218] sm:$0xff]
      %v346 = vld [vmem:[%s267 + $0x220] sm:$0xff]
      %v347 = vld [vmem:[%s267 + $0x228] sm:$0xff]
      %v348 = vld [vmem:[%s267 + $0x230] sm:$0xff]
      %v349 = vld [vmem:[%s267 + $0x238] sm:$0xff]
      %v350 = vld [vmem:[%s267 + $0x240] sm:$0xff]
      %v351 = vld [vmem:[%s267 + $0x248] sm:$0xff]
      %v352 = vld [vmem:[%s267 + $0x250] sm:$0xff]
      %v353 = vld [vmem:[%s267 + $0x258] sm:$0xff]
      %v354 = vld [vmem:[%s267 + $0x260] sm:$0xff]
      %v355 = vld [vmem:[%s267 + $0x268] sm:$0xff]
      %v356 = vld [vmem:[%s267 + $0x270] sm:$0xff]
      %v357 = vld [vmem:[%s267 + $0x278] sm:$0xff]
      %v358 = vld [vmem:[%s267 + $0x280] sm:$0xff]
      %v359 = vld [vmem:[%s267 + $0x288] sm:$0xff]
      %v360 = vld [vmem:[%s267 + $0x290] sm:$0xff]
      %v361 = vld [vmem:[%s267 + $0x298] sm:$0xff]
      %v362 = vld [vmem:[%s267 + $0x2a0] sm:$0xff]
      %v363 = vld [vmem:[%s267 + $0x2a8] sm:$0xff]
      %v364 = vld [vmem:[%s267 + $0x2b0] sm:$0xff]
      %v365 = vld [vmem:[%s267 + $0x2b8] sm:$0xff]
      %v366 = vld [vmem:[%s267 + $0x2c0] sm:$0xff]
      %v367 = vld [vmem:[%s267 + $0x2c8] sm:$0xff]
      %v368 = vld [vmem:[%s267 + $0x2d0] sm:$0xff]
      %v369 = vld [vmem:[%s267 + $0x2d8] sm:$0xff]
      %v370 = vld [vmem:[%s267 + $0x2e0] sm:$0xff]
      %v371 = vld [vmem:[%s267 + $0x2e8] sm:$0xff]
      %v372 = vld [vmem:[%s267 + $0x2f0] sm:$0xff]
      %v373 = vld [vmem:[%s267 + $0x2f8] sm:$0xff]
      %v374 = vld [vmem:[%s267 + $0x300] sm:$0xff]
      %v375 = vld [vmem:[%s267 + $0x308] sm:$0xff]
      %v376 = vld [vmem:[%s267 + $0x310] sm:$0xff]
      %v377 = vld [vmem:[%s267 + $0x318] sm:$0xff]
      %v378 = vld [vmem:[%s267 + $0x320] sm:$0xff]
      %v379 = vld [vmem:[%s267 + $0x328] sm:$0xff]
      %v380 = vld [vmem:[%s267 + $0x330] sm:$0xff]
      %v381 = vld [vmem:[%s267 + $0x338] sm:$0xff]
      %v382 = vld [vmem:[%s267 + $0x340] sm:$0xff]
      %v383 = vld [vmem:[%s267 + $0x348] sm:$0xff]
      %v384 = vld [vmem:[%s267 + $0x350] sm:$0xff]
      %v385 = vld [vmem:[%s267 + $0x358] sm:$0xff]
      %v386 = vld [vmem:[%s267 + $0x360] sm:$0xff]
      %v387 = vld [vmem:[%s267 + $0x368] sm:$0xff]
      %v388 = vld [vmem:[%s267 + $0x370] sm:$0xff]
      %v389 = vld [vmem:[%s267 + $0x378] sm:$0xff]
      %v390 = vld [vmem:[%s267 + $0x380] sm:$0xff]
      %v391 = vld [vmem:[%s267 + $0x388] sm:$0xff]
      %v392 = vld [vmem:[%s267 + $0x390] sm:$0xff]
      %v393 = vld [vmem:[%s267 + $0x398] sm:$0xff]
      %v394 = vld [vmem:[%s267 + $0x3a0] sm:$0xff]
      %v395 = vld [vmem:[%s267 + $0x3a8] sm:$0xff]
      %v396 = vld [vmem:[%s267 + $0x3b0] sm:$0xff]
      %v397 = vld [vmem:[%s267 + $0x3b8] sm:$0xff]
      %v398 = vld [vmem:[%s267 + $0x3c0] sm:$0xff]
      %v399 = vld [vmem:[%s267 + $0x3c8] sm:$0xff]
      %v400 = vld [vmem:[%s267 + $0x3d0] sm:$0xff]
      %v401 = vld [vmem:[%s267 + $0x3d8] sm:$0xff]
      %v402 = vld [vmem:[%s267 + $0x3e0] sm:$0xff]
      %v403 = vld [vmem:[%s267 + $0x3e8] sm:$0xff]
      %v404 = vld [vmem:[%s267 + $0x3f0] sm:$0xff]
      %v405 = vld [vmem:[%s267 + $0x3f8] sm:$0xff]
      %v406 = vld [vmem:[%s267 + $0x400] sm:$0xff]
      %v407 = vld [vmem:[%s267 + $0x408] sm:$0xff]
      %v408 = vld [vmem:[%s267 + $0x410] sm:$0xff]
      %v409 = vld [vmem:[%s267 + $0x418] sm:$0xff]
      %v410 = vld [vmem:[%s267 + $0x420] sm:$0xff]
      %v411 = vld [vmem:[%s267 + $0x428] sm:$0xff]
      %v412 = vld [vmem:[%s267 + $0x430] sm:$0xff]
      %v413 = vld [vmem:[%s267 + $0x438] sm:$0xff]
      %v414 = vld [vmem:[%s267 + $0x440] sm:$0xff]
      %v415 = vld [vmem:[%s267 + $0x448] sm:$0xff]
      %v416 = vld [vmem:[%s267 + $0x450] sm:$0xff]
      %v417 = vld [vmem:[%s267 + $0x458] sm:$0xff]
      %v418 = vld [vmem:[%s267 + $0x460] sm:$0xff]
      %v419 = vld [vmem:[%s267 + $0x468] sm:$0xff]
      %v420 = vld [vmem:[%s267 + $0x470] sm:$0xff]
      %v421 = vld [vmem:[%s267 + $0x478] sm:$0xff]
      %v422 = vld [vmem:[%s267 + $0x480] sm:$0xff]
      %v423 = vld [vmem:[%s267 + $0x488] sm:$0xff]
      %v424 = vld [vmem:[%s267 + $0x490] sm:$0xff]
      %v425 = vld [vmem:[%s267 + $0x498] sm:$0xff]
      %v426 = vld [vmem:[%s267 + $0x4a0] sm:$0xff]
      %v427 = vld [vmem:[%s267 + $0x4a8] sm:$0xff]
      %v428 = vld [vmem:[%s267 + $0x4b0] sm:$0xff]
      %v429 = vld [vmem:[%s267 + $0x4b8] sm:$0xff]
      %v430 = vld [vmem:[%s267 + $0x4c0] sm:$0xff]
      %v431 = vld [vmem:[%s267 + $0x4c8] sm:$0xff]
      %v432 = vld [vmem:[%s267 + $0x4d0] sm:$0xff]
      %v433 = vld [vmem:[%s267 + $0x4d8] sm:$0xff]
      %v434 = vld [vmem:[%s267 + $0x4e0] sm:$0xff]
      %v435 = vld [vmem:[%s267 + $0x4e8] sm:$0xff]
      %v436 = vld [vmem:[%s267 + $0x4f0] sm:$0xff]
      %v437 = vld [vmem:[%s267 + $0x4f8] sm:$0xff]
      %v438 = vld [vmem:[%s267 + $0x500] sm:$0xff]
      %v439 = vld [vmem:[%s267 + $0x508] sm:$0xff]
      %v440 = vld [vmem:[%s267 + $0x510] sm:$0xff]
      %v441 = vld [vmem:[%s267 + $0x518] sm:$0xff]
      %v442 = vld [vmem:[%s267 + $0x520] sm:$0xff]
      %v443 = vld [vmem:[%s267 + $0x528] sm:$0xff]
      %v444 = vld [vmem:[%s267 + $0x530] sm:$0xff]
      %v445 = vld [vmem:[%s267 + $0x538] sm:$0xff]
      %v446 = vld [vmem:[%s267 + $0x540] sm:$0xff]
      %v447 = vld [vmem:[%s267 + $0x548] sm:$0xff]
      %v448 = vld [vmem:[%s267 + $0x550] sm:$0xff]
      %v449 = vld [vmem:[%s267 + $0x558] sm:$0xff]
      %v450 = vld [vmem:[%s267 + $0x560] sm:$0xff]
      %v451 = vld [vmem:[%s267 + $0x568] sm:$0xff]
      %v452 = vld [vmem:[%s267 + $0x570] sm:$0xff]
      %v453 = vld [vmem:[%s267 + $0x578] sm:$0xff]
      %v454 = vld [vmem:[%s267 + $0x580] sm:$0xff]
      %v455 = vld [vmem:[%s267 + $0x588] sm:$0xff]
      %v456 = vld [vmem:[%s267 + $0x590] sm:$0xff]
      %v457 = vld [vmem:[%s267 + $0x598] sm:$0xff]
      %v458 = vld [vmem:[%s267 + $0x5a0] sm:$0xff]
      %v459 = vld [vmem:[%s267 + $0x5a8] sm:$0xff]
      %v460 = vld [vmem:[%s267 + $0x5b0] sm:$0xff]
      %v461 = vld [vmem:[%s267 + $0x5b8] sm:$0xff]
      %v462 = vld [vmem:[%s267 + $0x5c0] sm:$0xff]
      %v463 = vld [vmem:[%s267 + $0x5c8] sm:$0xff]
      %v464 = vld [vmem:[%s267 + $0x5d0] sm:$0xff]
      %v465 = vld [vmem:[%s267 + $0x5d8] sm:$0xff]
      %v466 = vld [vmem:[%s267 + $0x5e0] sm:$0xff]
      %v467 = vld [vmem:[%s267 + $0x5e8] sm:$0xff]
      %v468 = vld [vmem:[%s267 + $0x5f0] sm:$0xff]
      %v469 = vld [vmem:[%s267 + $0x5f8] sm:$0xff]
      %v470 = vld [vmem:[%s267 + $0x600] sm:$0xff]
      %v471 = vld [vmem:[%s267 + $0x608] sm:$0xff]
      %v472 = vld [vmem:[%s267 + $0x610] sm:$0xff]
      %v473 = vld [vmem:[%s267 + $0x618] sm:$0xff]
      %v474 = vld [vmem:[%s267 + $0x620] sm:$0xff]
      %v475 = vld [vmem:[%s267 + $0x628] sm:$0xff]
      %v476 = vld [vmem:[%s267 + $0x630] sm:$0xff]
      %v477 = vld [vmem:[%s267 + $0x638] sm:$0xff]
      %v478 = vld [vmem:[%s267 + $0x640] sm:$0xff]
      %v479 = vld [vmem:[%s267 + $0x648] sm:$0xff]
      %v480 = vld [vmem:[%s267 + $0x650] sm:$0xff]
      %v481 = vld [vmem:[%s267 + $0x658] sm:$0xff]
      %v482 = vld [vmem:[%s267 + $0x660] sm:$0xff]
      %v483 = vld [vmem:[%s267 + $0x668] sm:$0xff]
      %v484 = vld [vmem:[%s267 + $0x670] sm:$0xff]
      %v485 = vld [vmem:[%s267 + $0x678] sm:$0xff]
      %v486 = vld [vmem:[%s267 + $0x680] sm:$0xff]
      %v487 = vld [vmem:[%s267 + $0x688] sm:$0xff]
      %v488 = vld [vmem:[%s267 + $0x690] sm:$0xff]
      %v489 = vld [vmem:[%s267 + $0x698] sm:$0xff]
      %v490 = vld [vmem:[%s267 + $0x6a0] sm:$0xff]
      %v491 = vld [vmem:[%s267 + $0x6a8] sm:$0xff]
      %v492 = vld [vmem:[%s267 + $0x6b0] sm:$0xff]
      %v493 = vld [vmem:[%s267 + $0x6b8] sm:$0xff]
      %v494 = vld [vmem:[%s267 + $0x6c0] sm:$0xff]
      %v495 = vld [vmem:[%s267 + $0x6c8] sm:$0xff]
      %v496 = vld [vmem:[%s267 + $0x6d0] sm:$0xff]
      %v497 = vld [vmem:[%s267 + $0x6d8] sm:$0xff]
      %v498 = vld [vmem:[%s267 + $0x6e0] sm:$0xff]
      %v499 = vld [vmem:[%s267 + $0x6e8] sm:$0xff]
      %v500 = vld [vmem:[%s267 + $0x6f0] sm:$0xff]
      %v501 = vld [vmem:[%s267 + $0x6f8] sm:$0xff]
      %v502 = vld [vmem:[%s267 + $0x700] sm:$0xff]
      %v503 = vld [vmem:[%s267 + $0x708] sm:$0xff]
      %v504 = vld [vmem:[%s267 + $0x710] sm:$0xff]
      %v505 = vld [vmem:[%s267 + $0x718] sm:$0xff]
      %v506 = vld [vmem:[%s267 + $0x720] sm:$0xff]
      %v507 = vld [vmem:[%s267 + $0x728] sm:$0xff]
      %v508 = vld [vmem:[%s267 + $0x730] sm:$0xff]
      %v509 = vld [vmem:[%s267 + $0x738] sm:$0xff]
      %v510 = vld [vmem:[%s267 + $0x740] sm:$0xff]
      %v511 = vld [vmem:[%s267 + $0x748] sm:$0xff]
      %v512 = vld [vmem:[%s267 + $0x750] sm:$0xff]
      %v513 = vld [vmem:[%s267 + $0x758] sm:$0xff]
      %v514 = vld [vmem:[%s267 + $0x760] sm:$0xff]
      %v515 = vld [vmem:[%s267 + $0x768] sm:$0xff]
      %v516 = vld [vmem:[%s267 + $0x770] sm:$0xff]
      %v517 = vld [vmem:[%s267 + $0x778] sm:$0xff]
      %v518 = vld [vmem:[%s267 + $0x780] sm:$0xff]
      %v519 = vld [vmem:[%s267 + $0x788] sm:$0xff]
      %v520 = vld [vmem:[%s267 + $0x790] sm:$0xff]
      %v521 = vld [vmem:[%s267 + $0x798] sm:$0xff]
      %v522 = vld [vmem:[%s267 + $0x7a0] sm:$0xff]
      %v523 = vld [vmem:[%s267 + $0x7a8] sm:$0xff]
      %v524 = vld [vmem:[%s267 + $0x7b0] sm:$0xff]
      %v525 = vld [vmem:[%s267 + $0x7b8] sm:$0xff]
      %v526 = vld [vmem:[%s267 + $0x7c0] sm:$0xff]
      %v527 = vld [vmem:[%s267 + $0x7c8] sm:$0xff]
      %v528 = vld [vmem:[%s267 + $0x7d0] sm:$0xff]
      %v529 = vld [vmem:[%s267 + $0x7d8] sm:$0xff]
      %v530 = vld [vmem:[%s267 + $0x7e0] sm:$0xff]
      %v531 = vld [vmem:[%s267 + $0x7e8] sm:$0xff]
      %v532 = vld [vmem:[%s267 + $0x7f0] sm:$0xff]
      %v533 = vld [vmem:[%s267 + $0x7f8] sm:$0xff]
      %v534 = vld [vmem:[%s267 + $0x800] sm:$0xff]
      %v535 = vld [vmem:[%s267 + $0x808] sm:$0xff]
      %v536 = vld [vmem:[%s267 + $0x810] sm:$0xff]
      %v537 = vld [vmem:[%s267 + $0x818] sm:$0xff]
      %v538 = vld [vmem:[%s267 + $0x820] sm:$0xff]
      %v539 = vld [vmem:[%s267 + $0x828] sm:$0xff]
      %v540 = vld [vmem:[%s267 + $0x830] sm:$0xff]
      %v541 = vld [vmem:[%s267 + $0x838] sm:$0xff]
      %v542 = vld [vmem:[%s267 + $0x840] sm:$0xff]
      %v543 = vld [vmem:[%s267 + $0x848] sm:$0xff]
      %v544 = vld [vmem:[%s267 + $0x850] sm:$0xff]
      %v545 = vld [vmem:[%s267 + $0x858] sm:$0xff]
      %v546 = vld [vmem:[%s267 + $0x860] sm:$0xff]
      %v547 = vld [vmem:[%s267 + $0x868] sm:$0xff]
      %v548 = vld [vmem:[%s267 + $0x870] sm:$0xff]
      %v549 = vld [vmem:[%s267 + $0x878] sm:$0xff]
      %v550 = vld [vmem:[%s267 + $0x880] sm:$0xff]
      %v551 = vld [vmem:[%s267 + $0x888] sm:$0xff]
      %v552 = vld [vmem:[%s267 + $0x890] sm:$0xff]
      %v553 = vld [vmem:[%s267 + $0x898] sm:$0xff]
      %v554 = vld [vmem:[%s267 + $0x8a0] sm:$0xff]
      %v555 = vld [vmem:[%s267 + $0x8a8] sm:$0xff]
      %v556 = vld [vmem:[%s267 + $0x8b0] sm:$0xff]
      %v557 = vld [vmem:[%s267 + $0x8b8] sm:$0xff]
      %v558 = vld [vmem:[%s267 + $0x8c0] sm:$0xff]
      %v559 = vld [vmem:[%s267 + $0x8c8] sm:$0xff]
      %v560 = vld [vmem:[%s267 + $0x8d0] sm:$0xff]
      %v561 = vld [vmem:[%s267 + $0x8d8] sm:$0xff]
      %v562 = vld [vmem:[%s267 + $0x8e0] sm:$0xff]
      %v563 = vld [vmem:[%s267 + $0x8e8] sm:$0xff]
      %v564 = vld [vmem:[%s267 + $0x8f0] sm:$0xff]
      %v565 = vld [vmem:[%s267 + $0x8f8] sm:$0xff]
      %v566 = vld [vmem:[%s267 + $0x900] sm:$0xff]
      %v567 = vld [vmem:[%s267 + $0x908] sm:$0xff]
      %v568 = vld [vmem:[%s267 + $0x910] sm:$0xff]
      %v569 = vld [vmem:[%s267 + $0x918] sm:$0xff]
      %v570 = vld [vmem:[%s267 + $0x920] sm:$0xff]
      %v571 = vld [vmem:[%s267 + $0x928] sm:$0xff]
      %v572 = vld [vmem:[%s267 + $0x930] sm:$0xff]
      %v573 = vld [vmem:[%s267 + $0x938] sm:$0xff]
      %v574 = vld [vmem:[%s267 + $0x940] sm:$0xff]
      %v575 = vld [vmem:[%s267 + $0x948] sm:$0xff]
      %v576 = vld [vmem:[%s267 + $0x950] sm:$0xff]
      %v577 = vld [vmem:[%s267 + $0x958] sm:$0xff]
      %v578 = vld [vmem:[%s267 + $0x960] sm:$0xff]
      %v579 = vld [vmem:[%s267 + $0x968] sm:$0xff]
      %v580 = vld [vmem:[%s267 + $0x970] sm:$0xff]
      %v581 = vld [vmem:[%s267 + $0x978] sm:$0xff]
      %v582 = vld [vmem:[%s267 + $0x980] sm:$0xff]
      %v583 = vld [vmem:[%s267 + $0x988] sm:$0xff]
      %v584 = vld [vmem:[%s267 + $0x990] sm:$0xff]
      %v585 = vld [vmem:[%s267 + $0x998] sm:$0xff]
      %v586 = vld [vmem:[%s267 + $0x9a0] sm:$0xff]
      %v587 = vld [vmem:[%s267 + $0x9a8] sm:$0xff]
      %v588 = vld [vmem:[%s267 + $0x9b0] sm:$0xff]
      %v589 = vld [vmem:[%s267 + $0x9b8] sm:$0xff]
      %v590 = vld [vmem:[%s267 + $0x9c0] sm:$0xff]
      %v591 = vld [vmem:[%s267 + $0x9c8] sm:$0xff]
      %v592 = vld [vmem:[%s267 + $0x9d0] sm:$0xff]
      %v593 = vld [vmem:[%s267 + $0x9d8] sm:$0xff]
      %v594 = vld [vmem:[%s267 + $0x9e0] sm:$0xff]
      %v595 = vld [vmem:[%s267 + $0x9e8] sm:$0xff]
      %v596 = vld [vmem:[%s267 + $0x9f0] sm:$0xff]
      %v597 = vld [vmem:[%s267 + $0x9f8] sm:$0xff]
      %v598 = vld [vmem:[%s267 + $0xa00] sm:$0xff]
      %v599 = vld [vmem:[%s267 + $0xa08] sm:$0xff]
      %v600 = vld [vmem:[%s267 + $0xa10] sm:$0xff]
      %v601 = vld [vmem:[%s267 + $0xa18] sm:$0xff]
      %v602 = vld [vmem:[%s267 + $0xa20] sm:$0xff]
      %v603 = vld [vmem:[%s267 + $0xa28] sm:$0xff]
      %v604 = vld [vmem:[%s267 + $0xa30] sm:$0xff]
      %v605 = vld [vmem:[%s267 + $0xa38] sm:$0xff]
      %v606 = vld [vmem:[%s267 + $0xa40] sm:$0xff]
      %v607 = vld [vmem:[%s267 + $0xa48] sm:$0xff]
      %v608 = vld [vmem:[%s267 + $0xa50] sm:$0xff]
      %v609 = vld [vmem:[%s267 + $0xa58] sm:$0xff]
      %v610 = vld [vmem:[%s267 + $0xa60] sm:$0xff]
      %v611 = vld [vmem:[%s267 + $0xa68] sm:$0xff]
      %v612 = vld [vmem:[%s267 + $0xa70] sm:$0xff]
      %v613 = vld [vmem:[%s267 + $0xa78] sm:$0xff]
      %v614 = vld [vmem:[%s267 + $0xa80] sm:$0xff]
      %v615 = vld [vmem:[%s267 + $0xa88] sm:$0xff]
      %v616 = vld [vmem:[%s267 + $0xa90] sm:$0xff]
      %v617 = vld [vmem:[%s267 + $0xa98] sm:$0xff]
      %v618 = vld [vmem:[%s267 + $0xaa0] sm:$0xff]
      %v619 = vld [vmem:[%s267 + $0xaa8] sm:$0xff]
      %v620 = vld [vmem:[%s267 + $0xab0] sm:$0xff]
      %v621 = vld [vmem:[%s267 + $0xab8] sm:$0xff]
      %v622 = vld [vmem:[%s267 + $0xac0] sm:$0xff]
      %v623 = vld [vmem:[%s267 + $0xac8] sm:$0xff]
      %v624 = vld [vmem:[%s267 + $0xad0] sm:$0xff]
      %v625 = vld [vmem:[%s267 + $0xad8] sm:$0xff]
      %v626 = vld [vmem:[%s267 + $0xae0] sm:$0xff]
      %v627 = vld [vmem:[%s267 + $0xae8] sm:$0xff]
      %v628 = vld [vmem:[%s267 + $0xaf0] sm:$0xff]
      %v629 = vld [vmem:[%s267 + $0xaf8] sm:$0xff]
      %v630 = vld [vmem:[%s267 + $0xb00] sm:$0xff]
      %v631 = vld [vmem:[%s267 + $0xb08] sm:$0xff]
      %v632 = vld [vmem:[%s267 + $0xb10] sm:$0xff]
      %v633 = vld [vmem:[%s267 + $0xb18] sm:$0xff]
      %v634 = vld [vmem:[%s267 + $0xb20] sm:$0xff]
      %v635 = vld [vmem:[%s267 + $0xb28] sm:$0xff]
      %v636 = vld [vmem:[%s267 + $0xb30] sm:$0xff]
      %v637 = vld [vmem:[%s267 + $0xb38] sm:$0xff]
      %v638 = vld [vmem:[%s267 + $0xb40] sm:$0xff]
      %v639 = vld [vmem:[%s267 + $0xb48] sm:$0xff]
      %v640 = vld [vmem:[%s267 + $0xb50] sm:$0xff]
      %v641 = vld [vmem:[%s267 + $0xb58] sm:$0xff]
      %v642 = vld [vmem:[%s267 + $0xb60] sm:$0xff]
      %v643 = vld [vmem:[%s267 + $0xb68] sm:$0xff]
      %v644 = vld [vmem:[%s267 + $0xb70] sm:$0xff]
      %v645 = vld [vmem:[%s267 + $0xb78] sm:$0xff]
      %v646 = vld [vmem:[%s267 + $0xb80] sm:$0xff]
      %v647 = vld [vmem:[%s267 + $0xb88] sm:$0xff]
      %v648 = vld [vmem:[%s267 + $0xb90] sm:$0xff]
      %v649 = vld [vmem:[%s267 + $0xb98] sm:$0xff]
      %v650 = vld [vmem:[%s267 + $0xba0] sm:$0xff]
      %v651 = vld [vmem:[%s267 + $0xba8] sm:$0xff]
      %v652 = vld [vmem:[%s267 + $0xbb0] sm:$0xff]
      %v653 = vld [vmem:[%s267 + $0xbb8] sm:$0xff]
      %v654 = vld [vmem:[%s267 + $0xbc0] sm:$0xff]
      %v655 = vld [vmem:[%s267 + $0xbc8] sm:$0xff]
      %v656 = vld [vmem:[%s267 + $0xbd0] sm:$0xff]
      %v657 = vld [vmem:[%s267 + $0xbd8] sm:$0xff]
      %v658 = vld [vmem:[%s267 + $0xbe0] sm:$0xff]
      %v659 = vld [vmem:[%s267 + $0xbe8] sm:$0xff]
      %v660 = vld [vmem:[%s267 + $0xbf0] sm:$0xff]
      %v661 = vld [vmem:[%s267 + $0xbf8] sm:$0xff]
      %v662 = vld [vmem:[%s267 + $0xc00] sm:$0xff]
      %v663 = vld [vmem:[%s267 + $0xc08] sm:$0xff]
      %v664 = vld [vmem:[%s267 + $0xc10] sm:$0xff]
      %v665 = vld [vmem:[%s267 + $0xc18] sm:$0xff]
      %v666 = vld [vmem:[%s267 + $0xc20] sm:$0xff]
      %v667 = vld [vmem:[%s267 + $0xc28] sm:$0xff]
      %v668 = vld [vmem:[%s267 + $0xc30] sm:$0xff]
      %v669 = vld [vmem:[%s267 + $0xc38] sm:$0xff]
      %v670 = vld [vmem:[%s267 + $0xc40] sm:$0xff]
      %v671 = vld [vmem:[%s267 + $0xc48] sm:$0xff]
      %v672 = vld [vmem:[%s267 + $0xc50] sm:$0xff]
      %v673 = vld [vmem:[%s267 + $0xc58] sm:$0xff]
      %v674 = vld [vmem:[%s267 + $0xc60] sm:$0xff]
      %v675 = vld [vmem:[%s267 + $0xc68] sm:$0xff]
      %v676 = vld [vmem:[%s267 + $0xc70] sm:$0xff]
      %v677 = vld [vmem:[%s267 + $0xc78] sm:$0xff]
      %v678 = vld [vmem:[%s267 + $0xc80] sm:$0xff]
      %v679 = vld [vmem:[%s267 + $0xc88] sm:$0xff]
      %v680 = vld [vmem:[%s267 + $0xc90] sm:$0xff]
      %v681 = vld [vmem:[%s267 + $0xc98] sm:$0xff]
      %v682 = vld [vmem:[%s267 + $0xca0] sm:$0xff]
      %v683 = vld [vmem:[%s267 + $0xca8] sm:$0xff]
      %v684 = vld [vmem:[%s267 + $0xcb0] sm:$0xff]
      %v685 = vld [vmem:[%s267 + $0xcb8] sm:$0xff]
      %v686 = vld [vmem:[%s267 + $0xcc0] sm:$0xff]
      %v687 = vld [vmem:[%s267 + $0xcc8] sm:$0xff]
      %v688 = vld [vmem:[%s267 + $0xcd0] sm:$0xff]
      %v689 = vld [vmem:[%s267 + $0xcd8] sm:$0xff]
      %v690 = vld [vmem:[%s267 + $0xce0] sm:$0xff]
      %v691 = vld [vmem:[%s267 + $0xce8] sm:$0xff]
      %v692 = vld [vmem:[%s267 + $0xcf0] sm:$0xff]
      %v693 = vld [vmem:[%s267 + $0xcf8] sm:$0xff]
      %v694 = vld [vmem:[%s267 + $0xd00] sm:$0xff]
      %v695 = vld [vmem:[%s267 + $0xd08] sm:$0xff]
      %v696 = vld [vmem:[%s267 + $0xd10] sm:$0xff]
      %v697 = vld [vmem:[%s267 + $0xd18] sm:$0xff]
      %v698 = vld [vmem:[%s267 + $0xd20] sm:$0xff]
      %v699 = vld [vmem:[%s267 + $0xd28] sm:$0xff]
      %v700 = vld [vmem:[%s267 + $0xd30] sm:$0xff]
      %v701 = vld [vmem:[%s267 + $0xd38] sm:$0xff]
      %v702 = vld [vmem:[%s267 + $0xd40] sm:$0xff]
      %v703 = vld [vmem:[%s267 + $0xd48] sm:$0xff]
      %v704 = vld [vmem:[%s267 + $0xd50] sm:$0xff]
      %v705 = vld [vmem:[%s267 + $0xd58] sm:$0xff]
      %v706 = vld [vmem:[%s267 + $0xd60] sm:$0xff]
      %v707 = vld [vmem:[%s267 + $0xd68] sm:$0xff]
      %v708 = vld [vmem:[%s267 + $0xd70] sm:$0xff]
      %v709 = vld [vmem:[%s267 + $0xd78] sm:$0xff]
      %v710 = vld [vmem:[%s267 + $0xd80] sm:$0xff]
      %v711 = vld [vmem:[%s267 + $0xd88] sm:$0xff]
      %v712 = vld [vmem:[%s267 + $0xd90] sm:$0xff]
      %v713 = vld [vmem:[%s267 + $0xd98] sm:$0xff]
      %v714 = vld [vmem:[%s267 + $0xda0] sm:$0xff]
      %v715 = vld [vmem:[%s267 + $0xda8] sm:$0xff]
      %v716 = vld [vmem:[%s267 + $0xdb0] sm:$0xff]
      %v717 = vld [vmem:[%s267 + $0xdb8] sm:$0xff]
      %v718 = vld [vmem:[%s267 + $0xdc0] sm:$0xff]
      %v719 = vld [vmem:[%s267 + $0xdc8] sm:$0xff]
      %v720 = vld [vmem:[%s267 + $0xdd0] sm:$0xff]
      %v721 = vld [vmem:[%s267 + $0xdd8] sm:$0xff]
      %v722 = vld [vmem:[%s267 + $0xde0] sm:$0xff]
      %v723 = vld [vmem:[%s267 + $0xde8] sm:$0xff]
      %v724 = vld [vmem:[%s267 + $0xdf0] sm:$0xff]
      %v725 = vld [vmem:[%s267 + $0xdf8] sm:$0xff]
      %v726 = vld [vmem:[%s267 + $0xe00] sm:$0xff]
      %v727 = vld [vmem:[%s267 + $0xe08] sm:$0xff]
      %v728 = vld [vmem:[%s267 + $0xe10] sm:$0xff]
      %v729 = vld [vmem:[%s267 + $0xe18] sm:$0xff]
      %v730 = vld [vmem:[%s267 + $0xe20] sm:$0xff]
      %v731 = vld [vmem:[%s267 + $0xe28] sm:$0xff]
      %v732 = vld [vmem:[%s267 + $0xe30] sm:$0xff]
      %v733 = vld [vmem:[%s267 + $0xe38] sm:$0xff]
      %v734 = vld [vmem:[%s267 + $0xe40] sm:$0xff]
      %v735 = vld [vmem:[%s267 + $0xe48] sm:$0xff]
      %v736 = vld [vmem:[%s267 + $0xe50] sm:$0xff]
      %v737 = vld [vmem:[%s267 + $0xe58] sm:$0xff]
      %v738 = vld [vmem:[%s267 + $0xe60] sm:$0xff]
      %v739 = vld [vmem:[%s267 + $0xe68] sm:$0xff]
      %v740 = vld [vmem:[%s267 + $0xe70] sm:$0xff]
      %v741 = vld [vmem:[%s267 + $0xe78] sm:$0xff]
      %v742 = vld [vmem:[%s267 + $0xe80] sm:$0xff]
      %v743 = vld [vmem:[%s267 + $0xe88] sm:$0xff]
      %v744 = vld [vmem:[%s267 + $0xe90] sm:$0xff]
      %v745 = vld [vmem:[%s267 + $0xe98] sm:$0xff]
      %v746 = vld [vmem:[%s267 + $0xea0] sm:$0xff]
      %v747 = vld [vmem:[%s267 + $0xea8] sm:$0xff]
      %v748 = vld [vmem:[%s267 + $0xeb0] sm:$0xff]
      %v749 = vld [vmem:[%s267 + $0xeb8] sm:$0xff]
      %v750 = vld [vmem:[%s267 + $0xec0] sm:$0xff]
      %v751 = vld [vmem:[%s267 + $0xec8] sm:$0xff]
      %v752 = vld [vmem:[%s267 + $0xed0] sm:$0xff]
      %v753 = vld [vmem:[%s267 + $0xed8] sm:$0xff]
      %v754 = vld [vmem:[%s267 + $0xee0] sm:$0xff]
      %v755 = vld [vmem:[%s267 + $0xee8] sm:$0xff]
      %v756 = vld [vmem:[%s267 + $0xef0] sm:$0xff]
      %v757 = vld [vmem:[%s267 + $0xef8] sm:$0xff]
      %v758 = vld [vmem:[%s267 + $0xf00] sm:$0xff]
      %v759 = vld [vmem:[%s267 + $0xf08] sm:$0xff]
      %v760 = vld [vmem:[%s267 + $0xf10] sm:$0xff]
      %v761 = vld [vmem:[%s267 + $0xf18] sm:$0xff]
      %v762 = vld [vmem:[%s267 + $0xf20] sm:$0xff]
      %v763 = vld [vmem:[%s267 + $0xf28] sm:$0xff]
      %v764 = vld [vmem:[%s267 + $0xf30] sm:$0xff]
      %v765 = vld [vmem:[%s267 + $0xf38] sm:$0xff]
      %v766 = vld [vmem:[%s267 + $0xf40] sm:$0xff]
      %v767 = vld [vmem:[%s267 + $0xf48] sm:$0xff]
      %v768 = vld [vmem:[%s267 + $0xf50] sm:$0xff]
      %v769 = vld [vmem:[%s267 + $0xf58] sm:$0xff]
      %v770 = vld [vmem:[%s267 + $0xf60] sm:$0xff]
      %v771 = vld [vmem:[%s267 + $0xf68] sm:$0xff]
      %v772 = vld [vmem:[%s267 + $0xf70] sm:$0xff]
      %v773 = vld [vmem:[%s267 + $0xf78] sm:$0xff]
      %v774 = vld [vmem:[%s267 + $0xf80] sm:$0xff]
      %v775 = vld [vmem:[%s267 + $0xf88] sm:$0xff]
      %v776 = vld [vmem:[%s267 + $0xf90] sm:$0xff]
      %v777 = vld [vmem:[%s267 + $0xf98] sm:$0xff]
      %v778 = vld [vmem:[%s267 + $0xfa0] sm:$0xff]
      %v779 = vld [vmem:[%s267 + $0xfa8] sm:$0xff]
      %v780 = vld [vmem:[%s267 + $0xfb0] sm:$0xff]
      %v781 = vld [vmem:[%s267 + $0xfb8] sm:$0xff]
      %v782 = vld [vmem:[%s267 + $0xfc0] sm:$0xff]
      %v783 = vld [vmem:[%s267 + $0xfc8] sm:$0xff]
      %v784 = vld [vmem:[%s267 + $0xfd0] sm:$0xff]
      %v785 = vld [vmem:[%s267 + $0xfd8] sm:$0xff]
      %v786 = vld [vmem:[%s267 + $0xfe0] sm:$0xff]
      %v787 = vld [vmem:[%s267 + $0xfe8] sm:$0xff]
      %v788 = vld [vmem:[%s267 + $0xff0] sm:$0xff]
      %v789 = vld [vmem:[%s267 + $0xff8] sm:$0xff]
      %v790 = vld [vmem:[%s267 + $0x1000] sm:$0xff]
      %v791 = vld [vmem:[%s267 + $0x1008] sm:$0xff]
      %v792 = vld [vmem:[%s267 + $0x1010] sm:$0xff]
      %v793 = vld [vmem:[%s267 + $0x1018] sm:$0xff]
      %v794 = vld [vmem:[%s267 + $0x1020] sm:$0xff]
      %v795 = vld [vmem:[%s267 + $0x1028] sm:$0xff]
      %v796 = vld [vmem:[%s267 + $0x1030] sm:$0xff]
      %v797 = vld [vmem:[%s267 + $0x1038] sm:$0xff]
      %v798 = vld [vmem:[%s267 + $0x1040] sm:$0xff]
      %v799 = vld [vmem:[%s267 + $0x1048] sm:$0xff]
      %v800 = vld [vmem:[%s267 + $0x1050] sm:$0xff]
      %v801 = vld [vmem:[%s267 + $0x1058] sm:$0xff]
      %v802 = vld [vmem:[%s267 + $0x1060] sm:$0xff]
      %v803 = vld [vmem:[%s267 + $0x1068] sm:$0xff]
      %v804 = vld [vmem:[%s267 + $0x1070] sm:$0xff]
      %v805 = vld [vmem:[%s267 + $0x1078] sm:$0xff]
      %v806 = vld [vmem:[%s267 + $0x1080] sm:$0xff]
      %v807 = vld [vmem:[%s267 + $0x1088] sm:$0xff]
      %v808 = vld [vmem:[%s267 + $0x1090] sm:$0xff]
      %v809 = vld [vmem:[%s267 + $0x1098] sm:$0xff]
      %v810 = vld [vmem:[%s267 + $0x10a0] sm:$0xff]
      %v811 = vld [vmem:[%s267 + $0x10a8] sm:$0xff]
      %v812 = vld [vmem:[%s267 + $0x10b0] sm:$0xff]
      %v813 = vld [vmem:[%s267 + $0x10b8] sm:$0xff]
      %v814 = vld [vmem:[%s267 + $0x10c0] sm:$0xff]
      %v815 = vld [vmem:[%s267 + $0x10c8] sm:$0xff]
      %v816 = vld [vmem:[%s267 + $0x10d0] sm:$0xff]
      %v817 = vld [vmem:[%s267 + $0x10d8] sm:$0xff]
      %v818 = vld [vmem:[%s267 + $0x10e0] sm:$0xff]
      %v819 = vld [vmem:[%s267 + $0x10e8] sm:$0xff]
      %v820 = vld [vmem:[%s267 + $0x10f0] sm:$0xff]
      %v821 = vld [vmem:[%s267 + $0x10f8] sm:$0xff]
      %v822 = vld [vmem:[%s267 + $0x1100] sm:$0xff]
      %v823 = vld [vmem:[%s267 + $0x1108] sm:$0xff]
      %v824 = vld [vmem:[%s267 + $0x1110] sm:$0xff]
      %v825 = vld [vmem:[%s267 + $0x1118] sm:$0xff]
      %v826 = vld [vmem:[%s267 + $0x1120] sm:$0xff]
      %v827 = vld [vmem:[%s267 + $0x1128] sm:$0xff]
      %v828 = vld [vmem:[%s267 + $0x1130] sm:$0xff]
      %v829 = vld [vmem:[%s267 + $0x1138] sm:$0xff]
      %v830 = vld [vmem:[%s267 + $0x1140] sm:$0xff]
      %v831 = vld [vmem:[%s267 + $0x1148] sm:$0xff]
      %v832 = vld [vmem:[%s267 + $0x1150] sm:$0xff]
      %v833 = vld [vmem:[%s267 + $0x1158] sm:$0xff]
      %v834 = vld [vmem:[%s267 + $0x1160] sm:$0xff]
      %v835 = vld [vmem:[%s267 + $0x1168] sm:$0xff]
      %v836 = vld [vmem:[%s267 + $0x1170] sm:$0xff]
      %v837 = vld [vmem:[%s267 + $0x1178] sm:$0xff]
      %v838 = vld [vmem:[%s267 + $0x1180] sm:$0xff]
      %v839 = vld [vmem:[%s267 + $0x1188] sm:$0xff]
      %v840 = vld [vmem:[%s267 + $0x1190] sm:$0xff]
      %v841 = vld [vmem:[%s267 + $0x1198] sm:$0xff]
      %v842 = vld [vmem:[%s267 + $0x11a0] sm:$0xff]
      %v843 = vld [vmem:[%s267 + $0x11a8] sm:$0xff]
      %v844 = vld [vmem:[%s267 + $0x11b0] sm:$0xff]
      %v845 = vld [vmem:[%s267 + $0x11b8] sm:$0xff]
      %v846 = vld [vmem:[%s267 + $0x11c0] sm:$0xff]
      %v847 = vld [vmem:[%s267 + $0x11c8] sm:$0xff]
      %v848 = vld [vmem:[%s267 + $0x11d0] sm:$0xff]
      %v849 = vld [vmem:[%s267 + $0x11d8] sm:$0xff]
      %v850 = vld [vmem:[%s267 + $0x11e0] sm:$0xff]
      %v851 = vld [vmem:[%s267 + $0x11e8] sm:$0xff]
      %v852 = vld [vmem:[%s267 + $0x11f0] sm:$0xff]
      %v853 = vld [vmem:[%s267 + $0x11f8] sm:$0xff]
      %v854 = vld [vmem:[%s267 + $0x1200] sm:$0xff]
      %v855 = vld [vmem:[%s267 + $0x1208] sm:$0xff]
      %v856 = vld [vmem:[%s267 + $0x1210] sm:$0xff]
      %v857 = vld [vmem:[%s267 + $0x1218] sm:$0xff]
      %v858 = vld [vmem:[%s267 + $0x1220] sm:$0xff]
      %v859 = vld [vmem:[%s267 + $0x1228] sm:$0xff]
      %v860 = vld [vmem:[%s267 + $0x1230] sm:$0xff]
      %v861 = vld [vmem:[%s267 + $0x1238] sm:$0xff]
      %v862 = vld [vmem:[%s267 + $0x1240] sm:$0xff]
      %v863 = vld [vmem:[%s267 + $0x1248] sm:$0xff]
      %v864 = vld [vmem:[%s267 + $0x1250] sm:$0xff]
      %v865 = vld [vmem:[%s267 + $0x1258] sm:$0xff]
      %v866 = vld [vmem:[%s267 + $0x1260] sm:$0xff]
      %v867 = vld [vmem:[%s267 + $0x1268] sm:$0xff]
      %v868 = vld [vmem:[%s267 + $0x1270] sm:$0xff]
      %v869 = vld [vmem:[%s267 + $0x1278] sm:$0xff]
      %v870 = vld [vmem:[%s267 + $0x1280] sm:$0xff]
      %v871 = vld [vmem:[%s267 + $0x1288] sm:$0xff]
      %v872 = vld [vmem:[%s267 + $0x1290] sm:$0xff]
      %v873 = vld [vmem:[%s267 + $0x1298] sm:$0xff]
      %v874 = vld [vmem:[%s267 + $0x12a0] sm:$0xff]
      %v875 = vld [vmem:[%s267 + $0x12a8] sm:$0xff]
      %v876 = vld [vmem:[%s267 + $0x12b0] sm:$0xff]
      %v877 = vld [vmem:[%s267 + $0x12b8] sm:$0xff]
      %v878 = vld [vmem:[%s267 + $0x12c0] sm:$0xff]
      %v879 = vld [vmem:[%s267 + $0x12c8] sm:$0xff]
      %v880 = vld [vmem:[%s267 + $0x12d0] sm:$0xff]
      %v881 = vld [vmem:[%s267 + $0x12d8] sm:$0xff]
      %v882 = vld [vmem:[%s267 + $0x12e0] sm:$0xff]
      %v883 = vld [vmem:[%s267 + $0x12e8] sm:$0xff]
      %v884 = vld [vmem:[%s267 + $0x12f0] sm:$0xff]
      %v885 = vld [vmem:[%s267 + $0x12f8] sm:$0xff]
      %v886 = vld [vmem:[%s267 + $0x1300] sm:$0xff]
      %v887 = vld [vmem:[%s267 + $0x1308] sm:$0xff]
      %v888 = vld [vmem:[%s267 + $0x1310] sm:$0xff]
      %v889 = vld [vmem:[%s267 + $0x1318] sm:$0xff]
      %v890 = vld [vmem:[%s267 + $0x1320] sm:$0xff]
      %v891 = vld [vmem:[%s267 + $0x1328] sm:$0xff]
      %v892 = vld [vmem:[%s267 + $0x1330] sm:$0xff]
      %v893 = vld [vmem:[%s267 + $0x1338] sm:$0xff]
      %v894 = vld [vmem:[%s267 + $0x1340] sm:$0xff]
      %v895 = vld [vmem:[%s267 + $0x1348] sm:$0xff]
      %v896 = vld [vmem:[%s267 + $0x1350] sm:$0xff]
      %v897 = vld [vmem:[%s267 + $0x1358] sm:$0xff]
      %v898 = vld [vmem:[%s267 + $0x1360] sm:$0xff]
      %v899 = vld [vmem:[%s267 + $0x1368] sm:$0xff]
      %v900 = vld [vmem:[%s267 + $0x1370] sm:$0xff]
      %v901 = vld [vmem:[%s267 + $0x1378] sm:$0xff]
      %v902 = vld [vmem:[%s267 + $0x1380] sm:$0xff]
      %v903 = vld [vmem:[%s267 + $0x1388] sm:$0xff]
      %v904 = vld [vmem:[%s267 + $0x1390] sm:$0xff]
      %v905 = vld [vmem:[%s267 + $0x1398] sm:$0xff]
      %v906 = vld [vmem:[%s267 + $0x13a0] sm:$0xff]
      %v907 = vld [vmem:[%s267 + $0x13a8] sm:$0xff]
      %v908 = vld [vmem:[%s267 + $0x13b0] sm:$0xff]
      %v909 = vld [vmem:[%s267 + $0x13b8] sm:$0xff]
      %v910 = vld [vmem:[%s267 + $0x13c0] sm:$0xff]
      %v911 = vld [vmem:[%s267 + $0x13c8] sm:$0xff]
      %v912 = vld [vmem:[%s267 + $0x13d0] sm:$0xff]
      %v913 = vld [vmem:[%s267 + $0x13d8] sm:$0xff]
      %v914 = vld [vmem:[%s267 + $0x13e0] sm:$0xff]
      %v915 = vld [vmem:[%s267 + $0x13e8] sm:$0xff]
      %v916 = vld [vmem:[%s267 + $0x13f0] sm:$0xff]
      %v917 = vld [vmem:[%s267 + $0x13f8] sm:$0xff]
      %v918 = vld [vmem:[%s267 + $0x1400] sm:$0xff]
      %v919 = vld [vmem:[%s267 + $0x1408] sm:$0xff]
      %v920 = vld [vmem:[%s267 + $0x1410] sm:$0xff]
      %v921 = vld [vmem:[%s267 + $0x1418] sm:$0xff]
      %v922 = vld [vmem:[%s267 + $0x1420] sm:$0xff]
      %v923 = vld [vmem:[%s267 + $0x1428] sm:$0xff]
      %v924 = vld [vmem:[%s267 + $0x1430] sm:$0xff]
      %v925 = vld [vmem:[%s267 + $0x1438] sm:$0xff]
      %v926 = vld [vmem:[%s267 + $0x1440] sm:$0xff]
      %v927 = vld [vmem:[%s267 + $0x1448] sm:$0xff]
      %v928 = vld [vmem:[%s267 + $0x1450] sm:$0xff]
      %v929 = vld [vmem:[%s267 + $0x1458] sm:$0xff]
      %v930 = vld [vmem:[%s267 + $0x1460] sm:$0xff]
      %v931 = vld [vmem:[%s267 + $0x1468] sm:$0xff]
      %v932 = vld [vmem:[%s267 + $0x1470] sm:$0xff]
      %v933 = vld [vmem:[%s267 + $0x1478] sm:$0xff]
      %v934 = vld [vmem:[%s267 + $0x1480] sm:$0xff]
      %v935 = vld [vmem:[%s267 + $0x1488] sm:$0xff]
      %v936 = vld [vmem:[%s267 + $0x1490] sm:$0xff]
      %v937 = vld [vmem:[%s267 + $0x1498] sm:$0xff]
      %v938 = vld [vmem:[%s267 + $0x14a0] sm:$0xff]
      %v939 = vld [vmem:[%s267 + $0x14a8] sm:$0xff]
      %v940 = vld [vmem:[%s267 + $0x14b0] sm:$0xff]
      %v941 = vld [vmem:[%s267 + $0x14b8] sm:$0xff]
      %v942 = vld [vmem:[%s267 + $0x14c0] sm:$0xff]
      %v943 = vld [vmem:[%s267 + $0x14c8] sm:$0xff]
      %v944 = vld [vmem:[%s267 + $0x14d0] sm:$0xff]
      %v945 = vld [vmem:[%s267 + $0x14d8] sm:$0xff]
      %v946 = vld [vmem:[%s267 + $0x14e0] sm:$0xff]
      %v947 = vld [vmem:[%s267 + $0x14e8] sm:$0xff]
      %v948 = vld [vmem:[%s267 + $0x14f0] sm:$0xff]
      %v949 = vld [vmem:[%s267 + $0x14f8] sm:$0xff]
      %v950 = vld [vmem:[%s267 + $0x1500] sm:$0xff]
      %v951 = vld [vmem:[%s267 + $0x1508] sm:$0xff]
      %v952 = vld [vmem:[%s267 + $0x1510] sm:$0xff]
      %v953 = vld [vmem:[%s267 + $0x1518] sm:$0xff]
      %v954 = vld [vmem:[%s267 + $0x1520] sm:$0xff]
      %v955 = vld [vmem:[%s267 + $0x1528] sm:$0xff]
      %v956 = vld [vmem:[%s267 + $0x1530] sm:$0xff]
      %v957 = vld [vmem:[%s267 + $0x1538] sm:$0xff]
      %v958 = vld [vmem:[%s267 + $0x1540] sm:$0xff]
      %v959 = vld [vmem:[%s267 + $0x1548] sm:$0xff]
      %v960 = vld [vmem:[%s267 + $0x1550] sm:$0xff]
      %v961 = vld [vmem:[%s267 + $0x1558] sm:$0xff]
      %v962 = vld [vmem:[%s267 + $0x1560] sm:$0xff]
      %v963 = vld [vmem:[%s267 + $0x1568] sm:$0xff]
      %v964 = vld [vmem:[%s267 + $0x1570] sm:$0xff]
      %v965 = vld [vmem:[%s267 + $0x1578] sm:$0xff]
      %v966 = vld [vmem:[%s267 + $0x1580] sm:$0xff]
      %v967 = vld [vmem:[%s267 + $0x1588] sm:$0xff]
      %v968 = vld [vmem:[%s267 + $0x1590] sm:$0xff]
      %v969 = vld [vmem:[%s267 + $0x1598] sm:$0xff]
      %v970 = vld [vmem:[%s267 + $0x15a0] sm:$0xff]
      %v971 = vld [vmem:[%s267 + $0x15a8] sm:$0xff]
      %v972 = vld [vmem:[%s267 + $0x15b0] sm:$0xff]
      %v973 = vld [vmem:[%s267 + $0x15b8] sm:$0xff]
      %v974 = vld [vmem:[%s267 + $0x15c0] sm:$0xff]
      %v975 = vld [vmem:[%s267 + $0x15c8] sm:$0xff]
      %v976 = vld [vmem:[%s267 + $0x15d0] sm:$0xff]
      %v977 = vld [vmem:[%s267 + $0x15d8] sm:$0xff]
      %v978 = vld [vmem:[%s267 + $0x15e0] sm:$0xff]
      %v979 = vld [vmem:[%s267 + $0x15e8] sm:$0xff]
      %v980 = vld [vmem:[%s267 + $0x15f0] sm:$0xff]
      %v981 = vld [vmem:[%s267 + $0x15f8] sm:$0xff]
      %v982 = vld [vmem:[%s267 + $0x1600] sm:$0xff]
      %v983 = vld [vmem:[%s267 + $0x1608] sm:$0xff]
      %v984 = vld [vmem:[%s267 + $0x1610] sm:$0xff]
      %v985 = vld [vmem:[%s267 + $0x1618] sm:$0xff]
      %v986 = vld [vmem:[%s267 + $0x1620] sm:$0xff]
      %v987 = vld [vmem:[%s267 + $0x1628] sm:$0xff]
      %v988 = vld [vmem:[%s267 + $0x1630] sm:$0xff]
      %v989 = vld [vmem:[%s267 + $0x1638] sm:$0xff]
      %v990 = vld [vmem:[%s267 + $0x1640] sm:$0xff]
      %v991 = vld [vmem:[%s267 + $0x1648] sm:$0xff]
      %v992 = vld [vmem:[%s267 + $0x1650] sm:$0xff]
      %v993 = vld [vmem:[%s267 + $0x1658] sm:$0xff]
      %v994 = vld [vmem:[%s267 + $0x1660] sm:$0xff]
      %v995 = vld [vmem:[%s267 + $0x1668] sm:$0xff]
      %v996 = vld [vmem:[%s267 + $0x1670] sm:$0xff]
      %v997 = vld [vmem:[%s267 + $0x1678] sm:$0xff]
      %v998 = vld [vmem:[%s267 + $0x1680] sm:$0xff]
      %v999 = vld [vmem:[%s267 + $0x1688] sm:$0xff]
      %v1000 = vld [vmem:[%s267 + $0x1690] sm:$0xff]
      %v1001 = vld [vmem:[%s267 + $0x1698] sm:$0xff]
      %v1002 = vld [vmem:[%s267 + $0x16a0] sm:$0xff]
      %v1003 = vld [vmem:[%s267 + $0x16a8] sm:$0xff]
      %v1004 = vld [vmem:[%s267 + $0x16b0] sm:$0xff]
      %v1005 = vld [vmem:[%s267 + $0x16b8] sm:$0xff]
      %v1006 = vld [vmem:[%s267 + $0x16c0] sm:$0xff]
      %v1007 = vld [vmem:[%s267 + $0x16c8] sm:$0xff]
      %v1008 = vld [vmem:[%s267 + $0x16d0] sm:$0xff]
      %v1009 = vld [vmem:[%s267 + $0x16d8] sm:$0xff]
      %v1010 = vld [vmem:[%s267 + $0x16e0] sm:$0xff]
      %v1011 = vld [vmem:[%s267 + $0x16e8] sm:$0xff]
      %v1012 = vld [vmem:[%s267 + $0x16f0] sm:$0xff]
      %v1013 = vld [vmem:[%s267 + $0x16f8] sm:$0xff]
      %v1014 = vld [vmem:[%s267 + $0x1700] sm:$0xff]
      %v1015 = vld [vmem:[%s267 + $0x1708] sm:$0xff]
      %v1016 = vld [vmem:[%s267 + $0x1710] sm:$0xff]
      %v1017 = vld [vmem:[%s267 + $0x1718] sm:$0xff]
      %v1018 = vld [vmem:[%s267 + $0x1720] sm:$0xff]
      %v1019 = vld [vmem:[%s267 + $0x1728] sm:$0xff]
      %v1020 = vld [vmem:[%s267 + $0x1730] sm:$0xff]
      %v1021 = vld [vmem:[%s267 + $0x1738] sm:$0xff]
      %v1022 = vld [vmem:[%s267 + $0x1740] sm:$0xff]
      %v1023 = vld [vmem:[%s267 + $0x1748] sm:$0xff]
      %v1024 = vld [vmem:[%s267 + $0x1750] sm:$0xff]
      %v1025 = vld [vmem:[%s267 + $0x1758] sm:$0xff]
      %v1026 = vld [vmem:[%s267 + $0x1760] sm:$0xff]
      %v1027 = vld [vmem:[%s267 + $0x1768] sm:$0xff]
      %v1028 = vld [vmem:[%s267 + $0x1770] sm:$0xff]
      %v1029 = vld [vmem:[%s267 + $0x1778] sm:$0xff]
      %v1030 = vld [vmem:[%s267 + $0x1780] sm:$0xff]
      %v1031 = vld [vmem:[%s267 + $0x1788] sm:$0xff]
      %v1032 = vld [vmem:[%s267 + $0x1790] sm:$0xff]
      %v1033 = vld [vmem:[%s267 + $0x1798] sm:$0xff]
      %v1034 = vld [vmem:[%s267 + $0x17a0] sm:$0xff]
      %v1035 = vld [vmem:[%s267 + $0x17a8] sm:$0xff]
      %v1036 = vld [vmem:[%s267 + $0x17b0] sm:$0xff]
      %v1037 = vld [vmem:[%s267 + $0x17b8] sm:$0xff]
      %v1038 = vld [vmem:[%s267 + $0x17c0] sm:$0xff]
      %v1039 = vld [vmem:[%s267 + $0x17c8] sm:$0xff]
      %v1040 = vld [vmem:[%s267 + $0x17d0] sm:$0xff]
      %v1041 = vld [vmem:[%s267 + $0x17d8] sm:$0xff]
      %v1042 = vld [vmem:[%s267 + $0x17e0] sm:$0xff]
      %v1043 = vld [vmem:[%s267 + $0x17e8] sm:$0xff]
      %v1044 = vld [vmem:[%s267 + $0x17f0] sm:$0xff]
      %v1045 = vld [vmem:[%s267 + $0x17f8] sm:$0xff]
      %v1046 = vld [vmem:[%s267 + $0x1800] sm:$0xff]
      %v1047 = vld [vmem:[%s267 + $0x1808] sm:$0xff]
      %v1048 = vld [vmem:[%s267 + $0x1810] sm:$0xff]
      %v1049 = vld [vmem:[%s267 + $0x1818] sm:$0xff]
      %v1050 = vld [vmem:[%s267 + $0x1820] sm:$0xff]
      %v1051 = vld [vmem:[%s267 + $0x1828] sm:$0xff]
      %v1052 = vld [vmem:[%s267 + $0x1830] sm:$0xff]
      %v1053 = vld [vmem:[%s267 + $0x1838] sm:$0xff]
      %v1054 = vld [vmem:[%s267 + $0x1840] sm:$0xff]
      %v1055 = vld [vmem:[%s267 + $0x1848] sm:$0xff]
      %v1056 = vld [vmem:[%s267 + $0x1850] sm:$0xff]
      %v1057 = vld [vmem:[%s267 + $0x1858] sm:$0xff]
      %v1058 = vld [vmem:[%s267 + $0x1860] sm:$0xff]
      %v1059 = vld [vmem:[%s267 + $0x1868] sm:$0xff]
      %v1060 = vld [vmem:[%s267 + $0x1870] sm:$0xff]
      %v1061 = vld [vmem:[%s267 + $0x1878] sm:$0xff]
      %v1062 = vld [vmem:[%s267 + $0x1880] sm:$0xff]
      %v1063 = vld [vmem:[%s267 + $0x1888] sm:$0xff]
      %v1064 = vld [vmem:[%s267 + $0x1890] sm:$0xff]
      %v1065 = vld [vmem:[%s267 + $0x1898] sm:$0xff]
      %v1066 = vld [vmem:[%s267 + $0x18a0] sm:$0xff]
      %v1067 = vld [vmem:[%s267 + $0x18a8] sm:$0xff]
      %v1068 = vld [vmem:[%s267 + $0x18b0] sm:$0xff]
      %v1069 = vld [vmem:[%s267 + $0x18b8] sm:$0xff]
      %v1070 = vld [vmem:[%s267 + $0x18c0] sm:$0xff]
      %v1071 = vld [vmem:[%s267 + $0x18c8] sm:$0xff]
      %v1072 = vld [vmem:[%s267 + $0x18d0] sm:$0xff]
      %v1073 = vld [vmem:[%s267 + $0x18d8] sm:$0xff]
      %v1074 = vld [vmem:[%s267 + $0x18e0] sm:$0xff]
      %v1075 = vld [vmem:[%s267 + $0x18e8] sm:$0xff]
      %v1076 = vld [vmem:[%s267 + $0x18f0] sm:$0xff]
      %v1077 = vld [vmem:[%s267 + $0x18f8] sm:$0xff]
      %v1078 = vld [vmem:[%s267 + $0x1900] sm:$0xff]
      %v1079 = vld [vmem:[%s267 + $0x1908] sm:$0xff]
      %v1080 = vld [vmem:[%s267 + $0x1910] sm:$0xff]
      %v1081 = vld [vmem:[%s267 + $0x1918] sm:$0xff]
      %v1082 = vld [vmem:[%s267 + $0x1920] sm:$0xff]
      %v1083 = vld [vmem:[%s267 + $0x1928] sm:$0xff]
      %v1084 = vld [vmem:[%s267 + $0x1930] sm:$0xff]
      %v1085 = vld [vmem:[%s267 + $0x1938] sm:$0xff]
      %v1086 = vld [vmem:[%s267 + $0x1940] sm:$0xff]
      %v1087 = vld [vmem:[%s267 + $0x1948] sm:$0xff]
      %v1088 = vld [vmem:[%s267 + $0x1950] sm:$0xff]
      %v1089 = vld [vmem:[%s267 + $0x1958] sm:$0xff]
      %v1090 = vld [vmem:[%s267 + $0x1960] sm:$0xff]
      %v1091 = vld [vmem:[%s267 + $0x1968] sm:$0xff]
      %v1092 = vld [vmem:[%s267 + $0x1970] sm:$0xff]
      %v1093 = vld [vmem:[%s267 + $0x1978] sm:$0xff]
      %v1094 = vld [vmem:[%s267 + $0x1980] sm:$0xff]
      %v1095 = vld [vmem:[%s267 + $0x1988] sm:$0xff]
      %v1096 = vld [vmem:[%s267 + $0x1990] sm:$0xff]
      %v1097 = vld [vmem:[%s267 + $0x1998] sm:$0xff]
      %v1098 = vld [vmem:[%s267 + $0x19a0] sm:$0xff]
      %v1099 = vld [vmem:[%s267 + $0x19a8] sm:$0xff]
      %v1100 = vld [vmem:[%s267 + $0x19b0] sm:$0xff]
      %v1101 = vld [vmem:[%s267 + $0x19b8] sm:$0xff]
      %v1102 = vld [vmem:[%s267 + $0x19c0] sm:$0xff]
      %v1103 = vld [vmem:[%s267 + $0x19c8] sm:$0xff]
      %v1104 = vld [vmem:[%s267 + $0x19d0] sm:$0xff]
      %v1105 = vld [vmem:[%s267 + $0x19d8] sm:$0xff]
      %v1106 = vld [vmem:[%s267 + $0x19e0] sm:$0xff]
      %v1107 = vld [vmem:[%s267 + $0x19e8] sm:$0xff]
      %v1108 = vld [vmem:[%s267 + $0x19f0] sm:$0xff]
      %v1109 = vld [vmem:[%s267 + $0x19f8] sm:$0xff]
      %v1110 = vld [vmem:[%s267 + $0x1a00] sm:$0xff]
      %v1111 = vld [vmem:[%s267 + $0x1a08] sm:$0xff]
      %v1112 = vld [vmem:[%s267 + $0x1a10] sm:$0xff]
      %v1113 = vld [vmem:[%s267 + $0x1a18] sm:$0xff]
      %v1114 = vld [vmem:[%s267 + $0x1a20] sm:$0xff]
      %v1115 = vld [vmem:[%s267 + $0x1a28] sm:$0xff]
      %v1116 = vld [vmem:[%s267 + $0x1a30] sm:$0xff]
      %v1117 = vld [vmem:[%s267 + $0x1a38] sm:$0xff]
      %v1118 = vld [vmem:[%s267 + $0x1a40] sm:$0xff]
      %v1119 = vld [vmem:[%s267 + $0x1a48] sm:$0xff]
      %v1120 = vld [vmem:[%s267 + $0x1a50] sm:$0xff]
      %v1121 = vld [vmem:[%s267 + $0x1a58] sm:$0xff]
      %v1122 = vld [vmem:[%s267 + $0x1a60] sm:$0xff]
      %v1123 = vld [vmem:[%s267 + $0x1a68] sm:$0xff]
      %v1124 = vld [vmem:[%s267 + $0x1a70] sm:$0xff]
      %v1125 = vld [vmem:[%s267 + $0x1a78] sm:$0xff]
      %v1126 = vld [vmem:[%s267 + $0x1a80] sm:$0xff]
      %v1127 = vld [vmem:[%s267 + $0x1a88] sm:$0xff]
      %v1128 = vld [vmem:[%s267 + $0x1a90] sm:$0xff]
      %v1129 = vld [vmem:[%s267 + $0x1a98] sm:$0xff]
      %v1130 = vld [vmem:[%s267 + $0x1aa0] sm:$0xff]
      %v1131 = vld [vmem:[%s267 + $0x1aa8] sm:$0xff]
      %v1132 = vld [vmem:[%s267 + $0x1ab0] sm:$0xff]
      %v1133 = vld [vmem:[%s267 + $0x1ab8] sm:$0xff]
      %v1134 = vld [vmem:[%s267 + $0x1ac0] sm:$0xff]
      %v1135 = vld [vmem:[%s267 + $0x1ac8] sm:$0xff]
      %v1136 = vld [vmem:[%s267 + $0x1ad0] sm:$0xff]
      %v1137 = vld [vmem:[%s267 + $0x1ad8] sm:$0xff]
      %v1138 = vld [vmem:[%s267 + $0x1ae0] sm:$0xff]
      %v1139 = vld [vmem:[%s267 + $0x1ae8] sm:$0xff]
      %v1140 = vld [vmem:[%s267 + $0x1af0] sm:$0xff]
      %v1141 = vld [vmem:[%s267 + $0x1af8] sm:$0xff]
      %v1146 = vcombine.high %v274, %v274
      %v1148 = vunpack.c.l.s4 1966171168
      %v1149 = vunpack.c.0.s8 %v1148
      %v1150 = vlaneseq
      %v1151 = vshrl.u32 %v1150, 7
      %v1152 = vsub.s32 %v1149, %v1151
      %v1153 = vrot.slane %v274, %v1152
      %v1155 = vunpack.c.l.s4 1966171168
      %v1156 = vunpack.c.0.s8 %v1155
      %v1157 = vlaneseq
      %v1158 = vshrl.u32 %v1157, 7
      %v1159 = vsub.s32 %v1156, %v1158
      %v1160 = vrot.slane %v1146, %v1159
      %v1161 = vcombine.high %v1153, %v1153
      %v1162 = vcombine.high %v1160, %v1160
      %v1164 = vunpack.c.l.s4 1966171168
      %v1165 = vunpack.c.0.s8 %v1164
      %v1166 = vlaneseq
      %v1167 = vshrl.u32 %v1166, 7
      %v1168 = vsub.s32 %v1165, %v1167
      %v1169 = vrot.slane %v1153, %v1168
      %v1171 = vunpack.c.l.s4 1966171168
      %v1172 = vunpack.c.0.s8 %v1171
      %v1173 = vlaneseq
      %v1174 = vshrl.u32 %v1173, 7
      %v1175 = vsub.s32 %v1172, %v1174
      %v1176 = vrot.slane %v1160, %v1175
      %v1178 = vunpack.c.l.s4 1966171168
      %v1179 = vunpack.c.0.s8 %v1178
      %v1180 = vlaneseq
      %v1181 = vshrl.u32 %v1180, 7
      %v1182 = vsub.s32 %v1179, %v1181
      %v1183 = vrot.slane %v1161, %v1182
      %v1185 = vunpack.c.l.s4 1966171168
      %v1186 = vunpack.c.0.s8 %v1185
      %v1187 = vlaneseq
      %v1188 = vshrl.u32 %v1187, 7
      %v1189 = vsub.s32 %v1186, %v1188
      %v1190 = vrot.slane %v1162, %v1189
      %v1191 = vcombine.high %v1169, %v1169
      %v1192 = vcombine.high %v1176, %v1176
      %v1193 = vcombine.high %v1183, %v1183
      %v1194 = vcombine.high %v1190, %v1190
      %v1195 = vcombine.high %v275, %v275
      %v1197 = vunpack.c.l.s4 1966171168
      %v1198 = vunpack.c.0.s8 %v1197
      %v1199 = vlaneseq
      %v1200 = vshrl.u32 %v1199, 7
      %v1201 = vsub.s32 %v1198, %v1200
      %v1202 = vrot.slane %v275, %v1201
      %v1204 = vunpack.c.l.s4 1966171168
      %v1205 = vunpack.c.0.s8 %v1204
      %v1206 = vlaneseq
      %v1207 = vshrl.u32 %v1206, 7
      %v1208 = vsub.s32 %v1205, %v1207
      %v1209 = vrot.slane %v1195, %v1208
      %v1210 = vcombine.high %v1202, %v1202
      %v1211 = vcombine.high %v1209, %v1209
      %v1213 = vunpack.c.l.s4 1966171168
      %v1214 = vunpack.c.0.s8 %v1213
      %v1215 = vlaneseq
      %v1216 = vshrl.u32 %v1215, 7
      %v1217 = vsub.s32 %v1214, %v1216
      %v1218 = vrot.slane %v1202, %v1217
      %v1220 = vunpack.c.l.s4 1966171168
      %v1221 = vunpack.c.0.s8 %v1220
      %v1222 = vlaneseq
      %v1223 = vshrl.u32 %v1222, 7
      %v1224 = vsub.s32 %v1221, %v1223
      %v1225 = vrot.slane %v1209, %v1224
      %v1227 = vunpack.c.l.s4 1966171168
      %v1228 = vunpack.c.0.s8 %v1227
      %v1229 = vlaneseq
      %v1230 = vshrl.u32 %v1229, 7
      %v1231 = vsub.s32 %v1228, %v1230
      %v1232 = vrot.slane %v1210, %v1231
      %v1234 = vunpack.c.l.s4 1966171168
      %v1235 = vunpack.c.0.s8 %v1234
      %v1236 = vlaneseq
      %v1237 = vshrl.u32 %v1236, 7
      %v1238 = vsub.s32 %v1235, %v1237
      %v1239 = vrot.slane %v1211, %v1238
      %v1240 = vcombine.high %v1218, %v1218
      %v1241 = vcombine.high %v1225, %v1225
      %v1242 = vcombine.high %v1232, %v1232
      %v1243 = vcombine.high %v1239, %v1239
      %v1244 = vcombine.high %v276, %v276
      %v1246 = vunpack.c.l.s4 1966171168
      %v1247 = vunpack.c.0.s8 %v1246
      %v1248 = vlaneseq
      %v1249 = vshrl.u32 %v1248, 7
      %v1250 = vsub.s32 %v1247, %v1249
      %v1251 = vrot.slane %v276, %v1250
      %v1253 = vunpack.c.l.s4 1966171168
      %v1254 = vunpack.c.0.s8 %v1253
      %v1255 = vlaneseq
      %v1256 = vshrl.u32 %v1255, 7
      %v1257 = vsub.s32 %v1254, %v1256
      %v1258 = vrot.slane %v1244, %v1257
      %v1259 = vcombine.high %v1251, %v1251
      %v1260 = vcombine.high %v1258, %v1258
      %v1262 = vunpack.c.l.s4 1966171168
      %v1263 = vunpack.c.0.s8 %v1262
      %v1264 = vlaneseq
      %v1265 = vshrl.u32 %v1264, 7
      %v1266 = vsub.s32 %v1263, %v1265
      %v1267 = vrot.slane %v1251, %v1266
      %v1269 = vunpack.c.l.s4 1966171168
      %v1270 = vunpack.c.0.s8 %v1269
      %v1271 = vlaneseq
      %v1272 = vshrl.u32 %v1271, 7
      %v1273 = vsub.s32 %v1270, %v1272
      %v1274 = vrot.slane %v1258, %v1273
      %v1276 = vunpack.c.l.s4 1966171168
      %v1277 = vunpack.c.0.s8 %v1276
      %v1278 = vlaneseq
      %v1279 = vshrl.u32 %v1278, 7
      %v1280 = vsub.s32 %v1277, %v1279
      %v1281 = vrot.slane %v1259, %v1280
      %v1283 = vunpack.c.l.s4 1966171168
      %v1284 = vunpack.c.0.s8 %v1283
      %v1285 = vlaneseq
      %v1286 = vshrl.u32 %v1285, 7
      %v1287 = vsub.s32 %v1284, %v1286
      %v1288 = vrot.slane %v1260, %v1287
      %v1289 = vcombine.high %v1267, %v1267
      %v1290 = vcombine.high %v1274, %v1274
      %v1291 = vcombine.high %v1281, %v1281
      %v1292 = vcombine.high %v1288, %v1288
      %v1294 = vunpack.c.l.s4 1966171168
      %v1295 = vunpack.c.0.s8 %v1294
      %v1296 = vlaneseq
      %v1297 = vshrl.u32 %v1296, 7
      %v1298 = vsub.s32 %v1295, %v1297
      %v1299 = vrot.slane %v277, %v1298
      %v1300 = vcombine.high %v1299, %v1299
      %v1302 = vunpack.c.l.s4 1966171168
      %v1303 = vunpack.c.0.s8 %v1302
      %v1304 = vlaneseq
      %v1305 = vshrl.u32 %v1304, 7
      %v1306 = vsub.s32 %v1303, %v1305
      %v1307 = vrot.slane %v1299, %v1306
      %v1309 = vunpack.c.l.s4 1966171168
      %v1310 = vunpack.c.0.s8 %v1309
      %v1311 = vlaneseq
      %v1312 = vshrl.u32 %v1311, 7
      %v1313 = vsub.s32 %v1310, %v1312
      %v1314 = vrot.slane %v1300, %v1313
      %v1315 = vcombine.high %v1307, %v1307
      %v2207 = vunpack.c.l.b16 %v278
      %v2208 = vunpack.c.h.b16 %v278
      %v2209 = vunpack.c.l.b16 %v279
      %v2210 = vunpack.c.h.b16 %v279
      %v2211 = vunpack.c.l.b16 %v280
      %v2212 = vunpack.c.h.b16 %v280
      %v2213 = vunpack.c.l.b16 %v281
      %v2214 = vunpack.c.h.b16 %v281
      %v2215 = vunpack.c.l.b16 %v282
      %v2216 = vunpack.c.h.b16 %v282
      %v2217 = vunpack.c.l.b16 %v283
      %v2218 = vunpack.c.h.b16 %v283
      %v2219 = vunpack.c.l.b16 %v284
      %v2220 = vunpack.c.h.b16 %v284
      %v2221 = vunpack.c.l.b16 %v285
      %v2222 = vunpack.c.h.b16 %v285
      %v2223 = vunpack.c.l.b16 %v286
      %v2224 = vunpack.c.h.b16 %v286
      %v2225 = vunpack.c.l.b16 %v287
      %v2226 = vunpack.c.h.b16 %v287
      %v2227 = vunpack.c.l.b16 %v288
      %v2228 = vunpack.c.h.b16 %v288
      %v2229 = vunpack.c.l.b16 %v289
      %v2230 = vunpack.c.h.b16 %v289
      %v2231 = vunpack.c.l.b16 %v290
      %v2232 = vunpack.c.h.b16 %v290
      %v2233 = vunpack.c.l.b16 %v291
      %v2234 = vunpack.c.h.b16 %v291
      %v2235 = vunpack.c.l.b16 %v292
      %v2236 = vunpack.c.h.b16 %v292
      %v2237 = vunpack.c.l.b16 %v293
      %v2238 = vunpack.c.h.b16 %v293
      %v2239 = vunpack.c.l.b16 %v294
      %v2240 = vunpack.c.h.b16 %v294
      %v2241 = vunpack.c.l.b16 %v295
      %v2242 = vunpack.c.h.b16 %v295
      %v2243 = vunpack.c.l.b16 %v296
      %v2244 = vunpack.c.h.b16 %v296
      %v2245 = vunpack.c.l.b16 %v297
      %v2246 = vunpack.c.h.b16 %v297
      %v2247 = vunpack.c.l.b16 %v298
      %v2248 = vunpack.c.h.b16 %v298
      %v2249 = vunpack.c.l.b16 %v299
      %v2250 = vunpack.c.h.b16 %v299
      %v2251 = vunpack.c.l.b16 %v300
      %v2252 = vunpack.c.h.b16 %v300
      %v2253 = vunpack.c.l.b16 %v301
      %v2254 = vunpack.c.h.b16 %v301
      %v2255 = vunpack.c.l.b16 %v302
      %v2256 = vunpack.c.h.b16 %v302
      %v2257 = vunpack.c.l.b16 %v303
      %v2258 = vunpack.c.h.b16 %v303
      %v2259 = vunpack.c.l.b16 %v304
      %v2260 = vunpack.c.h.b16 %v304
      %v2261 = vunpack.c.l.b16 %v305
      %v2262 = vunpack.c.h.b16 %v305
      %v2263 = vunpack.c.l.b16 %v306
      %v2264 = vunpack.c.h.b16 %v306
      %v2265 = vunpack.c.l.b16 %v307
      %v2266 = vunpack.c.h.b16 %v307
      %v2267 = vunpack.c.l.b16 %v308
      %v2268 = vunpack.c.h.b16 %v308
      %v2269 = vunpack.c.l.b16 %v309
      %v2270 = vunpack.c.h.b16 %v309
      %v2271 = vunpack.c.l.b16 %v310
      %v2272 = vunpack.c.h.b16 %v310
      %v2273 = vunpack.c.l.b16 %v311
      %v2274 = vunpack.c.h.b16 %v311
      %v2275 = vunpack.c.l.b16 %v312
      %v2276 = vunpack.c.h.b16 %v312
      %v2277 = vunpack.c.l.b16 %v313
      %v2278 = vunpack.c.h.b16 %v313
      %v2279 = vunpack.c.l.b16 %v314
      %v2280 = vunpack.c.h.b16 %v314
      %v2281 = vunpack.c.l.b16 %v315
      %v2282 = vunpack.c.h.b16 %v315
      %v2283 = vunpack.c.l.b16 %v316
      %v2284 = vunpack.c.h.b16 %v316
      %v2285 = vunpack.c.l.b16 %v317
      %v2286 = vunpack.c.h.b16 %v317
      %v2287 = vunpack.c.l.b16 %v318
      %v2288 = vunpack.c.h.b16 %v318
      %v2289 = vunpack.c.l.b16 %v319
      %v2290 = vunpack.c.h.b16 %v319
      %v2291 = vunpack.c.l.b16 %v320
      %v2292 = vunpack.c.h.b16 %v320
      %v2293 = vunpack.c.l.b16 %v321
      %v2294 = vunpack.c.h.b16 %v321
      %v2295 = vunpack.c.l.b16 %v322
      %v2296 = vunpack.c.h.b16 %v322
      %v2297 = vunpack.c.l.b16 %v323
      %v2298 = vunpack.c.h.b16 %v323
      %v2299 = vunpack.c.l.b16 %v324
      %v2300 = vunpack.c.h.b16 %v324
      %v2301 = vunpack.c.l.b16 %v325
      %v2302 = vunpack.c.h.b16 %v325
      %v2303 = vunpack.c.l.b16 %v326
      %v2304 = vunpack.c.h.b16 %v326
      %v2305 = vunpack.c.l.b16 %v327
      %v2306 = vunpack.c.h.b16 %v327
      %v2307 = vunpack.c.l.b16 %v328
      %v2308 = vunpack.c.h.b16 %v328
      %v2309 = vunpack.c.l.b16 %v329
      %v2310 = vunpack.c.h.b16 %v329
      %v2311 = vunpack.c.l.b16 %v330
      %v2312 = vunpack.c.h.b16 %v330
      %v2313 = vunpack.c.l.b16 %v331
      %v2314 = vunpack.c.h.b16 %v331
      %v2315 = vunpack.c.l.b16 %v332
      %v2316 = vunpack.c.h.b16 %v332
      %v2317 = vunpack.c.l.b16 %v333
      %v2318 = vunpack.c.h.b16 %v333
      %v2319 = vunpack.c.l.b16 %v334
      %v2320 = vunpack.c.h.b16 %v334
      %v2321 = vunpack.c.l.b16 %v335
      %v2322 = vunpack.c.h.b16 %v335
      %v2323 = vunpack.c.l.b16 %v336
      %v2324 = vunpack.c.h.b16 %v336
      %v2325 = vunpack.c.l.b16 %v337
      %v2326 = vunpack.c.h.b16 %v337
      %v2327 = vunpack.c.l.b16 %v338
      %v2328 = vunpack.c.h.b16 %v338
      %v2329 = vunpack.c.l.b16 %v339
      %v2330 = vunpack.c.h.b16 %v339
      %v2331 = vunpack.c.l.b16 %v340
      %v2332 = vunpack.c.h.b16 %v340
      %v2333 = vunpack.c.l.b16 %v341
      %v2334 = vunpack.c.h.b16 %v341
      %v2335 = vunpack.c.l.b16 %v342
      %v2336 = vunpack.c.h.b16 %v342
      %v2337 = vunpack.c.l.b16 %v343
      %v2338 = vunpack.c.h.b16 %v343
      %v2339 = vunpack.c.l.b16 %v344
      %v2340 = vunpack.c.h.b16 %v344
      %v2341 = vunpack.c.l.b16 %v345
      %v2342 = vunpack.c.h.b16 %v345
      %v2343 = vunpack.c.l.b16 %v346
      %v2344 = vunpack.c.h.b16 %v346
      %v2345 = vunpack.c.l.b16 %v347
      %v2346 = vunpack.c.h.b16 %v347
      %v2347 = vunpack.c.l.b16 %v348
      %v2348 = vunpack.c.h.b16 %v348
      %v2349 = vunpack.c.l.b16 %v349
      %v2350 = vunpack.c.h.b16 %v349
      %v2351 = vunpack.c.l.b16 %v350
      %v2352 = vunpack.c.h.b16 %v350
      %v2353 = vunpack.c.l.b16 %v351
      %v2354 = vunpack.c.h.b16 %v351
      %v2355 = vunpack.c.l.b16 %v352
      %v2356 = vunpack.c.h.b16 %v352
      %v2357 = vunpack.c.l.b16 %v353
      %v2358 = vunpack.c.h.b16 %v353
      %v2359 = vunpack.c.l.b16 %v354
      %v2360 = vunpack.c.h.b16 %v354
      %v2361 = vunpack.c.l.b16 %v355
      %v2362 = vunpack.c.h.b16 %v355
      %v2363 = vunpack.c.l.b16 %v356
      %v2364 = vunpack.c.h.b16 %v356
      %v2365 = vunpack.c.l.b16 %v357
      %v2366 = vunpack.c.h.b16 %v357
      %v2367 = vunpack.c.l.b16 %v358
      %v2368 = vunpack.c.h.b16 %v358
      %v2369 = vunpack.c.l.b16 %v359
      %v2370 = vunpack.c.h.b16 %v359
      %v2371 = vunpack.c.l.b16 %v360
      %v2372 = vunpack.c.h.b16 %v360
      %v2373 = vunpack.c.l.b16 %v361
      %v2374 = vunpack.c.h.b16 %v361
      %v2375 = vunpack.c.l.b16 %v362
      %v2376 = vunpack.c.h.b16 %v362
      %v2377 = vunpack.c.l.b16 %v363
      %v2378 = vunpack.c.h.b16 %v363
      %v2379 = vunpack.c.l.b16 %v364
      %v2380 = vunpack.c.h.b16 %v364
      %v2381 = vunpack.c.l.b16 %v365
      %v2382 = vunpack.c.h.b16 %v365
      %v2383 = vunpack.c.l.b16 %v366
      %v2384 = vunpack.c.h.b16 %v366
      %v2385 = vunpack.c.l.b16 %v367
      %v2386 = vunpack.c.h.b16 %v367
      %v2387 = vunpack.c.l.b16 %v368
      %v2388 = vunpack.c.h.b16 %v368
      %v2389 = vunpack.c.l.b16 %v369
      %v2390 = vunpack.c.h.b16 %v369
      %v2391 = vunpack.c.l.b16 %v370
      %v2392 = vunpack.c.h.b16 %v370
      %v2393 = vunpack.c.l.b16 %v371
      %v2394 = vunpack.c.h.b16 %v371
      %v2395 = vunpack.c.l.b16 %v372
      %v2396 = vunpack.c.h.b16 %v372
      %v2397 = vunpack.c.l.b16 %v373
      %v2398 = vunpack.c.h.b16 %v373
      %v2399 = vunpack.c.l.b16 %v374
      %v2400 = vunpack.c.h.b16 %v374
      %v2401 = vunpack.c.l.b16 %v375
      %v2402 = vunpack.c.h.b16 %v375
      %v2403 = vunpack.c.l.b16 %v376
      %v2404 = vunpack.c.h.b16 %v376
      %v2405 = vunpack.c.l.b16 %v377
      %v2406 = vunpack.c.h.b16 %v377
      %v2407 = vunpack.c.l.b16 %v378
      %v2408 = vunpack.c.h.b16 %v378
      %v2409 = vunpack.c.l.b16 %v379
      %v2410 = vunpack.c.h.b16 %v379
      %v2411 = vunpack.c.l.b16 %v380
      %v2412 = vunpack.c.h.b16 %v380
      %v2413 = vunpack.c.l.b16 %v381
      %v2414 = vunpack.c.h.b16 %v381
      %v2415 = vunpack.c.l.b16 %v382
      %v2416 = vunpack.c.h.b16 %v382
      %v2417 = vunpack.c.l.b16 %v383
      %v2418 = vunpack.c.h.b16 %v383
      %v2419 = vunpack.c.l.b16 %v384
      %v2420 = vunpack.c.h.b16 %v384
      %v2421 = vunpack.c.l.b16 %v385
      %v2422 = vunpack.c.h.b16 %v385
      %v2423 = vunpack.c.l.b16 %v386
      %v2424 = vunpack.c.h.b16 %v386
      %v2425 = vunpack.c.l.b16 %v387
      %v2426 = vunpack.c.h.b16 %v387
      %v2427 = vunpack.c.l.b16 %v388
      %v2428 = vunpack.c.h.b16 %v388
      %v2429 = vunpack.c.l.b16 %v389
      %v2430 = vunpack.c.h.b16 %v389
      %v2431 = vunpack.c.l.b16 %v390
      %v2432 = vunpack.c.h.b16 %v390
      %v2433 = vunpack.c.l.b16 %v391
      %v2434 = vunpack.c.h.b16 %v391
      %v2435 = vunpack.c.l.b16 %v392
      %v2436 = vunpack.c.h.b16 %v392
      %v2437 = vunpack.c.l.b16 %v393
      %v2438 = vunpack.c.h.b16 %v393
      %v2439 = vunpack.c.l.b16 %v394
      %v2440 = vunpack.c.h.b16 %v394
      %v2441 = vunpack.c.l.b16 %v395
      %v2442 = vunpack.c.h.b16 %v395
      %v2443 = vunpack.c.l.b16 %v396
      %v2444 = vunpack.c.h.b16 %v396
      %v2445 = vunpack.c.l.b16 %v397
      %v2446 = vunpack.c.h.b16 %v397
      %v2447 = vunpack.c.l.b16 %v398
      %v2448 = vunpack.c.h.b16 %v398
      %v2449 = vunpack.c.l.b16 %v399
      %v2450 = vunpack.c.h.b16 %v399
      %v2451 = vunpack.c.l.b16 %v400
      %v2452 = vunpack.c.h.b16 %v400
      %v2453 = vunpack.c.l.b16 %v401
      %v2454 = vunpack.c.h.b16 %v401
      %v2455 = vunpack.c.l.b16 %v402
      %v2456 = vunpack.c.h.b16 %v402
      %v2457 = vunpack.c.l.b16 %v403
      %v2458 = vunpack.c.h.b16 %v403
      %v2459 = vunpack.c.l.b16 %v404
      %v2460 = vunpack.c.h.b16 %v404
      %v2461 = vunpack.c.l.b16 %v405
      %v2462 = vunpack.c.h.b16 %v405
      %v2463 = vunpack.c.l.b16 %v406
      %v2464 = vunpack.c.h.b16 %v406
      %v2465 = vunpack.c.l.b16 %v407
      %v2466 = vunpack.c.h.b16 %v407
      %v2467 = vunpack.c.l.b16 %v408
      %v2468 = vunpack.c.h.b16 %v408
      %v2469 = vunpack.c.l.b16 %v409
      %v2470 = vunpack.c.h.b16 %v409
      %v2471 = vunpack.c.l.b16 %v410
      %v2472 = vunpack.c.h.b16 %v410
      %v2473 = vunpack.c.l.b16 %v411
      %v2474 = vunpack.c.h.b16 %v411
      %v2475 = vunpack.c.l.b16 %v412
      %v2476 = vunpack.c.h.b16 %v412
      %v2477 = vunpack.c.l.b16 %v413
      %v2478 = vunpack.c.h.b16 %v413
      %v2479 = vunpack.c.l.b16 %v414
      %v2480 = vunpack.c.h.b16 %v414
      %v2481 = vunpack.c.l.b16 %v415
      %v2482 = vunpack.c.h.b16 %v415
      %v2483 = vunpack.c.l.b16 %v416
      %v2484 = vunpack.c.h.b16 %v416
      %v2485 = vunpack.c.l.b16 %v417
      %v2486 = vunpack.c.h.b16 %v417
      %v2487 = vunpack.c.l.b16 %v418
      %v2488 = vunpack.c.h.b16 %v418
      %v2489 = vunpack.c.l.b16 %v419
      %v2490 = vunpack.c.h.b16 %v419
      %v2491 = vunpack.c.l.b16 %v420
      %v2492 = vunpack.c.h.b16 %v420
      %v2493 = vunpack.c.l.b16 %v421
      %v2494 = vunpack.c.h.b16 %v421
      %v2495 = vunpack.c.l.b16 %v422
      %v2496 = vunpack.c.h.b16 %v422
      %v2497 = vunpack.c.l.b16 %v423
      %v2498 = vunpack.c.h.b16 %v423
      %v2499 = vunpack.c.l.b16 %v424
      %v2500 = vunpack.c.h.b16 %v424
      %v2501 = vunpack.c.l.b16 %v425
      %v2502 = vunpack.c.h.b16 %v425
      %v2503 = vunpack.c.l.b16 %v426
      %v2504 = vunpack.c.h.b16 %v426
      %v2505 = vunpack.c.l.b16 %v427
      %v2506 = vunpack.c.h.b16 %v427
      %v2507 = vunpack.c.l.b16 %v428
      %v2508 = vunpack.c.h.b16 %v428
      %v2509 = vunpack.c.l.b16 %v429
      %v2510 = vunpack.c.h.b16 %v429
      %v2511 = vunpack.c.l.b16 %v430
      %v2512 = vunpack.c.h.b16 %v430
      %v2513 = vunpack.c.l.b16 %v431
      %v2514 = vunpack.c.h.b16 %v431
      %v2515 = vunpack.c.l.b16 %v432
      %v2516 = vunpack.c.h.b16 %v432
      %v2517 = vunpack.c.l.b16 %v433
      %v2518 = vunpack.c.h.b16 %v433
      %v2519 = vunpack.c.l.b16 %v434
      %v2520 = vunpack.c.h.b16 %v434
      %v2521 = vunpack.c.l.b16 %v435
      %v2522 = vunpack.c.h.b16 %v435
      %v2523 = vunpack.c.l.b16 %v436
      %v2524 = vunpack.c.h.b16 %v436
      %v2525 = vunpack.c.l.b16 %v437
      %v2526 = vunpack.c.h.b16 %v437
      %v2527 = vunpack.c.l.b16 %v438
      %v2528 = vunpack.c.h.b16 %v438
      %v2529 = vunpack.c.l.b16 %v439
      %v2530 = vunpack.c.h.b16 %v439
      %v2531 = vunpack.c.l.b16 %v440
      %v2532 = vunpack.c.h.b16 %v440
      %v2533 = vunpack.c.l.b16 %v441
      %v2534 = vunpack.c.h.b16 %v441
      %v2535 = vunpack.c.l.b16 %v442
      %v2536 = vunpack.c.h.b16 %v442
      %v2537 = vunpack.c.l.b16 %v443
      %v2538 = vunpack.c.h.b16 %v443
      %v2539 = vunpack.c.l.b16 %v444
      %v2540 = vunpack.c.h.b16 %v444
      %v2541 = vunpack.c.l.b16 %v445
      %v2542 = vunpack.c.h.b16 %v445
      %v2543 = vunpack.c.l.b16 %v446
      %v2544 = vunpack.c.h.b16 %v446
      %v2545 = vunpack.c.l.b16 %v447
      %v2546 = vunpack.c.h.b16 %v447
      %v2547 = vunpack.c.l.b16 %v448
      %v2548 = vunpack.c.h.b16 %v448
      %v2549 = vunpack.c.l.b16 %v449
      %v2550 = vunpack.c.h.b16 %v449
      %v2551 = vunpack.c.l.b16 %v450
      %v2552 = vunpack.c.h.b16 %v450
      %v2553 = vunpack.c.l.b16 %v451
      %v2554 = vunpack.c.h.b16 %v451
      %v2555 = vunpack.c.l.b16 %v452
      %v2556 = vunpack.c.h.b16 %v452
      %v2557 = vunpack.c.l.b16 %v453
      %v2558 = vunpack.c.h.b16 %v453
      %v2559 = vunpack.c.l.b16 %v454
      %v2560 = vunpack.c.h.b16 %v454
      %v2561 = vunpack.c.l.b16 %v455
      %v2562 = vunpack.c.h.b16 %v455
      %v2563 = vunpack.c.l.b16 %v456
      %v2564 = vunpack.c.h.b16 %v456
      %v2565 = vunpack.c.l.b16 %v457
      %v2566 = vunpack.c.h.b16 %v457
      %v2567 = vunpack.c.l.b16 %v458
      %v2568 = vunpack.c.h.b16 %v458
      %v2569 = vunpack.c.l.b16 %v459
      %v2570 = vunpack.c.h.b16 %v459
      %v2571 = vunpack.c.l.b16 %v460
      %v2572 = vunpack.c.h.b16 %v460
      %v2573 = vunpack.c.l.b16 %v461
      %v2574 = vunpack.c.h.b16 %v461
      %v2575 = vunpack.c.l.b16 %v462
      %v2576 = vunpack.c.h.b16 %v462
      %v2577 = vunpack.c.l.b16 %v463
      %v2578 = vunpack.c.h.b16 %v463
      %v2579 = vunpack.c.l.b16 %v464
      %v2580 = vunpack.c.h.b16 %v464
      %v2581 = vunpack.c.l.b16 %v465
      %v2582 = vunpack.c.h.b16 %v465
      %v2583 = vunpack.c.l.b16 %v466
      %v2584 = vunpack.c.h.b16 %v466
      %v2585 = vunpack.c.l.b16 %v467
      %v2586 = vunpack.c.h.b16 %v467
      %v2587 = vunpack.c.l.b16 %v468
      %v2588 = vunpack.c.h.b16 %v468
      %v2589 = vunpack.c.l.b16 %v469
      %v2590 = vunpack.c.h.b16 %v469
      %v2591 = vunpack.c.l.b16 %v470
      %v2592 = vunpack.c.h.b16 %v470
      %v2593 = vunpack.c.l.b16 %v471
      %v2594 = vunpack.c.h.b16 %v471
      %v2595 = vunpack.c.l.b16 %v472
      %v2596 = vunpack.c.h.b16 %v472
      %v2597 = vunpack.c.l.b16 %v473
      %v2598 = vunpack.c.h.b16 %v473
      %v2599 = vunpack.c.l.b16 %v474
      %v2600 = vunpack.c.h.b16 %v474
      %v2601 = vunpack.c.l.b16 %v475
      %v2602 = vunpack.c.h.b16 %v475
      %v2603 = vunpack.c.l.b16 %v476
      %v2604 = vunpack.c.h.b16 %v476
      %v2605 = vunpack.c.l.b16 %v477
      %v2606 = vunpack.c.h.b16 %v477
      %v2607 = vunpack.c.l.b16 %v478
      %v2608 = vunpack.c.h.b16 %v478
      %v2609 = vunpack.c.l.b16 %v479
      %v2610 = vunpack.c.h.b16 %v479
      %v2611 = vunpack.c.l.b16 %v480
      %v2612 = vunpack.c.h.b16 %v480
      %v2613 = vunpack.c.l.b16 %v481
      %v2614 = vunpack.c.h.b16 %v481
      %v2615 = vunpack.c.l.b16 %v482
      %v2616 = vunpack.c.h.b16 %v482
      %v2617 = vunpack.c.l.b16 %v483
      %v2618 = vunpack.c.h.b16 %v483
      %v2619 = vunpack.c.l.b16 %v484
      %v2620 = vunpack.c.h.b16 %v484
      %v2621 = vunpack.c.l.b16 %v485
      %v2622 = vunpack.c.h.b16 %v485
      %v2623 = vunpack.c.l.b16 %v486
      %v2624 = vunpack.c.h.b16 %v486
      %v2625 = vunpack.c.l.b16 %v487
      %v2626 = vunpack.c.h.b16 %v487
      %v2627 = vunpack.c.l.b16 %v488
      %v2628 = vunpack.c.h.b16 %v488
      %v2629 = vunpack.c.l.b16 %v489
      %v2630 = vunpack.c.h.b16 %v489
      %v2631 = vunpack.c.l.b16 %v490
      %v2632 = vunpack.c.h.b16 %v490
      %v2633 = vunpack.c.l.b16 %v491
      %v2634 = vunpack.c.h.b16 %v491
      %v2635 = vunpack.c.l.b16 %v492
      %v2636 = vunpack.c.h.b16 %v492
      %v2637 = vunpack.c.l.b16 %v493
      %v2638 = vunpack.c.h.b16 %v493
      %v2639 = vunpack.c.l.b16 %v494
      %v2640 = vunpack.c.h.b16 %v494
      %v2641 = vunpack.c.l.b16 %v495
      %v2642 = vunpack.c.h.b16 %v495
      %v2643 = vunpack.c.l.b16 %v496
      %v2644 = vunpack.c.h.b16 %v496
      %v2645 = vunpack.c.l.b16 %v497
      %v2646 = vunpack.c.h.b16 %v497
      %v2647 = vunpack.c.l.b16 %v498
      %v2648 = vunpack.c.h.b16 %v498
      %v2649 = vunpack.c.l.b16 %v499
      %v2650 = vunpack.c.h.b16 %v499
      %v2651 = vunpack.c.l.b16 %v500
      %v2652 = vunpack.c.h.b16 %v500
      %v2653 = vunpack.c.l.b16 %v501
      %v2654 = vunpack.c.h.b16 %v501
      %v2655 = vunpack.c.l.b16 %v502
      %v2656 = vunpack.c.h.b16 %v502
      %v2657 = vunpack.c.l.b16 %v503
      %v2658 = vunpack.c.h.b16 %v503
      %v2659 = vunpack.c.l.b16 %v504
      %v2660 = vunpack.c.h.b16 %v504
      %v2661 = vunpack.c.l.b16 %v505
      %v2662 = vunpack.c.h.b16 %v505
      %v2663 = vunpack.c.l.b16 %v506
      %v2664 = vunpack.c.h.b16 %v506
      %v2665 = vunpack.c.l.b16 %v507
      %v2666 = vunpack.c.h.b16 %v507
      %v2667 = vunpack.c.l.b16 %v508
      %v2668 = vunpack.c.h.b16 %v508
      %v2669 = vunpack.c.l.b16 %v509
      %v2670 = vunpack.c.h.b16 %v509
      %v2671 = vunpack.c.l.b16 %v510
      %v2672 = vunpack.c.h.b16 %v510
      %v2673 = vunpack.c.l.b16 %v511
      %v2674 = vunpack.c.h.b16 %v511
      %v2675 = vunpack.c.l.b16 %v512
      %v2676 = vunpack.c.h.b16 %v512
      %v2677 = vunpack.c.l.b16 %v513
      %v2678 = vunpack.c.h.b16 %v513
      %v2679 = vunpack.c.l.b16 %v514
      %v2680 = vunpack.c.h.b16 %v514
      %v2681 = vunpack.c.l.b16 %v515
      %v2682 = vunpack.c.h.b16 %v515
      %v2683 = vunpack.c.l.b16 %v516
      %v2684 = vunpack.c.h.b16 %v516
      %v2685 = vunpack.c.l.b16 %v517
      %v2686 = vunpack.c.h.b16 %v517
      %v2687 = vunpack.c.l.b16 %v518
      %v2688 = vunpack.c.h.b16 %v518
      %v2689 = vunpack.c.l.b16 %v519
      %v2690 = vunpack.c.h.b16 %v519
      %v2691 = vunpack.c.l.b16 %v520
      %v2692 = vunpack.c.h.b16 %v520
      %v2693 = vunpack.c.l.b16 %v521
      %v2694 = vunpack.c.h.b16 %v521
      %v2695 = vunpack.c.l.b16 %v522
      %v2696 = vunpack.c.h.b16 %v522
      %v2697 = vunpack.c.l.b16 %v523
      %v2698 = vunpack.c.h.b16 %v523
      %v2699 = vunpack.c.l.b16 %v524
      %v2700 = vunpack.c.h.b16 %v524
      %v2701 = vunpack.c.l.b16 %v525
      %v2702 = vunpack.c.h.b16 %v525
      %v2703 = vunpack.c.l.b16 %v526
      %v2704 = vunpack.c.h.b16 %v526
      %v2705 = vunpack.c.l.b16 %v527
      %v2706 = vunpack.c.h.b16 %v527
      %v2707 = vunpack.c.l.b16 %v528
      %v2708 = vunpack.c.h.b16 %v528
      %v2709 = vunpack.c.l.b16 %v529
      %v2710 = vunpack.c.h.b16 %v529
      %v2711 = vunpack.c.l.b16 %v530
      %v2712 = vunpack.c.h.b16 %v530
      %v2713 = vunpack.c.l.b16 %v531
      %v2714 = vunpack.c.h.b16 %v531
      %v2715 = vunpack.c.l.b16 %v532
      %v2716 = vunpack.c.h.b16 %v532
      %v2717 = vunpack.c.l.b16 %v533
      %v2718 = vunpack.c.h.b16 %v533
      %v2719 = vunpack.c.l.b16 %v534
      %v2720 = vunpack.c.h.b16 %v534
      %v2721 = vunpack.c.l.b16 %v535
      %v2722 = vunpack.c.h.b16 %v535
      %v2723 = vunpack.c.l.b16 %v536
      %v2724 = vunpack.c.h.b16 %v536
      %v2725 = vunpack.c.l.b16 %v537
      %v2726 = vunpack.c.h.b16 %v537
      %v2727 = vunpack.c.l.b16 %v538
      %v2728 = vunpack.c.h.b16 %v538
      %v2729 = vunpack.c.l.b16 %v539
      %v2730 = vunpack.c.h.b16 %v539
      %v2731 = vunpack.c.l.b16 %v540
      %v2732 = vunpack.c.h.b16 %v540
      %v2733 = vunpack.c.l.b16 %v541
      %v2734 = vunpack.c.h.b16 %v541
      %v2735 = vunpack.c.l.b16 %v542
      %v2736 = vunpack.c.h.b16 %v542
      %v2737 = vunpack.c.l.b16 %v543
      %v2738 = vunpack.c.h.b16 %v543
      %v2739 = vunpack.c.l.b16 %v544
      %v2740 = vunpack.c.h.b16 %v544
      %v2741 = vunpack.c.l.b16 %v545
      %v2742 = vunpack.c.h.b16 %v545
      %v2743 = vunpack.c.l.b16 %v546
      %v2744 = vunpack.c.h.b16 %v546
      %v2745 = vunpack.c.l.b16 %v547
      %v2746 = vunpack.c.h.b16 %v547
      %v2747 = vunpack.c.l.b16 %v548
      %v2748 = vunpack.c.h.b16 %v548
      %v2749 = vunpack.c.l.b16 %v549
      %v2750 = vunpack.c.h.b16 %v549
      %v2751 = vunpack.c.l.b16 %v550
      %v2752 = vunpack.c.h.b16 %v550
      %v2753 = vunpack.c.l.b16 %v551
      %v2754 = vunpack.c.h.b16 %v551
      %v2755 = vunpack.c.l.b16 %v552
      %v2756 = vunpack.c.h.b16 %v552
      %v2757 = vunpack.c.l.b16 %v553
      %v2758 = vunpack.c.h.b16 %v553
      %v2759 = vunpack.c.l.b16 %v554
      %v2760 = vunpack.c.h.b16 %v554
      %v2761 = vunpack.c.l.b16 %v555
      %v2762 = vunpack.c.h.b16 %v555
      %v2763 = vunpack.c.l.b16 %v556
      %v2764 = vunpack.c.h.b16 %v556
      %v2765 = vunpack.c.l.b16 %v557
      %v2766 = vunpack.c.h.b16 %v557
      %v2767 = vunpack.c.l.b16 %v558
      %v2768 = vunpack.c.h.b16 %v558
      %v2769 = vunpack.c.l.b16 %v559
      %v2770 = vunpack.c.h.b16 %v559
      %v2771 = vunpack.c.l.b16 %v560
      %v2772 = vunpack.c.h.b16 %v560
      %v2773 = vunpack.c.l.b16 %v561
      %v2774 = vunpack.c.h.b16 %v561
      %v2775 = vunpack.c.l.b16 %v562
      %v2776 = vunpack.c.h.b16 %v562
      %v2777 = vunpack.c.l.b16 %v563
      %v2778 = vunpack.c.h.b16 %v563
      %v2779 = vunpack.c.l.b16 %v564
      %v2780 = vunpack.c.h.b16 %v564
      %v2781 = vunpack.c.l.b16 %v565
      %v2782 = vunpack.c.h.b16 %v565
      %v2783 = vunpack.c.l.b16 %v566
      %v2784 = vunpack.c.h.b16 %v566
      %v2785 = vunpack.c.l.b16 %v567
      %v2786 = vunpack.c.h.b16 %v567
      %v2787 = vunpack.c.l.b16 %v568
      %v2788 = vunpack.c.h.b16 %v568
      %v2789 = vunpack.c.l.b16 %v569
      %v2790 = vunpack.c.h.b16 %v569
      %v2791 = vunpack.c.l.b16 %v570
      %v2792 = vunpack.c.h.b16 %v570
      %v2793 = vunpack.c.l.b16 %v571
      %v2794 = vunpack.c.h.b16 %v571
      %v2795 = vunpack.c.l.b16 %v572
      %v2796 = vunpack.c.h.b16 %v572
      %v2797 = vunpack.c.l.b16 %v573
      %v2798 = vunpack.c.h.b16 %v573
      %v2799 = vunpack.c.l.b16 %v574
      %v2800 = vunpack.c.h.b16 %v574
      %v2801 = vunpack.c.l.b16 %v575
      %v2802 = vunpack.c.h.b16 %v575
      %v2803 = vunpack.c.l.b16 %v576
      %v2804 = vunpack.c.h.b16 %v576
      %v2805 = vunpack.c.l.b16 %v577
      %v2806 = vunpack.c.h.b16 %v577
      %v2807 = vunpack.c.l.b16 %v578
      %v2808 = vunpack.c.h.b16 %v578
      %v2809 = vunpack.c.l.b16 %v579
      %v2810 = vunpack.c.h.b16 %v579
      %v2811 = vunpack.c.l.b16 %v580
      %v2812 = vunpack.c.h.b16 %v580
      %v2813 = vunpack.c.l.b16 %v581
      %v2814 = vunpack.c.h.b16 %v581
      %v2815 = vunpack.c.l.b16 %v582
      %v2816 = vunpack.c.h.b16 %v582
      %v2817 = vunpack.c.l.b16 %v583
      %v2818 = vunpack.c.h.b16 %v583
      %v2819 = vunpack.c.l.b16 %v584
      %v2820 = vunpack.c.h.b16 %v584
      %v2821 = vunpack.c.l.b16 %v585
      %v2822 = vunpack.c.h.b16 %v585
      %v2823 = vunpack.c.l.b16 %v586
      %v2824 = vunpack.c.h.b16 %v586
      %v2825 = vunpack.c.l.b16 %v587
      %v2826 = vunpack.c.h.b16 %v587
      %v2827 = vunpack.c.l.b16 %v588
      %v2828 = vunpack.c.h.b16 %v588
      %v2829 = vunpack.c.l.b16 %v589
      %v2830 = vunpack.c.h.b16 %v589
      %v2831 = vunpack.c.l.b16 %v590
      %v2832 = vunpack.c.h.b16 %v590
      %v2833 = vunpack.c.l.b16 %v591
      %v2834 = vunpack.c.h.b16 %v591
      %v2835 = vunpack.c.l.b16 %v592
      %v2836 = vunpack.c.h.b16 %v592
      %v2837 = vunpack.c.l.b16 %v593
      %v2838 = vunpack.c.h.b16 %v593
      %v2839 = vunpack.c.l.b16 %v594
      %v2840 = vunpack.c.h.b16 %v594
      %v2841 = vunpack.c.l.b16 %v595
      %v2842 = vunpack.c.h.b16 %v595
      %v2843 = vunpack.c.l.b16 %v596
      %v2844 = vunpack.c.h.b16 %v596
      %v2845 = vunpack.c.l.b16 %v597
      %v2846 = vunpack.c.h.b16 %v597
      %v2847 = vunpack.c.l.b16 %v598
      %v2848 = vunpack.c.h.b16 %v598
      %v2849 = vunpack.c.l.b16 %v599
      %v2850 = vunpack.c.h.b16 %v599
      %v2851 = vunpack.c.l.b16 %v600
      %v2852 = vunpack.c.h.b16 %v600
      %v2853 = vunpack.c.l.b16 %v601
      %v2854 = vunpack.c.h.b16 %v601
      %v2855 = vunpack.c.l.b16 %v602
      %v2856 = vunpack.c.h.b16 %v602
      %v2857 = vunpack.c.l.b16 %v603
      %v2858 = vunpack.c.h.b16 %v603
      %v2859 = vunpack.c.l.b16 %v604
      %v2860 = vunpack.c.h.b16 %v604
      %v2861 = vunpack.c.l.b16 %v605
      %v2862 = vunpack.c.h.b16 %v605
      %v2863 = vunpack.c.l.b16 %v606
      %v2864 = vunpack.c.h.b16 %v606
      %v2865 = vunpack.c.l.b16 %v607
      %v2866 = vunpack.c.h.b16 %v607
      %v2867 = vunpack.c.l.b16 %v608
      %v2868 = vunpack.c.h.b16 %v608
      %v2869 = vunpack.c.l.b16 %v609
      %v2870 = vunpack.c.h.b16 %v609
      %v2871 = vunpack.c.l.b16 %v610
      %v2872 = vunpack.c.h.b16 %v610
      %v2873 = vunpack.c.l.b16 %v611
      %v2874 = vunpack.c.h.b16 %v611
      %v2875 = vunpack.c.l.b16 %v612
      %v2876 = vunpack.c.h.b16 %v612
      %v2877 = vunpack.c.l.b16 %v613
      %v2878 = vunpack.c.h.b16 %v613
      %v2879 = vunpack.c.l.b16 %v614
      %v2880 = vunpack.c.h.b16 %v614
      %v2881 = vunpack.c.l.b16 %v615
      %v2882 = vunpack.c.h.b16 %v615
      %v2883 = vunpack.c.l.b16 %v616
      %v2884 = vunpack.c.h.b16 %v616
      %v2885 = vunpack.c.l.b16 %v617
      %v2886 = vunpack.c.h.b16 %v617
      %v2887 = vunpack.c.l.b16 %v618
      %v2888 = vunpack.c.h.b16 %v618
      %v2889 = vunpack.c.l.b16 %v619
      %v2890 = vunpack.c.h.b16 %v619
      %v2891 = vunpack.c.l.b16 %v620
      %v2892 = vunpack.c.h.b16 %v620
      %v2893 = vunpack.c.l.b16 %v621
      %v2894 = vunpack.c.h.b16 %v621
      %v2895 = vunpack.c.l.b16 %v622
      %v2896 = vunpack.c.h.b16 %v622
      %v2897 = vunpack.c.l.b16 %v623
      %v2898 = vunpack.c.h.b16 %v623
      %v2899 = vunpack.c.l.b16 %v624
      %v2900 = vunpack.c.h.b16 %v624
      %v2901 = vunpack.c.l.b16 %v625
      %v2902 = vunpack.c.h.b16 %v625
      %v2903 = vunpack.c.l.b16 %v626
      %v2904 = vunpack.c.h.b16 %v626
      %v2905 = vunpack.c.l.b16 %v627
      %v2906 = vunpack.c.h.b16 %v627
      %v2907 = vunpack.c.l.b16 %v628
      %v2908 = vunpack.c.h.b16 %v628
      %v2909 = vunpack.c.l.b16 %v629
      %v2910 = vunpack.c.h.b16 %v629
      %v2911 = vunpack.c.l.b16 %v630
      %v2912 = vunpack.c.h.b16 %v630
      %v2913 = vunpack.c.l.b16 %v631
      %v2914 = vunpack.c.h.b16 %v631
      %v2915 = vunpack.c.l.b16 %v632
      %v2916 = vunpack.c.h.b16 %v632
      %v2917 = vunpack.c.l.b16 %v633
      %v2918 = vunpack.c.h.b16 %v633
      %v2919 = vunpack.c.l.b16 %v634
      %v2920 = vunpack.c.h.b16 %v634
      %v2921 = vunpack.c.l.b16 %v635
      %v2922 = vunpack.c.h.b16 %v635
      %v2923 = vunpack.c.l.b16 %v636
      %v2924 = vunpack.c.h.b16 %v636
      %v2925 = vunpack.c.l.b16 %v637
      %v2926 = vunpack.c.h.b16 %v637
      %v2927 = vunpack.c.l.b16 %v638
      %v2928 = vunpack.c.h.b16 %v638
      %v2929 = vunpack.c.l.b16 %v639
      %v2930 = vunpack.c.h.b16 %v639
      %v2931 = vunpack.c.l.b16 %v640
      %v2932 = vunpack.c.h.b16 %v640
      %v2933 = vunpack.c.l.b16 %v641
      %v2934 = vunpack.c.h.b16 %v641
      %v2935 = vunpack.c.l.b16 %v642
      %v2936 = vunpack.c.h.b16 %v642
      %v2937 = vunpack.c.l.b16 %v643
      %v2938 = vunpack.c.h.b16 %v643
      %v2939 = vunpack.c.l.b16 %v644
      %v2940 = vunpack.c.h.b16 %v644
      %v2941 = vunpack.c.l.b16 %v645
      %v2942 = vunpack.c.h.b16 %v645
      %v2943 = vunpack.c.l.b16 %v646
      %v2944 = vunpack.c.h.b16 %v646
      %v2945 = vunpack.c.l.b16 %v647
      %v2946 = vunpack.c.h.b16 %v647
      %v2947 = vunpack.c.l.b16 %v648
      %v2948 = vunpack.c.h.b16 %v648
      %v2949 = vunpack.c.l.b16 %v649
      %v2950 = vunpack.c.h.b16 %v649
      %v2951 = vunpack.c.l.b16 %v650
      %v2952 = vunpack.c.h.b16 %v650
      %v2953 = vunpack.c.l.b16 %v651
      %v2954 = vunpack.c.h.b16 %v651
      %v2955 = vunpack.c.l.b16 %v652
      %v2956 = vunpack.c.h.b16 %v652
      %v2957 = vunpack.c.l.b16 %v653
      %v2958 = vunpack.c.h.b16 %v653
      %v2959 = vunpack.c.l.b16 %v654
      %v2960 = vunpack.c.h.b16 %v654
      %v2961 = vunpack.c.l.b16 %v655
      %v2962 = vunpack.c.h.b16 %v655
      %v2963 = vunpack.c.l.b16 %v656
      %v2964 = vunpack.c.h.b16 %v656
      %v2965 = vunpack.c.l.b16 %v657
      %v2966 = vunpack.c.h.b16 %v657
      %v2967 = vunpack.c.l.b16 %v658
      %v2968 = vunpack.c.h.b16 %v658
      %v2969 = vunpack.c.l.b16 %v659
      %v2970 = vunpack.c.h.b16 %v659
      %v2971 = vunpack.c.l.b16 %v660
      %v2972 = vunpack.c.h.b16 %v660
      %v2973 = vunpack.c.l.b16 %v661
      %v2974 = vunpack.c.h.b16 %v661
      %v2975 = vunpack.c.l.b16 %v662
      %v2976 = vunpack.c.h.b16 %v662
      %v2977 = vunpack.c.l.b16 %v663
      %v2978 = vunpack.c.h.b16 %v663
      %v2979 = vunpack.c.l.b16 %v664
      %v2980 = vunpack.c.h.b16 %v664
      %v2981 = vunpack.c.l.b16 %v665
      %v2982 = vunpack.c.h.b16 %v665
      %v2983 = vunpack.c.l.b16 %v666
      %v2984 = vunpack.c.h.b16 %v666
      %v2985 = vunpack.c.l.b16 %v667
      %v2986 = vunpack.c.h.b16 %v667
      %v2987 = vunpack.c.l.b16 %v668
      %v2988 = vunpack.c.h.b16 %v668
      %v2989 = vunpack.c.l.b16 %v669
      %v2990 = vunpack.c.h.b16 %v669
      %v2991 = vunpack.c.l.b16 %v670
      %v2992 = vunpack.c.h.b16 %v670
      %v2993 = vunpack.c.l.b16 %v671
      %v2994 = vunpack.c.h.b16 %v671
      %v2995 = vunpack.c.l.b16 %v672
      %v2996 = vunpack.c.h.b16 %v672
      %v2997 = vunpack.c.l.b16 %v673
      %v2998 = vunpack.c.h.b16 %v673
      %v2999 = vunpack.c.l.b16 %v674
      %v3000 = vunpack.c.h.b16 %v674
      %v3001 = vunpack.c.l.b16 %v675
      %v3002 = vunpack.c.h.b16 %v675
      %v3003 = vunpack.c.l.b16 %v676
      %v3004 = vunpack.c.h.b16 %v676
      %v3005 = vunpack.c.l.b16 %v677
      %v3006 = vunpack.c.h.b16 %v677
      %v3007 = vunpack.c.l.b16 %v678
      %v3008 = vunpack.c.h.b16 %v678
      %v3009 = vunpack.c.l.b16 %v679
      %v3010 = vunpack.c.h.b16 %v679
      %v3011 = vunpack.c.l.b16 %v680
      %v3012 = vunpack.c.h.b16 %v680
      %v3013 = vunpack.c.l.b16 %v681
      %v3014 = vunpack.c.h.b16 %v681
      %v3015 = vunpack.c.l.b16 %v682
      %v3016 = vunpack.c.h.b16 %v682
      %v3017 = vunpack.c.l.b16 %v683
      %v3018 = vunpack.c.h.b16 %v683
      %v3019 = vunpack.c.l.b16 %v684
      %v3020 = vunpack.c.h.b16 %v684
      %v3021 = vunpack.c.l.b16 %v685
      %v3022 = vunpack.c.h.b16 %v685
      %v3023 = vunpack.c.l.b16 %v686
      %v3024 = vunpack.c.h.b16 %v686
      %v3025 = vunpack.c.l.b16 %v687
      %v3026 = vunpack.c.h.b16 %v687
      %v3027 = vunpack.c.l.b16 %v688
      %v3028 = vunpack.c.h.b16 %v688
      %v3029 = vunpack.c.l.b16 %v689
      %v3030 = vunpack.c.h.b16 %v689
      %v3031 = vunpack.c.l.b16 %v690
      %v3032 = vunpack.c.h.b16 %v690
      %v3033 = vunpack.c.l.b16 %v691
      %v3034 = vunpack.c.h.b16 %v691
      %v3035 = vunpack.c.l.b16 %v692
      %v3036 = vunpack.c.h.b16 %v692
      %v3037 = vunpack.c.l.b16 %v693
      %v3038 = vunpack.c.h.b16 %v693
      %v3039 = vunpack.c.l.b16 %v694
      %v3040 = vunpack.c.h.b16 %v694
      %v3041 = vunpack.c.l.b16 %v695
      %v3042 = vunpack.c.h.b16 %v695
      %v3043 = vunpack.c.l.b16 %v696
      %v3044 = vunpack.c.h.b16 %v696
      %v3045 = vunpack.c.l.b16 %v697
      %v3046 = vunpack.c.h.b16 %v697
      %v3047 = vunpack.c.l.b16 %v698
      %v3048 = vunpack.c.h.b16 %v698
      %v3049 = vunpack.c.l.b16 %v699
      %v3050 = vunpack.c.h.b16 %v699
      %v3051 = vunpack.c.l.b16 %v700
      %v3052 = vunpack.c.h.b16 %v700
      %v3053 = vunpack.c.l.b16 %v701
      %v3054 = vunpack.c.h.b16 %v701
      %v3055 = vunpack.c.l.b16 %v702
      %v3056 = vunpack.c.h.b16 %v702
      %v3057 = vunpack.c.l.b16 %v703
      %v3058 = vunpack.c.h.b16 %v703
      %v3059 = vunpack.c.l.b16 %v704
      %v3060 = vunpack.c.h.b16 %v704
      %v3061 = vunpack.c.l.b16 %v705
      %v3062 = vunpack.c.h.b16 %v705
      %v3063 = vunpack.c.l.b16 %v706
      %v3064 = vunpack.c.h.b16 %v706
      %v3065 = vunpack.c.l.b16 %v707
      %v3066 = vunpack.c.h.b16 %v707
      %v3067 = vunpack.c.l.b16 %v708
      %v3068 = vunpack.c.h.b16 %v708
      %v3069 = vunpack.c.l.b16 %v709
      %v3070 = vunpack.c.h.b16 %v709
      %v3071 = vunpack.c.l.b16 %v710
      %v3072 = vunpack.c.h.b16 %v710
      %v3073 = vunpack.c.l.b16 %v711
      %v3074 = vunpack.c.h.b16 %v711
      %v3075 = vunpack.c.l.b16 %v712
      %v3076 = vunpack.c.h.b16 %v712
      %v3077 = vunpack.c.l.b16 %v713
      %v3078 = vunpack.c.h.b16 %v713
      %v3079 = vunpack.c.l.b16 %v714
      %v3080 = vunpack.c.h.b16 %v714
      %v3081 = vunpack.c.l.b16 %v715
      %v3082 = vunpack.c.h.b16 %v715
      %v3083 = vunpack.c.l.b16 %v716
      %v3084 = vunpack.c.h.b16 %v716
      %v3085 = vunpack.c.l.b16 %v717
      %v3086 = vunpack.c.h.b16 %v717
      %v3087 = vunpack.c.l.b16 %v718
      %v3088 = vunpack.c.h.b16 %v718
      %v3089 = vunpack.c.l.b16 %v719
      %v3090 = vunpack.c.h.b16 %v719
      %v3091 = vunpack.c.l.b16 %v720
      %v3092 = vunpack.c.h.b16 %v720
      %v3093 = vunpack.c.l.b16 %v721
      %v3094 = vunpack.c.h.b16 %v721
      %v3095 = vunpack.c.l.b16 %v722
      %v3096 = vunpack.c.h.b16 %v722
      %v3097 = vunpack.c.l.b16 %v723
      %v3098 = vunpack.c.h.b16 %v723
      %v3099 = vunpack.c.l.b16 %v724
      %v3100 = vunpack.c.h.b16 %v724
      %v3101 = vunpack.c.l.b16 %v725
      %v3102 = vunpack.c.h.b16 %v725
      %v3103 = vunpack.c.l.b16 %v726
      %v3104 = vunpack.c.h.b16 %v726
      %v3105 = vunpack.c.l.b16 %v727
      %v3106 = vunpack.c.h.b16 %v727
      %v3107 = vunpack.c.l.b16 %v728
      %v3108 = vunpack.c.h.b16 %v728
      %v3109 = vunpack.c.l.b16 %v729
      %v3110 = vunpack.c.h.b16 %v729
      %v3111 = vunpack.c.l.b16 %v730
      %v3112 = vunpack.c.h.b16 %v730
      %v3113 = vunpack.c.l.b16 %v731
      %v3114 = vunpack.c.h.b16 %v731
      %v3115 = vunpack.c.l.b16 %v732
      %v3116 = vunpack.c.h.b16 %v732
      %v3117 = vunpack.c.l.b16 %v733
      %v3118 = vunpack.c.h.b16 %v733
      %v3119 = vunpack.c.l.b16 %v734
      %v3120 = vunpack.c.h.b16 %v734
      %v3121 = vunpack.c.l.b16 %v735
      %v3122 = vunpack.c.h.b16 %v735
      %v3123 = vunpack.c.l.b16 %v736
      %v3124 = vunpack.c.h.b16 %v736
      %v3125 = vunpack.c.l.b16 %v737
      %v3126 = vunpack.c.h.b16 %v737
      %v3127 = vunpack.c.l.b16 %v738
      %v3128 = vunpack.c.h.b16 %v738
      %v3129 = vunpack.c.l.b16 %v739
      %v3130 = vunpack.c.h.b16 %v739
      %v3131 = vunpack.c.l.b16 %v740
      %v3132 = vunpack.c.h.b16 %v740
      %v3133 = vunpack.c.l.b16 %v741
      %v3134 = vunpack.c.h.b16 %v741
      %v3135 = vunpack.c.l.b16 %v742
      %v3136 = vunpack.c.h.b16 %v742
      %v3137 = vunpack.c.l.b16 %v743
      %v3138 = vunpack.c.h.b16 %v743
      %v3139 = vunpack.c.l.b16 %v744
      %v3140 = vunpack.c.h.b16 %v744
      %v3141 = vunpack.c.l.b16 %v745
      %v3142 = vunpack.c.h.b16 %v745
      %v3143 = vunpack.c.l.b16 %v746
      %v3144 = vunpack.c.h.b16 %v746
      %v3145 = vunpack.c.l.b16 %v747
      %v3146 = vunpack.c.h.b16 %v747
      %v3147 = vunpack.c.l.b16 %v748
      %v3148 = vunpack.c.h.b16 %v748
      %v3149 = vunpack.c.l.b16 %v749
      %v3150 = vunpack.c.h.b16 %v749
      %v3151 = vunpack.c.l.b16 %v750
      %v3152 = vunpack.c.h.b16 %v750
      %v3153 = vunpack.c.l.b16 %v751
      %v3154 = vunpack.c.h.b16 %v751
      %v3155 = vunpack.c.l.b16 %v752
      %v3156 = vunpack.c.h.b16 %v752
      %v3157 = vunpack.c.l.b16 %v753
      %v3158 = vunpack.c.h.b16 %v753
      %v3159 = vunpack.c.l.b16 %v754
      %v3160 = vunpack.c.h.b16 %v754
      %v3161 = vunpack.c.l.b16 %v755
      %v3162 = vunpack.c.h.b16 %v755
      %v3163 = vunpack.c.l.b16 %v756
      %v3164 = vunpack.c.h.b16 %v756
      %v3165 = vunpack.c.l.b16 %v757
      %v3166 = vunpack.c.h.b16 %v757
      %v3167 = vunpack.c.l.b16 %v758
      %v3168 = vunpack.c.h.b16 %v758
      %v3169 = vunpack.c.l.b16 %v759
      %v3170 = vunpack.c.h.b16 %v759
      %v3171 = vunpack.c.l.b16 %v760
      %v3172 = vunpack.c.h.b16 %v760
      %v3173 = vunpack.c.l.b16 %v761
      %v3174 = vunpack.c.h.b16 %v761
      %v3175 = vunpack.c.l.b16 %v762
      %v3176 = vunpack.c.h.b16 %v762
      %v3177 = vunpack.c.l.b16 %v763
      %v3178 = vunpack.c.h.b16 %v763
      %v3179 = vunpack.c.l.b16 %v764
      %v3180 = vunpack.c.h.b16 %v764
      %v3181 = vunpack.c.l.b16 %v765
      %v3182 = vunpack.c.h.b16 %v765
      %v3183 = vunpack.c.l.b16 %v766
      %v3184 = vunpack.c.h.b16 %v766
      %v3185 = vunpack.c.l.b16 %v767
      %v3186 = vunpack.c.h.b16 %v767
      %v3187 = vunpack.c.l.b16 %v768
      %v3188 = vunpack.c.h.b16 %v768
      %v3189 = vunpack.c.l.b16 %v769
      %v3190 = vunpack.c.h.b16 %v769
      %v3191 = vunpack.c.l.b16 %v770
      %v3192 = vunpack.c.h.b16 %v770
      %v3193 = vunpack.c.l.b16 %v771
      %v3194 = vunpack.c.h.b16 %v771
      %v3195 = vunpack.c.l.b16 %v772
      %v3196 = vunpack.c.h.b16 %v772
      %v3197 = vunpack.c.l.b16 %v773
      %v3198 = vunpack.c.h.b16 %v773
      %v3199 = vunpack.c.l.b16 %v774
      %v3200 = vunpack.c.h.b16 %v774
      %v3201 = vunpack.c.l.b16 %v775
      %v3202 = vunpack.c.h.b16 %v775
      %v3203 = vunpack.c.l.b16 %v776
      %v3204 = vunpack.c.h.b16 %v776
      %v3205 = vunpack.c.l.b16 %v777
      %v3206 = vunpack.c.h.b16 %v777
      %v3207 = vunpack.c.l.b16 %v778
      %v3208 = vunpack.c.h.b16 %v778
      %v3209 = vunpack.c.l.b16 %v779
      %v3210 = vunpack.c.h.b16 %v779
      %v3211 = vunpack.c.l.b16 %v780
      %v3212 = vunpack.c.h.b16 %v780
      %v3213 = vunpack.c.l.b16 %v781
      %v3214 = vunpack.c.h.b16 %v781
      %v3215 = vunpack.c.l.b16 %v782
      %v3216 = vunpack.c.h.b16 %v782
      %v3217 = vunpack.c.l.b16 %v783
      %v3218 = vunpack.c.h.b16 %v783
      %v3219 = vunpack.c.l.b16 %v784
      %v3220 = vunpack.c.h.b16 %v784
      %v3221 = vunpack.c.l.b16 %v785
      %v3222 = vunpack.c.h.b16 %v785
      %v3223 = vunpack.c.l.b16 %v786
      %v3224 = vunpack.c.h.b16 %v786
      %v3225 = vunpack.c.l.b16 %v787
      %v3226 = vunpack.c.h.b16 %v787
      %v3227 = vunpack.c.l.b16 %v788
      %v3228 = vunpack.c.h.b16 %v788
      %v3229 = vunpack.c.l.b16 %v789
      %v3230 = vunpack.c.h.b16 %v789
      %v3231 = vunpack.c.l.b16 %v790
      %v3232 = vunpack.c.h.b16 %v790
      %v3233 = vunpack.c.l.b16 %v791
      %v3234 = vunpack.c.h.b16 %v791
      %v3235 = vunpack.c.l.b16 %v792
      %v3236 = vunpack.c.h.b16 %v792
      %v3237 = vunpack.c.l.b16 %v793
      %v3238 = vunpack.c.h.b16 %v793
      %v3239 = vunpack.c.l.b16 %v794
      %v3240 = vunpack.c.h.b16 %v794
      %v3241 = vunpack.c.l.b16 %v795
      %v3242 = vunpack.c.h.b16 %v795
      %v3243 = vunpack.c.l.b16 %v796
      %v3244 = vunpack.c.h.b16 %v796
      %v3245 = vunpack.c.l.b16 %v797
      %v3246 = vunpack.c.h.b16 %v797
      %v3247 = vunpack.c.l.b16 %v798
      %v3248 = vunpack.c.h.b16 %v798
      %v3249 = vunpack.c.l.b16 %v799
      %v3250 = vunpack.c.h.b16 %v799
      %v3251 = vunpack.c.l.b16 %v800
      %v3252 = vunpack.c.h.b16 %v800
      %v3253 = vunpack.c.l.b16 %v801
      %v3254 = vunpack.c.h.b16 %v801
      %v3255 = vunpack.c.l.b16 %v802
      %v3256 = vunpack.c.h.b16 %v802
      %v3257 = vunpack.c.l.b16 %v803
      %v3258 = vunpack.c.h.b16 %v803
      %v3259 = vunpack.c.l.b16 %v804
      %v3260 = vunpack.c.h.b16 %v804
      %v3261 = vunpack.c.l.b16 %v805
      %v3262 = vunpack.c.h.b16 %v805
      %v3263 = vunpack.c.l.b16 %v806
      %v3264 = vunpack.c.h.b16 %v806
      %v3265 = vunpack.c.l.b16 %v807
      %v3266 = vunpack.c.h.b16 %v807
      %v3267 = vunpack.c.l.b16 %v808
      %v3268 = vunpack.c.h.b16 %v808
      %v3269 = vunpack.c.l.b16 %v809
      %v3270 = vunpack.c.h.b16 %v809
      %v3271 = vunpack.c.l.b16 %v810
      %v3272 = vunpack.c.h.b16 %v810
      %v3273 = vunpack.c.l.b16 %v811
      %v3274 = vunpack.c.h.b16 %v811
      %v3275 = vunpack.c.l.b16 %v812
      %v3276 = vunpack.c.h.b16 %v812
      %v3277 = vunpack.c.l.b16 %v813
      %v3278 = vunpack.c.h.b16 %v813
      %v3279 = vunpack.c.l.b16 %v814
      %v3280 = vunpack.c.h.b16 %v814
      %v3281 = vunpack.c.l.b16 %v815
      %v3282 = vunpack.c.h.b16 %v815
      %v3283 = vunpack.c.l.b16 %v816
      %v3284 = vunpack.c.h.b16 %v816
      %v3285 = vunpack.c.l.b16 %v817
      %v3286 = vunpack.c.h.b16 %v817
      %v3287 = vunpack.c.l.b16 %v818
      %v3288 = vunpack.c.h.b16 %v818
      %v3289 = vunpack.c.l.b16 %v819
      %v3290 = vunpack.c.h.b16 %v819
      %v3291 = vunpack.c.l.b16 %v820
      %v3292 = vunpack.c.h.b16 %v820
      %v3293 = vunpack.c.l.b16 %v821
      %v3294 = vunpack.c.h.b16 %v821
      %v3295 = vunpack.c.l.b16 %v822
      %v3296 = vunpack.c.h.b16 %v822
      %v3297 = vunpack.c.l.b16 %v823
      %v3298 = vunpack.c.h.b16 %v823
      %v3299 = vunpack.c.l.b16 %v824
      %v3300 = vunpack.c.h.b16 %v824
      %v3301 = vunpack.c.l.b16 %v825
      %v3302 = vunpack.c.h.b16 %v825
      %v3303 = vunpack.c.l.b16 %v826
      %v3304 = vunpack.c.h.b16 %v826
      %v3305 = vunpack.c.l.b16 %v827
      %v3306 = vunpack.c.h.b16 %v827
      %v3307 = vunpack.c.l.b16 %v828
      %v3308 = vunpack.c.h.b16 %v828
      %v3309 = vunpack.c.l.b16 %v829
      %v3310 = vunpack.c.h.b16 %v829
      %v3311 = vunpack.c.l.b16 %v830
      %v3312 = vunpack.c.h.b16 %v830
      %v3313 = vunpack.c.l.b16 %v831
      %v3314 = vunpack.c.h.b16 %v831
      %v3315 = vunpack.c.l.b16 %v832
      %v3316 = vunpack.c.h.b16 %v832
      %v3317 = vunpack.c.l.b16 %v833
      %v3318 = vunpack.c.h.b16 %v833
      %v3319 = vunpack.c.l.b16 %v834
      %v3320 = vunpack.c.h.b16 %v834
      %v3321 = vunpack.c.l.b16 %v835
      %v3322 = vunpack.c.h.b16 %v835
      %v3323 = vunpack.c.l.b16 %v836
      %v3324 = vunpack.c.h.b16 %v836
      %v3325 = vunpack.c.l.b16 %v837
      %v3326 = vunpack.c.h.b16 %v837
      %v3327 = vunpack.c.l.b16 %v838
      %v3328 = vunpack.c.h.b16 %v838
      %v3329 = vunpack.c.l.b16 %v839
      %v3330 = vunpack.c.h.b16 %v839
      %v3331 = vunpack.c.l.b16 %v840
      %v3332 = vunpack.c.h.b16 %v840
      %v3333 = vunpack.c.l.b16 %v841
      %v3334 = vunpack.c.h.b16 %v841
      %v3335 = vunpack.c.l.b16 %v842
      %v3336 = vunpack.c.h.b16 %v842
      %v3337 = vunpack.c.l.b16 %v843
      %v3338 = vunpack.c.h.b16 %v843
      %v3339 = vunpack.c.l.b16 %v844
      %v3340 = vunpack.c.h.b16 %v844
      %v3341 = vunpack.c.l.b16 %v845
      %v3342 = vunpack.c.h.b16 %v845
      %v3343 = vunpack.c.l.b16 %v846
      %v3344 = vunpack.c.h.b16 %v846
      %v3345 = vunpack.c.l.b16 %v847
      %v3346 = vunpack.c.h.b16 %v847
      %v3347 = vunpack.c.l.b16 %v848
      %v3348 = vunpack.c.h.b16 %v848
      %v3349 = vunpack.c.l.b16 %v849
      %v3350 = vunpack.c.h.b16 %v849
      %v3351 = vunpack.c.l.b16 %v850
      %v3352 = vunpack.c.h.b16 %v850
      %v3353 = vunpack.c.l.b16 %v851
      %v3354 = vunpack.c.h.b16 %v851
      %v3355 = vunpack.c.l.b16 %v852
      %v3356 = vunpack.c.h.b16 %v852
      %v3357 = vunpack.c.l.b16 %v853
      %v3358 = vunpack.c.h.b16 %v853
      %v3359 = vunpack.c.l.b16 %v854
      %v3360 = vunpack.c.h.b16 %v854
      %v3361 = vunpack.c.l.b16 %v855
      %v3362 = vunpack.c.h.b16 %v855
      %v3363 = vunpack.c.l.b16 %v856
      %v3364 = vunpack.c.h.b16 %v856
      %v3365 = vunpack.c.l.b16 %v857
      %v3366 = vunpack.c.h.b16 %v857
      %v3367 = vunpack.c.l.b16 %v858
      %v3368 = vunpack.c.h.b16 %v858
      %v3369 = vunpack.c.l.b16 %v859
      %v3370 = vunpack.c.h.b16 %v859
      %v3371 = vunpack.c.l.b16 %v860
      %v3372 = vunpack.c.h.b16 %v860
      %v3373 = vunpack.c.l.b16 %v861
      %v3374 = vunpack.c.h.b16 %v861
      %v3375 = vunpack.c.l.b16 %v862
      %v3376 = vunpack.c.h.b16 %v862
      %v3377 = vunpack.c.l.b16 %v863
      %v3378 = vunpack.c.h.b16 %v863
      %v3379 = vunpack.c.l.b16 %v864
      %v3380 = vunpack.c.h.b16 %v864
      %v3381 = vunpack.c.l.b16 %v865
      %v3382 = vunpack.c.h.b16 %v865
      %v3383 = vunpack.c.l.b16 %v866
      %v3384 = vunpack.c.h.b16 %v866
      %v3385 = vunpack.c.l.b16 %v867
      %v3386 = vunpack.c.h.b16 %v867
      %v3387 = vunpack.c.l.b16 %v868
      %v3388 = vunpack.c.h.b16 %v868
      %v3389 = vunpack.c.l.b16 %v869
      %v3390 = vunpack.c.h.b16 %v869
      %v3391 = vunpack.c.l.b16 %v870
      %v3392 = vunpack.c.h.b16 %v870
      %v3393 = vunpack.c.l.b16 %v871
      %v3394 = vunpack.c.h.b16 %v871
      %v3395 = vunpack.c.l.b16 %v872
      %v3396 = vunpack.c.h.b16 %v872
      %v3397 = vunpack.c.l.b16 %v873
      %v3398 = vunpack.c.h.b16 %v873
      %v3399 = vunpack.c.l.b16 %v874
      %v3400 = vunpack.c.h.b16 %v874
      %v3401 = vunpack.c.l.b16 %v875
      %v3402 = vunpack.c.h.b16 %v875
      %v3403 = vunpack.c.l.b16 %v876
      %v3404 = vunpack.c.h.b16 %v876
      %v3405 = vunpack.c.l.b16 %v877
      %v3406 = vunpack.c.h.b16 %v877
      %v3407 = vunpack.c.l.b16 %v878
      %v3408 = vunpack.c.h.b16 %v878
      %v3409 = vunpack.c.l.b16 %v879
      %v3410 = vunpack.c.h.b16 %v879
      %v3411 = vunpack.c.l.b16 %v880
      %v3412 = vunpack.c.h.b16 %v880
      %v3413 = vunpack.c.l.b16 %v881
      %v3414 = vunpack.c.h.b16 %v881
      %v3415 = vunpack.c.l.b16 %v882
      %v3416 = vunpack.c.h.b16 %v882
      %v3417 = vunpack.c.l.b16 %v883
      %v3418 = vunpack.c.h.b16 %v883
      %v3419 = vunpack.c.l.b16 %v884
      %v3420 = vunpack.c.h.b16 %v884
      %v3421 = vunpack.c.l.b16 %v885
      %v3422 = vunpack.c.h.b16 %v885
      %v3423 = vunpack.c.l.b16 %v886
      %v3424 = vunpack.c.h.b16 %v886
      %v3425 = vunpack.c.l.b16 %v887
      %v3426 = vunpack.c.h.b16 %v887
      %v3427 = vunpack.c.l.b16 %v888
      %v3428 = vunpack.c.h.b16 %v888
      %v3429 = vunpack.c.l.b16 %v889
      %v3430 = vunpack.c.h.b16 %v889
      %v3431 = vunpack.c.l.b16 %v890
      %v3432 = vunpack.c.h.b16 %v890
      %v3433 = vunpack.c.l.b16 %v891
      %v3434 = vunpack.c.h.b16 %v891
      %v3435 = vunpack.c.l.b16 %v892
      %v3436 = vunpack.c.h.b16 %v892
      %v3437 = vunpack.c.l.b16 %v893
      %v3438 = vunpack.c.h.b16 %v893
      %v3439 = vunpack.c.l.b16 %v894
      %v3440 = vunpack.c.h.b16 %v894
      %v3441 = vunpack.c.l.b16 %v895
      %v3442 = vunpack.c.h.b16 %v895
      %v3443 = vunpack.c.l.b16 %v896
      %v3444 = vunpack.c.h.b16 %v896
      %v3445 = vunpack.c.l.b16 %v897
      %v3446 = vunpack.c.h.b16 %v897
      %v3447 = vunpack.c.l.b16 %v898
      %v3448 = vunpack.c.h.b16 %v898
      %v3449 = vunpack.c.l.b16 %v899
      %v3450 = vunpack.c.h.b16 %v899
      %v3451 = vunpack.c.l.b16 %v900
      %v3452 = vunpack.c.h.b16 %v900
      %v3453 = vunpack.c.l.b16 %v901
      %v3454 = vunpack.c.h.b16 %v901
      %v3455 = vunpack.c.l.b16 %v902
      %v3456 = vunpack.c.h.b16 %v902
      %v3457 = vunpack.c.l.b16 %v903
      %v3458 = vunpack.c.h.b16 %v903
      %v3459 = vunpack.c.l.b16 %v904
      %v3460 = vunpack.c.h.b16 %v904
      %v3461 = vunpack.c.l.b16 %v905
      %v3462 = vunpack.c.h.b16 %v905
      %v3463 = vunpack.c.l.b16 %v906
      %v3464 = vunpack.c.h.b16 %v906
      %v3465 = vunpack.c.l.b16 %v907
      %v3466 = vunpack.c.h.b16 %v907
      %v3467 = vunpack.c.l.b16 %v908
      %v3468 = vunpack.c.h.b16 %v908
      %v3469 = vunpack.c.l.b16 %v909
      %v3470 = vunpack.c.h.b16 %v909
      %v3471 = vunpack.c.l.b16 %v910
      %v3472 = vunpack.c.h.b16 %v910
      %v3473 = vunpack.c.l.b16 %v911
      %v3474 = vunpack.c.h.b16 %v911
      %v3475 = vunpack.c.l.b16 %v912
      %v3476 = vunpack.c.h.b16 %v912
      %v3477 = vunpack.c.l.b16 %v913
      %v3478 = vunpack.c.h.b16 %v913
      %v3479 = vunpack.c.l.b16 %v914
      %v3480 = vunpack.c.h.b16 %v914
      %v3481 = vunpack.c.l.b16 %v915
      %v3482 = vunpack.c.h.b16 %v915
      %v3483 = vunpack.c.l.b16 %v916
      %v3484 = vunpack.c.h.b16 %v916
      %v3485 = vunpack.c.l.b16 %v917
      %v3486 = vunpack.c.h.b16 %v917
      %v3487 = vunpack.c.l.b16 %v918
      %v3488 = vunpack.c.h.b16 %v918
      %v3489 = vunpack.c.l.b16 %v919
      %v3490 = vunpack.c.h.b16 %v919
      %v3491 = vunpack.c.l.b16 %v920
      %v3492 = vunpack.c.h.b16 %v920
      %v3493 = vunpack.c.l.b16 %v921
      %v3494 = vunpack.c.h.b16 %v921
      %v3495 = vunpack.c.l.b16 %v922
      %v3496 = vunpack.c.h.b16 %v922
      %v3497 = vunpack.c.l.b16 %v923
      %v3498 = vunpack.c.h.b16 %v923
      %v3499 = vunpack.c.l.b16 %v924
      %v3500 = vunpack.c.h.b16 %v924
      %v3501 = vunpack.c.l.b16 %v925
      %v3502 = vunpack.c.h.b16 %v925
      %v3503 = vunpack.c.l.b16 %v926
      %v3504 = vunpack.c.h.b16 %v926
      %v3505 = vunpack.c.l.b16 %v927
      %v3506 = vunpack.c.h.b16 %v927
      %v3507 = vunpack.c.l.b16 %v928
      %v3508 = vunpack.c.h.b16 %v928
      %v3509 = vunpack.c.l.b16 %v929
      %v3510 = vunpack.c.h.b16 %v929
      %v3511 = vunpack.c.l.b16 %v930
      %v3512 = vunpack.c.h.b16 %v930
      %v3513 = vunpack.c.l.b16 %v931
      %v3514 = vunpack.c.h.b16 %v931
      %v3515 = vunpack.c.l.b16 %v932
      %v3516 = vunpack.c.h.b16 %v932
      %v3517 = vunpack.c.l.b16 %v933
      %v3518 = vunpack.c.h.b16 %v933
      %v3519 = vunpack.c.l.b16 %v934
      %v3520 = vunpack.c.h.b16 %v934
      %v3521 = vunpack.c.l.b16 %v935
      %v3522 = vunpack.c.h.b16 %v935
      %v3523 = vunpack.c.l.b16 %v936
      %v3524 = vunpack.c.h.b16 %v936
      %v3525 = vunpack.c.l.b16 %v937
      %v3526 = vunpack.c.h.b16 %v937
      %v3527 = vunpack.c.l.b16 %v938
      %v3528 = vunpack.c.h.b16 %v938
      %v3529 = vunpack.c.l.b16 %v939
      %v3530 = vunpack.c.h.b16 %v939
      %v3531 = vunpack.c.l.b16 %v940
      %v3532 = vunpack.c.h.b16 %v940
      %v3533 = vunpack.c.l.b16 %v941
      %v3534 = vunpack.c.h.b16 %v941
      %v3535 = vunpack.c.l.b16 %v942
      %v3536 = vunpack.c.h.b16 %v942
      %v3537 = vunpack.c.l.b16 %v943
      %v3538 = vunpack.c.h.b16 %v943
      %v3539 = vunpack.c.l.b16 %v944
      %v3540 = vunpack.c.h.b16 %v944
      %v3541 = vunpack.c.l.b16 %v945
      %v3542 = vunpack.c.h.b16 %v945
      %v3543 = vunpack.c.l.b16 %v946
      %v3544 = vunpack.c.h.b16 %v946
      %v3545 = vunpack.c.l.b16 %v947
      %v3546 = vunpack.c.h.b16 %v947
      %v3547 = vunpack.c.l.b16 %v948
      %v3548 = vunpack.c.h.b16 %v948
      %v3549 = vunpack.c.l.b16 %v949
      %v3550 = vunpack.c.h.b16 %v949
      %v3551 = vunpack.c.l.b16 %v950
      %v3552 = vunpack.c.h.b16 %v950
      %v3553 = vunpack.c.l.b16 %v951
      %v3554 = vunpack.c.h.b16 %v951
      %v3555 = vunpack.c.l.b16 %v952
      %v3556 = vunpack.c.h.b16 %v952
      %v3557 = vunpack.c.l.b16 %v953
      %v3558 = vunpack.c.h.b16 %v953
      %v3559 = vunpack.c.l.b16 %v954
      %v3560 = vunpack.c.h.b16 %v954
      %v3561 = vunpack.c.l.b16 %v955
      %v3562 = vunpack.c.h.b16 %v955
      %v3563 = vunpack.c.l.b16 %v956
      %v3564 = vunpack.c.h.b16 %v956
      %v3565 = vunpack.c.l.b16 %v957
      %v3566 = vunpack.c.h.b16 %v957
      %v3567 = vunpack.c.l.b16 %v958
      %v3568 = vunpack.c.h.b16 %v958
      %v3569 = vunpack.c.l.b16 %v959
      %v3570 = vunpack.c.h.b16 %v959
      %v3571 = vunpack.c.l.b16 %v960
      %v3572 = vunpack.c.h.b16 %v960
      %v3573 = vunpack.c.l.b16 %v961
      %v3574 = vunpack.c.h.b16 %v961
      %v3575 = vunpack.c.l.b16 %v962
      %v3576 = vunpack.c.h.b16 %v962
      %v3577 = vunpack.c.l.b16 %v963
      %v3578 = vunpack.c.h.b16 %v963
      %v3579 = vunpack.c.l.b16 %v964
      %v3580 = vunpack.c.h.b16 %v964
      %v3581 = vunpack.c.l.b16 %v965
      %v3582 = vunpack.c.h.b16 %v965
      %v3583 = vunpack.c.l.b16 %v966
      %v3584 = vunpack.c.h.b16 %v966
      %v3585 = vunpack.c.l.b16 %v967
      %v3586 = vunpack.c.h.b16 %v967
      %v3587 = vunpack.c.l.b16 %v968
      %v3588 = vunpack.c.h.b16 %v968
      %v3589 = vunpack.c.l.b16 %v969
      %v3590 = vunpack.c.h.b16 %v969
      %v3591 = vunpack.c.l.b16 %v970
      %v3592 = vunpack.c.h.b16 %v970
      %v3593 = vunpack.c.l.b16 %v971
      %v3594 = vunpack.c.h.b16 %v971
      %v3595 = vunpack.c.l.b16 %v972
      %v3596 = vunpack.c.h.b16 %v972
      %v3597 = vunpack.c.l.b16 %v973
      %v3598 = vunpack.c.h.b16 %v973
      %v3599 = vunpack.c.l.b16 %v974
      %v3600 = vunpack.c.h.b16 %v974
      %v3601 = vunpack.c.l.b16 %v975
      %v3602 = vunpack.c.h.b16 %v975
      %v3603 = vunpack.c.l.b16 %v976
      %v3604 = vunpack.c.h.b16 %v976
      %v3605 = vunpack.c.l.b16 %v977
      %v3606 = vunpack.c.h.b16 %v977
      %v3607 = vunpack.c.l.b16 %v978
      %v3608 = vunpack.c.h.b16 %v978
      %v3609 = vunpack.c.l.b16 %v979
      %v3610 = vunpack.c.h.b16 %v979
      %v3611 = vunpack.c.l.b16 %v980
      %v3612 = vunpack.c.h.b16 %v980
      %v3613 = vunpack.c.l.b16 %v981
      %v3614 = vunpack.c.h.b16 %v981
      %v3615 = vunpack.c.l.b16 %v982
      %v3616 = vunpack.c.h.b16 %v982
      %v3617 = vunpack.c.l.b16 %v983
      %v3618 = vunpack.c.h.b16 %v983
      %v3619 = vunpack.c.l.b16 %v984
      %v3620 = vunpack.c.h.b16 %v984
      %v3621 = vunpack.c.l.b16 %v985
      %v3622 = vunpack.c.h.b16 %v985
      %v3623 = vunpack.c.l.b16 %v986
      %v3624 = vunpack.c.h.b16 %v986
      %v3625 = vunpack.c.l.b16 %v987
      %v3626 = vunpack.c.h.b16 %v987
      %v3627 = vunpack.c.l.b16 %v988
      %v3628 = vunpack.c.h.b16 %v988
      %v3629 = vunpack.c.l.b16 %v989
      %v3630 = vunpack.c.h.b16 %v989
      %v3631 = vunpack.c.l.b16 %v990
      %v3632 = vunpack.c.h.b16 %v990
      %v3633 = vunpack.c.l.b16 %v991
      %v3634 = vunpack.c.h.b16 %v991
      %v3635 = vunpack.c.l.b16 %v992
      %v3636 = vunpack.c.h.b16 %v992
      %v3637 = vunpack.c.l.b16 %v993
      %v3638 = vunpack.c.h.b16 %v993
      %v3639 = vunpack.c.l.b16 %v994
      %v3640 = vunpack.c.h.b16 %v994
      %v3641 = vunpack.c.l.b16 %v995
      %v3642 = vunpack.c.h.b16 %v995
      %v3643 = vunpack.c.l.b16 %v996
      %v3644 = vunpack.c.h.b16 %v996
      %v3645 = vunpack.c.l.b16 %v997
      %v3646 = vunpack.c.h.b16 %v997
      %v3647 = vunpack.c.l.b16 %v998
      %v3648 = vunpack.c.h.b16 %v998
      %v3649 = vunpack.c.l.b16 %v999
      %v3650 = vunpack.c.h.b16 %v999
      %v3651 = vunpack.c.l.b16 %v1000
      %v3652 = vunpack.c.h.b16 %v1000
      %v3653 = vunpack.c.l.b16 %v1001
      %v3654 = vunpack.c.h.b16 %v1001
      %v3655 = vunpack.c.l.b16 %v1002
      %v3656 = vunpack.c.h.b16 %v1002
      %v3657 = vunpack.c.l.b16 %v1003
      %v3658 = vunpack.c.h.b16 %v1003
      %v3659 = vunpack.c.l.b16 %v1004
      %v3660 = vunpack.c.h.b16 %v1004
      %v3661 = vunpack.c.l.b16 %v1005
      %v3662 = vunpack.c.h.b16 %v1005
      %v3663 = vunpack.c.l.b16 %v1006
      %v3664 = vunpack.c.h.b16 %v1006
      %v3665 = vunpack.c.l.b16 %v1007
      %v3666 = vunpack.c.h.b16 %v1007
      %v3667 = vunpack.c.l.b16 %v1008
      %v3668 = vunpack.c.h.b16 %v1008
      %v3669 = vunpack.c.l.b16 %v1009
      %v3670 = vunpack.c.h.b16 %v1009
      %v3671 = vunpack.c.l.b16 %v1010
      %v3672 = vunpack.c.h.b16 %v1010
      %v3673 = vunpack.c.l.b16 %v1011
      %v3674 = vunpack.c.h.b16 %v1011
      %v3675 = vunpack.c.l.b16 %v1012
      %v3676 = vunpack.c.h.b16 %v1012
      %v3677 = vunpack.c.l.b16 %v1013
      %v3678 = vunpack.c.h.b16 %v1013
      %v3679 = vunpack.c.l.b16 %v1014
      %v3680 = vunpack.c.h.b16 %v1014
      %v3681 = vunpack.c.l.b16 %v1015
      %v3682 = vunpack.c.h.b16 %v1015
      %v3683 = vunpack.c.l.b16 %v1016
      %v3684 = vunpack.c.h.b16 %v1016
      %v3685 = vunpack.c.l.b16 %v1017
      %v3686 = vunpack.c.h.b16 %v1017
      %v3687 = vunpack.c.l.b16 %v1018
      %v3688 = vunpack.c.h.b16 %v1018
      %v3689 = vunpack.c.l.b16 %v1019
      %v3690 = vunpack.c.h.b16 %v1019
      %v3691 = vunpack.c.l.b16 %v1020
      %v3692 = vunpack.c.h.b16 %v1020
      %v3693 = vunpack.c.l.b16 %v1021
      %v3694 = vunpack.c.h.b16 %v1021
      %v3695 = vunpack.c.l.b16 %v1022
      %v3696 = vunpack.c.h.b16 %v1022
      %v3697 = vunpack.c.l.b16 %v1023
      %v3698 = vunpack.c.h.b16 %v1023
      %v3699 = vunpack.c.l.b16 %v1024
      %v3700 = vunpack.c.h.b16 %v1024
      %v3701 = vunpack.c.l.b16 %v1025
      %v3702 = vunpack.c.h.b16 %v1025
      %v3703 = vunpack.c.l.b16 %v1026
      %v3704 = vunpack.c.h.b16 %v1026
      %v3705 = vunpack.c.l.b16 %v1027
      %v3706 = vunpack.c.h.b16 %v1027
      %v3707 = vunpack.c.l.b16 %v1028
      %v3708 = vunpack.c.h.b16 %v1028
      %v3709 = vunpack.c.l.b16 %v1029
      %v3710 = vunpack.c.h.b16 %v1029
      %v3711 = vunpack.c.l.b16 %v1030
      %v3712 = vunpack.c.h.b16 %v1030
      %v3713 = vunpack.c.l.b16 %v1031
      %v3714 = vunpack.c.h.b16 %v1031
      %v3715 = vunpack.c.l.b16 %v1032
      %v3716 = vunpack.c.h.b16 %v1032
      %v3717 = vunpack.c.l.b16 %v1033
      %v3718 = vunpack.c.h.b16 %v1033
      %v3719 = vunpack.c.l.b16 %v1034
      %v3720 = vunpack.c.h.b16 %v1034
      %v3721 = vunpack.c.l.b16 %v1035
      %v3722 = vunpack.c.h.b16 %v1035
      %v3723 = vunpack.c.l.b16 %v1036
      %v3724 = vunpack.c.h.b16 %v1036
      %v3725 = vunpack.c.l.b16 %v1037
      %v3726 = vunpack.c.h.b16 %v1037
      %v3727 = vunpack.c.l.b16 %v1038
      %v3728 = vunpack.c.h.b16 %v1038
      %v3729 = vunpack.c.l.b16 %v1039
      %v3730 = vunpack.c.h.b16 %v1039
      %v3731 = vunpack.c.l.b16 %v1040
      %v3732 = vunpack.c.h.b16 %v1040
      %v3733 = vunpack.c.l.b16 %v1041
      %v3734 = vunpack.c.h.b16 %v1041
      %v3735 = vunpack.c.l.b16 %v1042
      %v3736 = vunpack.c.h.b16 %v1042
      %v3737 = vunpack.c.l.b16 %v1043
      %v3738 = vunpack.c.h.b16 %v1043
      %v3739 = vunpack.c.l.b16 %v1044
      %v3740 = vunpack.c.h.b16 %v1044
      %v3741 = vunpack.c.l.b16 %v1045
      %v3742 = vunpack.c.h.b16 %v1045
      %v3743 = vunpack.c.l.b16 %v1046
      %v3744 = vunpack.c.h.b16 %v1046
      %v3745 = vunpack.c.l.b16 %v1047
      %v3746 = vunpack.c.h.b16 %v1047
      %v3747 = vunpack.c.l.b16 %v1048
      %v3748 = vunpack.c.h.b16 %v1048
      %v3749 = vunpack.c.l.b16 %v1049
      %v3750 = vunpack.c.h.b16 %v1049
      %v3751 = vunpack.c.l.b16 %v1050
      %v3752 = vunpack.c.h.b16 %v1050
      %v3753 = vunpack.c.l.b16 %v1051
      %v3754 = vunpack.c.h.b16 %v1051
      %v3755 = vunpack.c.l.b16 %v1052
      %v3756 = vunpack.c.h.b16 %v1052
      %v3757 = vunpack.c.l.b16 %v1053
      %v3758 = vunpack.c.h.b16 %v1053
      %v3759 = vunpack.c.l.b16 %v1054
      %v3760 = vunpack.c.h.b16 %v1054
      %v3761 = vunpack.c.l.b16 %v1055
      %v3762 = vunpack.c.h.b16 %v1055
      %v3763 = vunpack.c.l.b16 %v1056
      %v3764 = vunpack.c.h.b16 %v1056
      %v3765 = vunpack.c.l.b16 %v1057
      %v3766 = vunpack.c.h.b16 %v1057
      %v3767 = vunpack.c.l.b16 %v1058
      %v3768 = vunpack.c.h.b16 %v1058
      %v3769 = vunpack.c.l.b16 %v1059
      %v3770 = vunpack.c.h.b16 %v1059
      %v3771 = vunpack.c.l.b16 %v1060
      %v3772 = vunpack.c.h.b16 %v1060
      %v3773 = vunpack.c.l.b16 %v1061
      %v3774 = vunpack.c.h.b16 %v1061
      %v3775 = vunpack.c.l.b16 %v1062
      %v3776 = vunpack.c.h.b16 %v1062
      %v3777 = vunpack.c.l.b16 %v1063
      %v3778 = vunpack.c.h.b16 %v1063
      %v3779 = vunpack.c.l.b16 %v1064
      %v3780 = vunpack.c.h.b16 %v1064
      %v3781 = vunpack.c.l.b16 %v1065
      %v3782 = vunpack.c.h.b16 %v1065
      %v3783 = vunpack.c.l.b16 %v1066
      %v3784 = vunpack.c.h.b16 %v1066
      %v3785 = vunpack.c.l.b16 %v1067
      %v3786 = vunpack.c.h.b16 %v1067
      %v3787 = vunpack.c.l.b16 %v1068
      %v3788 = vunpack.c.h.b16 %v1068
      %v3789 = vunpack.c.l.b16 %v1069
      %v3790 = vunpack.c.h.b16 %v1069
      %v3791 = vunpack.c.l.b16 %v1070
      %v3792 = vunpack.c.h.b16 %v1070
      %v3793 = vunpack.c.l.b16 %v1071
      %v3794 = vunpack.c.h.b16 %v1071
      %v3795 = vunpack.c.l.b16 %v1072
      %v3796 = vunpack.c.h.b16 %v1072
      %v3797 = vunpack.c.l.b16 %v1073
      %v3798 = vunpack.c.h.b16 %v1073
      %v3799 = vunpack.c.l.b16 %v1074
      %v3800 = vunpack.c.h.b16 %v1074
      %v3801 = vunpack.c.l.b16 %v1075
      %v3802 = vunpack.c.h.b16 %v1075
      %v3803 = vunpack.c.l.b16 %v1076
      %v3804 = vunpack.c.h.b16 %v1076
      %v3805 = vunpack.c.l.b16 %v1077
      %v3806 = vunpack.c.h.b16 %v1077
      %v3807 = vunpack.c.l.b16 %v1078
      %v3808 = vunpack.c.h.b16 %v1078
      %v3809 = vunpack.c.l.b16 %v1079
      %v3810 = vunpack.c.h.b16 %v1079
      %v3811 = vunpack.c.l.b16 %v1080
      %v3812 = vunpack.c.h.b16 %v1080
      %v3813 = vunpack.c.l.b16 %v1081
      %v3814 = vunpack.c.h.b16 %v1081
      %v3815 = vunpack.c.l.b16 %v1082
      %v3816 = vunpack.c.h.b16 %v1082
      %v3817 = vunpack.c.l.b16 %v1083
      %v3818 = vunpack.c.h.b16 %v1083
      %v3819 = vunpack.c.l.b16 %v1084
      %v3820 = vunpack.c.h.b16 %v1084
      %v3821 = vunpack.c.l.b16 %v1085
      %v3822 = vunpack.c.h.b16 %v1085
      %v3823 = vunpack.c.l.b16 %v1086
      %v3824 = vunpack.c.h.b16 %v1086
      %v3825 = vunpack.c.l.b16 %v1087
      %v3826 = vunpack.c.h.b16 %v1087
      %v3827 = vunpack.c.l.b16 %v1088
      %v3828 = vunpack.c.h.b16 %v1088
      %v3829 = vunpack.c.l.b16 %v1089
      %v3830 = vunpack.c.h.b16 %v1089
      %v3831 = vunpack.c.l.b16 %v1090
      %v3832 = vunpack.c.h.b16 %v1090
      %v3833 = vunpack.c.l.b16 %v1091
      %v3834 = vunpack.c.h.b16 %v1091
      %v3835 = vunpack.c.l.b16 %v1092
      %v3836 = vunpack.c.h.b16 %v1092
      %v3837 = vunpack.c.l.b16 %v1093
      %v3838 = vunpack.c.h.b16 %v1093
      %v3839 = vunpack.c.l.b16 %v1094
      %v3840 = vunpack.c.h.b16 %v1094
      %v3841 = vunpack.c.l.b16 %v1095
      %v3842 = vunpack.c.h.b16 %v1095
      %v3843 = vunpack.c.l.b16 %v1096
      %v3844 = vunpack.c.h.b16 %v1096
      %v3845 = vunpack.c.l.b16 %v1097
      %v3846 = vunpack.c.h.b16 %v1097
      %v3847 = vunpack.c.l.b16 %v1098
      %v3848 = vunpack.c.h.b16 %v1098
      %v3849 = vunpack.c.l.b16 %v1099
      %v3850 = vunpack.c.h.b16 %v1099
      %v3851 = vunpack.c.l.b16 %v1100
      %v3852 = vunpack.c.h.b16 %v1100
      %v3853 = vunpack.c.l.b16 %v1101
      %v3854 = vunpack.c.h.b16 %v1101
      %v3855 = vunpack.c.l.b16 %v1102
      %v3856 = vunpack.c.h.b16 %v1102
      %v3857 = vunpack.c.l.b16 %v1103
      %v3858 = vunpack.c.h.b16 %v1103
      %v3859 = vunpack.c.l.b16 %v1104
      %v3860 = vunpack.c.h.b16 %v1104
      %v3861 = vunpack.c.l.b16 %v1105
      %v3862 = vunpack.c.h.b16 %v1105
      %v3863 = vunpack.c.l.b16 %v1106
      %v3864 = vunpack.c.h.b16 %v1106
      %v3865 = vunpack.c.l.b16 %v1107
      %v3866 = vunpack.c.h.b16 %v1107
      %v3867 = vunpack.c.l.b16 %v1108
      %v3868 = vunpack.c.h.b16 %v1108
      %v3869 = vunpack.c.l.b16 %v1109
      %v3870 = vunpack.c.h.b16 %v1109
      %v3871 = vunpack.c.l.b16 %v1110
      %v3872 = vunpack.c.h.b16 %v1110
      %v3873 = vunpack.c.l.b16 %v1111
      %v3874 = vunpack.c.h.b16 %v1111
      %v3875 = vunpack.c.l.b16 %v1112
      %v3876 = vunpack.c.h.b16 %v1112
      %v3877 = vunpack.c.l.b16 %v1113
      %v3878 = vunpack.c.h.b16 %v1113
      %v3879 = vunpack.c.l.b16 %v1114
      %v3880 = vunpack.c.h.b16 %v1114
      %v3881 = vunpack.c.l.b16 %v1115
      %v3882 = vunpack.c.h.b16 %v1115
      %v3883 = vunpack.c.l.b16 %v1116
      %v3884 = vunpack.c.h.b16 %v1116
      %v3885 = vunpack.c.l.b16 %v1117
      %v3886 = vunpack.c.h.b16 %v1117
      %v3887 = vunpack.c.l.b16 %v1118
      %v3888 = vunpack.c.h.b16 %v1118
      %v3889 = vunpack.c.l.b16 %v1119
      %v3890 = vunpack.c.h.b16 %v1119
      %v3891 = vunpack.c.l.b16 %v1120
      %v3892 = vunpack.c.h.b16 %v1120
      %v3893 = vunpack.c.l.b16 %v1121
      %v3894 = vunpack.c.h.b16 %v1121
      %v3895 = vunpack.c.l.b16 %v1122
      %v3896 = vunpack.c.h.b16 %v1122
      %v3897 = vunpack.c.l.b16 %v1123
      %v3898 = vunpack.c.h.b16 %v1123
      %v3899 = vunpack.c.l.b16 %v1124
      %v3900 = vunpack.c.h.b16 %v1124
      %v3901 = vunpack.c.l.b16 %v1125
      %v3902 = vunpack.c.h.b16 %v1125
      %v3903 = vunpack.c.l.b16 %v1126
      %v3904 = vunpack.c.h.b16 %v1126
      %v3905 = vunpack.c.l.b16 %v1127
      %v3906 = vunpack.c.h.b16 %v1127
      %v3907 = vunpack.c.l.b16 %v1128
      %v3908 = vunpack.c.h.b16 %v1128
      %v3909 = vunpack.c.l.b16 %v1129
      %v3910 = vunpack.c.h.b16 %v1129
      %v3911 = vunpack.c.l.b16 %v1130
      %v3912 = vunpack.c.h.b16 %v1130
      %v3913 = vunpack.c.l.b16 %v1131
      %v3914 = vunpack.c.h.b16 %v1131
      %v3915 = vunpack.c.l.b16 %v1132
      %v3916 = vunpack.c.h.b16 %v1132
      %v3917 = vunpack.c.l.b16 %v1133
      %v3918 = vunpack.c.h.b16 %v1133
      %v3919 = vunpack.c.l.b16 %v1134
      %v3920 = vunpack.c.h.b16 %v1134
      %v3921 = vunpack.c.l.b16 %v1135
      %v3922 = vunpack.c.h.b16 %v1135
      %v3923 = vunpack.c.l.b16 %v1136
      %v3924 = vunpack.c.h.b16 %v1136
      %v3925 = vunpack.c.l.b16 %v1137
      %v3926 = vunpack.c.h.b16 %v1137
      %v3927 = vunpack.c.l.b16 %v1138
      %v3928 = vunpack.c.h.b16 %v1138
      %v3929 = vunpack.c.l.b16 %v1139
      %v3930 = vunpack.c.h.b16 %v1139
      %v3931 = vunpack.c.l.b16 %v1140
      %v3932 = vunpack.c.h.b16 %v1140
      %v3933 = vunpack.c.l.b16 %v1141
      %v3934 = vunpack.c.h.b16 %v1141
      %v3935 = vpack.c.b16 %v2211, %v2207
      %v3936 = vpack.c.b16 %v2212, %v2208
      %v3937 = vpack.c.b16 %v2213, %v2209
      %v3938 = vpack.c.b16 %v2214, %v2210
      %v3939 = vpack.c.b16 %v2219, %v2215
      %v3940 = vpack.c.b16 %v2220, %v2216
      %v3941 = vpack.c.b16 %v2221, %v2217
      %v3942 = vpack.c.b16 %v2222, %v2218
      %v3943 = vpack.c.b16 %v2227, %v2223
      %v3944 = vpack.c.b16 %v2228, %v2224
      %v3945 = vpack.c.b16 %v2229, %v2225
      %v3946 = vpack.c.b16 %v2230, %v2226
      %v3947 = vpack.c.b16 %v2235, %v2231
      %v3948 = vpack.c.b16 %v2236, %v2232
      %v3949 = vpack.c.b16 %v2237, %v2233
      %v3950 = vpack.c.b16 %v2238, %v2234
      %v3951 = vpack.c.b16 %v2243, %v2239
      %v3952 = vpack.c.b16 %v2244, %v2240
      %v3953 = vpack.c.b16 %v2245, %v2241
      %v3954 = vpack.c.b16 %v2246, %v2242
      %v3955 = vpack.c.b16 %v2251, %v2247
      %v3956 = vpack.c.b16 %v2252, %v2248
      %v3957 = vpack.c.b16 %v2253, %v2249
      %v3958 = vpack.c.b16 %v2254, %v2250
      %v3959 = vpack.c.b16 %v2259, %v2255
      %v3960 = vpack.c.b16 %v2260, %v2256
      %v3961 = vpack.c.b16 %v2261, %v2257
      %v3962 = vpack.c.b16 %v2262, %v2258
      %v3963 = vpack.c.b16 %v2267, %v2263
      %v3964 = vpack.c.b16 %v2268, %v2264
      %v3965 = vpack.c.b16 %v2269, %v2265
      %v3966 = vpack.c.b16 %v2270, %v2266
      %v3967 = vpack.c.b16 %v2275, %v2271
      %v3968 = vpack.c.b16 %v2276, %v2272
      %v3969 = vpack.c.b16 %v2277, %v2273
      %v3970 = vpack.c.b16 %v2278, %v2274
      %v3971 = vpack.c.b16 %v2283, %v2279
      %v3972 = vpack.c.b16 %v2284, %v2280
      %v3973 = vpack.c.b16 %v2285, %v2281
      %v3974 = vpack.c.b16 %v2286, %v2282
      %v3975 = vpack.c.b16 %v2291, %v2287
      %v3976 = vpack.c.b16 %v2292, %v2288
      %v3977 = vpack.c.b16 %v2293, %v2289
      %v3978 = vpack.c.b16 %v2294, %v2290
      %v3979 = vpack.c.b16 %v2299, %v2295
      %v3980 = vpack.c.b16 %v2300, %v2296
      %v3981 = vpack.c.b16 %v2301, %v2297
      %v3982 = vpack.c.b16 %v2302, %v2298
      %v3983 = vpack.c.b16 %v2307, %v2303
      %v3984 = vpack.c.b16 %v2308, %v2304
      %v3985 = vpack.c.b16 %v2309, %v2305
      %v3986 = vpack.c.b16 %v2310, %v2306
      %v3987 = vpack.c.b16 %v2315, %v2311
      %v3988 = vpack.c.b16 %v2316, %v2312
      %v3989 = vpack.c.b16 %v2317, %v2313
      %v3990 = vpack.c.b16 %v2318, %v2314
      %v3991 = vpack.c.b16 %v2323, %v2319
      %v3992 = vpack.c.b16 %v2324, %v2320
      %v3993 = vpack.c.b16 %v2325, %v2321
      %v3994 = vpack.c.b16 %v2326, %v2322
      %v3995 = vpack.c.b16 %v2331, %v2327
      %v3996 = vpack.c.b16 %v2332, %v2328
      %v3997 = vpack.c.b16 %v2333, %v2329
      %v3998 = vpack.c.b16 %v2334, %v2330
      %v3999 = vpack.c.b16 %v2339, %v2335
      %v4000 = vpack.c.b16 %v2340, %v2336
      %v4001 = vpack.c.b16 %v2341, %v2337
      %v4002 = vpack.c.b16 %v2342, %v2338
      %v4003 = vpack.c.b16 %v2347, %v2343
      %v4004 = vpack.c.b16 %v2348, %v2344
      %v4005 = vpack.c.b16 %v2349, %v2345
      %v4006 = vpack.c.b16 %v2350, %v2346
      %v4007 = vpack.c.b16 %v2355, %v2351
      %v4008 = vpack.c.b16 %v2356, %v2352
      %v4009 = vpack.c.b16 %v2357, %v2353
      %v4010 = vpack.c.b16 %v2358, %v2354
      %v4011 = vpack.c.b16 %v2363, %v2359
      %v4012 = vpack.c.b16 %v2364, %v2360
      %v4013 = vpack.c.b16 %v2365, %v2361
      %v4014 = vpack.c.b16 %v2366, %v2362
      %v4015 = vpack.c.b16 %v2371, %v2367
      %v4016 = vpack.c.b16 %v2372, %v2368
      %v4017 = vpack.c.b16 %v2373, %v2369
      %v4018 = vpack.c.b16 %v2374, %v2370
      %v4019 = vpack.c.b16 %v2379, %v2375
      %v4020 = vpack.c.b16 %v2380, %v2376
      %v4021 = vpack.c.b16 %v2381, %v2377
      %v4022 = vpack.c.b16 %v2382, %v2378
      %v4023 = vpack.c.b16 %v2387, %v2383
      %v4024 = vpack.c.b16 %v2388, %v2384
      %v4025 = vpack.c.b16 %v2389, %v2385
      %v4026 = vpack.c.b16 %v2390, %v2386
      %v4027 = vpack.c.b16 %v2395, %v2391
      %v4028 = vpack.c.b16 %v2396, %v2392
      %v4029 = vpack.c.b16 %v2397, %v2393
      %v4030 = vpack.c.b16 %v2398, %v2394
      %v4031 = vpack.c.b16 %v2403, %v2399
      %v4032 = vpack.c.b16 %v2404, %v2400
      %v4033 = vpack.c.b16 %v2405, %v2401
      %v4034 = vpack.c.b16 %v2406, %v2402
      %v4035 = vpack.c.b16 %v2411, %v2407
      %v4036 = vpack.c.b16 %v2412, %v2408
      %v4037 = vpack.c.b16 %v2413, %v2409
      %v4038 = vpack.c.b16 %v2414, %v2410
      %v4039 = vpack.c.b16 %v2419, %v2415
      %v4040 = vpack.c.b16 %v2420, %v2416
      %v4041 = vpack.c.b16 %v2421, %v2417
      %v4042 = vpack.c.b16 %v2422, %v2418
      %v4043 = vpack.c.b16 %v2427, %v2423
      %v4044 = vpack.c.b16 %v2428, %v2424
      %v4045 = vpack.c.b16 %v2429, %v2425
      %v4046 = vpack.c.b16 %v2430, %v2426
      %v4047 = vpack.c.b16 %v2435, %v2431
      %v4048 = vpack.c.b16 %v2436, %v2432
      %v4049 = vpack.c.b16 %v2437, %v2433
      %v4050 = vpack.c.b16 %v2438, %v2434
      %v4051 = vpack.c.b16 %v2443, %v2439
      %v4052 = vpack.c.b16 %v2444, %v2440
      %v4053 = vpack.c.b16 %v2445, %v2441
      %v4054 = vpack.c.b16 %v2446, %v2442
      %v4055 = vpack.c.b16 %v2451, %v2447
      %v4056 = vpack.c.b16 %v2452, %v2448
      %v4057 = vpack.c.b16 %v2453, %v2449
      %v4058 = vpack.c.b16 %v2454, %v2450
      %v4059 = vpack.c.b16 %v2459, %v2455
      %v4060 = vpack.c.b16 %v2460, %v2456
      %v4061 = vpack.c.b16 %v2461, %v2457
      %v4062 = vpack.c.b16 %v2462, %v2458
      %v4063 = vpack.c.b16 %v2467, %v2463
      %v4064 = vpack.c.b16 %v2468, %v2464
      %v4065 = vpack.c.b16 %v2469, %v2465
      %v4066 = vpack.c.b16 %v2470, %v2466
      %v4067 = vpack.c.b16 %v2475, %v2471
      %v4068 = vpack.c.b16 %v2476, %v2472
      %v4069 = vpack.c.b16 %v2477, %v2473
      %v4070 = vpack.c.b16 %v2478, %v2474
      %v4071 = vpack.c.b16 %v2483, %v2479
      %v4072 = vpack.c.b16 %v2484, %v2480
      %v4073 = vpack.c.b16 %v2485, %v2481
      %v4074 = vpack.c.b16 %v2486, %v2482
      %v4075 = vpack.c.b16 %v2491, %v2487
      %v4076 = vpack.c.b16 %v2492, %v2488
      %v4077 = vpack.c.b16 %v2493, %v2489
      %v4078 = vpack.c.b16 %v2494, %v2490
      %v4079 = vpack.c.b16 %v2499, %v2495
      %v4080 = vpack.c.b16 %v2500, %v2496
      %v4081 = vpack.c.b16 %v2501, %v2497
      %v4082 = vpack.c.b16 %v2502, %v2498
      %v4083 = vpack.c.b16 %v2507, %v2503
      %v4084 = vpack.c.b16 %v2508, %v2504
      %v4085 = vpack.c.b16 %v2509, %v2505
      %v4086 = vpack.c.b16 %v2510, %v2506
      %v4087 = vpack.c.b16 %v2515, %v2511
      %v4088 = vpack.c.b16 %v2516, %v2512
      %v4089 = vpack.c.b16 %v2517, %v2513
      %v4090 = vpack.c.b16 %v2518, %v2514
      %v4091 = vpack.c.b16 %v2523, %v2519
      %v4092 = vpack.c.b16 %v2524, %v2520
      %v4093 = vpack.c.b16 %v2525, %v2521
      %v4094 = vpack.c.b16 %v2526, %v2522
      %v4095 = vpack.c.b16 %v2531, %v2527
      %v4096 = vpack.c.b16 %v2532, %v2528
      %v4097 = vpack.c.b16 %v2533, %v2529
      %v4098 = vpack.c.b16 %v2534, %v2530
      %v4099 = vpack.c.b16 %v2539, %v2535
      %v4100 = vpack.c.b16 %v2540, %v2536
      %v4101 = vpack.c.b16 %v2541, %v2537
      %v4102 = vpack.c.b16 %v2542, %v2538
      %v4103 = vpack.c.b16 %v2547, %v2543
      %v4104 = vpack.c.b16 %v2548, %v2544
      %v4105 = vpack.c.b16 %v2549, %v2545
      %v4106 = vpack.c.b16 %v2550, %v2546
      %v4107 = vpack.c.b16 %v2555, %v2551
      %v4108 = vpack.c.b16 %v2556, %v2552
      %v4109 = vpack.c.b16 %v2557, %v2553
      %v4110 = vpack.c.b16 %v2558, %v2554
      %v4111 = vpack.c.b16 %v2563, %v2559
      %v4112 = vpack.c.b16 %v2564, %v2560
      %v4113 = vpack.c.b16 %v2565, %v2561
      %v4114 = vpack.c.b16 %v2566, %v2562
      %v4115 = vpack.c.b16 %v2571, %v2567
      %v4116 = vpack.c.b16 %v2572, %v2568
      %v4117 = vpack.c.b16 %v2573, %v2569
      %v4118 = vpack.c.b16 %v2574, %v2570
      %v4119 = vpack.c.b16 %v2579, %v2575
      %v4120 = vpack.c.b16 %v2580, %v2576
      %v4121 = vpack.c.b16 %v2581, %v2577
      %v4122 = vpack.c.b16 %v2582, %v2578
      %v4123 = vpack.c.b16 %v2587, %v2583
      %v4124 = vpack.c.b16 %v2588, %v2584
      %v4125 = vpack.c.b16 %v2589, %v2585
      %v4126 = vpack.c.b16 %v2590, %v2586
      %v4127 = vpack.c.b16 %v2595, %v2591
      %v4128 = vpack.c.b16 %v2596, %v2592
      %v4129 = vpack.c.b16 %v2597, %v2593
      %v4130 = vpack.c.b16 %v2598, %v2594
      %v4131 = vpack.c.b16 %v2603, %v2599
      %v4132 = vpack.c.b16 %v2604, %v2600
      %v4133 = vpack.c.b16 %v2605, %v2601
      %v4134 = vpack.c.b16 %v2606, %v2602
      %v4135 = vpack.c.b16 %v2611, %v2607
      %v4136 = vpack.c.b16 %v2612, %v2608
      %v4137 = vpack.c.b16 %v2613, %v2609
      %v4138 = vpack.c.b16 %v2614, %v2610
      %v4139 = vpack.c.b16 %v2619, %v2615
      %v4140 = vpack.c.b16 %v2620, %v2616
      %v4141 = vpack.c.b16 %v2621, %v2617
      %v4142 = vpack.c.b16 %v2622, %v2618
      %v4143 = vpack.c.b16 %v2627, %v2623
      %v4144 = vpack.c.b16 %v2628, %v2624
      %v4145 = vpack.c.b16 %v2629, %v2625
      %v4146 = vpack.c.b16 %v2630, %v2626
      %v4147 = vpack.c.b16 %v2635, %v2631
      %v4148 = vpack.c.b16 %v2636, %v2632
      %v4149 = vpack.c.b16 %v2637, %v2633
      %v4150 = vpack.c.b16 %v2638, %v2634
      %v4151 = vpack.c.b16 %v2643, %v2639
      %v4152 = vpack.c.b16 %v2644, %v2640
      %v4153 = vpack.c.b16 %v2645, %v2641
      %v4154 = vpack.c.b16 %v2646, %v2642
      %v4155 = vpack.c.b16 %v2651, %v2647
      %v4156 = vpack.c.b16 %v2652, %v2648
      %v4157 = vpack.c.b16 %v2653, %v2649
      %v4158 = vpack.c.b16 %v2654, %v2650
      %v4159 = vpack.c.b16 %v2659, %v2655
      %v4160 = vpack.c.b16 %v2660, %v2656
      %v4161 = vpack.c.b16 %v2661, %v2657
      %v4162 = vpack.c.b16 %v2662, %v2658
      %v4163 = vpack.c.b16 %v2667, %v2663
      %v4164 = vpack.c.b16 %v2668, %v2664
      %v4165 = vpack.c.b16 %v2669, %v2665
      %v4166 = vpack.c.b16 %v2670, %v2666
      %v4167 = vpack.c.b16 %v2675, %v2671
      %v4168 = vpack.c.b16 %v2676, %v2672
      %v4169 = vpack.c.b16 %v2677, %v2673
      %v4170 = vpack.c.b16 %v2678, %v2674
      %v4171 = vpack.c.b16 %v2683, %v2679
      %v4172 = vpack.c.b16 %v2684, %v2680
      %v4173 = vpack.c.b16 %v2685, %v2681
      %v4174 = vpack.c.b16 %v2686, %v2682
      %v4175 = vpack.c.b16 %v2691, %v2687
      %v4176 = vpack.c.b16 %v2692, %v2688
      %v4177 = vpack.c.b16 %v2693, %v2689
      %v4178 = vpack.c.b16 %v2694, %v2690
      %v4179 = vpack.c.b16 %v2699, %v2695
      %v4180 = vpack.c.b16 %v2700, %v2696
      %v4181 = vpack.c.b16 %v2701, %v2697
      %v4182 = vpack.c.b16 %v2702, %v2698
      %v4183 = vpack.c.b16 %v2707, %v2703
      %v4184 = vpack.c.b16 %v2708, %v2704
      %v4185 = vpack.c.b16 %v2709, %v2705
      %v4186 = vpack.c.b16 %v2710, %v2706
      %v4187 = vpack.c.b16 %v2715, %v2711
      %v4188 = vpack.c.b16 %v2716, %v2712
      %v4189 = vpack.c.b16 %v2717, %v2713
      %v4190 = vpack.c.b16 %v2718, %v2714
      %v4191 = vpack.c.b16 %v2723, %v2719
      %v4192 = vpack.c.b16 %v2724, %v2720
      %v4193 = vpack.c.b16 %v2725, %v2721
      %v4194 = vpack.c.b16 %v2726, %v2722
      %v4195 = vpack.c.b16 %v2731, %v2727
      %v4196 = vpack.c.b16 %v2732, %v2728
      %v4197 = vpack.c.b16 %v2733, %v2729
      %v4198 = vpack.c.b16 %v2734, %v2730
      %v4199 = vpack.c.b16 %v2739, %v2735
      %v4200 = vpack.c.b16 %v2740, %v2736
      %v4201 = vpack.c.b16 %v2741, %v2737
      %v4202 = vpack.c.b16 %v2742, %v2738
      %v4203 = vpack.c.b16 %v2747, %v2743
      %v4204 = vpack.c.b16 %v2748, %v2744
      %v4205 = vpack.c.b16 %v2749, %v2745
      %v4206 = vpack.c.b16 %v2750, %v2746
      %v4207 = vpack.c.b16 %v2755, %v2751
      %v4208 = vpack.c.b16 %v2756, %v2752
      %v4209 = vpack.c.b16 %v2757, %v2753
      %v4210 = vpack.c.b16 %v2758, %v2754
      %v4211 = vpack.c.b16 %v2763, %v2759
      %v4212 = vpack.c.b16 %v2764, %v2760
      %v4213 = vpack.c.b16 %v2765, %v2761
      %v4214 = vpack.c.b16 %v2766, %v2762
      %v4215 = vpack.c.b16 %v2771, %v2767
      %v4216 = vpack.c.b16 %v2772, %v2768
      %v4217 = vpack.c.b16 %v2773, %v2769
      %v4218 = vpack.c.b16 %v2774, %v2770
      %v4219 = vpack.c.b16 %v2779, %v2775
      %v4220 = vpack.c.b16 %v2780, %v2776
      %v4221 = vpack.c.b16 %v2781, %v2777
      %v4222 = vpack.c.b16 %v2782, %v2778
      %v4223 = vpack.c.b16 %v2787, %v2783
      %v4224 = vpack.c.b16 %v2788, %v2784
      %v4225 = vpack.c.b16 %v2789, %v2785
      %v4226 = vpack.c.b16 %v2790, %v2786
      %v4227 = vpack.c.b16 %v2795, %v2791
      %v4228 = vpack.c.b16 %v2796, %v2792
      %v4229 = vpack.c.b16 %v2797, %v2793
      %v4230 = vpack.c.b16 %v2798, %v2794
      %v4231 = vpack.c.b16 %v2803, %v2799
      %v4232 = vpack.c.b16 %v2804, %v2800
      %v4233 = vpack.c.b16 %v2805, %v2801
      %v4234 = vpack.c.b16 %v2806, %v2802
      %v4235 = vpack.c.b16 %v2811, %v2807
      %v4236 = vpack.c.b16 %v2812, %v2808
      %v4237 = vpack.c.b16 %v2813, %v2809
      %v4238 = vpack.c.b16 %v2814, %v2810
      %v4239 = vpack.c.b16 %v2819, %v2815
      %v4240 = vpack.c.b16 %v2820, %v2816
      %v4241 = vpack.c.b16 %v2821, %v2817
      %v4242 = vpack.c.b16 %v2822, %v2818
      %v4243 = vpack.c.b16 %v2827, %v2823
      %v4244 = vpack.c.b16 %v2828, %v2824
      %v4245 = vpack.c.b16 %v2829, %v2825
      %v4246 = vpack.c.b16 %v2830, %v2826
      %v4247 = vpack.c.b16 %v2835, %v2831
      %v4248 = vpack.c.b16 %v2836, %v2832
      %v4249 = vpack.c.b16 %v2837, %v2833
      %v4250 = vpack.c.b16 %v2838, %v2834
      %v4251 = vpack.c.b16 %v2843, %v2839
      %v4252 = vpack.c.b16 %v2844, %v2840
      %v4253 = vpack.c.b16 %v2845, %v2841
      %v4254 = vpack.c.b16 %v2846, %v2842
      %v4255 = vpack.c.b16 %v2851, %v2847
      %v4256 = vpack.c.b16 %v2852, %v2848
      %v4257 = vpack.c.b16 %v2853, %v2849
      %v4258 = vpack.c.b16 %v2854, %v2850
      %v4259 = vpack.c.b16 %v2859, %v2855
      %v4260 = vpack.c.b16 %v2860, %v2856
      %v4261 = vpack.c.b16 %v2861, %v2857
      %v4262 = vpack.c.b16 %v2862, %v2858
      %v4263 = vpack.c.b16 %v2867, %v2863
      %v4264 = vpack.c.b16 %v2868, %v2864
      %v4265 = vpack.c.b16 %v2869, %v2865
      %v4266 = vpack.c.b16 %v2870, %v2866
      %v4267 = vpack.c.b16 %v2875, %v2871
      %v4268 = vpack.c.b16 %v2876, %v2872
      %v4269 = vpack.c.b16 %v2877, %v2873
      %v4270 = vpack.c.b16 %v2878, %v2874
      %v4271 = vpack.c.b16 %v2883, %v2879
      %v4272 = vpack.c.b16 %v2884, %v2880
      %v4273 = vpack.c.b16 %v2885, %v2881
      %v4274 = vpack.c.b16 %v2886, %v2882
      %v4275 = vpack.c.b16 %v2891, %v2887
      %v4276 = vpack.c.b16 %v2892, %v2888
      %v4277 = vpack.c.b16 %v2893, %v2889
      %v4278 = vpack.c.b16 %v2894, %v2890
      %v4279 = vpack.c.b16 %v2899, %v2895
      %v4280 = vpack.c.b16 %v2900, %v2896
      %v4281 = vpack.c.b16 %v2901, %v2897
      %v4282 = vpack.c.b16 %v2902, %v2898
      %v4283 = vpack.c.b16 %v2907, %v2903
      %v4284 = vpack.c.b16 %v2908, %v2904
      %v4285 = vpack.c.b16 %v2909, %v2905
      %v4286 = vpack.c.b16 %v2910, %v2906
      %v4287 = vpack.c.b16 %v2915, %v2911
      %v4288 = vpack.c.b16 %v2916, %v2912
      %v4289 = vpack.c.b16 %v2917, %v2913
      %v4290 = vpack.c.b16 %v2918, %v2914
      %v4291 = vpack.c.b16 %v2923, %v2919
      %v4292 = vpack.c.b16 %v2924, %v2920
      %v4293 = vpack.c.b16 %v2925, %v2921
      %v4294 = vpack.c.b16 %v2926, %v2922
      %v4295 = vpack.c.b16 %v2931, %v2927
      %v4296 = vpack.c.b16 %v2932, %v2928
      %v4297 = vpack.c.b16 %v2933, %v2929
      %v4298 = vpack.c.b16 %v2934, %v2930
      %v4299 = vpack.c.b16 %v2939, %v2935
      %v4300 = vpack.c.b16 %v2940, %v2936
      %v4301 = vpack.c.b16 %v2941, %v2937
      %v4302 = vpack.c.b16 %v2942, %v2938
      %v4303 = vpack.c.b16 %v2947, %v2943
      %v4304 = vpack.c.b16 %v2948, %v2944
      %v4305 = vpack.c.b16 %v2949, %v2945
      %v4306 = vpack.c.b16 %v2950, %v2946
      %v4307 = vpack.c.b16 %v2955, %v2951
      %v4308 = vpack.c.b16 %v2956, %v2952
      %v4309 = vpack.c.b16 %v2957, %v2953
      %v4310 = vpack.c.b16 %v2958, %v2954
      %v4311 = vpack.c.b16 %v2963, %v2959
      %v4312 = vpack.c.b16 %v2964, %v2960
      %v4313 = vpack.c.b16 %v2965, %v2961
      %v4314 = vpack.c.b16 %v2966, %v2962
      %v4315 = vpack.c.b16 %v2971, %v2967
      %v4316 = vpack.c.b16 %v2972, %v2968
      %v4317 = vpack.c.b16 %v2973, %v2969
      %v4318 = vpack.c.b16 %v2974, %v2970
      %v4319 = vpack.c.b16 %v2979, %v2975
      %v4320 = vpack.c.b16 %v2980, %v2976
      %v4321 = vpack.c.b16 %v2981, %v2977
      %v4322 = vpack.c.b16 %v2982, %v2978
      %v4323 = vpack.c.b16 %v2987, %v2983
      %v4324 = vpack.c.b16 %v2988, %v2984
      %v4325 = vpack.c.b16 %v2989, %v2985
      %v4326 = vpack.c.b16 %v2990, %v2986
      %v4327 = vpack.c.b16 %v2995, %v2991
      %v4328 = vpack.c.b16 %v2996, %v2992
      %v4329 = vpack.c.b16 %v2997, %v2993
      %v4330 = vpack.c.b16 %v2998, %v2994
      %v4331 = vpack.c.b16 %v3003, %v2999
      %v4332 = vpack.c.b16 %v3004, %v3000
      %v4333 = vpack.c.b16 %v3005, %v3001
      %v4334 = vpack.c.b16 %v3006, %v3002
      %v4335 = vpack.c.b16 %v3011, %v3007
      %v4336 = vpack.c.b16 %v3012, %v3008
      %v4337 = vpack.c.b16 %v3013, %v3009
      %v4338 = vpack.c.b16 %v3014, %v3010
      %v4339 = vpack.c.b16 %v3019, %v3015
      %v4340 = vpack.c.b16 %v3020, %v3016
      %v4341 = vpack.c.b16 %v3021, %v3017
      %v4342 = vpack.c.b16 %v3022, %v3018
      %v4343 = vpack.c.b16 %v3027, %v3023
      %v4344 = vpack.c.b16 %v3028, %v3024
      %v4345 = vpack.c.b16 %v3029, %v3025
      %v4346 = vpack.c.b16 %v3030, %v3026
      %v4347 = vpack.c.b16 %v3035, %v3031
      %v4348 = vpack.c.b16 %v3036, %v3032
      %v4349 = vpack.c.b16 %v3037, %v3033
      %v4350 = vpack.c.b16 %v3038, %v3034
      %v4351 = vpack.c.b16 %v3043, %v3039
      %v4352 = vpack.c.b16 %v3044, %v3040
      %v4353 = vpack.c.b16 %v3045, %v3041
      %v4354 = vpack.c.b16 %v3046, %v3042
      %v4355 = vpack.c.b16 %v3051, %v3047
      %v4356 = vpack.c.b16 %v3052, %v3048
      %v4357 = vpack.c.b16 %v3053, %v3049
      %v4358 = vpack.c.b16 %v3054, %v3050
      %v4359 = vpack.c.b16 %v3059, %v3055
      %v4360 = vpack.c.b16 %v3060, %v3056
      %v4361 = vpack.c.b16 %v3061, %v3057
      %v4362 = vpack.c.b16 %v3062, %v3058
      %v4363 = vpack.c.b16 %v3067, %v3063
      %v4364 = vpack.c.b16 %v3068, %v3064
      %v4365 = vpack.c.b16 %v3069, %v3065
      %v4366 = vpack.c.b16 %v3070, %v3066
      %v4367 = vpack.c.b16 %v3075, %v3071
      %v4368 = vpack.c.b16 %v3076, %v3072
      %v4369 = vpack.c.b16 %v3077, %v3073
      %v4370 = vpack.c.b16 %v3078, %v3074
      %v4371 = vpack.c.b16 %v3083, %v3079
      %v4372 = vpack.c.b16 %v3084, %v3080
      %v4373 = vpack.c.b16 %v3085, %v3081
      %v4374 = vpack.c.b16 %v3086, %v3082
      %v4375 = vpack.c.b16 %v3091, %v3087
      %v4376 = vpack.c.b16 %v3092, %v3088
      %v4377 = vpack.c.b16 %v3093, %v3089
      %v4378 = vpack.c.b16 %v3094, %v3090
      %v4379 = vpack.c.b16 %v3099, %v3095
      %v4380 = vpack.c.b16 %v3100, %v3096
      %v4381 = vpack.c.b16 %v3101, %v3097
      %v4382 = vpack.c.b16 %v3102, %v3098
      %v4383 = vpack.c.b16 %v3107, %v3103
      %v4384 = vpack.c.b16 %v3108, %v3104
      %v4385 = vpack.c.b16 %v3109, %v3105
      %v4386 = vpack.c.b16 %v3110, %v3106
      %v4387 = vpack.c.b16 %v3115, %v3111
      %v4388 = vpack.c.b16 %v3116, %v3112
      %v4389 = vpack.c.b16 %v3117, %v3113
      %v4390 = vpack.c.b16 %v3118, %v3114
      %v4391 = vpack.c.b16 %v3123, %v3119
      %v4392 = vpack.c.b16 %v3124, %v3120
      %v4393 = vpack.c.b16 %v3125, %v3121
      %v4394 = vpack.c.b16 %v3126, %v3122
      %v4395 = vpack.c.b16 %v3131, %v3127
      %v4396 = vpack.c.b16 %v3132, %v3128
      %v4397 = vpack.c.b16 %v3133, %v3129
      %v4398 = vpack.c.b16 %v3134, %v3130
      %v4399 = vpack.c.b16 %v3139, %v3135
      %v4400 = vpack.c.b16 %v3140, %v3136
      %v4401 = vpack.c.b16 %v3141, %v3137
      %v4402 = vpack.c.b16 %v3142, %v3138
      %v4403 = vpack.c.b16 %v3147, %v3143
      %v4404 = vpack.c.b16 %v3148, %v3144
      %v4405 = vpack.c.b16 %v3149, %v3145
      %v4406 = vpack.c.b16 %v3150, %v3146
      %v4407 = vpack.c.b16 %v3155, %v3151
      %v4408 = vpack.c.b16 %v3156, %v3152
      %v4409 = vpack.c.b16 %v3157, %v3153
      %v4410 = vpack.c.b16 %v3158, %v3154
      %v4411 = vpack.c.b16 %v3163, %v3159
      %v4412 = vpack.c.b16 %v3164, %v3160
      %v4413 = vpack.c.b16 %v3165, %v3161
      %v4414 = vpack.c.b16 %v3166, %v3162
      %v4415 = vpack.c.b16 %v3171, %v3167
      %v4416 = vpack.c.b16 %v3172, %v3168
      %v4417 = vpack.c.b16 %v3173, %v3169
      %v4418 = vpack.c.b16 %v3174, %v3170
      %v4419 = vpack.c.b16 %v3179, %v3175
      %v4420 = vpack.c.b16 %v3180, %v3176
      %v4421 = vpack.c.b16 %v3181, %v3177
      %v4422 = vpack.c.b16 %v3182, %v3178
      %v4423 = vpack.c.b16 %v3187, %v3183
      %v4424 = vpack.c.b16 %v3188, %v3184
      %v4425 = vpack.c.b16 %v3189, %v3185
      %v4426 = vpack.c.b16 %v3190, %v3186
      %v4427 = vpack.c.b16 %v3195, %v3191
      %v4428 = vpack.c.b16 %v3196, %v3192
      %v4429 = vpack.c.b16 %v3197, %v3193
      %v4430 = vpack.c.b16 %v3198, %v3194
      %v4431 = vpack.c.b16 %v3203, %v3199
      %v4432 = vpack.c.b16 %v3204, %v3200
      %v4433 = vpack.c.b16 %v3205, %v3201
      %v4434 = vpack.c.b16 %v3206, %v3202
      %v4435 = vpack.c.b16 %v3211, %v3207
      %v4436 = vpack.c.b16 %v3212, %v3208
      %v4437 = vpack.c.b16 %v3213, %v3209
      %v4438 = vpack.c.b16 %v3214, %v3210
      %v4439 = vpack.c.b16 %v3219, %v3215
      %v4440 = vpack.c.b16 %v3220, %v3216
      %v4441 = vpack.c.b16 %v3221, %v3217
      %v4442 = vpack.c.b16 %v3222, %v3218
      %v4443 = vpack.c.b16 %v3227, %v3223
      %v4444 = vpack.c.b16 %v3228, %v3224
      %v4445 = vpack.c.b16 %v3229, %v3225
      %v4446 = vpack.c.b16 %v3230, %v3226
      %v4447 = vpack.c.b16 %v3235, %v3231
      %v4448 = vpack.c.b16 %v3236, %v3232
      %v4449 = vpack.c.b16 %v3237, %v3233
      %v4450 = vpack.c.b16 %v3238, %v3234
      %v4451 = vpack.c.b16 %v3243, %v3239
      %v4452 = vpack.c.b16 %v3244, %v3240
      %v4453 = vpack.c.b16 %v3245, %v3241
      %v4454 = vpack.c.b16 %v3246, %v3242
      %v4455 = vpack.c.b16 %v3251, %v3247
      %v4456 = vpack.c.b16 %v3252, %v3248
      %v4457 = vpack.c.b16 %v3253, %v3249
      %v4458 = vpack.c.b16 %v3254, %v3250
      %v4459 = vpack.c.b16 %v3259, %v3255
      %v4460 = vpack.c.b16 %v3260, %v3256
      %v4461 = vpack.c.b16 %v3261, %v3257
      %v4462 = vpack.c.b16 %v3262, %v3258
      %v4463 = vpack.c.b16 %v3267, %v3263
      %v4464 = vpack.c.b16 %v3268, %v3264
      %v4465 = vpack.c.b16 %v3269, %v3265
      %v4466 = vpack.c.b16 %v3270, %v3266
      %v4467 = vpack.c.b16 %v3275, %v3271
      %v4468 = vpack.c.b16 %v3276, %v3272
      %v4469 = vpack.c.b16 %v3277, %v3273
      %v4470 = vpack.c.b16 %v3278, %v3274
      %v4471 = vpack.c.b16 %v3283, %v3279
      %v4472 = vpack.c.b16 %v3284, %v3280
      %v4473 = vpack.c.b16 %v3285, %v3281
      %v4474 = vpack.c.b16 %v3286, %v3282
      %v4475 = vpack.c.b16 %v3291, %v3287
      %v4476 = vpack.c.b16 %v3292, %v3288
      %v4477 = vpack.c.b16 %v3293, %v3289
      %v4478 = vpack.c.b16 %v3294, %v3290
      %v4479 = vpack.c.b16 %v3299, %v3295
      %v4480 = vpack.c.b16 %v3300, %v3296
      %v4481 = vpack.c.b16 %v3301, %v3297
      %v4482 = vpack.c.b16 %v3302, %v3298
      %v4483 = vpack.c.b16 %v3307, %v3303
      %v4484 = vpack.c.b16 %v3308, %v3304
      %v4485 = vpack.c.b16 %v3309, %v3305
      %v4486 = vpack.c.b16 %v3310, %v3306
      %v4487 = vpack.c.b16 %v3315, %v3311
      %v4488 = vpack.c.b16 %v3316, %v3312
      %v4489 = vpack.c.b16 %v3317, %v3313
      %v4490 = vpack.c.b16 %v3318, %v3314
      %v4491 = vpack.c.b16 %v3323, %v3319
      %v4492 = vpack.c.b16 %v3324, %v3320
      %v4493 = vpack.c.b16 %v3325, %v3321
      %v4494 = vpack.c.b16 %v3326, %v3322
      %v4495 = vpack.c.b16 %v3331, %v3327
      %v4496 = vpack.c.b16 %v3332, %v3328
      %v4497 = vpack.c.b16 %v3333, %v3329
      %v4498 = vpack.c.b16 %v3334, %v3330
      %v4499 = vpack.c.b16 %v3339, %v3335
      %v4500 = vpack.c.b16 %v3340, %v3336
      %v4501 = vpack.c.b16 %v3341, %v3337
      %v4502 = vpack.c.b16 %v3342, %v3338
      %v4503 = vpack.c.b16 %v3347, %v3343
      %v4504 = vpack.c.b16 %v3348, %v3344
      %v4505 = vpack.c.b16 %v3349, %v3345
      %v4506 = vpack.c.b16 %v3350, %v3346
      %v4507 = vpack.c.b16 %v3355, %v3351
      %v4508 = vpack.c.b16 %v3356, %v3352
      %v4509 = vpack.c.b16 %v3357, %v3353
      %v4510 = vpack.c.b16 %v3358, %v3354
      %v4511 = vpack.c.b16 %v3363, %v3359
      %v4512 = vpack.c.b16 %v3364, %v3360
      %v4513 = vpack.c.b16 %v3365, %v3361
      %v4514 = vpack.c.b16 %v3366, %v3362
      %v4515 = vpack.c.b16 %v3371, %v3367
      %v4516 = vpack.c.b16 %v3372, %v3368
      %v4517 = vpack.c.b16 %v3373, %v3369
      %v4518 = vpack.c.b16 %v3374, %v3370
      %v4519 = vpack.c.b16 %v3379, %v3375
      %v4520 = vpack.c.b16 %v3380, %v3376
      %v4521 = vpack.c.b16 %v3381, %v3377
      %v4522 = vpack.c.b16 %v3382, %v3378
      %v4523 = vpack.c.b16 %v3387, %v3383
      %v4524 = vpack.c.b16 %v3388, %v3384
      %v4525 = vpack.c.b16 %v3389, %v3385
      %v4526 = vpack.c.b16 %v3390, %v3386
      %v4527 = vpack.c.b16 %v3395, %v3391
      %v4528 = vpack.c.b16 %v3396, %v3392
      %v4529 = vpack.c.b16 %v3397, %v3393
      %v4530 = vpack.c.b16 %v3398, %v3394
      %v4531 = vpack.c.b16 %v3403, %v3399
      %v4532 = vpack.c.b16 %v3404, %v3400
      %v4533 = vpack.c.b16 %v3405, %v3401
      %v4534 = vpack.c.b16 %v3406, %v3402
      %v4535 = vpack.c.b16 %v3411, %v3407
      %v4536 = vpack.c.b16 %v3412, %v3408
      %v4537 = vpack.c.b16 %v3413, %v3409
      %v4538 = vpack.c.b16 %v3414, %v3410
      %v4539 = vpack.c.b16 %v3419, %v3415
      %v4540 = vpack.c.b16 %v3420, %v3416
      %v4541 = vpack.c.b16 %v3421, %v3417
      %v4542 = vpack.c.b16 %v3422, %v3418
      %v4543 = vpack.c.b16 %v3427, %v3423
      %v4544 = vpack.c.b16 %v3428, %v3424
      %v4545 = vpack.c.b16 %v3429, %v3425
      %v4546 = vpack.c.b16 %v3430, %v3426
      %v4547 = vpack.c.b16 %v3435, %v3431
      %v4548 = vpack.c.b16 %v3436, %v3432
      %v4549 = vpack.c.b16 %v3437, %v3433
      %v4550 = vpack.c.b16 %v3438, %v3434
      %v4551 = vpack.c.b16 %v3443, %v3439
      %v4552 = vpack.c.b16 %v3444, %v3440
      %v4553 = vpack.c.b16 %v3445, %v3441
      %v4554 = vpack.c.b16 %v3446, %v3442
      %v4555 = vpack.c.b16 %v3451, %v3447
      %v4556 = vpack.c.b16 %v3452, %v3448
      %v4557 = vpack.c.b16 %v3453, %v3449
      %v4558 = vpack.c.b16 %v3454, %v3450
      %v4559 = vpack.c.b16 %v3459, %v3455
      %v4560 = vpack.c.b16 %v3460, %v3456
      %v4561 = vpack.c.b16 %v3461, %v3457
      %v4562 = vpack.c.b16 %v3462, %v3458
      %v4563 = vpack.c.b16 %v3467, %v3463
      %v4564 = vpack.c.b16 %v3468, %v3464
      %v4565 = vpack.c.b16 %v3469, %v3465
      %v4566 = vpack.c.b16 %v3470, %v3466
      %v4567 = vpack.c.b16 %v3475, %v3471
      %v4568 = vpack.c.b16 %v3476, %v3472
      %v4569 = vpack.c.b16 %v3477, %v3473
      %v4570 = vpack.c.b16 %v3478, %v3474
      %v4571 = vpack.c.b16 %v3483, %v3479
      %v4572 = vpack.c.b16 %v3484, %v3480
      %v4573 = vpack.c.b16 %v3485, %v3481
      %v4574 = vpack.c.b16 %v3486, %v3482
      %v4575 = vpack.c.b16 %v3491, %v3487
      %v4576 = vpack.c.b16 %v3492, %v3488
      %v4577 = vpack.c.b16 %v3493, %v3489
      %v4578 = vpack.c.b16 %v3494, %v3490
      %v4579 = vpack.c.b16 %v3499, %v3495
      %v4580 = vpack.c.b16 %v3500, %v3496
      %v4581 = vpack.c.b16 %v3501, %v3497
      %v4582 = vpack.c.b16 %v3502, %v3498
      %v4583 = vpack.c.b16 %v3507, %v3503
      %v4584 = vpack.c.b16 %v3508, %v3504
      %v4585 = vpack.c.b16 %v3509, %v3505
      %v4586 = vpack.c.b16 %v3510, %v3506
      %v4587 = vpack.c.b16 %v3515, %v3511
      %v4588 = vpack.c.b16 %v3516, %v3512
      %v4589 = vpack.c.b16 %v3517, %v3513
      %v4590 = vpack.c.b16 %v3518, %v3514
      %v4591 = vpack.c.b16 %v3523, %v3519
      %v4592 = vpack.c.b16 %v3524, %v3520
      %v4593 = vpack.c.b16 %v3525, %v3521
      %v4594 = vpack.c.b16 %v3526, %v3522
      %v4595 = vpack.c.b16 %v3531, %v3527
      %v4596 = vpack.c.b16 %v3532, %v3528
      %v4597 = vpack.c.b16 %v3533, %v3529
      %v4598 = vpack.c.b16 %v3534, %v3530
      %v4599 = vpack.c.b16 %v3539, %v3535
      %v4600 = vpack.c.b16 %v3540, %v3536
      %v4601 = vpack.c.b16 %v3541, %v3537
      %v4602 = vpack.c.b16 %v3542, %v3538
      %v4603 = vpack.c.b16 %v3547, %v3543
      %v4604 = vpack.c.b16 %v3548, %v3544
      %v4605 = vpack.c.b16 %v3549, %v3545
      %v4606 = vpack.c.b16 %v3550, %v3546
      %v4607 = vpack.c.b16 %v3555, %v3551
      %v4608 = vpack.c.b16 %v3556, %v3552
      %v4609 = vpack.c.b16 %v3557, %v3553
      %v4610 = vpack.c.b16 %v3558, %v3554
      %v4611 = vpack.c.b16 %v3563, %v3559
      %v4612 = vpack.c.b16 %v3564, %v3560
      %v4613 = vpack.c.b16 %v3565, %v3561
      %v4614 = vpack.c.b16 %v3566, %v3562
      %v4615 = vpack.c.b16 %v3571, %v3567
      %v4616 = vpack.c.b16 %v3572, %v3568
      %v4617 = vpack.c.b16 %v3573, %v3569
      %v4618 = vpack.c.b16 %v3574, %v3570
      %v4619 = vpack.c.b16 %v3579, %v3575
      %v4620 = vpack.c.b16 %v3580, %v3576
      %v4621 = vpack.c.b16 %v3581, %v3577
      %v4622 = vpack.c.b16 %v3582, %v3578
      %v4623 = vpack.c.b16 %v3587, %v3583
      %v4624 = vpack.c.b16 %v3588, %v3584
      %v4625 = vpack.c.b16 %v3589, %v3585
      %v4626 = vpack.c.b16 %v3590, %v3586
      %v4627 = vpack.c.b16 %v3595, %v3591
      %v4628 = vpack.c.b16 %v3596, %v3592
      %v4629 = vpack.c.b16 %v3597, %v3593
      %v4630 = vpack.c.b16 %v3598, %v3594
      %v4631 = vpack.c.b16 %v3603, %v3599
      %v4632 = vpack.c.b16 %v3604, %v3600
      %v4633 = vpack.c.b16 %v3605, %v3601
      %v4634 = vpack.c.b16 %v3606, %v3602
      %v4635 = vpack.c.b16 %v3611, %v3607
      %v4636 = vpack.c.b16 %v3612, %v3608
      %v4637 = vpack.c.b16 %v3613, %v3609
      %v4638 = vpack.c.b16 %v3614, %v3610
      %v4639 = vpack.c.b16 %v3619, %v3615
      %v4640 = vpack.c.b16 %v3620, %v3616
      %v4641 = vpack.c.b16 %v3621, %v3617
      %v4642 = vpack.c.b16 %v3622, %v3618
      %v4643 = vpack.c.b16 %v3627, %v3623
      %v4644 = vpack.c.b16 %v3628, %v3624
      %v4645 = vpack.c.b16 %v3629, %v3625
      %v4646 = vpack.c.b16 %v3630, %v3626
      %v4647 = vpack.c.b16 %v3635, %v3631
      %v4648 = vpack.c.b16 %v3636, %v3632
      %v4649 = vpack.c.b16 %v3637, %v3633
      %v4650 = vpack.c.b16 %v3638, %v3634
      %v4651 = vpack.c.b16 %v3643, %v3639
      %v4652 = vpack.c.b16 %v3644, %v3640
      %v4653 = vpack.c.b16 %v3645, %v3641
      %v4654 = vpack.c.b16 %v3646, %v3642
      %v4655 = vpack.c.b16 %v3651, %v3647
      %v4656 = vpack.c.b16 %v3652, %v3648
      %v4657 = vpack.c.b16 %v3653, %v3649
      %v4658 = vpack.c.b16 %v3654, %v3650
      %v4659 = vpack.c.b16 %v3659, %v3655
      %v4660 = vpack.c.b16 %v3660, %v3656
      %v4661 = vpack.c.b16 %v3661, %v3657
      %v4662 = vpack.c.b16 %v3662, %v3658
      %v4663 = vpack.c.b16 %v3667, %v3663
      %v4664 = vpack.c.b16 %v3668, %v3664
      %v4665 = vpack.c.b16 %v3669, %v3665
      %v4666 = vpack.c.b16 %v3670, %v3666
      %v4667 = vpack.c.b16 %v3675, %v3671
      %v4668 = vpack.c.b16 %v3676, %v3672
      %v4669 = vpack.c.b16 %v3677, %v3673
      %v4670 = vpack.c.b16 %v3678, %v3674
      %v4671 = vpack.c.b16 %v3683, %v3679
      %v4672 = vpack.c.b16 %v3684, %v3680
      %v4673 = vpack.c.b16 %v3685, %v3681
      %v4674 = vpack.c.b16 %v3686, %v3682
      %v4675 = vpack.c.b16 %v3691, %v3687
      %v4676 = vpack.c.b16 %v3692, %v3688
      %v4677 = vpack.c.b16 %v3693, %v3689
      %v4678 = vpack.c.b16 %v3694, %v3690
      %v4679 = vpack.c.b16 %v3699, %v3695
      %v4680 = vpack.c.b16 %v3700, %v3696
      %v4681 = vpack.c.b16 %v3701, %v3697
      %v4682 = vpack.c.b16 %v3702, %v3698
      %v4683 = vpack.c.b16 %v3707, %v3703
      %v4684 = vpack.c.b16 %v3708, %v3704
      %v4685 = vpack.c.b16 %v3709, %v3705
      %v4686 = vpack.c.b16 %v3710, %v3706
      %v4687 = vpack.c.b16 %v3715, %v3711
      %v4688 = vpack.c.b16 %v3716, %v3712
      %v4689 = vpack.c.b16 %v3717, %v3713
      %v4690 = vpack.c.b16 %v3718, %v3714
      %v4691 = vpack.c.b16 %v3723, %v3719
      %v4692 = vpack.c.b16 %v3724, %v3720
      %v4693 = vpack.c.b16 %v3725, %v3721
      %v4694 = vpack.c.b16 %v3726, %v3722
      %v4695 = vpack.c.b16 %v3731, %v3727
      %v4696 = vpack.c.b16 %v3732, %v3728
      %v4697 = vpack.c.b16 %v3733, %v3729
      %v4698 = vpack.c.b16 %v3734, %v3730
      %v4699 = vpack.c.b16 %v3739, %v3735
      %v4700 = vpack.c.b16 %v3740, %v3736
      %v4701 = vpack.c.b16 %v3741, %v3737
      %v4702 = vpack.c.b16 %v3742, %v3738
      %v4703 = vpack.c.b16 %v3747, %v3743
      %v4704 = vpack.c.b16 %v3748, %v3744
      %v4705 = vpack.c.b16 %v3749, %v3745
      %v4706 = vpack.c.b16 %v3750, %v3746
      %v4707 = vpack.c.b16 %v3755, %v3751
      %v4708 = vpack.c.b16 %v3756, %v3752
      %v4709 = vpack.c.b16 %v3757, %v3753
      %v4710 = vpack.c.b16 %v3758, %v3754
      %v4711 = vpack.c.b16 %v3763, %v3759
      %v4712 = vpack.c.b16 %v3764, %v3760
      %v4713 = vpack.c.b16 %v3765, %v3761
      %v4714 = vpack.c.b16 %v3766, %v3762
      %v4715 = vpack.c.b16 %v3771, %v3767
      %v4716 = vpack.c.b16 %v3772, %v3768
      %v4717 = vpack.c.b16 %v3773, %v3769
      %v4718 = vpack.c.b16 %v3774, %v3770
      %v4719 = vpack.c.b16 %v3779, %v3775
      %v4720 = vpack.c.b16 %v3780, %v3776
      %v4721 = vpack.c.b16 %v3781, %v3777
      %v4722 = vpack.c.b16 %v3782, %v3778
      %v4723 = vpack.c.b16 %v3787, %v3783
      %v4724 = vpack.c.b16 %v3788, %v3784
      %v4725 = vpack.c.b16 %v3789, %v3785
      %v4726 = vpack.c.b16 %v3790, %v3786
      %v4727 = vpack.c.b16 %v3795, %v3791
      %v4728 = vpack.c.b16 %v3796, %v3792
      %v4729 = vpack.c.b16 %v3797, %v3793
      %v4730 = vpack.c.b16 %v3798, %v3794
      %v4731 = vpack.c.b16 %v3803, %v3799
      %v4732 = vpack.c.b16 %v3804, %v3800
      %v4733 = vpack.c.b16 %v3805, %v3801
      %v4734 = vpack.c.b16 %v3806, %v3802
      %v4735 = vpack.c.b16 %v3811, %v3807
      %v4736 = vpack.c.b16 %v3812, %v3808
      %v4737 = vpack.c.b16 %v3813, %v3809
      %v4738 = vpack.c.b16 %v3814, %v3810
      %v4739 = vpack.c.b16 %v3819, %v3815
      %v4740 = vpack.c.b16 %v3820, %v3816
      %v4741 = vpack.c.b16 %v3821, %v3817
      %v4742 = vpack.c.b16 %v3822, %v3818
      %v4743 = vpack.c.b16 %v3827, %v3823
      %v4744 = vpack.c.b16 %v3828, %v3824
      %v4745 = vpack.c.b16 %v3829, %v3825
      %v4746 = vpack.c.b16 %v3830, %v3826
      %v4747 = vpack.c.b16 %v3835, %v3831
      %v4748 = vpack.c.b16 %v3836, %v3832
      %v4749 = vpack.c.b16 %v3837, %v3833
      %v4750 = vpack.c.b16 %v3838, %v3834
      %v4751 = vpack.c.b16 %v3843, %v3839
      %v4752 = vpack.c.b16 %v3844, %v3840
      %v4753 = vpack.c.b16 %v3845, %v3841
      %v4754 = vpack.c.b16 %v3846, %v3842
      %v4755 = vpack.c.b16 %v3851, %v3847
      %v4756 = vpack.c.b16 %v3852, %v3848
      %v4757 = vpack.c.b16 %v3853, %v3849
      %v4758 = vpack.c.b16 %v3854, %v3850
      %v4759 = vpack.c.b16 %v3859, %v3855
      %v4760 = vpack.c.b16 %v3860, %v3856
      %v4761 = vpack.c.b16 %v3861, %v3857
      %v4762 = vpack.c.b16 %v3862, %v3858
      %v4763 = vpack.c.b16 %v3867, %v3863
      %v4764 = vpack.c.b16 %v3868, %v3864
      %v4765 = vpack.c.b16 %v3869, %v3865
      %v4766 = vpack.c.b16 %v3870, %v3866
      %v4767 = vpack.c.b16 %v3875, %v3871
      %v4768 = vpack.c.b16 %v3876, %v3872
      %v4769 = vpack.c.b16 %v3877, %v3873
      %v4770 = vpack.c.b16 %v3878, %v3874
      %v4771 = vpack.c.b16 %v3883, %v3879
      %v4772 = vpack.c.b16 %v3884, %v3880
      %v4773 = vpack.c.b16 %v3885, %v3881
      %v4774 = vpack.c.b16 %v3886, %v3882
      %v4775 = vpack.c.b16 %v3891, %v3887
      %v4776 = vpack.c.b16 %v3892, %v3888
      %v4777 = vpack.c.b16 %v3893, %v3889
      %v4778 = vpack.c.b16 %v3894, %v3890
      %v4779 = vpack.c.b16 %v3899, %v3895
      %v4780 = vpack.c.b16 %v3900, %v3896
      %v4781 = vpack.c.b16 %v3901, %v3897
      %v4782 = vpack.c.b16 %v3902, %v3898
      %v4783 = vpack.c.b16 %v3907, %v3903
      %v4784 = vpack.c.b16 %v3908, %v3904
      %v4785 = vpack.c.b16 %v3909, %v3905
      %v4786 = vpack.c.b16 %v3910, %v3906
      %v4787 = vpack.c.b16 %v3915, %v3911
      %v4788 = vpack.c.b16 %v3916, %v3912
      %v4789 = vpack.c.b16 %v3917, %v3913
      %v4790 = vpack.c.b16 %v3918, %v3914
      %v4791 = vpack.c.b16 %v3923, %v3919
      %v4792 = vpack.c.b16 %v3924, %v3920
      %v4793 = vpack.c.b16 %v3925, %v3921
      %v4794 = vpack.c.b16 %v3926, %v3922
      %v4795 = vpack.c.b16 %v3931, %v3927
      %v4796 = vpack.c.b16 %v3932, %v3928
      %v4797 = vpack.c.b16 %v3933, %v3929
      %v4798 = vpack.c.b16 %v3934, %v3930
      %5663 = vmatprep.subr.bf16.mxu0 %v3964
      %5664 = vmatpush1.bf16.msra.mxu0 %v3963
      %5665 = vmatprep.subr.bf16.mxu0 %v3960
      %5666 = vmatpush1.bf16.msra.mxu0 %v3959
      %5667 = vmatprep.subr.bf16.mxu0 %v3956
      %5668 = vmatpush1.bf16.msra.mxu0 %v3955
      %5669 = vmatprep.subr.bf16.mxu0 %v3952
      %5670 = vmatpush1.bf16.msra.mxu0 %v3951
      %5671 = vmatprep.subr.bf16.mxu0 %v3948
      %5672 = vmatpush1.bf16.msra.mxu0 %v3947
      %5673 = vmatprep.subr.bf16.mxu0 %v3944
      %5674 = vmatpush1.bf16.msra.mxu0 %v3943
      %5675 = vmatprep.subr.bf16.mxu0 %v3940
      %5676 = vmatpush1.bf16.msra.mxu0 %v3939
      %5677 = vmatprep.subr.bf16.mxu0 %v3936
      %5678 = vmatpush1.bf16.msra.mxu0 %v3935
      %5679 = vmatprep.subr.bf16.mxu0 %v3996
      %5680 = vmatpush2.bf16.msra.mxu0 %v3995
      %5681 = vmatprep.subr.bf16.mxu0 %v3992
      %5682 = vmatpush2.bf16.msra.mxu0 %v3991
      %5683 = vmatprep.subr.bf16.mxu0 %v3988
      %5684 = vmatpush2.bf16.msra.mxu0 %v3987
      %5685 = vmatprep.subr.bf16.mxu0 %v3984
      %5686 = vmatpush2.bf16.msra.mxu0 %v3983
      %5687 = vmatprep.subr.bf16.mxu0 %v3980
      %5688 = vmatpush2.bf16.msra.mxu0 %v3979
      %5689 = vmatprep.subr.bf16.mxu0 %v3976
      %5690 = vmatpush2.bf16.msra.mxu0 %v3975
      %5691 = vmatprep.subr.bf16.mxu0 %v3972
      %5692 = vmatpush2.bf16.msra.mxu0 %v3971
      %5693 = vmatprep.subr.bf16.mxu0 %v3968
      %5694 = vmatpush2.bf16.msra.mxu0 %v3967
      %5695 = vmatprep.mubr.bf16.mxu0 %v1183
      %5696 = vmatmul.mubr.bf16.gmra.mxu0 %v1169
      %v5697 = vpop.f32.mrf.mxu0
      %v5698 = vadd.f32 0.0, %v5697
      %v5699 = vpop.f32.mrf.mxu0
      %v5700 = vadd.f32 0.0, %v5699
      %v5701 = vpop.f32.mrf.mxu0
      %v5702 = vpop.f32.mrf.mxu0
      %5703 = vdwg.mxu0
      %5704 = vmatprep.subr.bf16.mxu0 %v4028
      %5705 = vmatpush1.bf16.msra.mxu0 %v4027
      %5706 = vmatprep.subr.bf16.mxu0 %v4024
      %5707 = vmatpush1.bf16.msra.mxu0 %v4023
      %5708 = vmatprep.subr.bf16.mxu0 %v4020
      %5709 = vmatpush1.bf16.msra.mxu0 %v4019
      %5710 = vmatprep.subr.bf16.mxu0 %v4016
      %5711 = vmatpush1.bf16.msra.mxu0 %v4015
      %5712 = vmatprep.subr.bf16.mxu0 %v4012
      %5713 = vmatpush1.bf16.msra.mxu0 %v4011
      %5714 = vmatprep.subr.bf16.mxu0 %v4008
      %5715 = vmatpush1.bf16.msra.mxu0 %v4007
      %5716 = vmatprep.subr.bf16.mxu0 %v4004
      %5717 = vmatpush1.bf16.msra.mxu0 %v4003
      %5718 = vmatprep.subr.bf16.mxu0 %v4000
      %5719 = vmatpush1.bf16.msra.mxu0 %v3999
      %5720 = vmatprep.subr.bf16.mxu0 %v4060
      %5721 = vmatpush2.bf16.msra.mxu0 %v4059
      %5722 = vmatprep.subr.bf16.mxu0 %v4056
      %5723 = vmatpush2.bf16.msra.mxu0 %v4055
      %5724 = vmatprep.subr.bf16.mxu0 %v4052
      %5725 = vmatpush2.bf16.msra.mxu0 %v4051
      %5726 = vmatprep.subr.bf16.mxu0 %v4048
      %5727 = vmatpush2.bf16.msra.mxu0 %v4047
      %5728 = vmatprep.subr.bf16.mxu0 %v4044
      %5729 = vmatpush2.bf16.msra.mxu0 %v4043
      %5730 = vmatprep.subr.bf16.mxu0 %v4040
      %5731 = vmatpush2.bf16.msra.mxu0 %v4039
      %5732 = vmatprep.subr.bf16.mxu0 %v4036
      %5733 = vmatpush2.bf16.msra.mxu0 %v4035
      %5734 = vmatprep.subr.bf16.mxu0 %v4032
      %5735 = vmatpush2.bf16.msra.mxu0 %v4031
      %5736 = vmatprep.mubr.bf16.mxu0 %v1193
      %5737 = vmatmul.mubr.bf16.gmra.mxu0 %v1191
      %v5738 = vpop.f32.mrf.mxu0
      %v5739 = vadd.f32 %v5698, %v5738
      %v5740 = vpop.f32.mrf.mxu0
      %v5741 = vadd.f32 %v5700, %v5740
      %v5742 = vpop.f32.mrf.mxu0
      %v5743 = vpop.f32.mrf.mxu0
      %5744 = vdwg.mxu0
      %5745 = vmatprep.subr.bf16.mxu0 %v4092
      %5746 = vmatpush1.bf16.msra.mxu0 %v4091
      %5747 = vmatprep.subr.bf16.mxu0 %v4088
      %5748 = vmatpush1.bf16.msra.mxu0 %v4087
      %5749 = vmatprep.subr.bf16.mxu0 %v4084
      %5750 = vmatpush1.bf16.msra.mxu0 %v4083
      %5751 = vmatprep.subr.bf16.mxu0 %v4080
      %5752 = vmatpush1.bf16.msra.mxu0 %v4079
      %5753 = vmatprep.subr.bf16.mxu0 %v4076
      %5754 = vmatpush1.bf16.msra.mxu0 %v4075
      %5755 = vmatprep.subr.bf16.mxu0 %v4072
      %5756 = vmatpush1.bf16.msra.mxu0 %v4071
      %5757 = vmatprep.subr.bf16.mxu0 %v4068
      %5758 = vmatpush1.bf16.msra.mxu0 %v4067
      %5759 = vmatprep.subr.bf16.mxu0 %v4064
      %5760 = vmatpush1.bf16.msra.mxu0 %v4063
      %5761 = vmatprep.subr.bf16.mxu0 %v4124
      %5762 = vmatpush2.bf16.msra.mxu0 %v4123
      %5763 = vmatprep.subr.bf16.mxu0 %v4120
      %5764 = vmatpush2.bf16.msra.mxu0 %v4119
      %5765 = vmatprep.subr.bf16.mxu0 %v4116
      %5766 = vmatpush2.bf16.msra.mxu0 %v4115
      %5767 = vmatprep.subr.bf16.mxu0 %v4112
      %5768 = vmatpush2.bf16.msra.mxu0 %v4111
      %5769 = vmatprep.subr.bf16.mxu0 %v4108
      %5770 = vmatpush2.bf16.msra.mxu0 %v4107
      %5771 = vmatprep.subr.bf16.mxu0 %v4104
      %5772 = vmatpush2.bf16.msra.mxu0 %v4103
      %5773 = vmatprep.subr.bf16.mxu0 %v4100
      %5774 = vmatpush2.bf16.msra.mxu0 %v4099
      %5775 = vmatprep.subr.bf16.mxu0 %v4096
      %5776 = vmatpush2.bf16.msra.mxu0 %v4095
      %5777 = vmatprep.mubr.bf16.mxu0 %v1190
      %5778 = vmatmul.mubr.bf16.gmra.mxu0 %v1176
      %v5779 = vpop.f32.mrf.mxu0
      %v5780 = vadd.f32 %v5739, %v5779
      %v5781 = vpop.f32.mrf.mxu0
      %v5782 = vadd.f32 %v5741, %v5781
      %v5783 = vpop.f32.mrf.mxu0
      %v5784 = vpop.f32.mrf.mxu0
      %5785 = vdwg.mxu0
      %5786 = vmatprep.subr.bf16.mxu0 %v4156
      %5787 = vmatpush1.bf16.msra.mxu0 %v4155
      %5788 = vmatprep.subr.bf16.mxu0 %v4152
      %5789 = vmatpush1.bf16.msra.mxu0 %v4151
      %5790 = vmatprep.subr.bf16.mxu0 %v4148
      %5791 = vmatpush1.bf16.msra.mxu0 %v4147
      %5792 = vmatprep.subr.bf16.mxu0 %v4144
      %5793 = vmatpush1.bf16.msra.mxu0 %v4143
      %5794 = vmatprep.subr.bf16.mxu0 %v4140
      %5795 = vmatpush1.bf16.msra.mxu0 %v4139
      %5796 = vmatprep.subr.bf16.mxu0 %v4136
      %5797 = vmatpush1.bf16.msra.mxu0 %v4135
      %5798 = vmatprep.subr.bf16.mxu0 %v4132
      %5799 = vmatpush1.bf16.msra.mxu0 %v4131
      %5800 = vmatprep.subr.bf16.mxu0 %v4128
      %5801 = vmatpush1.bf16.msra.mxu0 %v4127
      %5802 = vmatprep.subr.bf16.mxu0 %v4188
      %5803 = vmatpush2.bf16.msra.mxu0 %v4187
      %5804 = vmatprep.subr.bf16.mxu0 %v4184
      %5805 = vmatpush2.bf16.msra.mxu0 %v4183
      %5806 = vmatprep.subr.bf16.mxu0 %v4180
      %5807 = vmatpush2.bf16.msra.mxu0 %v4179
      %5808 = vmatprep.subr.bf16.mxu0 %v4176
      %5809 = vmatpush2.bf16.msra.mxu0 %v4175
      %5810 = vmatprep.subr.bf16.mxu0 %v4172
      %5811 = vmatpush2.bf16.msra.mxu0 %v4171
      %5812 = vmatprep.subr.bf16.mxu0 %v4168
      %5813 = vmatpush2.bf16.msra.mxu0 %v4167
      %5814 = vmatprep.subr.bf16.mxu0 %v4164
      %5815 = vmatpush2.bf16.msra.mxu0 %v4163
      %5816 = vmatprep.subr.bf16.mxu0 %v4160
      %5817 = vmatpush2.bf16.msra.mxu0 %v4159
      %5818 = vmatprep.mubr.bf16.mxu0 %v1194
      %5819 = vmatmul.mubr.bf16.gmra.mxu0 %v1192
      %v5820 = vpop.f32.mrf.mxu0
      %v5821 = vadd.f32 %v5780, %v5820
      %v5822 = vpop.f32.mrf.mxu0
      %v5823 = vadd.f32 %v5782, %v5822
      %v5824 = vpop.f32.mrf.mxu0
      %v5825 = vpop.f32.mrf.mxu0
      %5826 = vdwg.mxu0
      %5827 = vmatprep.subr.bf16.mxu0 %v4220
      %5828 = vmatpush1.bf16.msra.mxu0 %v4219
      %5829 = vmatprep.subr.bf16.mxu0 %v4216
      %5830 = vmatpush1.bf16.msra.mxu0 %v4215
      %5831 = vmatprep.subr.bf16.mxu0 %v4212
      %5832 = vmatpush1.bf16.msra.mxu0 %v4211
      %5833 = vmatprep.subr.bf16.mxu0 %v4208
      %5834 = vmatpush1.bf16.msra.mxu0 %v4207
      %5835 = vmatprep.subr.bf16.mxu0 %v4204
      %5836 = vmatpush1.bf16.msra.mxu0 %v4203
      %5837 = vmatprep.subr.bf16.mxu0 %v4200
      %5838 = vmatpush1.bf16.msra.mxu0 %v4199
      %5839 = vmatprep.subr.bf16.mxu0 %v4196
      %5840 = vmatpush1.bf16.msra.mxu0 %v4195
      %5841 = vmatprep.subr.bf16.mxu0 %v4192
      %5842 = vmatpush1.bf16.msra.mxu0 %v4191
      %5843 = vmatprep.subr.bf16.mxu0 %v4252
      %5844 = vmatpush2.bf16.msra.mxu0 %v4251
      %5845 = vmatprep.subr.bf16.mxu0 %v4248
      %5846 = vmatpush2.bf16.msra.mxu0 %v4247
      %5847 = vmatprep.subr.bf16.mxu0 %v4244
      %5848 = vmatpush2.bf16.msra.mxu0 %v4243
      %5849 = vmatprep.subr.bf16.mxu0 %v4240
      %5850 = vmatpush2.bf16.msra.mxu0 %v4239
      %5851 = vmatprep.subr.bf16.mxu0 %v4236
      %5852 = vmatpush2.bf16.msra.mxu0 %v4235
      %5853 = vmatprep.subr.bf16.mxu0 %v4232
      %5854 = vmatpush2.bf16.msra.mxu0 %v4231
      %5855 = vmatprep.subr.bf16.mxu0 %v4228
      %5856 = vmatpush2.bf16.msra.mxu0 %v4227
      %5857 = vmatprep.subr.bf16.mxu0 %v4224
      %5858 = vmatpush2.bf16.msra.mxu0 %v4223
      %5859 = vmatprep.mubr.bf16.mxu0 %v1232
      %5860 = vmatmul.mubr.bf16.gmra.mxu0 %v1218
      %v5861 = vpop.f32.mrf.mxu0
      %v5862 = vadd.f32 %v5821, %v5861
      %v5863 = vpop.f32.mrf.mxu0
      %v5864 = vadd.f32 %v5823, %v5863
      %v5865 = vpop.f32.mrf.mxu0
      %v5866 = vpop.f32.mrf.mxu0
      %5867 = vdwg.mxu0
      %5868 = vmatprep.subr.bf16.mxu0 %v4284
      %5869 = vmatpush1.bf16.msra.mxu0 %v4283
      %5870 = vmatprep.subr.bf16.mxu0 %v4280
      %5871 = vmatpush1.bf16.msra.mxu0 %v4279
      %5872 = vmatprep.subr.bf16.mxu0 %v4276
      %5873 = vmatpush1.bf16.msra.mxu0 %v4275
      %5874 = vmatprep.subr.bf16.mxu0 %v4272
      %5875 = vmatpush1.bf16.msra.mxu0 %v4271
      %5876 = vmatprep.subr.bf16.mxu0 %v4268
      %5877 = vmatpush1.bf16.msra.mxu0 %v4267
      %5878 = vmatprep.subr.bf16.mxu0 %v4264
      %5879 = vmatpush1.bf16.msra.mxu0 %v4263
      %5880 = vmatprep.subr.bf16.mxu0 %v4260
      %5881 = vmatpush1.bf16.msra.mxu0 %v4259
      %5882 = vmatprep.subr.bf16.mxu0 %v4256
      %5883 = vmatpush1.bf16.msra.mxu0 %v4255
      %5884 = vmatprep.subr.bf16.mxu0 %v4316
      %5885 = vmatpush2.bf16.msra.mxu0 %v4315
      %5886 = vmatprep.subr.bf16.mxu0 %v4312
      %5887 = vmatpush2.bf16.msra.mxu0 %v4311
      %5888 = vmatprep.subr.bf16.mxu0 %v4308
      %5889 = vmatpush2.bf16.msra.mxu0 %v4307
      %5890 = vmatprep.subr.bf16.mxu0 %v4304
      %5891 = vmatpush2.bf16.msra.mxu0 %v4303
      %5892 = vmatprep.subr.bf16.mxu0 %v4300
      %5893 = vmatpush2.bf16.msra.mxu0 %v4299
      %5894 = vmatprep.subr.bf16.mxu0 %v4296
      %5895 = vmatpush2.bf16.msra.mxu0 %v4295
      %5896 = vmatprep.subr.bf16.mxu0 %v4292
      %5897 = vmatpush2.bf16.msra.mxu0 %v4291
      %5898 = vmatprep.subr.bf16.mxu0 %v4288
      %5899 = vmatpush2.bf16.msra.mxu0 %v4287
      %5900 = vmatprep.mubr.bf16.mxu0 %v1242
      %5901 = vmatmul.mubr.bf16.gmra.mxu0 %v1240
      %v5902 = vpop.f32.mrf.mxu0
      %v5903 = vadd.f32 %v5862, %v5902
      %v5904 = vpop.f32.mrf.mxu0
      %v5905 = vadd.f32 %v5864, %v5904
      %v5906 = vpop.f32.mrf.mxu0
      %v5907 = vpop.f32.mrf.mxu0
      %5908 = vdwg.mxu0
      %5909 = vmatprep.subr.bf16.mxu0 %v4348
      %5910 = vmatpush1.bf16.msra.mxu0 %v4347
      %5911 = vmatprep.subr.bf16.mxu0 %v4344
      %5912 = vmatpush1.bf16.msra.mxu0 %v4343
      %5913 = vmatprep.subr.bf16.mxu0 %v4340
      %5914 = vmatpush1.bf16.msra.mxu0 %v4339
      %5915 = vmatprep.subr.bf16.mxu0 %v4336
      %5916 = vmatpush1.bf16.msra.mxu0 %v4335
      %5917 = vmatprep.subr.bf16.mxu0 %v4332
      %5918 = vmatpush1.bf16.msra.mxu0 %v4331
      %5919 = vmatprep.subr.bf16.mxu0 %v4328
      %5920 = vmatpush1.bf16.msra.mxu0 %v4327
      %5921 = vmatprep.subr.bf16.mxu0 %v4324
      %5922 = vmatpush1.bf16.msra.mxu0 %v4323
      %5923 = vmatprep.subr.bf16.mxu0 %v4320
      %5924 = vmatpush1.bf16.msra.mxu0 %v4319
      %5925 = vmatprep.subr.bf16.mxu0 %v4380
      %5926 = vmatpush2.bf16.msra.mxu0 %v4379
      %5927 = vmatprep.subr.bf16.mxu0 %v4376
      %5928 = vmatpush2.bf16.msra.mxu0 %v4375
      %5929 = vmatprep.subr.bf16.mxu0 %v4372
      %5930 = vmatpush2.bf16.msra.mxu0 %v4371
      %5931 = vmatprep.subr.bf16.mxu0 %v4368
      %5932 = vmatpush2.bf16.msra.mxu0 %v4367
      %5933 = vmatprep.subr.bf16.mxu0 %v4364
      %5934 = vmatpush2.bf16.msra.mxu0 %v4363
      %5935 = vmatprep.subr.bf16.mxu0 %v4360
      %5936 = vmatpush2.bf16.msra.mxu0 %v4359
      %5937 = vmatprep.subr.bf16.mxu0 %v4356
      %5938 = vmatpush2.bf16.msra.mxu0 %v4355
      %5939 = vmatprep.subr.bf16.mxu0 %v4352
      %5940 = vmatpush2.bf16.msra.mxu0 %v4351
      %5941 = vmatprep.mubr.bf16.mxu0 %v1239
      %5942 = vmatmul.mubr.bf16.gmra.mxu0 %v1225
      %v5943 = vpop.f32.mrf.mxu0
      %v5944 = vadd.f32 %v5903, %v5943
      %v5945 = vpop.f32.mrf.mxu0
      %v5946 = vadd.f32 %v5905, %v5945
      %v5947 = vpop.f32.mrf.mxu0
      %v5948 = vpop.f32.mrf.mxu0
      %5949 = vdwg.mxu0
      %5950 = vmatprep.subr.bf16.mxu0 %v4412
      %5951 = vmatpush1.bf16.msra.mxu0 %v4411
      %5952 = vmatprep.subr.bf16.mxu0 %v4408
      %5953 = vmatpush1.bf16.msra.mxu0 %v4407
      %5954 = vmatprep.subr.bf16.mxu0 %v4404
      %5955 = vmatpush1.bf16.msra.mxu0 %v4403
      %5956 = vmatprep.subr.bf16.mxu0 %v4400
      %5957 = vmatpush1.bf16.msra.mxu0 %v4399
      %5958 = vmatprep.subr.bf16.mxu0 %v4396
      %5959 = vmatpush1.bf16.msra.mxu0 %v4395
      %5960 = vmatprep.subr.bf16.mxu0 %v4392
      %5961 = vmatpush1.bf16.msra.mxu0 %v4391
      %5962 = vmatprep.subr.bf16.mxu0 %v4388
      %5963 = vmatpush1.bf16.msra.mxu0 %v4387
      %5964 = vmatprep.subr.bf16.mxu0 %v4384
      %5965 = vmatpush1.bf16.msra.mxu0 %v4383
      %5966 = vmatprep.subr.bf16.mxu0 %v4444
      %5967 = vmatpush2.bf16.msra.mxu0 %v4443
      %5968 = vmatprep.subr.bf16.mxu0 %v4440
      %5969 = vmatpush2.bf16.msra.mxu0 %v4439
      %5970 = vmatprep.subr.bf16.mxu0 %v4436
      %5971 = vmatpush2.bf16.msra.mxu0 %v4435
      %5972 = vmatprep.subr.bf16.mxu0 %v4432
      %5973 = vmatpush2.bf16.msra.mxu0 %v4431
      %5974 = vmatprep.subr.bf16.mxu0 %v4428
      %5975 = vmatpush2.bf16.msra.mxu0 %v4427
      %5976 = vmatprep.subr.bf16.mxu0 %v4424
      %5977 = vmatpush2.bf16.msra.mxu0 %v4423
      %5978 = vmatprep.subr.bf16.mxu0 %v4420
      %5979 = vmatpush2.bf16.msra.mxu0 %v4419
      %5980 = vmatprep.subr.bf16.mxu0 %v4416
      %5981 = vmatpush2.bf16.msra.mxu0 %v4415
      %5982 = vmatprep.mubr.bf16.mxu0 %v1243
      %5983 = vmatmul.mubr.bf16.gmra.mxu0 %v1241
      %v5984 = vpop.f32.mrf.mxu0
      %v5985 = vadd.f32 %v5944, %v5984
      %v5986 = vpop.f32.mrf.mxu0
      %v5987 = vadd.f32 %v5946, %v5986
      %v5988 = vpop.f32.mrf.mxu0
      %v5989 = vpop.f32.mrf.mxu0
      %5990 = vdwg.mxu0
      %5991 = vmatprep.subr.bf16.mxu0 %v4476
      %5992 = vmatpush1.bf16.msra.mxu0 %v4475
      %5993 = vmatprep.subr.bf16.mxu0 %v4472
      %5994 = vmatpush1.bf16.msra.mxu0 %v4471
      %5995 = vmatprep.subr.bf16.mxu0 %v4468
      %5996 = vmatpush1.bf16.msra.mxu0 %v4467
      %5997 = vmatprep.subr.bf16.mxu0 %v4464
      %5998 = vmatpush1.bf16.msra.mxu0 %v4463
      %5999 = vmatprep.subr.bf16.mxu0 %v4460
      %6000 = vmatpush1.bf16.msra.mxu0 %v4459
      %6001 = vmatprep.subr.bf16.mxu0 %v4456
      %6002 = vmatpush1.bf16.msra.mxu0 %v4455
      %6003 = vmatprep.subr.bf16.mxu0 %v4452
      %6004 = vmatpush1.bf16.msra.mxu0 %v4451
      %6005 = vmatprep.subr.bf16.mxu0 %v4448
      %6006 = vmatpush1.bf16.msra.mxu0 %v4447
      %6007 = vmatprep.subr.bf16.mxu0 %v4508
      %6008 = vmatpush2.bf16.msra.mxu0 %v4507
      %6009 = vmatprep.subr.bf16.mxu0 %v4504
      %6010 = vmatpush2.bf16.msra.mxu0 %v4503
      %6011 = vmatprep.subr.bf16.mxu0 %v4500
      %6012 = vmatpush2.bf16.msra.mxu0 %v4499
      %6013 = vmatprep.subr.bf16.mxu0 %v4496
      %6014 = vmatpush2.bf16.msra.mxu0 %v4495
      %6015 = vmatprep.subr.bf16.mxu0 %v4492
      %6016 = vmatpush2.bf16.msra.mxu0 %v4491
      %6017 = vmatprep.subr.bf16.mxu0 %v4488
      %6018 = vmatpush2.bf16.msra.mxu0 %v4487
      %6019 = vmatprep.subr.bf16.mxu0 %v4484
      %6020 = vmatpush2.bf16.msra.mxu0 %v4483
      %6021 = vmatprep.subr.bf16.mxu0 %v4480
      %6022 = vmatpush2.bf16.msra.mxu0 %v4479
      %6023 = vmatprep.mubr.bf16.mxu0 %v1281
      %6024 = vmatmul.mubr.bf16.gmra.mxu0 %v1267
      %v6025 = vpop.f32.mrf.mxu0
      %v6026 = vadd.f32 %v5985, %v6025
      %v6027 = vpop.f32.mrf.mxu0
      %v6028 = vadd.f32 %v5987, %v6027
      %v6029 = vpop.f32.mrf.mxu0
      %v6030 = vpop.f32.mrf.mxu0
      %6031 = vdwg.mxu0
      %6032 = vmatprep.subr.bf16.mxu0 %v4540
      %6033 = vmatpush1.bf16.msra.mxu0 %v4539
      %6034 = vmatprep.subr.bf16.mxu0 %v4536
      %6035 = vmatpush1.bf16.msra.mxu0 %v4535
      %6036 = vmatprep.subr.bf16.mxu0 %v4532
      %6037 = vmatpush1.bf16.msra.mxu0 %v4531
      %6038 = vmatprep.subr.bf16.mxu0 %v4528
      %6039 = vmatpush1.bf16.msra.mxu0 %v4527
      %6040 = vmatprep.subr.bf16.mxu0 %v4524
      %6041 = vmatpush1.bf16.msra.mxu0 %v4523
      %6042 = vmatprep.subr.bf16.mxu0 %v4520
      %6043 = vmatpush1.bf16.msra.mxu0 %v4519
      %6044 = vmatprep.subr.bf16.mxu0 %v4516
      %6045 = vmatpush1.bf16.msra.mxu0 %v4515
      %6046 = vmatprep.subr.bf16.mxu0 %v4512
      %6047 = vmatpush1.bf16.msra.mxu0 %v4511
      %6048 = vmatprep.subr.bf16.mxu0 %v4572
      %6049 = vmatpush2.bf16.msra.mxu0 %v4571
      %6050 = vmatprep.subr.bf16.mxu0 %v4568
      %6051 = vmatpush2.bf16.msra.mxu0 %v4567
      %6052 = vmatprep.subr.bf16.mxu0 %v4564
      %6053 = vmatpush2.bf16.msra.mxu0 %v4563
      %6054 = vmatprep.subr.bf16.mxu0 %v4560
      %6055 = vmatpush2.bf16.msra.mxu0 %v4559
      %6056 = vmatprep.subr.bf16.mxu0 %v4556
      %6057 = vmatpush2.bf16.msra.mxu0 %v4555
      %6058 = vmatprep.subr.bf16.mxu0 %v4552
      %6059 = vmatpush2.bf16.msra.mxu0 %v4551
      %6060 = vmatprep.subr.bf16.mxu0 %v4548
      %6061 = vmatpush2.bf16.msra.mxu0 %v4547
      %6062 = vmatprep.subr.bf16.mxu0 %v4544
      %6063 = vmatpush2.bf16.msra.mxu0 %v4543
      %6064 = vmatprep.mubr.bf16.mxu0 %v1291
      %6065 = vmatmul.mubr.bf16.gmra.mxu0 %v1289
      %v6066 = vpop.f32.mrf.mxu0
      %v6067 = vadd.f32 %v6026, %v6066
      %v6068 = vpop.f32.mrf.mxu0
      %v6069 = vadd.f32 %v6028, %v6068
      %v6070 = vpop.f32.mrf.mxu0
      %v6071 = vpop.f32.mrf.mxu0
      %6072 = vdwg.mxu0
      %6073 = vmatprep.subr.bf16.mxu0 %v4604
      %6074 = vmatpush1.bf16.msra.mxu0 %v4603
      %6075 = vmatprep.subr.bf16.mxu0 %v4600
      %6076 = vmatpush1.bf16.msra.mxu0 %v4599
      %6077 = vmatprep.subr.bf16.mxu0 %v4596
      %6078 = vmatpush1.bf16.msra.mxu0 %v4595
      %6079 = vmatprep.subr.bf16.mxu0 %v4592
      %6080 = vmatpush1.bf16.msra.mxu0 %v4591
      %6081 = vmatprep.subr.bf16.mxu0 %v4588
      %6082 = vmatpush1.bf16.msra.mxu0 %v4587
      %6083 = vmatprep.subr.bf16.mxu0 %v4584
      %6084 = vmatpush1.bf16.msra.mxu0 %v4583
      %6085 = vmatprep.subr.bf16.mxu0 %v4580
      %6086 = vmatpush1.bf16.msra.mxu0 %v4579
      %6087 = vmatprep.subr.bf16.mxu0 %v4576
      %6088 = vmatpush1.bf16.msra.mxu0 %v4575
      %6089 = vmatprep.subr.bf16.mxu0 %v4636
      %6090 = vmatpush2.bf16.msra.mxu0 %v4635
      %6091 = vmatprep.subr.bf16.mxu0 %v4632
      %6092 = vmatpush2.bf16.msra.mxu0 %v4631
      %6093 = vmatprep.subr.bf16.mxu0 %v4628
      %6094 = vmatpush2.bf16.msra.mxu0 %v4627
      %6095 = vmatprep.subr.bf16.mxu0 %v4624
      %6096 = vmatpush2.bf16.msra.mxu0 %v4623
      %6097 = vmatprep.subr.bf16.mxu0 %v4620
      %6098 = vmatpush2.bf16.msra.mxu0 %v4619
      %6099 = vmatprep.subr.bf16.mxu0 %v4616
      %6100 = vmatpush2.bf16.msra.mxu0 %v4615
      %6101 = vmatprep.subr.bf16.mxu0 %v4612
      %6102 = vmatpush2.bf16.msra.mxu0 %v4611
      %6103 = vmatprep.subr.bf16.mxu0 %v4608
      %6104 = vmatpush2.bf16.msra.mxu0 %v4607
      %6105 = vmatprep.mubr.bf16.mxu0 %v1288
      %6106 = vmatmul.mubr.bf16.gmra.mxu0 %v1274
      %v6107 = vpop.f32.mrf.mxu0
      %v6108 = vadd.f32 %v6067, %v6107
      %v6109 = vpop.f32.mrf.mxu0
      %v6110 = vadd.f32 %v6069, %v6109
      %v6111 = vpop.f32.mrf.mxu0
      %v6112 = vpop.f32.mrf.mxu0
      %6113 = vdwg.mxu0
      %6114 = vmatprep.subr.bf16.mxu0 %v4668
      %6115 = vmatpush1.bf16.msra.mxu0 %v4667
      %6116 = vmatprep.subr.bf16.mxu0 %v4664
      %6117 = vmatpush1.bf16.msra.mxu0 %v4663
      %6118 = vmatprep.subr.bf16.mxu0 %v4660
      %6119 = vmatpush1.bf16.msra.mxu0 %v4659
      %6120 = vmatprep.subr.bf16.mxu0 %v4656
      %6121 = vmatpush1.bf16.msra.mxu0 %v4655
      %6122 = vmatprep.subr.bf16.mxu0 %v4652
      %6123 = vmatpush1.bf16.msra.mxu0 %v4651
      %6124 = vmatprep.subr.bf16.mxu0 %v4648
      %6125 = vmatpush1.bf16.msra.mxu0 %v4647
      %6126 = vmatprep.subr.bf16.mxu0 %v4644
      %6127 = vmatpush1.bf16.msra.mxu0 %v4643
      %6128 = vmatprep.subr.bf16.mxu0 %v4640
      %6129 = vmatpush1.bf16.msra.mxu0 %v4639
      %6130 = vmatprep.subr.bf16.mxu0 %v4700
      %6131 = vmatpush2.bf16.msra.mxu0 %v4699
      %6132 = vmatprep.subr.bf16.mxu0 %v4696
      %6133 = vmatpush2.bf16.msra.mxu0 %v4695
      %6134 = vmatprep.subr.bf16.mxu0 %v4692
      %6135 = vmatpush2.bf16.msra.mxu0 %v4691
      %6136 = vmatprep.subr.bf16.mxu0 %v4688
      %6137 = vmatpush2.bf16.msra.mxu0 %v4687
      %6138 = vmatprep.subr.bf16.mxu0 %v4684
      %6139 = vmatpush2.bf16.msra.mxu0 %v4683
      %6140 = vmatprep.subr.bf16.mxu0 %v4680
      %6141 = vmatpush2.bf16.msra.mxu0 %v4679
      %6142 = vmatprep.subr.bf16.mxu0 %v4676
      %6143 = vmatpush2.bf16.msra.mxu0 %v4675
      %6144 = vmatprep.subr.bf16.mxu0 %v4672
      %6145 = vmatpush2.bf16.msra.mxu0 %v4671
      %6146 = vmatprep.mubr.bf16.mxu0 %v1292
      %6147 = vmatmul.mubr.bf16.gmra.mxu0 %v1290
      %v6148 = vpop.f32.mrf.mxu0
      %v6149 = vadd.f32 %v6108, %v6148
      %v6150 = vpop.f32.mrf.mxu0
      %v6151 = vadd.f32 %v6110, %v6150
      %v6152 = vpop.f32.mrf.mxu0
      %v6153 = vpop.f32.mrf.mxu0
      %6154 = vdwg.mxu0
      %6155 = vmatprep.subr.bf16.mxu0 %v4732
      %6156 = vmatpush1.bf16.msra.mxu0 %v4731
      %6157 = vmatprep.subr.bf16.mxu0 %v4728
      %6158 = vmatpush1.bf16.msra.mxu0 %v4727
      %6159 = vmatprep.subr.bf16.mxu0 %v4724
      %6160 = vmatpush1.bf16.msra.mxu0 %v4723
      %6161 = vmatprep.subr.bf16.mxu0 %v4720
      %6162 = vmatpush1.bf16.msra.mxu0 %v4719
      %6163 = vmatprep.subr.bf16.mxu0 %v4716
      %6164 = vmatpush1.bf16.msra.mxu0 %v4715
      %6165 = vmatprep.subr.bf16.mxu0 %v4712
      %6166 = vmatpush1.bf16.msra.mxu0 %v4711
      %6167 = vmatprep.subr.bf16.mxu0 %v4708
      %6168 = vmatpush1.bf16.msra.mxu0 %v4707
      %6169 = vmatprep.subr.bf16.mxu0 %v4704
      %6170 = vmatpush1.bf16.msra.mxu0 %v4703
      %6171 = vmatprep.subr.bf16.mxu0 %v4764
      %6172 = vmatpush2.bf16.msra.mxu0 %v4763
      %6173 = vmatprep.subr.bf16.mxu0 %v4760
      %6174 = vmatpush2.bf16.msra.mxu0 %v4759
      %6175 = vmatprep.subr.bf16.mxu0 %v4756
      %6176 = vmatpush2.bf16.msra.mxu0 %v4755
      %6177 = vmatprep.subr.bf16.mxu0 %v4752
      %6178 = vmatpush2.bf16.msra.mxu0 %v4751
      %6179 = vmatprep.subr.bf16.mxu0 %v4748
      %6180 = vmatpush2.bf16.msra.mxu0 %v4747
      %6181 = vmatprep.subr.bf16.mxu0 %v4744
      %6182 = vmatpush2.bf16.msra.mxu0 %v4743
      %6183 = vmatprep.subr.bf16.mxu0 %v4740
      %6184 = vmatpush2.bf16.msra.mxu0 %v4739
      %6185 = vmatprep.subr.bf16.mxu0 %v4736
      %6186 = vmatpush2.bf16.msra.mxu0 %v4735
      %6187 = vmatprep.mubr.bf16.mxu0 %v1314
      %6188 = vmatmul.mubr.bf16.gmra.mxu0 %v1307
      %v6189 = vpop.f32.mrf.mxu0
      %v6190 = vadd.f32 %v6149, %v6189
      %v6191 = vpop.f32.mrf.mxu0
      %v6192 = vadd.f32 %v6151, %v6191
      %v6193 = vpop.f32.mrf.mxu0
      %v6194 = vpop.f32.mrf.mxu0
      %6195 = vdwg.mxu0
      %6196 = vmatprep.subr.bf16.mxu0 %v4796
      %6197 = vmatpush1.bf16.msra.mxu0 %v4795
      %6198 = vmatprep.subr.bf16.mxu0 %v4792
      %6199 = vmatpush1.bf16.msra.mxu0 %v4791
      %6200 = vmatprep.subr.bf16.mxu0 %v4788
      %6201 = vmatpush1.bf16.msra.mxu0 %v4787
      %6202 = vmatprep.subr.bf16.mxu0 %v4784
      %6203 = vmatpush1.bf16.msra.mxu0 %v4783
      %6204 = vmatprep.subr.bf16.mxu0 %v4780
      %6205 = vmatpush1.bf16.msra.mxu0 %v4779
      %6206 = vmatprep.subr.bf16.mxu0 %v4776
      %6207 = vmatpush1.bf16.msra.mxu0 %v4775
      %6208 = vmatprep.subr.bf16.mxu0 %v4772
      %6209 = vmatpush1.bf16.msra.mxu0 %v4771
      %6210 = vmatprep.subr.bf16.mxu0 %v4768
      %6211 = vmatpush1.bf16.msra.mxu0 %v4767
      %6212 = vmatprep.subr.bf16.mxu0 0
      %6213 = vmatpush2.bf16.msra.mxu0 0
      %6214 = vmatprep.subr.bf16.mxu0 0
      %6215 = vmatpush2.bf16.msra.mxu0 0
      %6216 = vmatprep.subr.bf16.mxu0 0
      %6217 = vmatpush2.bf16.msra.mxu0 0
      %6218 = vmatprep.subr.bf16.mxu0 0
      %6219 = vmatpush2.bf16.msra.mxu0 0
      %6220 = vmatprep.subr.bf16.mxu0 0
      %6221 = vmatpush2.bf16.msra.mxu0 0
      %6222 = vmatprep.subr.bf16.mxu0 0
      %6223 = vmatpush2.bf16.msra.mxu0 0
      %6224 = vmatprep.subr.bf16.mxu0 0
      %6225 = vmatpush2.bf16.msra.mxu0 0
      %6226 = vmatprep.subr.bf16.mxu0 0
      %6227 = vmatpush2.bf16.msra.mxu0 0
      %6228 = vmatprep.mubr.bf16.mxu0 0
      %6229 = vmatmul.mubr.bf16.gmra.mxu0 %v1315
      %v6230 = vpop.f32.mrf.mxu0
      %v6231 = vadd.f32 %v6190, %v6230
      %v6232 = vpop.f32.mrf.mxu0
      %v6233 = vadd.f32 %v6192, %v6232
      %v6234 = vpop.f32.mrf.mxu0
      %v6235 = vpop.f32.mrf.mxu0
      %6236 = vdwg.mxu0
      %6237 = vmatprep.subr.bf16.mxu0 %v3966
      %6238 = vmatpush1.bf16.msra.mxu0 %v3965
      %6239 = vmatprep.subr.bf16.mxu0 %v3962
      %6240 = vmatpush1.bf16.msra.mxu0 %v3961
      %6241 = vmatprep.subr.bf16.mxu0 %v3958
      %6242 = vmatpush1.bf16.msra.mxu0 %v3957
      %6243 = vmatprep.subr.bf16.mxu0 %v3954
      %6244 = vmatpush1.bf16.msra.mxu0 %v3953
      %6245 = vmatprep.subr.bf16.mxu0 %v3950
      %6246 = vmatpush1.bf16.msra.mxu0 %v3949
      %6247 = vmatprep.subr.bf16.mxu0 %v3946
      %6248 = vmatpush1.bf16.msra.mxu0 %v3945
      %6249 = vmatprep.subr.bf16.mxu0 %v3942
      %6250 = vmatpush1.bf16.msra.mxu0 %v3941
      %6251 = vmatprep.subr.bf16.mxu0 %v3938
      %6252 = vmatpush1.bf16.msra.mxu0 %v3937
      %6253 = vmatprep.subr.bf16.mxu0 %v3998
      %6254 = vmatpush2.bf16.msra.mxu0 %v3997
      %6255 = vmatprep.subr.bf16.mxu0 %v3994
      %6256 = vmatpush2.bf16.msra.mxu0 %v3993
      %6257 = vmatprep.subr.bf16.mxu0 %v3990
      %6258 = vmatpush2.bf16.msra.mxu0 %v3989
      %6259 = vmatprep.subr.bf16.mxu0 %v3986
      %6260 = vmatpush2.bf16.msra.mxu0 %v3985
      %6261 = vmatprep.subr.bf16.mxu0 %v3982
      %6262 = vmatpush2.bf16.msra.mxu0 %v3981
      %6263 = vmatprep.subr.bf16.mxu0 %v3978
      %6264 = vmatpush2.bf16.msra.mxu0 %v3977
      %6265 = vmatprep.subr.bf16.mxu0 %v3974
      %6266 = vmatpush2.bf16.msra.mxu0 %v3973
      %6267 = vmatprep.subr.bf16.mxu0 %v3970
      %6268 = vmatpush2.bf16.msra.mxu0 %v3969
      %6269 = vmatprep.mubr.bf16.mxu0 %v1183
      %6270 = vmatmul.mubr.bf16.gmra.mxu0 %v1169
      %v6271 = vpop.f32.mrf.mxu0
      %v6272 = vadd.f32 0.0, %v6271
      %v6273 = vpop.f32.mrf.mxu0
      %v6274 = vadd.f32 0.0, %v6273
      %v6275 = vpop.f32.mrf.mxu0
      %v6276 = vpop.f32.mrf.mxu0
      %6277 = vdwg.mxu0
      %6278 = vmatprep.subr.bf16.mxu0 %v4030
      %6279 = vmatpush1.bf16.msra.mxu0 %v4029
      %6280 = vmatprep.subr.bf16.mxu0 %v4026
      %6281 = vmatpush1.bf16.msra.mxu0 %v4025
      %6282 = vmatprep.subr.bf16.mxu0 %v4022
      %6283 = vmatpush1.bf16.msra.mxu0 %v4021
      %6284 = vmatprep.subr.bf16.mxu0 %v4018
      %6285 = vmatpush1.bf16.msra.mxu0 %v4017
      %6286 = vmatprep.subr.bf16.mxu0 %v4014
      %6287 = vmatpush1.bf16.msra.mxu0 %v4013
      %6288 = vmatprep.subr.bf16.mxu0 %v4010
      %6289 = vmatpush1.bf16.msra.mxu0 %v4009
      %6290 = vmatprep.subr.bf16.mxu0 %v4006
      %6291 = vmatpush1.bf16.msra.mxu0 %v4005
      %6292 = vmatprep.subr.bf16.mxu0 %v4002
      %6293 = vmatpush1.bf16.msra.mxu0 %v4001
      %6294 = vmatprep.subr.bf16.mxu0 %v4062
      %6295 = vmatpush2.bf16.msra.mxu0 %v4061
      %6296 = vmatprep.subr.bf16.mxu0 %v4058
      %6297 = vmatpush2.bf16.msra.mxu0 %v4057
      %6298 = vmatprep.subr.bf16.mxu0 %v4054
      %6299 = vmatpush2.bf16.msra.mxu0 %v4053
      %6300 = vmatprep.subr.bf16.mxu0 %v4050
      %6301 = vmatpush2.bf16.msra.mxu0 %v4049
      %6302 = vmatprep.subr.bf16.mxu0 %v4046
      %6303 = vmatpush2.bf16.msra.mxu0 %v4045
      %6304 = vmatprep.subr.bf16.mxu0 %v4042
      %6305 = vmatpush2.bf16.msra.mxu0 %v4041
      %6306 = vmatprep.subr.bf16.mxu0 %v4038
      %6307 = vmatpush2.bf16.msra.mxu0 %v4037
      %6308 = vmatprep.subr.bf16.mxu0 %v4034
      %6309 = vmatpush2.bf16.msra.mxu0 %v4033
      %6310 = vmatprep.mubr.bf16.mxu0 %v1193
      %6311 = vmatmul.mubr.bf16.gmra.mxu0 %v1191
      %v6312 = vpop.f32.mrf.mxu0
      %v6313 = vadd.f32 %v6272, %v6312
      %v6314 = vpop.f32.mrf.mxu0
      %v6315 = vadd.f32 %v6274, %v6314
      %v6316 = vpop.f32.mrf.mxu0
      %v6317 = vpop.f32.mrf.mxu0
      %6318 = vdwg.mxu0
      %6319 = vmatprep.subr.bf16.mxu0 %v4094
      %6320 = vmatpush1.bf16.msra.mxu0 %v4093
      %6321 = vmatprep.subr.bf16.mxu0 %v4090
      %6322 = vmatpush1.bf16.msra.mxu0 %v4089
      %6323 = vmatprep.subr.bf16.mxu0 %v4086
      %6324 = vmatpush1.bf16.msra.mxu0 %v4085
      %6325 = vmatprep.subr.bf16.mxu0 %v4082
      %6326 = vmatpush1.bf16.msra.mxu0 %v4081
      %6327 = vmatprep.subr.bf16.mxu0 %v4078
      %6328 = vmatpush1.bf16.msra.mxu0 %v4077
      %6329 = vmatprep.subr.bf16.mxu0 %v4074
      %6330 = vmatpush1.bf16.msra.mxu0 %v4073
      %6331 = vmatprep.subr.bf16.mxu0 %v4070
      %6332 = vmatpush1.bf16.msra.mxu0 %v4069
      %6333 = vmatprep.subr.bf16.mxu0 %v4066
      %6334 = vmatpush1.bf16.msra.mxu0 %v4065
      %6335 = vmatprep.subr.bf16.mxu0 %v4126
      %6336 = vmatpush2.bf16.msra.mxu0 %v4125
      %6337 = vmatprep.subr.bf16.mxu0 %v4122
      %6338 = vmatpush2.bf16.msra.mxu0 %v4121
      %6339 = vmatprep.subr.bf16.mxu0 %v4118
      %6340 = vmatpush2.bf16.msra.mxu0 %v4117
      %6341 = vmatprep.subr.bf16.mxu0 %v4114
      %6342 = vmatpush2.bf16.msra.mxu0 %v4113
      %6343 = vmatprep.subr.bf16.mxu0 %v4110
      %6344 = vmatpush2.bf16.msra.mxu0 %v4109
      %6345 = vmatprep.subr.bf16.mxu0 %v4106
      %6346 = vmatpush2.bf16.msra.mxu0 %v4105
      %6347 = vmatprep.subr.bf16.mxu0 %v4102
      %6348 = vmatpush2.bf16.msra.mxu0 %v4101
      %6349 = vmatprep.subr.bf16.mxu0 %v4098
      %6350 = vmatpush2.bf16.msra.mxu0 %v4097
      %6351 = vmatprep.mubr.bf16.mxu0 %v1190
      %6352 = vmatmul.mubr.bf16.gmra.mxu0 %v1176
      %v6353 = vpop.f32.mrf.mxu0
      %v6354 = vadd.f32 %v6313, %v6353
      %v6355 = vpop.f32.mrf.mxu0
      %v6356 = vadd.f32 %v6315, %v6355
      %v6357 = vpop.f32.mrf.mxu0
      %v6358 = vpop.f32.mrf.mxu0
      %6359 = vdwg.mxu0
      %6360 = vmatprep.subr.bf16.mxu0 %v4158
      %6361 = vmatpush1.bf16.msra.mxu0 %v4157
      %6362 = vmatprep.subr.bf16.mxu0 %v4154
      %6363 = vmatpush1.bf16.msra.mxu0 %v4153
      %6364 = vmatprep.subr.bf16.mxu0 %v4150
      %6365 = vmatpush1.bf16.msra.mxu0 %v4149
      %6366 = vmatprep.subr.bf16.mxu0 %v4146
      %6367 = vmatpush1.bf16.msra.mxu0 %v4145
      %6368 = vmatprep.subr.bf16.mxu0 %v4142
      %6369 = vmatpush1.bf16.msra.mxu0 %v4141
      %6370 = vmatprep.subr.bf16.mxu0 %v4138
      %6371 = vmatpush1.bf16.msra.mxu0 %v4137
      %6372 = vmatprep.subr.bf16.mxu0 %v4134
      %6373 = vmatpush1.bf16.msra.mxu0 %v4133
      %6374 = vmatprep.subr.bf16.mxu0 %v4130
      %6375 = vmatpush1.bf16.msra.mxu0 %v4129
      %6376 = vmatprep.subr.bf16.mxu0 %v4190
      %6377 = vmatpush2.bf16.msra.mxu0 %v4189
      %6378 = vmatprep.subr.bf16.mxu0 %v4186
      %6379 = vmatpush2.bf16.msra.mxu0 %v4185
      %6380 = vmatprep.subr.bf16.mxu0 %v4182
      %6381 = vmatpush2.bf16.msra.mxu0 %v4181
      %6382 = vmatprep.subr.bf16.mxu0 %v4178
      %6383 = vmatpush2.bf16.msra.mxu0 %v4177
      %6384 = vmatprep.subr.bf16.mxu0 %v4174
      %6385 = vmatpush2.bf16.msra.mxu0 %v4173
      %6386 = vmatprep.subr.bf16.mxu0 %v4170
      %6387 = vmatpush2.bf16.msra.mxu0 %v4169
      %6388 = vmatprep.subr.bf16.mxu0 %v4166
      %6389 = vmatpush2.bf16.msra.mxu0 %v4165
      %6390 = vmatprep.subr.bf16.mxu0 %v4162
      %6391 = vmatpush2.bf16.msra.mxu0 %v4161
      %6392 = vmatprep.mubr.bf16.mxu0 %v1194
      %6393 = vmatmul.mubr.bf16.gmra.mxu0 %v1192
      %v6394 = vpop.f32.mrf.mxu0
      %v6395 = vadd.f32 %v6354, %v6394
      %v6396 = vpop.f32.mrf.mxu0
      %v6397 = vadd.f32 %v6356, %v6396
      %v6398 = vpop.f32.mrf.mxu0
      %v6399 = vpop.f32.mrf.mxu0
      %6400 = vdwg.mxu0
      %6401 = vmatprep.subr.bf16.mxu0 %v4222
      %6402 = vmatpush1.bf16.msra.mxu0 %v4221
      %6403 = vmatprep.subr.bf16.mxu0 %v4218
      %6404 = vmatpush1.bf16.msra.mxu0 %v4217
      %6405 = vmatprep.subr.bf16.mxu0 %v4214
      %6406 = vmatpush1.bf16.msra.mxu0 %v4213
      %6407 = vmatprep.subr.bf16.mxu0 %v4210
      %6408 = vmatpush1.bf16.msra.mxu0 %v4209
      %6409 = vmatprep.subr.bf16.mxu0 %v4206
      %6410 = vmatpush1.bf16.msra.mxu0 %v4205
      %6411 = vmatprep.subr.bf16.mxu0 %v4202
      %6412 = vmatpush1.bf16.msra.mxu0 %v4201
      %6413 = vmatprep.subr.bf16.mxu0 %v4198
      %6414 = vmatpush1.bf16.msra.mxu0 %v4197
      %6415 = vmatprep.subr.bf16.mxu0 %v4194
      %6416 = vmatpush1.bf16.msra.mxu0 %v4193
      %6417 = vmatprep.subr.bf16.mxu0 %v4254
      %6418 = vmatpush2.bf16.msra.mxu0 %v4253
      %6419 = vmatprep.subr.bf16.mxu0 %v4250
      %6420 = vmatpush2.bf16.msra.mxu0 %v4249
      %6421 = vmatprep.subr.bf16.mxu0 %v4246
      %6422 = vmatpush2.bf16.msra.mxu0 %v4245
      %6423 = vmatprep.subr.bf16.mxu0 %v4242
      %6424 = vmatpush2.bf16.msra.mxu0 %v4241
      %6425 = vmatprep.subr.bf16.mxu0 %v4238
      %6426 = vmatpush2.bf16.msra.mxu0 %v4237
      %6427 = vmatprep.subr.bf16.mxu0 %v4234
      %6428 = vmatpush2.bf16.msra.mxu0 %v4233
      %6429 = vmatprep.subr.bf16.mxu0 %v4230
      %6430 = vmatpush2.bf16.msra.mxu0 %v4229
      %6431 = vmatprep.subr.bf16.mxu0 %v4226
      %6432 = vmatpush2.bf16.msra.mxu0 %v4225
      %6433 = vmatprep.mubr.bf16.mxu0 %v1232
      %6434 = vmatmul.mubr.bf16.gmra.mxu0 %v1218
      %v6435 = vpop.f32.mrf.mxu0
      %v6436 = vadd.f32 %v6395, %v6435
      %v6437 = vpop.f32.mrf.mxu0
      %v6438 = vadd.f32 %v6397, %v6437
      %v6439 = vpop.f32.mrf.mxu0
      %v6440 = vpop.f32.mrf.mxu0
      %6441 = vdwg.mxu0
      %6442 = vmatprep.subr.bf16.mxu0 %v4286
      %6443 = vmatpush1.bf16.msra.mxu0 %v4285
      %6444 = vmatprep.subr.bf16.mxu0 %v4282
      %6445 = vmatpush1.bf16.msra.mxu0 %v4281
      %6446 = vmatprep.subr.bf16.mxu0 %v4278
      %6447 = vmatpush1.bf16.msra.mxu0 %v4277
      %6448 = vmatprep.subr.bf16.mxu0 %v4274
      %6449 = vmatpush1.bf16.msra.mxu0 %v4273
      %6450 = vmatprep.subr.bf16.mxu0 %v4270
      %6451 = vmatpush1.bf16.msra.mxu0 %v4269
      %6452 = vmatprep.subr.bf16.mxu0 %v4266
      %6453 = vmatpush1.bf16.msra.mxu0 %v4265
      %6454 = vmatprep.subr.bf16.mxu0 %v4262
      %6455 = vmatpush1.bf16.msra.mxu0 %v4261
      %6456 = vmatprep.subr.bf16.mxu0 %v4258
      %6457 = vmatpush1.bf16.msra.mxu0 %v4257
      %6458 = vmatprep.subr.bf16.mxu0 %v4318
      %6459 = vmatpush2.bf16.msra.mxu0 %v4317
      %6460 = vmatprep.subr.bf16.mxu0 %v4314
      %6461 = vmatpush2.bf16.msra.mxu0 %v4313
      %6462 = vmatprep.subr.bf16.mxu0 %v4310
      %6463 = vmatpush2.bf16.msra.mxu0 %v4309
      %6464 = vmatprep.subr.bf16.mxu0 %v4306
      %6465 = vmatpush2.bf16.msra.mxu0 %v4305
      %6466 = vmatprep.subr.bf16.mxu0 %v4302
      %6467 = vmatpush2.bf16.msra.mxu0 %v4301
      %6468 = vmatprep.subr.bf16.mxu0 %v4298
      %6469 = vmatpush2.bf16.msra.mxu0 %v4297
      %6470 = vmatprep.subr.bf16.mxu0 %v4294
      %6471 = vmatpush2.bf16.msra.mxu0 %v4293
      %6472 = vmatprep.subr.bf16.mxu0 %v4290
      %6473 = vmatpush2.bf16.msra.mxu0 %v4289
      %6474 = vmatprep.mubr.bf16.mxu0 %v1242
      %6475 = vmatmul.mubr.bf16.gmra.mxu0 %v1240
      %v6476 = vpop.f32.mrf.mxu0
      %v6477 = vadd.f32 %v6436, %v6476
      %v6478 = vpop.f32.mrf.mxu0
      %v6479 = vadd.f32 %v6438, %v6478
      %v6480 = vpop.f32.mrf.mxu0
      %v6481 = vpop.f32.mrf.mxu0
      %6482 = vdwg.mxu0
      %6483 = vmatprep.subr.bf16.mxu0 %v4350
      %6484 = vmatpush1.bf16.msra.mxu0 %v4349
      %6485 = vmatprep.subr.bf16.mxu0 %v4346
      %6486 = vmatpush1.bf16.msra.mxu0 %v4345
      %6487 = vmatprep.subr.bf16.mxu0 %v4342
      %6488 = vmatpush1.bf16.msra.mxu0 %v4341
      %6489 = vmatprep.subr.bf16.mxu0 %v4338
      %6490 = vmatpush1.bf16.msra.mxu0 %v4337
      %6491 = vmatprep.subr.bf16.mxu0 %v4334
      %6492 = vmatpush1.bf16.msra.mxu0 %v4333
      %6493 = vmatprep.subr.bf16.mxu0 %v4330
      %6494 = vmatpush1.bf16.msra.mxu0 %v4329
      %6495 = vmatprep.subr.bf16.mxu0 %v4326
      %6496 = vmatpush1.bf16.msra.mxu0 %v4325
      %6497 = vmatprep.subr.bf16.mxu0 %v4322
      %6498 = vmatpush1.bf16.msra.mxu0 %v4321
      %6499 = vmatprep.subr.bf16.mxu0 %v4382
      %6500 = vmatpush2.bf16.msra.mxu0 %v4381
      %6501 = vmatprep.subr.bf16.mxu0 %v4378
      %6502 = vmatpush2.bf16.msra.mxu0 %v4377
      %6503 = vmatprep.subr.bf16.mxu0 %v4374
      %6504 = vmatpush2.bf16.msra.mxu0 %v4373
      %6505 = vmatprep.subr.bf16.mxu0 %v4370
      %6506 = vmatpush2.bf16.msra.mxu0 %v4369
      %6507 = vmatprep.subr.bf16.mxu0 %v4366
      %6508 = vmatpush2.bf16.msra.mxu0 %v4365
      %6509 = vmatprep.subr.bf16.mxu0 %v4362
      %6510 = vmatpush2.bf16.msra.mxu0 %v4361
      %6511 = vmatprep.subr.bf16.mxu0 %v4358
      %6512 = vmatpush2.bf16.msra.mxu0 %v4357
      %6513 = vmatprep.subr.bf16.mxu0 %v4354
      %6514 = vmatpush2.bf16.msra.mxu0 %v4353
      %6515 = vmatprep.mubr.bf16.mxu0 %v1239
      %6516 = vmatmul.mubr.bf16.gmra.mxu0 %v1225
      %v6517 = vpop.f32.mrf.mxu0
      %v6518 = vadd.f32 %v6477, %v6517
      %v6519 = vpop.f32.mrf.mxu0
      %v6520 = vadd.f32 %v6479, %v6519
      %v6521 = vpop.f32.mrf.mxu0
      %v6522 = vpop.f32.mrf.mxu0
      %6523 = vdwg.mxu0
      %6524 = vmatprep.subr.bf16.mxu0 %v4414
      %6525 = vmatpush1.bf16.msra.mxu0 %v4413
      %6526 = vmatprep.subr.bf16.mxu0 %v4410
      %6527 = vmatpush1.bf16.msra.mxu0 %v4409
      %6528 = vmatprep.subr.bf16.mxu0 %v4406
      %6529 = vmatpush1.bf16.msra.mxu0 %v4405
      %6530 = vmatprep.subr.bf16.mxu0 %v4402
      %6531 = vmatpush1.bf16.msra.mxu0 %v4401
      %6532 = vmatprep.subr.bf16.mxu0 %v4398
      %6533 = vmatpush1.bf16.msra.mxu0 %v4397
      %6534 = vmatprep.subr.bf16.mxu0 %v4394
      %6535 = vmatpush1.bf16.msra.mxu0 %v4393
      %6536 = vmatprep.subr.bf16.mxu0 %v4390
      %6537 = vmatpush1.bf16.msra.mxu0 %v4389
      %6538 = vmatprep.subr.bf16.mxu0 %v4386
      %6539 = vmatpush1.bf16.msra.mxu0 %v4385
      %6540 = vmatprep.subr.bf16.mxu0 %v4446
      %6541 = vmatpush2.bf16.msra.mxu0 %v4445
      %6542 = vmatprep.subr.bf16.mxu0 %v4442
      %6543 = vmatpush2.bf16.msra.mxu0 %v4441
      %6544 = vmatprep.subr.bf16.mxu0 %v4438
      %6545 = vmatpush2.bf16.msra.mxu0 %v4437
      %6546 = vmatprep.subr.bf16.mxu0 %v4434
      %6547 = vmatpush2.bf16.msra.mxu0 %v4433
      %6548 = vmatprep.subr.bf16.mxu0 %v4430
      %6549 = vmatpush2.bf16.msra.mxu0 %v4429
      %6550 = vmatprep.subr.bf16.mxu0 %v4426
      %6551 = vmatpush2.bf16.msra.mxu0 %v4425
      %6552 = vmatprep.subr.bf16.mxu0 %v4422
      %6553 = vmatpush2.bf16.msra.mxu0 %v4421
      %6554 = vmatprep.subr.bf16.mxu0 %v4418
      %6555 = vmatpush2.bf16.msra.mxu0 %v4417
      %6556 = vmatprep.mubr.bf16.mxu0 %v1243
      %6557 = vmatmul.mubr.bf16.gmra.mxu0 %v1241
      %v6558 = vpop.f32.mrf.mxu0
      %v6559 = vadd.f32 %v6518, %v6558
      %v6560 = vpop.f32.mrf.mxu0
      %v6561 = vadd.f32 %v6520, %v6560
      %v6562 = vpop.f32.mrf.mxu0
      %v6563 = vpop.f32.mrf.mxu0
      %6564 = vdwg.mxu0
      %6565 = vmatprep.subr.bf16.mxu0 %v4478
      %6566 = vmatpush1.bf16.msra.mxu0 %v4477
      %6567 = vmatprep.subr.bf16.mxu0 %v4474
      %6568 = vmatpush1.bf16.msra.mxu0 %v4473
      %6569 = vmatprep.subr.bf16.mxu0 %v4470
      %6570 = vmatpush1.bf16.msra.mxu0 %v4469
      %6571 = vmatprep.subr.bf16.mxu0 %v4466
      %6572 = vmatpush1.bf16.msra.mxu0 %v4465
      %6573 = vmatprep.subr.bf16.mxu0 %v4462
      %6574 = vmatpush1.bf16.msra.mxu0 %v4461
      %6575 = vmatprep.subr.bf16.mxu0 %v4458
      %6576 = vmatpush1.bf16.msra.mxu0 %v4457
      %6577 = vmatprep.subr.bf16.mxu0 %v4454
      %6578 = vmatpush1.bf16.msra.mxu0 %v4453
      %6579 = vmatprep.subr.bf16.mxu0 %v4450
      %6580 = vmatpush1.bf16.msra.mxu0 %v4449
      %6581 = vmatprep.subr.bf16.mxu0 %v4510
      %6582 = vmatpush2.bf16.msra.mxu0 %v4509
      %6583 = vmatprep.subr.bf16.mxu0 %v4506
      %6584 = vmatpush2.bf16.msra.mxu0 %v4505
      %6585 = vmatprep.subr.bf16.mxu0 %v4502
      %6586 = vmatpush2.bf16.msra.mxu0 %v4501
      %6587 = vmatprep.subr.bf16.mxu0 %v4498
      %6588 = vmatpush2.bf16.msra.mxu0 %v4497
      %6589 = vmatprep.subr.bf16.mxu0 %v4494
      %6590 = vmatpush2.bf16.msra.mxu0 %v4493
      %6591 = vmatprep.subr.bf16.mxu0 %v4490
      %6592 = vmatpush2.bf16.msra.mxu0 %v4489
      %6593 = vmatprep.subr.bf16.mxu0 %v4486
      %6594 = vmatpush2.bf16.msra.mxu0 %v4485
      %6595 = vmatprep.subr.bf16.mxu0 %v4482
      %6596 = vmatpush2.bf16.msra.mxu0 %v4481
      %6597 = vmatprep.mubr.bf16.mxu0 %v1281
      %6598 = vmatmul.mubr.bf16.gmra.mxu0 %v1267
      %v6599 = vpop.f32.mrf.mxu0
      %v6600 = vadd.f32 %v6559, %v6599
      %v6601 = vpop.f32.mrf.mxu0
      %v6602 = vadd.f32 %v6561, %v6601
      %v6603 = vpop.f32.mrf.mxu0
      %v6604 = vpop.f32.mrf.mxu0
      %6605 = vdwg.mxu0
      %6606 = vmatprep.subr.bf16.mxu0 %v4542
      %6607 = vmatpush1.bf16.msra.mxu0 %v4541
      %6608 = vmatprep.subr.bf16.mxu0 %v4538
      %6609 = vmatpush1.bf16.msra.mxu0 %v4537
      %6610 = vmatprep.subr.bf16.mxu0 %v4534
      %6611 = vmatpush1.bf16.msra.mxu0 %v4533
      %6612 = vmatprep.subr.bf16.mxu0 %v4530
      %6613 = vmatpush1.bf16.msra.mxu0 %v4529
      %6614 = vmatprep.subr.bf16.mxu0 %v4526
      %6615 = vmatpush1.bf16.msra.mxu0 %v4525
      %6616 = vmatprep.subr.bf16.mxu0 %v4522
      %6617 = vmatpush1.bf16.msra.mxu0 %v4521
      %6618 = vmatprep.subr.bf16.mxu0 %v4518
      %6619 = vmatpush1.bf16.msra.mxu0 %v4517
      %6620 = vmatprep.subr.bf16.mxu0 %v4514
      %6621 = vmatpush1.bf16.msra.mxu0 %v4513
      %6622 = vmatprep.subr.bf16.mxu0 %v4574
      %6623 = vmatpush2.bf16.msra.mxu0 %v4573
      %6624 = vmatprep.subr.bf16.mxu0 %v4570
      %6625 = vmatpush2.bf16.msra.mxu0 %v4569
      %6626 = vmatprep.subr.bf16.mxu0 %v4566
      %6627 = vmatpush2.bf16.msra.mxu0 %v4565
      %6628 = vmatprep.subr.bf16.mxu0 %v4562
      %6629 = vmatpush2.bf16.msra.mxu0 %v4561
      %6630 = vmatprep.subr.bf16.mxu0 %v4558
      %6631 = vmatpush2.bf16.msra.mxu0 %v4557
      %6632 = vmatprep.subr.bf16.mxu0 %v4554
      %6633 = vmatpush2.bf16.msra.mxu0 %v4553
      %6634 = vmatprep.subr.bf16.mxu0 %v4550
      %6635 = vmatpush2.bf16.msra.mxu0 %v4549
      %6636 = vmatprep.subr.bf16.mxu0 %v4546
      %6637 = vmatpush2.bf16.msra.mxu0 %v4545
      %6638 = vmatprep.mubr.bf16.mxu0 %v1291
      %6639 = vmatmul.mubr.bf16.gmra.mxu0 %v1289
      %v6640 = vpop.f32.mrf.mxu0
      %v6641 = vadd.f32 %v6600, %v6640
      %v6642 = vpop.f32.mrf.mxu0
      %v6643 = vadd.f32 %v6602, %v6642
      %v6644 = vpop.f32.mrf.mxu0
      %v6645 = vpop.f32.mrf.mxu0
      %6646 = vdwg.mxu0
      %6647 = vmatprep.subr.bf16.mxu0 %v4606
      %6648 = vmatpush1.bf16.msra.mxu0 %v4605
      %6649 = vmatprep.subr.bf16.mxu0 %v4602
      %6650 = vmatpush1.bf16.msra.mxu0 %v4601
      %6651 = vmatprep.subr.bf16.mxu0 %v4598
      %6652 = vmatpush1.bf16.msra.mxu0 %v4597
      %6653 = vmatprep.subr.bf16.mxu0 %v4594
      %6654 = vmatpush1.bf16.msra.mxu0 %v4593
      %6655 = vmatprep.subr.bf16.mxu0 %v4590
      %6656 = vmatpush1.bf16.msra.mxu0 %v4589
      %6657 = vmatprep.subr.bf16.mxu0 %v4586
      %6658 = vmatpush1.bf16.msra.mxu0 %v4585
      %6659 = vmatprep.subr.bf16.mxu0 %v4582
      %6660 = vmatpush1.bf16.msra.mxu0 %v4581
      %6661 = vmatprep.subr.bf16.mxu0 %v4578
      %6662 = vmatpush1.bf16.msra.mxu0 %v4577
      %6663 = vmatprep.subr.bf16.mxu0 %v4638
      %6664 = vmatpush2.bf16.msra.mxu0 %v4637
      %6665 = vmatprep.subr.bf16.mxu0 %v4634
      %6666 = vmatpush2.bf16.msra.mxu0 %v4633
      %6667 = vmatprep.subr.bf16.mxu0 %v4630
      %6668 = vmatpush2.bf16.msra.mxu0 %v4629
      %6669 = vmatprep.subr.bf16.mxu0 %v4626
      %6670 = vmatpush2.bf16.msra.mxu0 %v4625
      %6671 = vmatprep.subr.bf16.mxu0 %v4622
      %6672 = vmatpush2.bf16.msra.mxu0 %v4621
      %6673 = vmatprep.subr.bf16.mxu0 %v4618
      %6674 = vmatpush2.bf16.msra.mxu0 %v4617
      %6675 = vmatprep.subr.bf16.mxu0 %v4614
      %6676 = vmatpush2.bf16.msra.mxu0 %v4613
      %6677 = vmatprep.subr.bf16.mxu0 %v4610
      %6678 = vmatpush2.bf16.msra.mxu0 %v4609
      %6679 = vmatprep.mubr.bf16.mxu0 %v1288
      %6680 = vmatmul.mubr.bf16.gmra.mxu0 %v1274
      %v6681 = vpop.f32.mrf.mxu0
      %v6682 = vadd.f32 %v6641, %v6681
      %v6683 = vpop.f32.mrf.mxu0
      %v6684 = vadd.f32 %v6643, %v6683
      %v6685 = vpop.f32.mrf.mxu0
      %v6686 = vpop.f32.mrf.mxu0
      %6687 = vdwg.mxu0
      %6688 = vmatprep.subr.bf16.mxu0 %v4670
      %6689 = vmatpush1.bf16.msra.mxu0 %v4669
      %6690 = vmatprep.subr.bf16.mxu0 %v4666
      %6691 = vmatpush1.bf16.msra.mxu0 %v4665
      %6692 = vmatprep.subr.bf16.mxu0 %v4662
      %6693 = vmatpush1.bf16.msra.mxu0 %v4661
      %6694 = vmatprep.subr.bf16.mxu0 %v4658
      %6695 = vmatpush1.bf16.msra.mxu0 %v4657
      %6696 = vmatprep.subr.bf16.mxu0 %v4654
      %6697 = vmatpush1.bf16.msra.mxu0 %v4653
      %6698 = vmatprep.subr.bf16.mxu0 %v4650
      %6699 = vmatpush1.bf16.msra.mxu0 %v4649
      %6700 = vmatprep.subr.bf16.mxu0 %v4646
      %6701 = vmatpush1.bf16.msra.mxu0 %v4645
      %6702 = vmatprep.subr.bf16.mxu0 %v4642
      %6703 = vmatpush1.bf16.msra.mxu0 %v4641
      %6704 = vmatprep.subr.bf16.mxu0 %v4702
      %6705 = vmatpush2.bf16.msra.mxu0 %v4701
      %6706 = vmatprep.subr.bf16.mxu0 %v4698
      %6707 = vmatpush2.bf16.msra.mxu0 %v4697
      %6708 = vmatprep.subr.bf16.mxu0 %v4694
      %6709 = vmatpush2.bf16.msra.mxu0 %v4693
      %6710 = vmatprep.subr.bf16.mxu0 %v4690
      %6711 = vmatpush2.bf16.msra.mxu0 %v4689
      %6712 = vmatprep.subr.bf16.mxu0 %v4686
      %6713 = vmatpush2.bf16.msra.mxu0 %v4685
      %6714 = vmatprep.subr.bf16.mxu0 %v4682
      %6715 = vmatpush2.bf16.msra.mxu0 %v4681
      %6716 = vmatprep.subr.bf16.mxu0 %v4678
      %6717 = vmatpush2.bf16.msra.mxu0 %v4677
      %6718 = vmatprep.subr.bf16.mxu0 %v4674
      %6719 = vmatpush2.bf16.msra.mxu0 %v4673
      %6720 = vmatprep.mubr.bf16.mxu0 %v1292
      %6721 = vmatmul.mubr.bf16.gmra.mxu0 %v1290
      %v6722 = vpop.f32.mrf.mxu0
      %v6723 = vadd.f32 %v6682, %v6722
      %v6724 = vpop.f32.mrf.mxu0
      %v6725 = vadd.f32 %v6684, %v6724
      %v6726 = vpop.f32.mrf.mxu0
      %v6727 = vpop.f32.mrf.mxu0
      %6728 = vdwg.mxu0
      %6729 = vmatprep.subr.bf16.mxu0 %v4734
      %6730 = vmatpush1.bf16.msra.mxu0 %v4733
      %6731 = vmatprep.subr.bf16.mxu0 %v4730
      %6732 = vmatpush1.bf16.msra.mxu0 %v4729
      %6733 = vmatprep.subr.bf16.mxu0 %v4726
      %6734 = vmatpush1.bf16.msra.mxu0 %v4725
      %6735 = vmatprep.subr.bf16.mxu0 %v4722
      %6736 = vmatpush1.bf16.msra.mxu0 %v4721
      %6737 = vmatprep.subr.bf16.mxu0 %v4718
      %6738 = vmatpush1.bf16.msra.mxu0 %v4717
      %6739 = vmatprep.subr.bf16.mxu0 %v4714
      %6740 = vmatpush1.bf16.msra.mxu0 %v4713
      %6741 = vmatprep.subr.bf16.mxu0 %v4710
      %6742 = vmatpush1.bf16.msra.mxu0 %v4709
      %6743 = vmatprep.subr.bf16.mxu0 %v4706
      %6744 = vmatpush1.bf16.msra.mxu0 %v4705
      %6745 = vmatprep.subr.bf16.mxu0 %v4766
      %6746 = vmatpush2.bf16.msra.mxu0 %v4765
      %6747 = vmatprep.subr.bf16.mxu0 %v4762
      %6748 = vmatpush2.bf16.msra.mxu0 %v4761
      %6749 = vmatprep.subr.bf16.mxu0 %v4758
      %6750 = vmatpush2.bf16.msra.mxu0 %v4757
      %6751 = vmatprep.subr.bf16.mxu0 %v4754
      %6752 = vmatpush2.bf16.msra.mxu0 %v4753
      %6753 = vmatprep.subr.bf16.mxu0 %v4750
      %6754 = vmatpush2.bf16.msra.mxu0 %v4749
      %6755 = vmatprep.subr.bf16.mxu0 %v4746
      %6756 = vmatpush2.bf16.msra.mxu0 %v4745
      %6757 = vmatprep.subr.bf16.mxu0 %v4742
      %6758 = vmatpush2.bf16.msra.mxu0 %v4741
      %6759 = vmatprep.subr.bf16.mxu0 %v4738
      %6760 = vmatpush2.bf16.msra.mxu0 %v4737
      %6761 = vmatprep.mubr.bf16.mxu0 %v1314
      %6762 = vmatmul.mubr.bf16.gmra.mxu0 %v1307
      %v6763 = vpop.f32.mrf.mxu0
      %v6764 = vadd.f32 %v6723, %v6763
      %v6765 = vpop.f32.mrf.mxu0
      %v6766 = vadd.f32 %v6725, %v6765
      %v6767 = vpop.f32.mrf.mxu0
      %v6768 = vpop.f32.mrf.mxu0
      %6769 = vdwg.mxu0
      %6770 = vmatprep.subr.bf16.mxu0 %v4798
      %6771 = vmatpush1.bf16.msra.mxu0 %v4797
      %6772 = vmatprep.subr.bf16.mxu0 %v4794
      %6773 = vmatpush1.bf16.msra.mxu0 %v4793
      %6774 = vmatprep.subr.bf16.mxu0 %v4790
      %6775 = vmatpush1.bf16.msra.mxu0 %v4789
      %6776 = vmatprep.subr.bf16.mxu0 %v4786
      %6777 = vmatpush1.bf16.msra.mxu0 %v4785
      %6778 = vmatprep.subr.bf16.mxu0 %v4782
      %6779 = vmatpush1.bf16.msra.mxu0 %v4781
      %6780 = vmatprep.subr.bf16.mxu0 %v4778
      %6781 = vmatpush1.bf16.msra.mxu0 %v4777
      %6782 = vmatprep.subr.bf16.mxu0 %v4774
      %6783 = vmatpush1.bf16.msra.mxu0 %v4773
      %6784 = vmatprep.subr.bf16.mxu0 %v4770
      %6785 = vmatpush1.bf16.msra.mxu0 %v4769
      %6786 = vmatprep.subr.bf16.mxu0 0
      %6787 = vmatpush2.bf16.msra.mxu0 0
      %6788 = vmatprep.subr.bf16.mxu0 0
      %6789 = vmatpush2.bf16.msra.mxu0 0
      %6790 = vmatprep.subr.bf16.mxu0 0
      %6791 = vmatpush2.bf16.msra.mxu0 0
      %6792 = vmatprep.subr.bf16.mxu0 0
      %6793 = vmatpush2.bf16.msra.mxu0 0
      %6794 = vmatprep.subr.bf16.mxu0 0
      %6795 = vmatpush2.bf16.msra.mxu0 0
      %6796 = vmatprep.subr.bf16.mxu0 0
      %6797 = vmatpush2.bf16.msra.mxu0 0
      %6798 = vmatprep.subr.bf16.mxu0 0
      %6799 = vmatpush2.bf16.msra.mxu0 0
      %6800 = vmatprep.subr.bf16.mxu0 0
      %6801 = vmatpush2.bf16.msra.mxu0 0
      %6802 = vmatprep.mubr.bf16.mxu0 0
      %6803 = vmatmul.mubr.bf16.gmra.mxu0 %v1315
      %v6804 = vpop.f32.mrf.mxu0
      %v6805 = vadd.f32 %v6764, %v6804
      %v6806 = vpop.f32.mrf.mxu0
      %v6807 = vadd.f32 %v6766, %v6806
      %v6808 = vpop.f32.mrf.mxu0
      %v6809 = vpop.f32.mrf.mxu0
      %6810 = vdwg.mxu0
      %p6811 = scmp.eq.s32.totalorder %s21, 0
      // Predicated region
      $region41: #{actor_critic_forward.3} parent=39 // pred_check
        %p6812 = pneg %p6811
      $region42: #{actor_critic_forward.3} parent=39 // pred_check_branch
        %6814 = sbr.rel (%p6812) target = $region44
      $region43: #{actor_critic_forward.3} parent=39 // pred_region
        %v6815 = vld [vmem:[%s2] sm:$0xf]
        %v6817 = vlaneseq
        %v6818 = vshrl.u32 %v6817, 7
        %v6819 = vsub.s32 0, %v6818
        %v6820 = vrot.slane %v6815, %v6819
        %v6821 = vlaneseq
        %v6822 = vshrl.u32 %v6821, 7
        %v6823 = vsub.s32 1, %v6822
        %v6824 = vrot.slane %v6815, %v6823
        %v6825 = vlaneseq
        %v6826 = vshrl.u32 %v6825, 7
        %v6827 = vsub.s32 2, %v6826
        %v6828 = vrot.slane %v6815, %v6827
        %v6829 = vlaneseq
        %v6830 = vshrl.u32 %v6829, 7
        %v6831 = vsub.s32 3, %v6830
        %v6832 = vrot.slane %v6815, %v6831
        %v6837 = vadd.f32 %v6231, %v6820
        %v6838 = vadd.f32 %v6233, %v6824
        %v6839 = vadd.f32 %v6805, %v6828
        %v6840 = vadd.f32 %v6807, %v6832
        %v6845 = vcombine.low %v6837, %v6838
        %v6846 = vcombine.low %v6839, %v6840
        %v6848 = vunpack.c.l.s4 1983009808
        %v6849 = vunpack.c.0.s8 %v6848
        %v6850 = vlaneseq
        %v6851 = vshrl.u32 %v6850, 7
        %v6852 = vsub.s32 %v6849, %v6851
        %v6853 = vrot.slane %v6845, %v6852
        %v6855 = vunpack.c.l.s4 1983009808
        %v6856 = vunpack.c.0.s8 %v6855
        %v6857 = vlaneseq
        %v6858 = vshrl.u32 %v6857, 7
        %v6859 = vsub.s32 %v6856, %v6858
        %v6860 = vrot.slane %v6846, %v6859
        %v6861 = vcombine.low %v6853, %v6860
        %6863 = vst [vmem:[#allocation2] sm:$0xff] %v6861
      $region44: #{actor_critic_forward.3} parent=39 // pred_fallthru
        _
      %p6864 = scmp.gt.s32.totalorder %s21, 0
      // Predicated region
      $region45: #{actor_critic_forward.3} parent=39 // pred_check
        %p6865 = pneg %p6864
      $region46: #{actor_critic_forward.3} parent=39 // pred_check_branch
        %6867 = sbr.rel (%p6865) target = $region48
      $region47: #{actor_critic_forward.3} parent=39 // pred_region
        %v6868 = vld [vmem:[#allocation2] sm:$0xff]
        %v6873 = vcombine.low %v6231, %v6233
        %v6874 = vcombine.low %v6805, %v6807
        %v6876 = vunpack.c.l.s4 1983009808
        %v6877 = vunpack.c.0.s8 %v6876
        %v6878 = vlaneseq
        %v6879 = vshrl.u32 %v6878, 7
        %v6880 = vsub.s32 %v6877, %v6879
        %v6881 = vrot.slane %v6873, %v6880
        %v6883 = vunpack.c.l.s4 1983009808
        %v6884 = vunpack.c.0.s8 %v6883
        %v6885 = vlaneseq
        %v6886 = vshrl.u32 %v6885, 7
        %v6887 = vsub.s32 %v6884, %v6886
        %v6888 = vrot.slane %v6874, %v6887
        %v6889 = vcombine.low %v6881, %v6888
        %v6891 = vadd.f32 %v6868, %v6889
        %6892 = vst [vmem:[#allocation2] sm:$0xff] %v6891
      $region48: #{actor_critic_forward.3} parent=39 // pred_fallthru
        _
      %p6893 = scmp.eq.s32.totalorder %s21, 5
      // Predicated region
      $region49: #{actor_critic_forward.3} parent=39 // pred_check
        %p6894 = pneg %p6893
      $region50: #{actor_critic_forward.3} parent=39 // pred_check_branch
        %6896 = sbr.rel (%p6894) target = $region52
      $region51: #{actor_critic_forward.3} parent=39 // pred_region
        %v6897 = vld [vmem:[#allocation2] sm:$0xff]
        %v6898 = vmax.f32 %v6897, 0.0
        %v6900 = vcombine.high %v6898, %v6898
        %v6902 = vunpack.c.l.s4 1983009808
        %v6903 = vunpack.c.0.s8 %v6902
        %v6904 = vlaneseq
        %v6905 = vshrl.u32 %v6904, 7
        %v6906 = vsub.s32 %v6903, %v6905
        %v6907 = vrot.slane %v6898, %v6906
        %v6909 = vunpack.c.l.s4 1983009808
        %v6910 = vunpack.c.0.s8 %v6909
        %v6911 = vlaneseq
        %v6912 = vshrl.u32 %v6911, 7
        %v6913 = vsub.s32 %v6910, %v6912
        %v6914 = vrot.slane %v6900, %v6913
        %v6915 = vcombine.high %v6907, %v6907
        %v6916 = vcombine.high %v6914, %v6914
        %v6921 = vpack.c.bf16 %v6907, %v6907
        %v6922 = vpack.c.bf16 %v6915, %v6915
        %v6923 = vpack.c.bf16 %v6914, %v6914
        %v6924 = vpack.c.bf16 %v6916, %v6916
        %v6925 = vld [vmem:[%s3] sm:$0xf]
        %v6926 = vld [vmem:[%s3 + $0x4] sm:$0xf]
        %v6927 = vld [vmem:[%s3 + $0x8] sm:$0xf]
        %v6928 = vld [vmem:[%s3 + $0xc] sm:$0xf]
        %v6929 = vld [vmem:[%s3 + $0x10] sm:$0xf]
        %v6930 = vld [vmem:[%s3 + $0x14] sm:$0xf]
        %v6931 = vld [vmem:[%s3 + $0x18] sm:$0xf]
        %v6932 = vld [vmem:[%s3 + $0x1c] sm:$0xf]
        %v6933 = vld [vmem:[%s3 + $0x20] sm:$0xf]
        %v6934 = vld [vmem:[%s3 + $0x24] sm:$0xf]
        %v6935 = vld [vmem:[%s3 + $0x28] sm:$0xf]
        %v6936 = vld [vmem:[%s3 + $0x2c] sm:$0xf]
        %v6937 = vld [vmem:[%s3 + $0x30] sm:$0xf]
        %v6938 = vld [vmem:[%s3 + $0x34] sm:$0xf]
        %v6939 = vld [vmem:[%s3 + $0x38] sm:$0xf]
        %v6940 = vld [vmem:[%s3 + $0x3c] sm:$0xf]
        %v6941 = vld [vmem:[%s3 + $0x40] sm:$0xf]
        %v6942 = vld [vmem:[%s3 + $0x44] sm:$0xf]
        %v6943 = vld [vmem:[%s3 + $0x48] sm:$0xf]
        %v6944 = vld [vmem:[%s3 + $0x4c] sm:$0xf]
        %v6945 = vld [vmem:[%s3 + $0x50] sm:$0xf]
        %v6946 = vld [vmem:[%s3 + $0x54] sm:$0xf]
        %v6947 = vld [vmem:[%s3 + $0x58] sm:$0xf]
        %v6948 = vld [vmem:[%s3 + $0x5c] sm:$0xf]
        %v6949 = vld [vmem:[%s3 + $0x60] sm:$0xf]
        %v6950 = vld [vmem:[%s3 + $0x64] sm:$0xf]
        %v6951 = vld [vmem:[%s3 + $0x68] sm:$0xf]
        %v6952 = vld [vmem:[%s3 + $0x6c] sm:$0xf]
        %v6953 = vld [vmem:[%s3 + $0x70] sm:$0xf]
        %v6954 = vld [vmem:[%s3 + $0x74] sm:$0xf]
        %v6955 = vld [vmem:[%s3 + $0x78] sm:$0xf]
        %v6956 = vld [vmem:[%s3 + $0x7c] sm:$0xf]
        %v6957 = vld [vmem:[%s3 + $0x80] sm:$0xf]
        %v6958 = vld [vmem:[%s3 + $0x84] sm:$0xf]
        %v6959 = vld [vmem:[%s3 + $0x88] sm:$0xf]
        %v6960 = vld [vmem:[%s3 + $0x8c] sm:$0xf]
        %v6961 = vld [vmem:[%s3 + $0x90] sm:$0xf]
        %v6962 = vld [vmem:[%s3 + $0x94] sm:$0xf]
        %v6963 = vld [vmem:[%s3 + $0x98] sm:$0xf]
        %v6964 = vld [vmem:[%s3 + $0x9c] sm:$0xf]
        %v6965 = vld [vmem:[%s3 + $0xa0] sm:$0xf]
        %v6966 = vld [vmem:[%s3 + $0xa4] sm:$0xf]
        %v6967 = vld [vmem:[%s3 + $0xa8] sm:$0xf]
        %v6968 = vld [vmem:[%s3 + $0xac] sm:$0xf]
        %v6969 = vld [vmem:[%s3 + $0xb0] sm:$0xf]
        %v6970 = vld [vmem:[%s3 + $0xb4] sm:$0xf]
        %v6971 = vld [vmem:[%s3 + $0xb8] sm:$0xf]
        %v6972 = vld [vmem:[%s3 + $0xbc] sm:$0xf]
        %v6973 = vld [vmem:[%s3 + $0xc0] sm:$0xf]
        %v6974 = vld [vmem:[%s3 + $0xc4] sm:$0xf]
        %v6975 = vld [vmem:[%s3 + $0xc8] sm:$0xf]
        %v6976 = vld [vmem:[%s3 + $0xcc] sm:$0xf]
        %v6977 = vld [vmem:[%s3 + $0xd0] sm:$0xf]
        %v6978 = vld [vmem:[%s3 + $0xd4] sm:$0xf]
        %v6979 = vld [vmem:[%s3 + $0xd8] sm:$0xf]
        %v6980 = vld [vmem:[%s3 + $0xdc] sm:$0xf]
        %v6981 = vld [vmem:[%s3 + $0xe0] sm:$0xf]
        %v6982 = vld [vmem:[%s3 + $0xe4] sm:$0xf]
        %v6983 = vld [vmem:[%s3 + $0xe8] sm:$0xf]
        %v6984 = vld [vmem:[%s3 + $0xec] sm:$0xf]
        %v6985 = vld [vmem:[%s3 + $0xf0] sm:$0xf]
        %v6986 = vld [vmem:[%s3 + $0xf4] sm:$0xf]
        %v6987 = vld [vmem:[%s3 + $0xf8] sm:$0xf]
        %v6988 = vld [vmem:[%s3 + $0xfc] sm:$0xf]
        %v6989 = vld [vmem:[%s4] sm:$0x1]
        %v6991 = vlaneseq
        %v6992 = vshrl.u32 %v6991, 7
        %v6993 = vsub.s32 0, %v6992
        %v6994 = vrot.slane %v6989, %v6993
        %v7060 = vunpack.c.l.b16 %v6925
        %v7061 = vunpack.c.l.b16 %v6926
        %v7062 = vunpack.c.l.b16 %v6927
        %v7063 = vunpack.c.l.b16 %v6928
        %v7064 = vunpack.c.l.b16 %v6929
        %v7065 = vunpack.c.l.b16 %v6930
        %v7066 = vunpack.c.l.b16 %v6931
        %v7067 = vunpack.c.l.b16 %v6932
        %v7068 = vunpack.c.l.b16 %v6933
        %v7069 = vunpack.c.l.b16 %v6934
        %v7070 = vunpack.c.l.b16 %v6935
        %v7071 = vunpack.c.l.b16 %v6936
        %v7072 = vunpack.c.l.b16 %v6937
        %v7073 = vunpack.c.l.b16 %v6938
        %v7074 = vunpack.c.l.b16 %v6939
        %v7075 = vunpack.c.l.b16 %v6940
        %v7076 = vunpack.c.l.b16 %v6941
        %v7077 = vunpack.c.l.b16 %v6942
        %v7078 = vunpack.c.l.b16 %v6943
        %v7079 = vunpack.c.l.b16 %v6944
        %v7080 = vunpack.c.l.b16 %v6945
        %v7081 = vunpack.c.l.b16 %v6946
        %v7082 = vunpack.c.l.b16 %v6947
        %v7083 = vunpack.c.l.b16 %v6948
        %v7084 = vunpack.c.l.b16 %v6949
        %v7085 = vunpack.c.l.b16 %v6950
        %v7086 = vunpack.c.l.b16 %v6951
        %v7087 = vunpack.c.l.b16 %v6952
        %v7088 = vunpack.c.l.b16 %v6953
        %v7089 = vunpack.c.l.b16 %v6954
        %v7090 = vunpack.c.l.b16 %v6955
        %v7091 = vunpack.c.l.b16 %v6956
        %v7092 = vunpack.c.l.b16 %v6957
        %v7093 = vunpack.c.l.b16 %v6958
        %v7094 = vunpack.c.l.b16 %v6959
        %v7095 = vunpack.c.l.b16 %v6960
        %v7096 = vunpack.c.l.b16 %v6961
        %v7097 = vunpack.c.l.b16 %v6962
        %v7098 = vunpack.c.l.b16 %v6963
        %v7099 = vunpack.c.l.b16 %v6964
        %v7100 = vunpack.c.l.b16 %v6965
        %v7101 = vunpack.c.l.b16 %v6966
        %v7102 = vunpack.c.l.b16 %v6967
        %v7103 = vunpack.c.l.b16 %v6968
        %v7104 = vunpack.c.l.b16 %v6969
        %v7105 = vunpack.c.l.b16 %v6970
        %v7106 = vunpack.c.l.b16 %v6971
        %v7107 = vunpack.c.l.b16 %v6972
        %v7108 = vunpack.c.l.b16 %v6973
        %v7109 = vunpack.c.l.b16 %v6974
        %v7110 = vunpack.c.l.b16 %v6975
        %v7111 = vunpack.c.l.b16 %v6976
        %v7112 = vunpack.c.l.b16 %v6977
        %v7113 = vunpack.c.l.b16 %v6978
        %v7114 = vunpack.c.l.b16 %v6979
        %v7115 = vunpack.c.l.b16 %v6980
        %v7116 = vunpack.c.l.b16 %v6981
        %v7117 = vunpack.c.l.b16 %v6982
        %v7118 = vunpack.c.l.b16 %v6983
        %v7119 = vunpack.c.l.b16 %v6984
        %v7120 = vunpack.c.l.b16 %v6985
        %v7121 = vunpack.c.l.b16 %v6986
        %v7122 = vunpack.c.l.b16 %v6987
        %v7123 = vunpack.c.l.b16 %v6988
        %v7124 = vpack.c.b16 %v7061, %v7060
        %v7125 = vpack.c.b16 %v7063, %v7062
        %v7126 = vpack.c.b16 %v7065, %v7064
        %v7127 = vpack.c.b16 %v7067, %v7066
        %v7128 = vpack.c.b16 %v7069, %v7068
        %v7129 = vpack.c.b16 %v7071, %v7070
        %v7130 = vpack.c.b16 %v7073, %v7072
        %v7131 = vpack.c.b16 %v7075, %v7074
        %v7132 = vpack.c.b16 %v7077, %v7076
        %v7133 = vpack.c.b16 %v7079, %v7078
        %v7134 = vpack.c.b16 %v7081, %v7080
        %v7135 = vpack.c.b16 %v7083, %v7082
        %v7136 = vpack.c.b16 %v7085, %v7084
        %v7137 = vpack.c.b16 %v7087, %v7086
        %v7138 = vpack.c.b16 %v7089, %v7088
        %v7139 = vpack.c.b16 %v7091, %v7090
        %v7140 = vpack.c.b16 %v7093, %v7092
        %v7141 = vpack.c.b16 %v7095, %v7094
        %v7142 = vpack.c.b16 %v7097, %v7096
        %v7143 = vpack.c.b16 %v7099, %v7098
        %v7144 = vpack.c.b16 %v7101, %v7100
        %v7145 = vpack.c.b16 %v7103, %v7102
        %v7146 = vpack.c.b16 %v7105, %v7104
        %v7147 = vpack.c.b16 %v7107, %v7106
        %v7148 = vpack.c.b16 %v7109, %v7108
        %v7149 = vpack.c.b16 %v7111, %v7110
        %v7150 = vpack.c.b16 %v7113, %v7112
        %v7151 = vpack.c.b16 %v7115, %v7114
        %v7152 = vpack.c.b16 %v7117, %v7116
        %v7153 = vpack.c.b16 %v7119, %v7118
        %v7154 = vpack.c.b16 %v7121, %v7120
        %v7155 = vpack.c.b16 %v7123, %v7122
        %7188 = vmatprep.subr.bf16.mxu0 0
        %7189 = vmatpush1.bf16.msra.mxu0 %v7131
        %7190 = vmatprep.subr.bf16.mxu0 0
        %7191 = vmatpush1.bf16.msra.mxu0 %v7130
        %7192 = vmatprep.subr.bf16.mxu0 0
        %7193 = vmatpush1.bf16.msra.mxu0 %v7129
        %7194 = vmatprep.subr.bf16.mxu0 0
        %7195 = vmatpush1.bf16.msra.mxu0 %v7128
        %7196 = vmatprep.subr.bf16.mxu0 0
        %7197 = vmatpush1.bf16.msra.mxu0 %v7127
        %7198 = vmatprep.subr.bf16.mxu0 0
        %7199 = vmatpush1.bf16.msra.mxu0 %v7126
        %7200 = vmatprep.subr.bf16.mxu0 0
        %7201 = vmatpush1.bf16.msra.mxu0 %v7125
        %7202 = vmatprep.subr.bf16.mxu0 0
        %7203 = vmatpush1.bf16.msra.mxu0 %v7124
        %7204 = vmatprep.subr.bf16.mxu0 0
        %7205 = vmatpush2.bf16.msra.mxu0 %v7139
        %7206 = vmatprep.subr.bf16.mxu0 0
        %7207 = vmatpush2.bf16.msra.mxu0 %v7138
        %7208 = vmatprep.subr.bf16.mxu0 0
        %7209 = vmatpush2.bf16.msra.mxu0 %v7137
        %7210 = vmatprep.subr.bf16.mxu0 0
        %7211 = vmatpush2.bf16.msra.mxu0 %v7136
        %7212 = vmatprep.subr.bf16.mxu0 0
        %7213 = vmatpush2.bf16.msra.mxu0 %v7135
        %7214 = vmatprep.subr.bf16.mxu0 0
        %7215 = vmatpush2.bf16.msra.mxu0 %v7134
        %7216 = vmatprep.subr.bf16.mxu0 0
        %7217 = vmatpush2.bf16.msra.mxu0 %v7133
        %7218 = vmatprep.subr.bf16.mxu0 0
        %7219 = vmatpush2.bf16.msra.mxu0 %v7132
        %7220 = vmatprep.mubr.bf16.mxu0 %v6922
        %7221 = vmatmul.mubr.bf16.gmra.mxu0 %v6921
        %v7222 = vpop.f32.mrf.mxu0
        %v7223 = vadd.f32 %v6994, %v7222
        %v7224 = vpop.f32.mrf.mxu0
        %v7225 = vpop.f32.mrf.mxu0
        %v7226 = vpop.f32.mrf.mxu0
        %7227 = vdwg.mxu0
        %7228 = vmatprep.subr.bf16.mxu0 0
        %7229 = vmatpush1.bf16.msra.mxu0 %v7147
        %7230 = vmatprep.subr.bf16.mxu0 0
        %7231 = vmatpush1.bf16.msra.mxu0 %v7146
        %7232 = vmatprep.subr.bf16.mxu0 0
        %7233 = vmatpush1.bf16.msra.mxu0 %v7145
        %7234 = vmatprep.subr.bf16.mxu0 0
        %7235 = vmatpush1.bf16.msra.mxu0 %v7144
        %7236 = vmatprep.subr.bf16.mxu0 0
        %7237 = vmatpush1.bf16.msra.mxu0 %v7143
        %7238 = vmatprep.subr.bf16.mxu0 0
        %7239 = vmatpush1.bf16.msra.mxu0 %v7142
        %7240 = vmatprep.subr.bf16.mxu0 0
        %7241 = vmatpush1.bf16.msra.mxu0 %v7141
        %7242 = vmatprep.subr.bf16.mxu0 0
        %7243 = vmatpush1.bf16.msra.mxu0 %v7140
        %7244 = vmatprep.subr.bf16.mxu0 0
        %7245 = vmatpush2.bf16.msra.mxu0 %v7155
        %7246 = vmatprep.subr.bf16.mxu0 0
        %7247 = vmatpush2.bf16.msra.mxu0 %v7154
        %7248 = vmatprep.subr.bf16.mxu0 0
        %7249 = vmatpush2.bf16.msra.mxu0 %v7153
        %7250 = vmatprep.subr.bf16.mxu0 0
        %7251 = vmatpush2.bf16.msra.mxu0 %v7152
        %7252 = vmatprep.subr.bf16.mxu0 0
        %7253 = vmatpush2.bf16.msra.mxu0 %v7151
        %7254 = vmatprep.subr.bf16.mxu0 0
        %7255 = vmatpush2.bf16.msra.mxu0 %v7150
        %7256 = vmatprep.subr.bf16.mxu0 0
        %7257 = vmatpush2.bf16.msra.mxu0 %v7149
        %7258 = vmatprep.subr.bf16.mxu0 0
        %7259 = vmatpush2.bf16.msra.mxu0 %v7148
        %7260 = vmatprep.mubr.bf16.mxu0 %v6924
        %7261 = vmatmul.mubr.bf16.gmra.mxu0 %v6923
        %v7262 = vpop.f32.mrf.mxu0
        %v7263 = vadd.f32 %v7223, %v7262
        %v7264 = vpop.f32.mrf.mxu0
        %v7265 = vpop.f32.mrf.mxu0
        %v7266 = vpop.f32.mrf.mxu0
        %7267 = vdwg.mxu0
        %7268 = vst [vmem:[%s272] sm:$0x3] %v7263
      $region52: #{actor_critic_forward.3} parent=39 // pred_fallthru
        _
      %p7269 = scmp.lt.s32.totalorder %s20, 0
      %s7270 = scalar_select %p7269, %s20, 0
      %s7271 = smul.addr %s7270, 2
      %s7272 = scalar_lea.vmem %s5, %s7271
      // Predicated region
      $region53: #{actor_critic_forward.3} parent=39 // pred_check
        %p7273 = pneg %p163
      $region54: #{actor_critic_forward.3} parent=39 // pred_check_branch
        %7275 = sbr.rel (%p7273) target = $region56
      $region55: #{actor_critic_forward.3} parent=39 // pred_region
        _
      $region56: #{actor_critic_forward.3} parent=39 // pred_fallthru
        _
      // Predicated region
      $region57: #{actor_critic_forward.3} parent=39 // pred_check
        %p7276 = pneg %p163
      $region58: #{actor_critic_forward.3} parent=39 // pred_check_branch
        %7278 = sbr.rel (%p7276) target = $region60
      $region59: #{actor_critic_forward.3} parent=39 // pred_region
        %p7279 = scmp.lt.s32.totalorder %s20, 0
        %s7280 = scalar_select %p7279, %s20, 0
        %s7281 = smul.addr %s7280, 2
        %s7282 = scalar_lea.vmem %s5, %s7281
      $region60: #{actor_critic_forward.3} parent=39 // pred_fallthru
        _
    $region40: #{actor_critic_forward.3} parent=5 // pred_fallthru
      _
    %p7283 = scmp.le.s32.totalorder 2, %s11
    // Predicated region
    $region61: #{actor_critic_forward.3} parent=5 // pred_check
      %p7284 = pneg %p7283
    $region62: #{actor_critic_forward.3} parent=5 // pred_check_branch
      %7286 = sbr.rel (%p7284) target = $region64
    $region63: #{actor_critic_forward.3} parent=5 // pred_region
      %s7287 = ssub.s32 %s11, 2
    $region64: #{actor_critic_forward.3} parent=5 // pred_fallthru
      _
  $region6: #{actor_critic_forward.3} parent=0 // loop_footer
    %s15 = sadd.s32 1, %s11
  $region7: #{actor_critic_forward.3} parent=0 // loop_footer_branch
    %10 = sbr.rel target = $region3
  $region8: #{actor_critic_forward.3} parent=0 // loop_exit
    _

</llo_original>
